<compile_context>
chip_gen: v7x
topology: tpu7x:2x2x1
jax: 0.10.0
libtpu: 0.0.40
codegen_flags: <defaults>
</compile_context>

<pallas_src>
import numpy as np
import jax
import jax.numpy as jnp
from jax.experimental import pallas as pl
from jax.experimental.pallas import tpu as pltpu

EMBED = 300            # embedding_dim
HID = 50               # lstm_hidden_dim
GPAD = 128             # per-gate lane padding (HID -> 128)
NGATE = 4
GWIDTH = NGATE * GPAD  # 512
H2 = 300               # regressor hidden
FEA = 21 * 3           # 63
REG_IN = 3 + FEA       # 66
SEQ0, SEQ1, SEQ2 = 1, 4, 16
NSEQ = SEQ0 + SEQ1 + SEQ2   # 21

# Packed LSTM parameter layout: (LSTM_ROWS, 512)
W_IH_OFF = 0                 # rows [0, 300): W_ih^T, gate g in lanes [128g, 128g+50)
W_HH_OFF = 304               # rows [304, 432): W_hh^T (padded to 128 rows)
B_OFF = W_HH_OFF + GPAD      # row 432: combined bias (b_ih + b_hh), zero in pad lanes
LSTM_ROWS = 440

# Packed regressor parameter layout: (REG_ROWS, 300) -- trimmed to live rows.
FEA_K = 128                  # fea matmul K (63 live rows zero-padded to 128)
WFEA_OFF = 0                 # rows [0, 63): fea part of W1^T, rows [63, 128) zero
W1O_OFF = 128                # rows 128..130: W1^T rows for out1/out2/out3
B1_OFF = 131                 # row 131: b1
W2_OFF = 132                 # row 132: W2 row
B2_OFF = 133                 # row 133, lane 0: b2
REG_ROWS = 136


def _round_up(n, m):
    return -(-n // m) * m


# ----------------------------------------------------------------------------- kernel
def _make_kernel(B, BM):
    """Kernel for batch B; BM = per-stream merged/padded batch (multiple of 8)."""
    BM3 = 3 * BM
    REC_ROWS = NSEQ * BM          # 21*BM recurrence rows (step-major, active blocks only)
    CH = 7 * BM                   # precompute chunk rows (3 chunks, multiple of 8)
    FEA_ROW = REC_ROWS            # fea block starts here in the packed data

    def kernel(data_ref, lstm_ref, reg_hbm, out_ref,
               precomp, h_scr, c_scr, reg_vmem, reg_sem):
        # ---- regressor params: start HBM->VMEM DMA now, hide it under the recurrence.
        reg_copy = pltpu.make_async_copy(reg_hbm, reg_vmem, reg_sem)
        reg_copy.start()

        # ---- hoisted input projection, chunked over M, staged in VMEM scratch ------
        for ci in range(3):
            r0 = ci * CH
            precomp[r0:r0 + CH, :] = (
                jnp.dot(data_ref[r0:r0 + CH, :],
                        lstm_ref[W_IH_OFF:W_IH_OFF + EMBED, :],
                        preferred_element_type=jnp.float32)
                + lstm_ref[B_OFF:B_OFF + 1, :])

        # ---- merged 16-step recurrence ----------------------------------------------
        # rows [0:BM)      : 16-step stream (input3)        -- active from t=0
        # rows [BM:2BM)    :  4-step stream (input2)        -- joins at t=12
        # rows [2BM:3BM)   :  1-step stream (input1)        -- joins at t=15
        h_scr[...] = jnp.zeros((BM3, GPAD), jnp.float32)
        c_scr[...] = jnp.zeros((BM3, GPAD), jnp.float32)

        row = 0
        for t in range(SEQ2):                              # static unroll (16 steps)
            if t < SEQ2 - SEQ1:
                nact = BM
            elif t < SEQ2 - SEQ0:
                nact = 2 * BM
            else:
                nact = BM3
            gates = precomp[row:row + nact, :] + jnp.dot(
                h_scr[0:nact, :],
                lstm_ref[W_HH_OFF:W_HH_OFF + GPAD, :],
                preferred_element_type=jnp.float32)        # (nact, 512)
            sg = jax.nn.sigmoid(gates)                     # one EUP pass over all gates
            ig = sg[:, 0 * GPAD:1 * GPAD]
            fg = sg[:, 1 * GPAD:2 * GPAD]
            gg = 2.0 * sg[:, 2 * GPAD:3 * GPAD] - 1.0      # tanh via 2x-prescaled weights
            og = sg[:, 3 * GPAD:4 * GPAD]
            c_new = fg * c_scr[0:nact, :] + ig * gg
            c_scr[0:nact, :] = c_new
            h_scr[0:nact, :] = og * jnp.tanh(c_new)        # pad lanes stay exactly 0
            row += nact

        # ---- similarity heads ---------------------------------------------------------
        lane_mask = (jax.lax.broadcasted_iota(jnp.int32, (1, GPAD), 1)
                     < HID).astype(jnp.float32)

        def absdiff(blk):
            base = blk * BM
            d = jnp.abs(h_scr[base:base + B, :] - h_scr[base + B:base + 2 * B, :])
            return jnp.sum(d * lane_mask, axis=1, keepdims=True)   # (B, 1)

        out3 = jnp.exp(-absdiff(0))        # 16-step stream
        out2 = jnp.exp(-absdiff(1))        #  4-step stream
        # NOTE: out1 uses exp(+sum) — faithful to the original PyTorch code.
        out1 = jnp.exp(absdiff(2))         #  1-step stream

        # ---- regressor (weights arrive via the overlapped DMA) -------------------------
        reg_copy.wait()
        fea = data_ref[FEA_ROW:FEA_ROW + B, 0:FEA_K]                 # (B, 128)
        hid = jnp.tanh(
            out1 * reg_vmem[W1O_OFF + 0:W1O_OFF + 1, :]
            + out2 * reg_vmem[W1O_OFF + 1:W1O_OFF + 2, :]
            + out3 * reg_vmem[W1O_OFF + 2:W1O_OFF + 3, :]
            + jnp.dot(fea, reg_vmem[WFEA_OFF:WFEA_OFF + FEA_K, :],
                      preferred_element_type=jnp.float32)
            + reg_vmem[B1_OFF:B1_OFF + 1, :])                        # (B, 300)

        # Final (300 -> 1) layer as multiply + cross-lane sum (no N=1 MXU matmul).
        pre = jax.nn.sigmoid(
            jnp.sum(hid * reg_vmem[W2_OFF:W2_OFF + 1, :], axis=1, keepdims=True)
            + reg_vmem[B2_OFF:B2_OFF + 1, 0:1])
        out_ref[...] = pre                                           # (B, 1)

    return kernel


# ---------------------------------------------------------------------------- packing
def _gather_index(B, BM):
    """Row-gather indices building the packed data layout (step-major, active blocks)."""
    zrow = 2 * NSEQ * B + B                      # index of the all-zero row in src
    idx = np.full((22 * BM,), zrow, dtype=np.int32)
    streams = ((5, SEQ2), (1, SEQ1), (0, SEQ0))  # (seq-start in x, length)
    row = 0
    for t in range(SEQ2):
        nblk = 1 + int(t >= SEQ2 - SEQ1) + int(t >= SEQ2 - SEQ0)
        for s in range(nblk):
            s0, L = streams[s]
            tau = t - (SEQ2 - L)
            # torch .contiguous().view(seq, batch, embed) == row-major reinterpretation
            flat = tau * B + np.arange(B)
            left = (flat // L) * NSEQ + s0 + (flat % L)
            idx[row:row + B] = left
            idx[row + B:row + 2 * B] = left + NSEQ * B
            row += BM
    idx[row:row + B] = 2 * NSEQ * B + np.arange(B)     # fea rows
    return idx


def _pack_data(x, B, BM):
    """Single-gather packing into the (22*BM, 300) kernel data layout."""
    xl = x[:, :, 0:EMBED].reshape(B * NSEQ, EMBED)
    xr = x[:, :, EMBED:2 * EMBED].reshape(B * NSEQ, EMBED)
    fea = x[:, :, 2 * EMBED:2 * EMBED + 3].reshape(B, FEA)
    fea_p = jnp.pad(fea, ((0, 0), (0, EMBED - FEA)))
    src = jnp.concatenate([xl, xr, fea_p, jnp.zeros((1, EMBED), x.dtype)], axis=0)
    idx = jnp.asarray(_gather_index(B, BM))
    return src[idx]                                      # one gather -> (22*BM, 300)


def init_raw_params(key):
    """Synthetic parameters in PyTorch layouts with PyTorch-style uniform init."""
    ks = jax.random.split(key, 8)
    s = 1.0 / jnp.sqrt(jnp.float32(HID))
    w_ih = jax.random.uniform(ks[0], (4 * HID, EMBED), jnp.float32, -s, s)
    w_hh = jax.random.uniform(ks[1], (4 * HID, HID), jnp.float32, -s, s)
    b_ih = jax.random.uniform(ks[2], (4 * HID,), jnp.float32, -s, s)
    b_hh = jax.random.uniform(ks[3], (4 * HID,), jnp.float32, -s, s)
    s1 = 1.0 / jnp.sqrt(jnp.float32(REG_IN))
    w1 = jax.random.uniform(ks[4], (H2, REG_IN), jnp.float32, -s1, s1)
    b1 = jax.random.uniform(ks[5], (H2,), jnp.float32, -s1, s1)
    s2 = 1.0 / jnp.sqrt(jnp.float32(H2))
    w2 = jax.random.uniform(ks[6], (1, H2), jnp.float32, -s2, s2)
    b2 = jax.random.uniform(ks[7], (1,), jnp.float32, -s2, s2)
    return dict(w_ih=w_ih, w_hh=w_hh, b_ih=b_ih, b_hh=b_hh,
                w1=w1, b1=b1, w2=w2, b2=b2)


def pack_params(raw):
    """Pre-transpose / pad / pack parameters into two VMEM-friendly arrays.

    The g-gate (tanh) columns of W_ih / W_hh / bias are pre-scaled by 2 so the
    kernel can use a single sigmoid pass: tanh(z) = 2*sigmoid(2z) - 1.
    Pad lanes stay exactly zero (scaling zeros keeps them zero).
    """
    w_ih, w_hh = raw["w_ih"], raw["w_hh"]
    b = raw["b_ih"] + raw["b_hh"]

    w_ih_p = jnp.zeros((EMBED, GWIDTH), jnp.float32)
    w_hh_p = jnp.zeros((GPAD, GWIDTH), jnp.float32)
    b_p = jnp.zeros((1, GWIDTH), jnp.float32)
    for g in range(NGATE):                                 # gates i, f, g, o
        scale = 2.0 if g == 2 else 1.0
        w_ih_p = w_ih_p.at[:, g * GPAD:g * GPAD + HID].set(
            scale * w_ih[g * HID:(g + 1) * HID, :].T)
        w_hh_p = w_hh_p.at[0:HID, g * GPAD:g * GPAD + HID].set(
            scale * w_hh[g * HID:(g + 1) * HID, :].T)
        b_p = b_p.at[0, g * GPAD:g * GPAD + HID].set(scale * b[g * HID:(g + 1) * HID])

    lstm_pack = jnp.zeros((LSTM_ROWS, GWIDTH), jnp.float32)
    lstm_pack = lstm_pack.at[W_IH_OFF:W_IH_OFF + EMBED, :].set(w_ih_p)
    lstm_pack = lstm_pack.at[W_HH_OFF:W_HH_OFF + GPAD, :].set(w_hh_p)
    lstm_pack = lstm_pack.at[B_OFF:B_OFF + 1, :].set(b_p)

    w1, b1, w2, b2 = raw["w1"], raw["b1"], raw["w2"], raw["b2"]
    reg_pack = jnp.zeros((REG_ROWS, EMBED), jnp.float32)
    reg_pack = reg_pack.at[WFEA_OFF:WFEA_OFF + FEA, :].set(w1[:, 3:REG_IN].T)
    reg_pack = reg_pack.at[W1O_OFF:W1O_OFF + 3, :].set(w1[:, 0:3].T)
    reg_pack = reg_pack.at[B1_OFF, :].set(b1)
    reg_pack = reg_pack.at[W2_OFF, :].set(w2[0])
    reg_pack = reg_pack.at[B2_OFF, 0].set(b2[0])
    return {"lstm": lstm_pack, "reg": reg_pack}


# ---------------------------------------------------------------------------- forward
@jax.jit
def sem_match_forward(x, lstm_pack, reg_pack):
    B = x.shape[0]
    BM = _round_up(2 * B, 8)
    data = _pack_data(x, B, BM)
    vmem = lambda: pl.BlockSpec(memory_space=pltpu.MemorySpace.VMEM)
    return pl.pallas_call(
        _make_kernel(B, BM),
        out_shape=jax.ShapeDtypeStruct((B, 1), jnp.float32),
        in_specs=[vmem(), vmem(), pl.BlockSpec(memory_space=pl.ANY)],
        out_specs=vmem(),
        scratch_shapes=[
            pltpu.VMEM((NSEQ * BM, GWIDTH), jnp.float32),   # precomp (x@W_ih + b)
            pltpu.VMEM((3 * BM, GPAD), jnp.float32),        # h state (3 stacked streams)
            pltpu.VMEM((3 * BM, GPAD), jnp.float32),        # c state
            pltpu.VMEM((REG_ROWS, EMBED), jnp.float32),     # regressor params landing pad
            pltpu.SemaphoreType.DMA(()),                    # reg DMA completion
        ],
    )(data, lstm_pack, reg_pack)


# -------------------------------------------------------------------------- reference
def _lstm_ref(inp, w_ih, w_hh, b):
    """Unpadded single-layer LSTM (PyTorch gate order i,f,g,o), zero initial state."""
    seq, bsz, _ = inp.shape
    h = jnp.zeros((bsz, HID), jnp.float32)
    c = jnp.zeros((bsz, HID), jnp.float32)
    for t in range(seq):
        gates = inp[t] @ w_ih.T + h @ w_hh.T + b
        i = jax.nn.sigmoid(gates[:, 0 * HID:1 * HID])
        f = jax.nn.sigmoid(gates[:, 1 * HID:2 * HID])
        g = jnp.tanh(gates[:, 2 * HID:3 * HID])
        o = jax.nn.sigmoid(gates[:, 3 * HID:4 * HID])
        c = f * c + i * g
        h = o * jnp.tanh(c)
    return h


def reference_forward(x, raw):
    """Pure-JAX reference mirroring the PyTorch forward, for a sanity check."""
    B = x.shape[0]
    xl = x[:, :, 0:EMBED]
    xr = x[:, :, EMBED:2 * EMBED]
    fea = x[:, :, 2 * EMBED:2 * EMBED + 3].reshape(B, FEA)
    b = raw["b_ih"] + raw["b_hh"]

    def run(a, s0, L):
        return _lstm_ref(a[:, s0:s0 + L, :].reshape(L, B, EMBED),
                         raw["w_ih"], raw["w_hh"], b)

    hl1, hr1 = run(xl, 0, SEQ0), run(xr, 0, SEQ0)
    hl2, hr2 = run(xl, SEQ0, SEQ1), run(xr, SEQ0, SEQ1)
    hl3, hr3 = run(xl, SEQ0 + SEQ1, SEQ2), run(xr, SEQ0 + SEQ1, SEQ2)

    out1 = jnp.exp(jnp.sum(jnp.abs(hl1 - hr1), axis=1, keepdims=True))
    out2 = jnp.exp(-jnp.sum(jnp.abs(hl2 - hr2), axis=1, keepdims=True))
    out3 = jnp.exp(-jnp.sum(jnp.abs(hl3 - hr3), axis=1, keepdims=True))
    out = jnp.concatenate([out1, out2, out3, fea], axis=1)
    hid = jnp.tanh(out @ raw["w1"].T + raw["b1"])
    return jax.nn.sigmoid(hid @ raw["w2"].T + raw["b2"])


if __name__ == "__main__":
    key = jax.random.PRNGKey(0)
    k_x, k_p = jax.random.split(key)
    B = 2
    # x: (batch=2, seq=21, 603); scaled so exp(+sum|Δh|) stays well in f32 range
    # (the exp(+sum) in out1 is the original model's own behaviour).
    x = 0.1 * jax.random.normal(k_x, (B, 21, 2 * EMBED + 3), jnp.float32)
    raw = init_raw_params(k_p)
    packed = pack_params(raw)

    out = sem_match_forward(x, packed["lstm"], packed["reg"])
    out = jax.block_until_ready(out)

    assert out.shape == (B, 1)
    assert bool(jnp.all(jnp.isfinite(out)))
    ref = reference_forward(x, raw)
    assert bool(jnp.allclose(out, ref, rtol=2e-2, atol=2e-2))
    print("KERNEL_OK")
</pallas_src>

<mosaic_0001>
module attributes {stable_mosaic.version = 11 : i64} {
  func.func @kernel(%arg0: memref<176x300xf32, #tpu.memory_space<vmem>>, %arg1: memref<440x512xf32, #tpu.memory_space<vmem>>, %arg2: memref<136x300xf32, #tpu.memory_space<any>>, %arg3: memref<2x1xf32, #tpu.memory_space<vmem>>, %arg4: memref<168x512xf32, #tpu.memory_space<vmem>>, %arg5: memref<24x128xf32, #tpu.memory_space<vmem>>, %arg6: memref<24x128xf32, #tpu.memory_space<vmem>>, %arg7: memref<136x300xf32, #tpu.memory_space<vmem>>, %arg8: memref<!tpu.dma_semaphore, #tpu.memory_space<semaphore_mem>>) attributes {dimension_semantics = [], scalar_prefetch = 0 : i64, scratch_operands = 5 : i64, tpu.core_type = #tpu.core_type<tc>} {
    tpu.enqueue_dma source(%arg2 : memref<136x300xf32, #tpu.memory_space<any>>) target(%arg7 : memref<136x300xf32, #tpu.memory_space<vmem>>) target_semaphore(%arg8 : memref<!tpu.dma_semaphore, #tpu.memory_space<semaphore_mem>>)
    %c0 = arith.constant 0 : index
    %c0_0 = arith.constant 0 : index
    %0 = vector.load %arg0[%c0, %c0_0] : memref<176x300xf32, #tpu.memory_space<vmem>>, vector<56x300xf32>
    %c0_1 = arith.constant 0 : index
    %c0_2 = arith.constant 0 : index
    %1 = vector.load %arg1[%c0_1, %c0_2] : memref<440x512xf32, #tpu.memory_space<vmem>>, vector<300x512xf32>
    %cst = arith.constant dense<0.000000e+00> : vector<56x512xf32>
    %2 = tpu.matmul %0, %1, %cst {dimension_numbers = #tpu.dot_dimension_numbers<[1], [0], [0], [1], [0, 0, 1, 1], [], []>} : vector<56x300xf32>, vector<300x512xf32>, vector<56x512xf32> -> vector<56x512xf32>
    %c432 = arith.constant 432 : index
    %c0_3 = arith.constant 0 : index
    %3 = vector.load %arg1[%c432, %c0_3] : memref<440x512xf32, #tpu.memory_space<vmem>>, vector<1x512xf32>
    %4 = vector.broadcast %3 : vector<1x512xf32> to vector<56x512xf32>
    %5 = arith.addf %2, %4 : vector<56x512xf32>
    %c0_4 = arith.constant 0 : index
    %c0_5 = arith.constant 0 : index
    %6 = vector.load %arg4[%c0_4, %c0_5] : memref<168x512xf32, #tpu.memory_space<vmem>>, vector<56x512xf32>
    tpu.vector_store %arg4[%c0_4, %c0_5], %5 {strides = array<i32>} : memref<168x512xf32, #tpu.memory_space<vmem>>, vector<56x512xf32>,
    %c56 = arith.constant 56 : index
    %c0_6 = arith.constant 0 : index
    %7 = vector.load %arg0[%c56, %c0_6] : memref<176x300xf32, #tpu.memory_space<vmem>>, vector<56x300xf32>
    %c0_7 = arith.constant 0 : index
    %c0_8 = arith.constant 0 : index
    %8 = vector.load %arg1[%c0_7, %c0_8] : memref<440x512xf32, #tpu.memory_space<vmem>>, vector<300x512xf32>
    %cst_9 = arith.constant dense<0.000000e+00> : vector<56x512xf32>
    %9 = tpu.matmul %7, %8, %cst_9 {dimension_numbers = #tpu.dot_dimension_numbers<[1], [0], [0], [1], [0, 0, 1, 1], [], []>} : vector<56x300xf32>, vector<300x512xf32>, vector<56x512xf32> -> vector<56x512xf32>
    %c432_10 = arith.constant 432 : index
    %c0_11 = arith.constant 0 : index
    %10 = vector.load %arg1[%c432_10, %c0_11] : memref<440x512xf32, #tpu.memory_space<vmem>>, vector<1x512xf32>
    %11 = vector.broadcast %10 : vector<1x512xf32> to vector<56x512xf32>
    %12 = arith.addf %9, %11 : vector<56x512xf32>
    %c56_12 = arith.constant 56 : index
    %c0_13 = arith.constant 0 : index
    %13 = vector.load %arg4[%c56_12, %c0_13] : memref<168x512xf32, #tpu.memory_space<vmem>>, vector<56x512xf32>
    tpu.vector_store %arg4[%c56_12, %c0_13], %12 {strides = array<i32>} : memref<168x512xf32, #tpu.memory_space<vmem>>, vector<56x512xf32>,
    %c112 = arith.constant 112 : index
    %c0_14 = arith.constant 0 : index
    %14 = vector.load %arg0[%c112, %c0_14] : memref<176x300xf32, #tpu.memory_space<vmem>>, vector<56x300xf32>
    %c0_15 = arith.constant 0 : index
    %c0_16 = arith.constant 0 : index
    %15 = vector.load %arg1[%c0_15, %c0_16] : memref<440x512xf32, #tpu.memory_space<vmem>>, vector<300x512xf32>
    %cst_17 = arith.constant dense<0.000000e+00> : vector<56x512xf32>
    %16 = tpu.matmul %14, %15, %cst_17 {dimension_numbers = #tpu.dot_dimension_numbers<[1], [0], [0], [1], [0, 0, 1, 1], [], []>} : vector<56x300xf32>, vector<300x512xf32>, vector<56x512xf32> -> vector<56x512xf32>
    %c432_18 = arith.constant 432 : index
    %c0_19 = arith.constant 0 : index
    %17 = vector.load %arg1[%c432_18, %c0_19] : memref<440x512xf32, #tpu.memory_space<vmem>>, vector<1x512xf32>
    %18 = vector.broadcast %17 : vector<1x512xf32> to vector<56x512xf32>
    %19 = arith.addf %16, %18 : vector<56x512xf32>
    %c112_20 = arith.constant 112 : index
    %c0_21 = arith.constant 0 : index
    %20 = vector.load %arg4[%c112_20, %c0_21] : memref<168x512xf32, #tpu.memory_space<vmem>>, vector<56x512xf32>
    tpu.vector_store %arg4[%c112_20, %c0_21], %19 {strides = array<i32>} : memref<168x512xf32, #tpu.memory_space<vmem>>, vector<56x512xf32>,
    %cst_22 = arith.constant 0.000000e+00 : f32
    %21 = vector.broadcast %cst_22 : f32 to vector<24x128xf32>
    %c0_23 = arith.constant 0 : index
    %c0_24 = arith.constant 0 : index
    %22 = vector.load %arg5[%c0_23, %c0_24] : memref<24x128xf32, #tpu.memory_space<vmem>>, vector<24x128xf32>
    tpu.vector_store %arg5[%c0_23, %c0_24], %21 {strides = array<i32>} : memref<24x128xf32, #tpu.memory_space<vmem>>, vector<24x128xf32>,
    %cst_25 = arith.constant 0.000000e+00 : f32
    %23 = vector.broadcast %cst_25 : f32 to vector<24x128xf32>
    %c0_26 = arith.constant 0 : index
    %c0_27 = arith.constant 0 : index
    %24 = vector.load %arg6[%c0_26, %c0_27] : memref<24x128xf32, #tpu.memory_space<vmem>>, vector<24x128xf32>
    tpu.vector_store %arg6[%c0_26, %c0_27], %23 {strides = array<i32>} : memref<24x128xf32, #tpu.memory_space<vmem>>, vector<24x128xf32>,
    %c0_28 = arith.constant 0 : index
    %c0_29 = arith.constant 0 : index
    %25 = vector.load %arg4[%c0_28, %c0_29] : memref<168x512xf32, #tpu.memory_space<vmem>>, vector<8x512xf32>
    %c0_30 = arith.constant 0 : index
    %c0_31 = arith.constant 0 : index
    %26 = vector.load %arg5[%c0_30, %c0_31] : memref<24x128xf32, #tpu.memory_space<vmem>>, vector<8x128xf32>
    %c304 = arith.constant 304 : index
    %c0_32 = arith.constant 0 : index
    %27 = vector.load %arg1[%c304, %c0_32] : memref<440x512xf32, #tpu.memory_space<vmem>>, vector<128x512xf32>
    %cst_33 = arith.constant dense<0.000000e+00> : vector<8x512xf32>
    %28 = tpu.matmul %26, %27, %cst_33 {dimension_numbers = #tpu.dot_dimension_numbers<[1], [0], [0], [1], [0, 0, 1, 1], [], []>} : vector<8x128xf32>, vector<128x512xf32>, vector<8x512xf32> -> vector<8x512xf32>
    %29 = arith.addf %25, %28 : vector<8x512xf32>
    %30 = arith.negf %29 : vector<8x512xf32>
    %31 = math.exp %30 : vector<8x512xf32>
    %cst_34 = arith.constant 1.000000e+00 : f32
    %32 = vector.broadcast %cst_34 : f32 to vector<8x512xf32>
    %33 = arith.addf %32, %31 : vector<8x512xf32>
    %34 = arith.divf %32, %33 : vector<8x512xf32>
    %35 = vector.extract_strided_slice %34 {offsets = [0, 0], sizes = [8, 128], strides = [1, 1]} : vector<8x512xf32> to vector<8x128xf32>
    %36 = vector.extract_strided_slice %34 {offsets = [0, 128], sizes = [8, 128], strides = [1, 1]} : vector<8x512xf32> to vector<8x128xf32>
    %37 = vector.extract_strided_slice %34 {offsets = [0, 256], sizes = [8, 128], strides = [1, 1]} : vector<8x512xf32> to vector<8x128xf32>
    %cst_35 = arith.constant 2.000000e+00 : f32
    %38 = vector.broadcast %cst_35 : f32 to vector<8x128xf32>
    %39 = arith.mulf %38, %37 : vector<8x128xf32>
    %cst_36 = arith.constant 1.000000e+00 : f32
    %40 = vector.broadcast %cst_36 : f32 to vector<8x128xf32>
    %41 = arith.subf %39, %40 : vector<8x128xf32>
    %42 = vector.extract_strided_slice %34 {offsets = [0, 384], sizes = [8, 128], strides = [1, 1]} : vector<8x512xf32> to vector<8x128xf32>
    %c0_37 = arith.constant 0 : index
    %c0_38 = arith.constant 0 : index
    %43 = vector.load %arg6[%c0_37, %c0_38] : memref<24x128xf32, #tpu.memory_space<vmem>>, vector<8x128xf32>
    %44 = arith.mulf %36, %43 : vector<8x128xf32>
    %45 = arith.mulf %35, %41 : vector<8x128xf32>
    %46 = arith.addf %44, %45 : vector<8x128xf32>
    %c0_39 = arith.constant 0 : index
    %c0_40 = arith.constant 0 : index
    %47 = vector.load %arg6[%c0_39, %c0_40] : memref<24x128xf32, #tpu.memory_space<vmem>>, vector<8x128xf32>
    tpu.vector_store %arg6[%c0_39, %c0_40], %46 {strides = array<i32>} : memref<24x128xf32, #tpu.memory_space<vmem>>, vector<8x128xf32>,
    %48 = math.tanh %46 : vector<8x128xf32>
    %49 = arith.mulf %42, %48 : vector<8x128xf32>
    %c0_41 = arith.constant 0 : index
    %c0_42 = arith.constant 0 : index
    %50 = vector.load %arg5[%c0_41, %c0_42] : memref<24x128xf32, #tpu.memory_space<vmem>>, vector<8x128xf32>
    tpu.vector_store %arg5[%c0_41, %c0_42], %49 {strides = array<i32>} : memref<24x128xf32, #tpu.memory_space<vmem>>, vector<8x128xf32>,
    %c8 = arith.constant 8 : index
    %c0_43 = arith.constant 0 : index
    %51 = vector.load %arg4[%c8, %c0_43] : memref<168x512xf32, #tpu.memory_space<vmem>>, vector<8x512xf32>
    %c0_44 = arith.constant 0 : index
    %c0_45 = arith.constant 0 : index
    %52 = vector.load %arg5[%c0_44, %c0_45] : memref<24x128xf32, #tpu.memory_space<vmem>>, vector<8x128xf32>
    %c304_46 = arith.constant 304 : index
    %c0_47 = arith.constant 0 : index
    %53 = vector.load %arg1[%c304_46, %c0_47] : memref<440x512xf32, #tpu.memory_space<vmem>>, vector<128x512xf32>
    %cst_48 = arith.constant dense<0.000000e+00> : vector<8x512xf32>
    %54 = tpu.matmul %52, %53, %cst_48 {dimension_numbers = #tpu.dot_dimension_numbers<[1], [0], [0], [1], [0, 0, 1, 1], [], []>} : vector<8x128xf32>, vector<128x512xf32>, vector<8x512xf32> -> vector<8x512xf32>
    %55 = arith.addf %51, %54 : vector<8x512xf32>
    %56 = arith.negf %55 : vector<8x512xf32>
    %57 = math.exp %56 : vector<8x512xf32>
    %cst_49 = arith.constant 1.000000e+00 : f32
    %58 = vector.broadcast %cst_49 : f32 to vector<8x512xf32>
    %59 = arith.addf %58, %57 : vector<8x512xf32>
    %60 = arith.divf %58, %59 : vector<8x512xf32>
    %61 = vector.extract_strided_slice %60 {offsets = [0, 0], sizes = [8, 128], strides = [1, 1]} : vector<8x512xf32> to vector<8x128xf32>
    %62 = vector.extract_strided_slice %60 {offsets = [0, 128], sizes = [8, 128], strides = [1, 1]} : vector<8x512xf32> to vector<8x128xf32>
    %63 = vector.extract_strided_slice %60 {offsets = [0, 256], sizes = [8, 128], strides = [1, 1]} : vector<8x512xf32> to vector<8x128xf32>
    %cst_50 = arith.constant 2.000000e+00 : f32
    %64 = vector.broadcast %cst_50 : f32 to vector<8x128xf32>
    %65 = arith.mulf %64, %63 : vector<8x128xf32>
    %cst_51 = arith.constant 1.000000e+00 : f32
    %66 = vector.broadcast %cst_51 : f32 to vector<8x128xf32>
    %67 = arith.subf %65, %66 : vector<8x128xf32>
    %68 = vector.extract_strided_slice %60 {offsets = [0, 384], sizes = [8, 128], strides = [1, 1]} : vector<8x512xf32> to vector<8x128xf32>
    %c0_52 = arith.constant 0 : index
    %c0_53 = arith.constant 0 : index
    %69 = vector.load %arg6[%c0_52, %c0_53] : memref<24x128xf32, #tpu.memory_space<vmem>>, vector<8x128xf32>
    %70 = arith.mulf %62, %69 : vector<8x128xf32>
    %71 = arith.mulf %61, %67 : vector<8x128xf32>
    %72 = arith.addf %70, %71 : vector<8x128xf32>
    %c0_54 = arith.constant 0 : index
    %c0_55 = arith.constant 0 : index
    %73 = vector.load %arg6[%c0_54, %c0_55] : memref<24x128xf32, #tpu.memory_space<vmem>>, vector<8x128xf32>
    tpu.vector_store %arg6[%c0_54, %c0_55], %72 {strides = array<i32>} : memref<24x128xf32, #tpu.memory_space<vmem>>, vector<8x128xf32>,
    %74 = math.tanh %72 : vector<8x128xf32>
    %75 = arith.mulf %68, %74 : vector<8x128xf32>
    %c0_56 = arith.constant 0 : index
    %c0_57 = arith.constant 0 : index
    %76 = vector.load %arg5[%c0_56, %c0_57] : memref<24x128xf32, #tpu.memory_space<vmem>>, vector<8x128xf32>
    tpu.vector_store %arg5[%c0_56, %c0_57], %75 {strides = array<i32>} : memref<24x128xf32, #tpu.memory_space<vmem>>, vector<8x128xf32>,
    %c16 = arith.constant 16 : index
    %c0_58 = arith.constant 0 : index
    %77 = vector.load %arg4[%c16, %c0_58] : memref<168x512xf32, #tpu.memory_space<vmem>>, vector<8x512xf32>
    %c0_59 = arith.constant 0 : index
    %c0_60 = arith.constant 0 : index
    %78 = vector.load %arg5[%c0_59, %c0_60] : memref<24x128xf32, #tpu.memory_space<vmem>>, vector<8x128xf32>
    %c304_61 = arith.constant 304 : index
    %c0_62 = arith.constant 0 : index
    %79 = vector.load %arg1[%c304_61, %c0_62] : memref<440x512xf32, #tpu.memory_space<vmem>>, vector<128x512xf32>
    %cst_63 = arith.constant dense<0.000000e+00> : vector<8x512xf32>
    %80 = tpu.matmul %78, %79, %cst_63 {dimension_numbers = #tpu.dot_dimension_numbers<[1], [0], [0], [1], [0, 0, 1, 1], [], []>} : vector<8x128xf32>, vector<128x512xf32>, vector<8x512xf32> -> vector<8x512xf32>
    %81 = arith.addf %77, %80 : vector<8x512xf32>
    %82 = arith.negf %81 : vector<8x512xf32>
    %83 = math.exp %82 : vector<8x512xf32>
    %cst_64 = arith.constant 1.000000e+00 : f32
    %84 = vector.broadcast %cst_64 : f32 to vector<8x512xf32>
    %85 = arith.addf %84, %83 : vector<8x512xf32>
    %86 = arith.divf %84, %85 : vector<8x512xf32>
    %87 = vector.extract_strided_slice %86 {offsets = [0, 0], sizes = [8, 128], strides = [1, 1]} : vector<8x512xf32> to vector<8x128xf32>
    %88 = vector.extract_strided_slice %86 {offsets = [0, 128], sizes = [8, 128], strides = [1, 1]} : vector<8x512xf32> to vector<8x128xf32>
    %89 = vector.extract_strided_slice %86 {offsets = [0, 256], sizes = [8, 128], strides = [1, 1]} : vector<8x512xf32> to vector<8x128xf32>
    %cst_65 = arith.constant 2.000000e+00 : f32
    %90 = vector.broadcast %cst_65 : f32 to vector<8x128xf32>
    %91 = arith.mulf %90, %89 : vector<8x128xf32>
    %cst_66 = arith.constant 1.000000e+00 : f32
    %92 = vector.broadcast %cst_66 : f32 to vector<8x128xf32>
    %93 = arith.subf %91, %92 : vector<8x128xf32>
    %94 = vector.extract_strided_slice %86 {offsets = [0, 384], sizes = [8, 128], strides = [1, 1]} : vector<8x512xf32> to vector<8x128xf32>
    %c0_67 = arith.constant 0 : index
    %c0_68 = arith.constant 0 : index
    %95 = vector.load %arg6[%c0_67, %c0_68] : memref<24x128xf32, #tpu.memory_space<vmem>>, vector<8x128xf32>
    %96 = arith.mulf %88, %95 : vector<8x128xf32>
    %97 = arith.mulf %87, %93 : vector<8x128xf32>
    %98 = arith.addf %96, %97 : vector<8x128xf32>
    %c0_69 = arith.constant 0 : index
    %c0_70 = arith.constant 0 : index
    %99 = vector.load %arg6[%c0_69, %c0_70] : memref<24x128xf32, #tpu.memory_space<vmem>>, vector<8x128xf32>
    tpu.vector_store %arg6[%c0_69, %c0_70], %98 {strides = array<i32>} : memref<24x128xf32, #tpu.memory_space<vmem>>, vector<8x128xf32>,
    %100 = math.tanh %98 : vector<8x128xf32>
    %101 = arith.mulf %94, %100 : vector<8x128xf32>
    %c0_71 = arith.constant 0 : index
    %c0_72 = arith.constant 0 : index
    %102 = vector.load %arg5[%c0_71, %c0_72] : memref<24x128xf32, #tpu.memory_space<vmem>>, vector<8x128xf32>
    tpu.vector_store %arg5[%c0_71, %c0_72], %101 {strides = array<i32>} : memref<24x128xf32, #tpu.memory_space<vmem>>, vector<8x128xf32>,
    %c24 = arith.constant 24 : index
    %c0_73 = arith.constant 0 : index
    %103 = vector.load %arg4[%c24, %c0_73] : memref<168x512xf32, #tpu.memory_space<vmem>>, vector<8x512xf32>
    %c0_74 = arith.constant 0 : index
    %c0_75 = arith.constant 0 : index
    %104 = vector.load %arg5[%c0_74, %c0_75] : memref<24x128xf32, #tpu.memory_space<vmem>>, vector<8x128xf32>
    %c304_76 = arith.constant 304 : index
    %c0_77 = arith.constant 0 : index
    %105 = vector.load %arg1[%c304_76, %c0_77] : memref<440x512xf32, #tpu.memory_space<vmem>>, vector<128x512xf32>
    %cst_78 = arith.constant dense<0.000000e+00> : vector<8x512xf32>
    %106 = tpu.matmul %104, %105, %cst_78 {dimension_numbers = #tpu.dot_dimension_numbers<[1], [0], [0], [1], [0, 0, 1, 1], [], []>} : vector<8x128xf32>, vector<128x512xf32>, vector<8x512xf32> -> vector<8x512xf32>
    %107 = arith.addf %103, %106 : vector<8x512xf32>
    %108 = arith.negf %107 : vector<8x512xf32>
    %109 = math.exp %108 : vector<8x512xf32>
    %cst_79 = arith.constant 1.000000e+00 : f32
    %110 = vector.broadcast %cst_79 : f32 to vector<8x512xf32>
    %111 = arith.addf %110, %109 : vector<8x512xf32>
    %112 = arith.divf %110, %111 : vector<8x512xf32>
    %113 = vector.extract_strided_slice %112 {offsets = [0, 0], sizes = [8, 128], strides = [1, 1]} : vector<8x512xf32> to vector<8x128xf32>
    %114 = vector.extract_strided_slice %112 {offsets = [0, 128], sizes = [8, 128], strides = [1, 1]} : vector<8x512xf32> to vector<8x128xf32>
    %115 = vector.extract_strided_slice %112 {offsets = [0, 256], sizes = [8, 128], strides = [1, 1]} : vector<8x512xf32> to vector<8x128xf32>
    %cst_80 = arith.constant 2.000000e+00 : f32
    %116 = vector.broadcast %cst_80 : f32 to vector<8x128xf32>
    %117 = arith.mulf %116, %115 : vector<8x128xf32>
    %cst_81 = arith.constant 1.000000e+00 : f32
    %118 = vector.broadcast %cst_81 : f32 to vector<8x128xf32>
    %119 = arith.subf %117, %118 : vector<8x128xf32>
    %120 = vector.extract_strided_slice %112 {offsets = [0, 384], sizes = [8, 128], strides = [1, 1]} : vector<8x512xf32> to vector<8x128xf32>
    %c0_82 = arith.constant 0 : index
    %c0_83 = arith.constant 0 : index
    %121 = vector.load %arg6[%c0_82, %c0_83] : memref<24x128xf32, #tpu.memory_space<vmem>>, vector<8x128xf32>
    %122 = arith.mulf %114, %121 : vector<8x128xf32>
    %123 = arith.mulf %113, %119 : vector<8x128xf32>
    %124 = arith.addf %122, %123 : vector<8x128xf32>
    %c0_84 = arith.constant 0 : index
    %c0_85 = arith.constant 0 : index
    %125 = vector.load %arg6[%c0_84, %c0_85] : memref<24x128xf32, #tpu.memory_space<vmem>>, vector<8x128xf32>
    tpu.vector_store %arg6[%c0_84, %c0_85], %124 {strides = array<i32>} : memref<24x128xf32, #tpu.memory_space<vmem>>, vector<8x128xf32>,
    %126 = math.tanh %124 : vector<8x128xf32>
    %127 = arith.mulf %120, %126 : vector<8x128xf32>
    %c0_86 = arith.constant 0 : index
    %c0_87 = arith.constant 0 : index
    %128 = vector.load %arg5[%c0_86, %c0_87] : memref<24x128xf32, #tpu.memory_space<vmem>>, vector<8x128xf32>
    tpu.vector_store %arg5[%c0_86, %c0_87], %127 {strides = array<i32>} : memref<24x128xf32, #tpu.memory_space<vmem>>, vector<8x128xf32>,
    %c32 = arith.constant 32 : index
    %c0_88 = arith.constant 0 : index
    %129 = vector.load %arg4[%c32, %c0_88] : memref<168x512xf32, #tpu.memory_space<vmem>>, vector<8x512xf32>
    %c0_89 = arith.constant 0 : index
    %c0_90 = arith.constant 0 : index
    %130 = vector.load %arg5[%c0_89, %c0_90] : memref<24x128xf32, #tpu.memory_space<vmem>>, vector<8x128xf32>
    %c304_91 = arith.constant 304 : index
    %c0_92 = arith.constant 0 : index
    %131 = vector.load %arg1[%c304_91, %c0_92] : memref<440x512xf32, #tpu.memory_space<vmem>>, vector<128x512xf32>
    %cst_93 = arith.constant dense<0.000000e+00> : vector<8x512xf32>
    %132 = tpu.matmul %130, %131, %cst_93 {dimension_numbers = #tpu.dot_dimension_numbers<[1], [0], [0], [1], [0, 0, 1, 1], [], []>} : vector<8x128xf32>, vector<128x512xf32>, vector<8x512xf32> -> vector<8x512xf32>
    %133 = arith.addf %129, %132 : vector<8x512xf32>
    %134 = arith.negf %133 : vector<8x512xf32>
    %135 = math.exp %134 : vector<8x512xf32>
    %cst_94 = arith.constant 1.000000e+00 : f32
    %136 = vector.broadcast %cst_94 : f32 to vector<8x512xf32>
    %137 = arith.addf %136, %135 : vector<8x512xf32>
    %138 = arith.divf %136, %137 : vector<8x512xf32>
    %139 = vector.extract_strided_slice %138 {offsets = [0, 0], sizes = [8, 128], strides = [1, 1]} : vector<8x512xf32> to vector<8x128xf32>
    %140 = vector.extract_strided_slice %138 {offsets = [0, 128], sizes = [8, 128], strides = [1, 1]} : vector<8x512xf32> to vector<8x128xf32>
    %141 = vector.extract_strided_slice %138 {offsets = [0, 256], sizes = [8, 128], strides = [1, 1]} : vector<8x512xf32> to vector<8x128xf32>
    %cst_95 = arith.constant 2.000000e+00 : f32
    %142 = vector.broadcast %cst_95 : f32 to vector<8x128xf32>
    %143 = arith.mulf %142, %141 : vector<8x128xf32>
    %cst_96 = arith.constant 1.000000e+00 : f32
    %144 = vector.broadcast %cst_96 : f32 to vector<8x128xf32>
    %145 = arith.subf %143, %144 : vector<8x128xf32>
    %146 = vector.extract_strided_slice %138 {offsets = [0, 384], sizes = [8, 128], strides = [1, 1]} : vector<8x512xf32> to vector<8x128xf32>
    %c0_97 = arith.constant 0 : index
    %c0_98 = arith.constant 0 : index
    %147 = vector.load %arg6[%c0_97, %c0_98] : memref<24x128xf32, #tpu.memory_space<vmem>>, vector<8x128xf32>
    %148 = arith.mulf %140, %147 : vector<8x128xf32>
    %149 = arith.mulf %139, %145 : vector<8x128xf32>
    %150 = arith.addf %148, %149 : vector<8x128xf32>
    %c0_99 = arith.constant 0 : index
    %c0_100 = arith.constant 0 : index
    %151 = vector.load %arg6[%c0_99, %c0_100] : memref<24x128xf32, #tpu.memory_space<vmem>>, vector<8x128xf32>
    tpu.vector_store %arg6[%c0_99, %c0_100], %150 {strides = array<i32>} : memref<24x128xf32, #tpu.memory_space<vmem>>, vector<8x128xf32>,
    %152 = math.tanh %150 : vector<8x128xf32>
    %153 = arith.mulf %146, %152 : vector<8x128xf32>
    %c0_101 = arith.constant 0 : index
    %c0_102 = arith.constant 0 : index
    %154 = vector.load %arg5[%c0_101, %c0_102] : memref<24x128xf32, #tpu.memory_space<vmem>>, vector<8x128xf32>
    tpu.vector_store %arg5[%c0_101, %c0_102], %153 {strides = array<i32>} : memref<24x128xf32, #tpu.memory_space<vmem>>, vector<8x128xf32>,
    %c40 = arith.constant 40 : index
    %c0_103 = arith.constant 0 : index
    %155 = vector.load %arg4[%c40, %c0_103] : memref<168x512xf32, #tpu.memory_space<vmem>>, vector<8x512xf32>
    %c0_104 = arith.constant 0 : index
    %c0_105 = arith.constant 0 : index
    %156 = vector.load %arg5[%c0_104, %c0_105] : memref<24x128xf32, #tpu.memory_space<vmem>>, vector<8x128xf32>
    %c304_106 = arith.constant 304 : index
    %c0_107 = arith.constant 0 : index
    %157 = vector.load %arg1[%c304_106, %c0_107] : memref<440x512xf32, #tpu.memory_space<vmem>>, vector<128x512xf32>
    %cst_108 = arith.constant dense<0.000000e+00> : vector<8x512xf32>
    %158 = tpu.matmul %156, %157, %cst_108 {dimension_numbers = #tpu.dot_dimension_numbers<[1], [0], [0], [1], [0, 0, 1, 1], [], []>} : vector<8x128xf32>, vector<128x512xf32>, vector<8x512xf32> -> vector<8x512xf32>
    %159 = arith.addf %155, %158 : vector<8x512xf32>
    %160 = arith.negf %159 : vector<8x512xf32>
    %161 = math.exp %160 : vector<8x512xf32>
    %cst_109 = arith.constant 1.000000e+00 : f32
    %162 = vector.broadcast %cst_109 : f32 to vector<8x512xf32>
    %163 = arith.addf %162, %161 : vector<8x512xf32>
    %164 = arith.divf %162, %163 : vector<8x512xf32>
    %165 = vector.extract_strided_slice %164 {offsets = [0, 0], sizes = [8, 128], strides = [1, 1]} : vector<8x512xf32> to vector<8x128xf32>
    %166 = vector.extract_strided_slice %164 {offsets = [0, 128], sizes = [8, 128], strides = [1, 1]} : vector<8x512xf32> to vector<8x128xf32>
    %167 = vector.extract_strided_slice %164 {offsets = [0, 256], sizes = [8, 128], strides = [1, 1]} : vector<8x512xf32> to vector<8x128xf32>
    %cst_110 = arith.constant 2.000000e+00 : f32
    %168 = vector.broadcast %cst_110 : f32 to vector<8x128xf32>
    %169 = arith.mulf %168, %167 : vector<8x128xf32>
    %cst_111 = arith.constant 1.000000e+00 : f32
    %170 = vector.broadcast %cst_111 : f32 to vector<8x128xf32>
    %171 = arith.subf %169, %170 : vector<8x128xf32>
    %172 = vector.extract_strided_slice %164 {offsets = [0, 384], sizes = [8, 128], strides = [1, 1]} : vector<8x512xf32> to vector<8x128xf32>
    %c0_112 = arith.constant 0 : index
    %c0_113 = arith.constant 0 : index
    %173 = vector.load %arg6[%c0_112, %c0_113] : memref<24x128xf32, #tpu.memory_space<vmem>>, vector<8x128xf32>
    %174 = arith.mulf %166, %173 : vector<8x128xf32>
    %175 = arith.mulf %165, %171 : vector<8x128xf32>
    %176 = arith.addf %174, %175 : vector<8x128xf32>
    %c0_114 = arith.constant 0 : index
    %c0_115 = arith.constant 0 : index
    %177 = vector.load %arg6[%c0_114, %c0_115] : memref<24x128xf32, #tpu.memory_space<vmem>>, vector<8x128xf32>
    tpu.vector_store %arg6[%c0_114, %c0_115], %176 {strides = array<i32>} : memref<24x128xf32, #tpu.memory_space<vmem>>, vector<8x128xf32>,
    %178 = math.tanh %176 : vector<8x128xf32>
    %179 = arith.mulf %172, %178 : vector<8x128xf32>
    %c0_116 = arith.constant 0 : index
    %c0_117 = arith.constant 0 : index
    %180 = vector.load %arg5[%c0_116, %c0_117] : memref<24x128xf32, #tpu.memory_space<vmem>>, vector<8x128xf32>
    tpu.vector_store %arg5[%c0_116, %c0_117], %179 {strides = array<i32>} : memref<24x128xf32, #tpu.memory_space<vmem>>, vector<8x128xf32>,
    %c48 = arith.constant 48 : index
    %c0_118 = arith.constant 0 : index
    %181 = vector.load %arg4[%c48, %c0_118] : memref<168x512xf32, #tpu.memory_space<vmem>>, vector<8x512xf32>
    %c0_119 = arith.constant 0 : index
    %c0_120 = arith.constant 0 : index
    %182 = vector.load %arg5[%c0_119, %c0_120] : memref<24x128xf32, #tpu.memory_space<vmem>>, vector<8x128xf32>
    %c304_121 = arith.constant 304 : index
    %c0_122 = arith.constant 0 : index
    %183 = vector.load %arg1[%c304_121, %c0_122] : memref<440x512xf32, #tpu.memory_space<vmem>>, vector<128x512xf32>
    %cst_123 = arith.constant dense<0.000000e+00> : vector<8x512xf32>
    %184 = tpu.matmul %182, %183, %cst_123 {dimension_numbers = #tpu.dot_dimension_numbers<[1], [0], [0], [1], [0, 0, 1, 1], [], []>} : vector<8x128xf32>, vector<128x512xf32>, vector<8x512xf32> -> vector<8x512xf32>
    %185 = arith.addf %181, %184 : vector<8x512xf32>
    %186 = arith.negf %185 : vector<8x512xf32>
    %187 = math.exp %186 : vector<8x512xf32>
    %cst_124 = arith.constant 1.000000e+00 : f32
    %188 = vector.broadcast %cst_124 : f32 to vector<8x512xf32>
    %189 = arith.addf %188, %187 : vector<8x512xf32>
    %190 = arith.divf %188, %189 : vector<8x512xf32>
    %191 = vector.extract_strided_slice %190 {offsets = [0, 0], sizes = [8, 128], strides = [1, 1]} : vector<8x512xf32> to vector<8x128xf32>
    %192 = vector.extract_strided_slice %190 {offsets = [0, 128], sizes = [8, 128], strides = [1, 1]} : vector<8x512xf32> to vector<8x128xf32>
    %193 = vector.extract_strided_slice %190 {offsets = [0, 256], sizes = [8, 128], strides = [1, 1]} : vector<8x512xf32> to vector<8x128xf32>
    %cst_125 = arith.constant 2.000000e+00 : f32
    %194 = vector.broadcast %cst_125 : f32 to vector<8x128xf32>
    %195 = arith.mulf %194, %193 : vector<8x128xf32>
    %cst_126 = arith.constant 1.000000e+00 : f32
    %196 = vector.broadcast %cst_126 : f32 to vector<8x128xf32>
    %197 = arith.subf %195, %196 : vector<8x128xf32>
    %198 = vector.extract_strided_slice %190 {offsets = [0, 384], sizes = [8, 128], strides = [1, 1]} : vector<8x512xf32> to vector<8x128xf32>
    %c0_127 = arith.constant 0 : index
    %c0_128 = arith.constant 0 : index
    %199 = vector.load %arg6[%c0_127, %c0_128] : memref<24x128xf32, #tpu.memory_space<vmem>>, vector<8x128xf32>
    %200 = arith.mulf %192, %199 : vector<8x128xf32>
    %201 = arith.mulf %191, %197 : vector<8x128xf32>
    %202 = arith.addf %200, %201 : vector<8x128xf32>
    %c0_129 = arith.constant 0 : index
    %c0_130 = arith.constant 0 : index
    %203 = vector.load %arg6[%c0_129, %c0_130] : memref<24x128xf32, #tpu.memory_space<vmem>>, vector<8x128xf32>
    tpu.vector_store %arg6[%c0_129, %c0_130], %202 {strides = array<i32>} : memref<24x128xf32, #tpu.memory_space<vmem>>, vector<8x128xf32>,
    %204 = math.tanh %202 : vector<8x128xf32>
    %205 = arith.mulf %198, %204 : vector<8x128xf32>
    %c0_131 = arith.constant 0 : index
    %c0_132 = arith.constant 0 : index
    %206 = vector.load %arg5[%c0_131, %c0_132] : memref<24x128xf32, #tpu.memory_space<vmem>>, vector<8x128xf32>
    tpu.vector_store %arg5[%c0_131, %c0_132], %205 {strides = array<i32>} : memref<24x128xf32, #tpu.memory_space<vmem>>, vector<8x128xf32>,
    %c56_133 = arith.constant 56 : index
    %c0_134 = arith.constant 0 : index
    %207 = vector.load %arg4[%c56_133, %c0_134] : memref<168x512xf32, #tpu.memory_space<vmem>>, vector<8x512xf32>
    %c0_135 = arith.constant 0 : index
    %c0_136 = arith.constant 0 : index
    %208 = vector.load %arg5[%c0_135, %c0_136] : memref<24x128xf32, #tpu.memory_space<vmem>>, vector<8x128xf32>
    %c304_137 = arith.constant 304 : index
    %c0_138 = arith.constant 0 : index
    %209 = vector.load %arg1[%c304_137, %c0_138] : memref<440x512xf32, #tpu.memory_space<vmem>>, vector<128x512xf32>
    %cst_139 = arith.constant dense<0.000000e+00> : vector<8x512xf32>
    %210 = tpu.matmul %208, %209, %cst_139 {dimension_numbers = #tpu.dot_dimension_numbers<[1], [0], [0], [1], [0, 0, 1, 1], [], []>} : vector<8x128xf32>, vector<128x512xf32>, vector<8x512xf32> -> vector<8x512xf32>
    %211 = arith.addf %207, %210 : vector<8x512xf32>
    %212 = arith.negf %211 : vector<8x512xf32>
    %213 = math.exp %212 : vector<8x512xf32>
    %cst_140 = arith.constant 1.000000e+00 : f32
    %214 = vector.broadcast %cst_140 : f32 to vector<8x512xf32>
    %215 = arith.addf %214, %213 : vector<8x512xf32>
    %216 = arith.divf %214, %215 : vector<8x512xf32>
    %217 = vector.extract_strided_slice %216 {offsets = [0, 0], sizes = [8, 128], strides = [1, 1]} : vector<8x512xf32> to vector<8x128xf32>
    %218 = vector.extract_strided_slice %216 {offsets = [0, 128], sizes = [8, 128], strides = [1, 1]} : vector<8x512xf32> to vector<8x128xf32>
    %219 = vector.extract_strided_slice %216 {offsets = [0, 256], sizes = [8, 128], strides = [1, 1]} : vector<8x512xf32> to vector<8x128xf32>
    %cst_141 = arith.constant 2.000000e+00 : f32
    %220 = vector.broadcast %cst_141 : f32 to vector<8x128xf32>
    %221 = arith.mulf %220, %219 : vector<8x128xf32>
    %cst_142 = arith.constant 1.000000e+00 : f32
    %222 = vector.broadcast %cst_142 : f32 to vector<8x128xf32>
    %223 = arith.subf %221, %222 : vector<8x128xf32>
    %224 = vector.extract_strided_slice %216 {offsets = [0, 384], sizes = [8, 128], strides = [1, 1]} : vector<8x512xf32> to vector<8x128xf32>
    %c0_143 = arith.constant 0 : index
    %c0_144 = arith.constant 0 : index
    %225 = vector.load %arg6[%c0_143, %c0_144] : memref<24x128xf32, #tpu.memory_space<vmem>>, vector<8x128xf32>
    %226 = arith.mulf %218, %225 : vector<8x128xf32>
    %227 = arith.mulf %217, %223 : vector<8x128xf32>
    %228 = arith.addf %226, %227 : vector<8x128xf32>
    %c0_145 = arith.constant 0 : index
    %c0_146 = arith.constant 0 : index
    %229 = vector.load %arg6[%c0_145, %c0_146] : memref<24x128xf32, #tpu.memory_space<vmem>>, vector<8x128xf32>
    tpu.vector_store %arg6[%c0_145, %c0_146], %228 {strides = array<i32>} : memref<24x128xf32, #tpu.memory_space<vmem>>, vector<8x128xf32>,
    %230 = math.tanh %228 : vector<8x128xf32>
    %231 = arith.mulf %224, %230 : vector<8x128xf32>
    %c0_147 = arith.constant 0 : index
    %c0_148 = arith.constant 0 : index
    %232 = vector.load %arg5[%c0_147, %c0_148] : memref<24x128xf32, #tpu.memory_space<vmem>>, vector<8x128xf32>
    tpu.vector_store %arg5[%c0_147, %c0_148], %231 {strides = array<i32>} : memref<24x128xf32, #tpu.memory_space<vmem>>, vector<8x128xf32>,
    %c64 = arith.constant 64 : index
    %c0_149 = arith.constant 0 : index
    %233 = vector.load %arg4[%c64, %c0_149] : memref<168x512xf32, #tpu.memory_space<vmem>>, vector<8x512xf32>
    %c0_150 = arith.constant 0 : index
    %c0_151 = arith.constant 0 : index
    %234 = vector.load %arg5[%c0_150, %c0_151] : memref<24x128xf32, #tpu.memory_space<vmem>>, vector<8x128xf32>
    %c304_152 = arith.constant 304 : index
    %c0_153 = arith.constant 0 : index
    %235 = vector.load %arg1[%c304_152, %c0_153] : memref<440x512xf32, #tpu.memory_space<vmem>>, vector<128x512xf32>
    %cst_154 = arith.constant dense<0.000000e+00> : vector<8x512xf32>
    %236 = tpu.matmul %234, %235, %cst_154 {dimension_numbers = #tpu.dot_dimension_numbers<[1], [0], [0], [1], [0, 0, 1, 1], [], []>} : vector<8x128xf32>, vector<128x512xf32>, vector<8x512xf32> -> vector<8x512xf32>
    %237 = arith.addf %233, %236 : vector<8x512xf32>
    %238 = arith.negf %237 : vector<8x512xf32>
    %239 = math.exp %238 : vector<8x512xf32>
    %cst_155 = arith.constant 1.000000e+00 : f32
    %240 = vector.broadcast %cst_155 : f32 to vector<8x512xf32>
    %241 = arith.addf %240, %239 : vector<8x512xf32>
    %242 = arith.divf %240, %241 : vector<8x512xf32>
    %243 = vector.extract_strided_slice %242 {offsets = [0, 0], sizes = [8, 128], strides = [1, 1]} : vector<8x512xf32> to vector<8x128xf32>
    %244 = vector.extract_strided_slice %242 {offsets = [0, 128], sizes = [8, 128], strides = [1, 1]} : vector<8x512xf32> to vector<8x128xf32>
    %245 = vector.extract_strided_slice %242 {offsets = [0, 256], sizes = [8, 128], strides = [1, 1]} : vector<8x512xf32> to vector<8x128xf32>
    %cst_156 = arith.constant 2.000000e+00 : f32
    %246 = vector.broadcast %cst_156 : f32 to vector<8x128xf32>
    %247 = arith.mulf %246, %245 : vector<8x128xf32>
    %cst_157 = arith.constant 1.000000e+00 : f32
    %248 = vector.broadcast %cst_157 : f32 to vector<8x128xf32>
    %249 = arith.subf %247, %248 : vector<8x128xf32>
    %250 = vector.extract_strided_slice %242 {offsets = [0, 384], sizes = [8, 128], strides = [1, 1]} : vector<8x512xf32> to vector<8x128xf32>
    %c0_158 = arith.constant 0 : index
    %c0_159 = arith.constant 0 : index
    %251 = vector.load %arg6[%c0_158, %c0_159] : memref<24x128xf32, #tpu.memory_space<vmem>>, vector<8x128xf32>
    %252 = arith.mulf %244, %251 : vector<8x128xf32>
    %253 = arith.mulf %243, %249 : vector<8x128xf32>
    %254 = arith.addf %252, %253 : vector<8x128xf32>
    %c0_160 = arith.constant 0 : index
    %c0_161 = arith.constant 0 : index
    %255 = vector.load %arg6[%c0_160, %c0_161] : memref<24x128xf32, #tpu.memory_space<vmem>>, vector<8x128xf32>
    tpu.vector_store %arg6[%c0_160, %c0_161], %254 {strides = array<i32>} : memref<24x128xf32, #tpu.memory_space<vmem>>, vector<8x128xf32>,
    %256 = math.tanh %254 : vector<8x128xf32>
    %257 = arith.mulf %250, %256 : vector<8x128xf32>
    %c0_162 = arith.constant 0 : index
    %c0_163 = arith.constant 0 : index
    %258 = vector.load %arg5[%c0_162, %c0_163] : memref<24x128xf32, #tpu.memory_space<vmem>>, vector<8x128xf32>
    tpu.vector_store %arg5[%c0_162, %c0_163], %257 {strides = array<i32>} : memref<24x128xf32, #tpu.memory_space<vmem>>, vector<8x128xf32>,
    %c72 = arith.constant 72 : index
    %c0_164 = arith.constant 0 : index
    %259 = vector.load %arg4[%c72, %c0_164] : memref<168x512xf32, #tpu.memory_space<vmem>>, vector<8x512xf32>
    %c0_165 = arith.constant 0 : index
    %c0_166 = arith.constant 0 : index
    %260 = vector.load %arg5[%c0_165, %c0_166] : memref<24x128xf32, #tpu.memory_space<vmem>>, vector<8x128xf32>
    %c304_167 = arith.constant 304 : index
    %c0_168 = arith.constant 0 : index
    %261 = vector.load %arg1[%c304_167, %c0_168] : memref<440x512xf32, #tpu.memory_space<vmem>>, vector<128x512xf32>
    %cst_169 = arith.constant dense<0.000000e+00> : vector<8x512xf32>
    %262 = tpu.matmul %260, %261, %cst_169 {dimension_numbers = #tpu.dot_dimension_numbers<[1], [0], [0], [1], [0, 0, 1, 1], [], []>} : vector<8x128xf32>, vector<128x512xf32>, vector<8x512xf32> -> vector<8x512xf32>
    %263 = arith.addf %259, %262 : vector<8x512xf32>
    %264 = arith.negf %263 : vector<8x512xf32>
    %265 = math.exp %264 : vector<8x512xf32>
    %cst_170 = arith.constant 1.000000e+00 : f32
    %266 = vector.broadcast %cst_170 : f32 to vector<8x512xf32>
    %267 = arith.addf %266, %265 : vector<8x512xf32>
    %268 = arith.divf %266, %267 : vector<8x512xf32>
    %269 = vector.extract_strided_slice %268 {offsets = [0, 0], sizes = [8, 128], strides = [1, 1]} : vector<8x512xf32> to vector<8x128xf32>
    %270 = vector.extract_strided_slice %268 {offsets = [0, 128], sizes = [8, 128], strides = [1, 1]} : vector<8x512xf32> to vector<8x128xf32>
    %271 = vector.extract_strided_slice %268 {offsets = [0, 256], sizes = [8, 128], strides = [1, 1]} : vector<8x512xf32> to vector<8x128xf32>
    %cst_171 = arith.constant 2.000000e+00 : f32
    %272 = vector.broadcast %cst_171 : f32 to vector<8x128xf32>
    %273 = arith.mulf %272, %271 : vector<8x128xf32>
    %cst_172 = arith.constant 1.000000e+00 : f32
    %274 = vector.broadcast %cst_172 : f32 to vector<8x128xf32>
    %275 = arith.subf %273, %274 : vector<8x128xf32>
    %276 = vector.extract_strided_slice %268 {offsets = [0, 384], sizes = [8, 128], strides = [1, 1]} : vector<8x512xf32> to vector<8x128xf32>
    %c0_173 = arith.constant 0 : index
    %c0_174 = arith.constant 0 : index
    %277 = vector.load %arg6[%c0_173, %c0_174] : memref<24x128xf32, #tpu.memory_space<vmem>>, vector<8x128xf32>
    %278 = arith.mulf %270, %277 : vector<8x128xf32>
    %279 = arith.mulf %269, %275 : vector<8x128xf32>
    %280 = arith.addf %278, %279 : vector<8x128xf32>
    %c0_175 = arith.constant 0 : index
    %c0_176 = arith.constant 0 : index
    %281 = vector.load %arg6[%c0_175, %c0_176] : memref<24x128xf32, #tpu.memory_space<vmem>>, vector<8x128xf32>
    tpu.vector_store %arg6[%c0_175, %c0_176], %280 {strides = array<i32>} : memref<24x128xf32, #tpu.memory_space<vmem>>, vector<8x128xf32>,
    %282 = math.tanh %280 : vector<8x128xf32>
    %283 = arith.mulf %276, %282 : vector<8x128xf32>
    %c0_177 = arith.constant 0 : index
    %c0_178 = arith.constant 0 : index
    %284 = vector.load %arg5[%c0_177, %c0_178] : memref<24x128xf32, #tpu.memory_space<vmem>>, vector<8x128xf32>
    tpu.vector_store %arg5[%c0_177, %c0_178], %283 {strides = array<i32>} : memref<24x128xf32, #tpu.memory_space<vmem>>, vector<8x128xf32>,
    %c80 = arith.constant 80 : index
    %c0_179 = arith.constant 0 : index
    %285 = vector.load %arg4[%c80, %c0_179] : memref<168x512xf32, #tpu.memory_space<vmem>>, vector<8x512xf32>
    %c0_180 = arith.constant 0 : index
    %c0_181 = arith.constant 0 : index
    %286 = vector.load %arg5[%c0_180, %c0_181] : memref<24x128xf32, #tpu.memory_space<vmem>>, vector<8x128xf32>
    %c304_182 = arith.constant 304 : index
    %c0_183 = arith.constant 0 : index
    %287 = vector.load %arg1[%c304_182, %c0_183] : memref<440x512xf32, #tpu.memory_space<vmem>>, vector<128x512xf32>
    %cst_184 = arith.constant dense<0.000000e+00> : vector<8x512xf32>
    %288 = tpu.matmul %286, %287, %cst_184 {dimension_numbers = #tpu.dot_dimension_numbers<[1], [0], [0], [1], [0, 0, 1, 1], [], []>} : vector<8x128xf32>, vector<128x512xf32>, vector<8x512xf32> -> vector<8x512xf32>
    %289 = arith.addf %285, %288 : vector<8x512xf32>
    %290 = arith.negf %289 : vector<8x512xf32>
    %291 = math.exp %290 : vector<8x512xf32>
    %cst_185 = arith.constant 1.000000e+00 : f32
    %292 = vector.broadcast %cst_185 : f32 to vector<8x512xf32>
    %293 = arith.addf %292, %291 : vector<8x512xf32>
    %294 = arith.divf %292, %293 : vector<8x512xf32>
    %295 = vector.extract_strided_slice %294 {offsets = [0, 0], sizes = [8, 128], strides = [1, 1]} : vector<8x512xf32> to vector<8x128xf32>
    %296 = vector.extract_strided_slice %294 {offsets = [0, 128], sizes = [8, 128], strides = [1, 1]} : vector<8x512xf32> to vector<8x128xf32>
    %297 = vector.extract_strided_slice %294 {offsets = [0, 256], sizes = [8, 128], strides = [1, 1]} : vector<8x512xf32> to vector<8x128xf32>
    %cst_186 = arith.constant 2.000000e+00 : f32
    %298 = vector.broadcast %cst_186 : f32 to vector<8x128xf32>
    %299 = arith.mulf %298, %297 : vector<8x128xf32>
    %cst_187 = arith.constant 1.000000e+00 : f32
    %300 = vector.broadcast %cst_187 : f32 to vector<8x128xf32>
    %301 = arith.subf %299, %300 : vector<8x128xf32>
    %302 = vector.extract_strided_slice %294 {offsets = [0, 384], sizes = [8, 128], strides = [1, 1]} : vector<8x512xf32> to vector<8x128xf32>
    %c0_188 = arith.constant 0 : index
    %c0_189 = arith.constant 0 : index
    %303 = vector.load %arg6[%c0_188, %c0_189] : memref<24x128xf32, #tpu.memory_space<vmem>>, vector<8x128xf32>
    %304 = arith.mulf %296, %303 : vector<8x128xf32>
    %305 = arith.mulf %295, %301 : vector<8x128xf32>
    %306 = arith.addf %304, %305 : vector<8x128xf32>
    %c0_190 = arith.constant 0 : index
    %c0_191 = arith.constant 0 : index
    %307 = vector.load %arg6[%c0_190, %c0_191] : memref<24x128xf32, #tpu.memory_space<vmem>>, vector<8x128xf32>
    tpu.vector_store %arg6[%c0_190, %c0_191], %306 {strides = array<i32>} : memref<24x128xf32, #tpu.memory_space<vmem>>, vector<8x128xf32>,
    %308 = math.tanh %306 : vector<8x128xf32>
    %309 = arith.mulf %302, %308 : vector<8x128xf32>
    %c0_192 = arith.constant 0 : index
    %c0_193 = arith.constant 0 : index
    %310 = vector.load %arg5[%c0_192, %c0_193] : memref<24x128xf32, #tpu.memory_space<vmem>>, vector<8x128xf32>
    tpu.vector_store %arg5[%c0_192, %c0_193], %309 {strides = array<i32>} : memref<24x128xf32, #tpu.memory_space<vmem>>, vector<8x128xf32>,
    %c88 = arith.constant 88 : index
    %c0_194 = arith.constant 0 : index
    %311 = vector.load %arg4[%c88, %c0_194] : memref<168x512xf32, #tpu.memory_space<vmem>>, vector<8x512xf32>
    %c0_195 = arith.constant 0 : index
    %c0_196 = arith.constant 0 : index
    %312 = vector.load %arg5[%c0_195, %c0_196] : memref<24x128xf32, #tpu.memory_space<vmem>>, vector<8x128xf32>
    %c304_197 = arith.constant 304 : index
    %c0_198 = arith.constant 0 : index
    %313 = vector.load %arg1[%c304_197, %c0_198] : memref<440x512xf32, #tpu.memory_space<vmem>>, vector<128x512xf32>
    %cst_199 = arith.constant dense<0.000000e+00> : vector<8x512xf32>
    %314 = tpu.matmul %312, %313, %cst_199 {dimension_numbers = #tpu.dot_dimension_numbers<[1], [0], [0], [1], [0, 0, 1, 1], [], []>} : vector<8x128xf32>, vector<128x512xf32>, vector<8x512xf32> -> vector<8x512xf32>
    %315 = arith.addf %311, %314 : vector<8x512xf32>
    %316 = arith.negf %315 : vector<8x512xf32>
    %317 = math.exp %316 : vector<8x512xf32>
    %cst_200 = arith.constant 1.000000e+00 : f32
    %318 = vector.broadcast %cst_200 : f32 to vector<8x512xf32>
    %319 = arith.addf %318, %317 : vector<8x512xf32>
    %320 = arith.divf %318, %319 : vector<8x512xf32>
    %321 = vector.extract_strided_slice %320 {offsets = [0, 0], sizes = [8, 128], strides = [1, 1]} : vector<8x512xf32> to vector<8x128xf32>
    %322 = vector.extract_strided_slice %320 {offsets = [0, 128], sizes = [8, 128], strides = [1, 1]} : vector<8x512xf32> to vector<8x128xf32>
    %323 = vector.extract_strided_slice %320 {offsets = [0, 256], sizes = [8, 128], strides = [1, 1]} : vector<8x512xf32> to vector<8x128xf32>
    %cst_201 = arith.constant 2.000000e+00 : f32
    %324 = vector.broadcast %cst_201 : f32 to vector<8x128xf32>
    %325 = arith.mulf %324, %323 : vector<8x128xf32>
    %cst_202 = arith.constant 1.000000e+00 : f32
    %326 = vector.broadcast %cst_202 : f32 to vector<8x128xf32>
    %327 = arith.subf %325, %326 : vector<8x128xf32>
    %328 = vector.extract_strided_slice %320 {offsets = [0, 384], sizes = [8, 128], strides = [1, 1]} : vector<8x512xf32> to vector<8x128xf32>
    %c0_203 = arith.constant 0 : index
    %c0_204 = arith.constant 0 : index
    %329 = vector.load %arg6[%c0_203, %c0_204] : memref<24x128xf32, #tpu.memory_space<vmem>>, vector<8x128xf32>
    %330 = arith.mulf %322, %329 : vector<8x128xf32>
    %331 = arith.mulf %321, %327 : vector<8x128xf32>
    %332 = arith.addf %330, %331 : vector<8x128xf32>
    %c0_205 = arith.constant 0 : index
    %c0_206 = arith.constant 0 : index
    %333 = vector.load %arg6[%c0_205, %c0_206] : memref<24x128xf32, #tpu.memory_space<vmem>>, vector<8x128xf32>
    tpu.vector_store %arg6[%c0_205, %c0_206], %332 {strides = array<i32>} : memref<24x128xf32, #tpu.memory_space<vmem>>, vector<8x128xf32>,
    %334 = math.tanh %332 : vector<8x128xf32>
    %335 = arith.mulf %328, %334 : vector<8x128xf32>
    %c0_207 = arith.constant 0 : index
    %c0_208 = arith.constant 0 : index
    %336 = vector.load %arg5[%c0_207, %c0_208] : memref<24x128xf32, #tpu.memory_space<vmem>>, vector<8x128xf32>
    tpu.vector_store %arg5[%c0_207, %c0_208], %335 {strides = array<i32>} : memref<24x128xf32, #tpu.memory_space<vmem>>, vector<8x128xf32>,
    %c96 = arith.constant 96 : index
    %c0_209 = arith.constant 0 : index
    %337 = vector.load %arg4[%c96, %c0_209] : memref<168x512xf32, #tpu.memory_space<vmem>>, vector<16x512xf32>
    %c0_210 = arith.constant 0 : index
    %c0_211 = arith.constant 0 : index
    %338 = vector.load %arg5[%c0_210, %c0_211] : memref<24x128xf32, #tpu.memory_space<vmem>>, vector<16x128xf32>
    %c304_212 = arith.constant 304 : index
    %c0_213 = arith.constant 0 : index
    %339 = vector.load %arg1[%c304_212, %c0_213] : memref<440x512xf32, #tpu.memory_space<vmem>>, vector<128x512xf32>
    %cst_214 = arith.constant dense<0.000000e+00> : vector<16x512xf32>
    %340 = tpu.matmul %338, %339, %cst_214 {dimension_numbers = #tpu.dot_dimension_numbers<[1], [0], [0], [1], [0, 0, 1, 1], [], []>} : vector<16x128xf32>, vector<128x512xf32>, vector<16x512xf32> -> vector<16x512xf32>
    %341 = arith.addf %337, %340 : vector<16x512xf32>
    %342 = arith.negf %341 : vector<16x512xf32>
    %343 = math.exp %342 : vector<16x512xf32>
    %cst_215 = arith.constant 1.000000e+00 : f32
    %344 = vector.broadcast %cst_215 : f32 to vector<16x512xf32>
    %345 = arith.addf %344, %343 : vector<16x512xf32>
    %346 = arith.divf %344, %345 : vector<16x512xf32>
    %347 = vector.extract_strided_slice %346 {offsets = [0, 0], sizes = [16, 128], strides = [1, 1]} : vector<16x512xf32> to vector<16x128xf32>
    %348 = vector.extract_strided_slice %346 {offsets = [0, 128], sizes = [16, 128], strides = [1, 1]} : vector<16x512xf32> to vector<16x128xf32>
    %349 = vector.extract_strided_slice %346 {offsets = [0, 256], sizes = [16, 128], strides = [1, 1]} : vector<16x512xf32> to vector<16x128xf32>
    %cst_216 = arith.constant 2.000000e+00 : f32
    %350 = vector.broadcast %cst_216 : f32 to vector<16x128xf32>
    %351 = arith.mulf %350, %349 : vector<16x128xf32>
    %cst_217 = arith.constant 1.000000e+00 : f32
    %352 = vector.broadcast %cst_217 : f32 to vector<16x128xf32>
    %353 = arith.subf %351, %352 : vector<16x128xf32>
    %354 = vector.extract_strided_slice %346 {offsets = [0, 384], sizes = [16, 128], strides = [1, 1]} : vector<16x512xf32> to vector<16x128xf32>
    %c0_218 = arith.constant 0 : index
    %c0_219 = arith.constant 0 : index
    %355 = vector.load %arg6[%c0_218, %c0_219] : memref<24x128xf32, #tpu.memory_space<vmem>>, vector<16x128xf32>
    %356 = arith.mulf %348, %355 : vector<16x128xf32>
    %357 = arith.mulf %347, %353 : vector<16x128xf32>
    %358 = arith.addf %356, %357 : vector<16x128xf32>
    %c0_220 = arith.constant 0 : index
    %c0_221 = arith.constant 0 : index
    %359 = vector.load %arg6[%c0_220, %c0_221] : memref<24x128xf32, #tpu.memory_space<vmem>>, vector<16x128xf32>
    tpu.vector_store %arg6[%c0_220, %c0_221], %358 {strides = array<i32>} : memref<24x128xf32, #tpu.memory_space<vmem>>, vector<16x128xf32>,
    %360 = math.tanh %358 : vector<16x128xf32>
    %361 = arith.mulf %354, %360 : vector<16x128xf32>
    %c0_222 = arith.constant 0 : index
    %c0_223 = arith.constant 0 : index
    %362 = vector.load %arg5[%c0_222, %c0_223] : memref<24x128xf32, #tpu.memory_space<vmem>>, vector<16x128xf32>
    tpu.vector_store %arg5[%c0_222, %c0_223], %361 {strides = array<i32>} : memref<24x128xf32, #tpu.memory_space<vmem>>, vector<16x128xf32>,
    %c112_224 = arith.constant 112 : index
    %c0_225 = arith.constant 0 : index
    %363 = vector.load %arg4[%c112_224, %c0_225] : memref<168x512xf32, #tpu.memory_space<vmem>>, vector<16x512xf32>
    %c0_226 = arith.constant 0 : index
    %c0_227 = arith.constant 0 : index
    %364 = vector.load %arg5[%c0_226, %c0_227] : memref<24x128xf32, #tpu.memory_space<vmem>>, vector<16x128xf32>
    %c304_228 = arith.constant 304 : index
    %c0_229 = arith.constant 0 : index
    %365 = vector.load %arg1[%c304_228, %c0_229] : memref<440x512xf32, #tpu.memory_space<vmem>>, vector<128x512xf32>
    %cst_230 = arith.constant dense<0.000000e+00> : vector<16x512xf32>
    %366 = tpu.matmul %364, %365, %cst_230 {dimension_numbers = #tpu.dot_dimension_numbers<[1], [0], [0], [1], [0, 0, 1, 1], [], []>} : vector<16x128xf32>, vector<128x512xf32>, vector<16x512xf32> -> vector<16x512xf32>
    %367 = arith.addf %363, %366 : vector<16x512xf32>
    %368 = arith.negf %367 : vector<16x512xf32>
    %369 = math.exp %368 : vector<16x512xf32>
    %cst_231 = arith.constant 1.000000e+00 : f32
    %370 = vector.broadcast %cst_231 : f32 to vector<16x512xf32>
    %371 = arith.addf %370, %369 : vector<16x512xf32>
    %372 = arith.divf %370, %371 : vector<16x512xf32>
    %373 = vector.extract_strided_slice %372 {offsets = [0, 0], sizes = [16, 128], strides = [1, 1]} : vector<16x512xf32> to vector<16x128xf32>
    %374 = vector.extract_strided_slice %372 {offsets = [0, 128], sizes = [16, 128], strides = [1, 1]} : vector<16x512xf32> to vector<16x128xf32>
    %375 = vector.extract_strided_slice %372 {offsets = [0, 256], sizes = [16, 128], strides = [1, 1]} : vector<16x512xf32> to vector<16x128xf32>
    %cst_232 = arith.constant 2.000000e+00 : f32
    %376 = vector.broadcast %cst_232 : f32 to vector<16x128xf32>
    %377 = arith.mulf %376, %375 : vector<16x128xf32>
    %cst_233 = arith.constant 1.000000e+00 : f32
    %378 = vector.broadcast %cst_233 : f32 to vector<16x128xf32>
    %379 = arith.subf %377, %378 : vector<16x128xf32>
    %380 = vector.extract_strided_slice %372 {offsets = [0, 384], sizes = [16, 128], strides = [1, 1]} : vector<16x512xf32> to vector<16x128xf32>
    %c0_234 = arith.constant 0 : index
    %c0_235 = arith.constant 0 : index
    %381 = vector.load %arg6[%c0_234, %c0_235] : memref<24x128xf32, #tpu.memory_space<vmem>>, vector<16x128xf32>
    %382 = arith.mulf %374, %381 : vector<16x128xf32>
    %383 = arith.mulf %373, %379 : vector<16x128xf32>
    %384 = arith.addf %382, %383 : vector<16x128xf32>
    %c0_236 = arith.constant 0 : index
    %c0_237 = arith.constant 0 : index
    %385 = vector.load %arg6[%c0_236, %c0_237] : memref<24x128xf32, #tpu.memory_space<vmem>>, vector<16x128xf32>
    tpu.vector_store %arg6[%c0_236, %c0_237], %384 {strides = array<i32>} : memref<24x128xf32, #tpu.memory_space<vmem>>, vector<16x128xf32>,
    %386 = math.tanh %384 : vector<16x128xf32>
    %387 = arith.mulf %380, %386 : vector<16x128xf32>
    %c0_238 = arith.constant 0 : index
    %c0_239 = arith.constant 0 : index
    %388 = vector.load %arg5[%c0_238, %c0_239] : memref<24x128xf32, #tpu.memory_space<vmem>>, vector<16x128xf32>
    tpu.vector_store %arg5[%c0_238, %c0_239], %387 {strides = array<i32>} : memref<24x128xf32, #tpu.memory_space<vmem>>, vector<16x128xf32>,
    %c128 = arith.constant 128 : index
    %c0_240 = arith.constant 0 : index
    %389 = vector.load %arg4[%c128, %c0_240] : memref<168x512xf32, #tpu.memory_space<vmem>>, vector<16x512xf32>
    %c0_241 = arith.constant 0 : index
    %c0_242 = arith.constant 0 : index
    %390 = vector.load %arg5[%c0_241, %c0_242] : memref<24x128xf32, #tpu.memory_space<vmem>>, vector<16x128xf32>
    %c304_243 = arith.constant 304 : index
    %c0_244 = arith.constant 0 : index
    %391 = vector.load %arg1[%c304_243, %c0_244] : memref<440x512xf32, #tpu.memory_space<vmem>>, vector<128x512xf32>
    %cst_245 = arith.constant dense<0.000000e+00> : vector<16x512xf32>
    %392 = tpu.matmul %390, %391, %cst_245 {dimension_numbers = #tpu.dot_dimension_numbers<[1], [0], [0], [1], [0, 0, 1, 1], [], []>} : vector<16x128xf32>, vector<128x512xf32>, vector<16x512xf32> -> vector<16x512xf32>
    %393 = arith.addf %389, %392 : vector<16x512xf32>
    %394 = arith.negf %393 : vector<16x512xf32>
    %395 = math.exp %394 : vector<16x512xf32>
    %cst_246 = arith.constant 1.000000e+00 : f32
    %396 = vector.broadcast %cst_246 : f32 to vector<16x512xf32>
    %397 = arith.addf %396, %395 : vector<16x512xf32>
    %398 = arith.divf %396, %397 : vector<16x512xf32>
    %399 = vector.extract_strided_slice %398 {offsets = [0, 0], sizes = [16, 128], strides = [1, 1]} : vector<16x512xf32> to vector<16x128xf32>
    %400 = vector.extract_strided_slice %398 {offsets = [0, 128], sizes = [16, 128], strides = [1, 1]} : vector<16x512xf32> to vector<16x128xf32>
    %401 = vector.extract_strided_slice %398 {offsets = [0, 256], sizes = [16, 128], strides = [1, 1]} : vector<16x512xf32> to vector<16x128xf32>
    %cst_247 = arith.constant 2.000000e+00 : f32
    %402 = vector.broadcast %cst_247 : f32 to vector<16x128xf32>
    %403 = arith.mulf %402, %401 : vector<16x128xf32>
    %cst_248 = arith.constant 1.000000e+00 : f32
    %404 = vector.broadcast %cst_248 : f32 to vector<16x128xf32>
    %405 = arith.subf %403, %404 : vector<16x128xf32>
    %406 = vector.extract_strided_slice %398 {offsets = [0, 384], sizes = [16, 128], strides = [1, 1]} : vector<16x512xf32> to vector<16x128xf32>
    %c0_249 = arith.constant 0 : index
    %c0_250 = arith.constant 0 : index
    %407 = vector.load %arg6[%c0_249, %c0_250] : memref<24x128xf32, #tpu.memory_space<vmem>>, vector<16x128xf32>
    %408 = arith.mulf %400, %407 : vector<16x128xf32>
    %409 = arith.mulf %399, %405 : vector<16x128xf32>
    %410 = arith.addf %408, %409 : vector<16x128xf32>
    %c0_251 = arith.constant 0 : index
    %c0_252 = arith.constant 0 : index
    %411 = vector.load %arg6[%c0_251, %c0_252] : memref<24x128xf32, #tpu.memory_space<vmem>>, vector<16x128xf32>
    tpu.vector_store %arg6[%c0_251, %c0_252], %410 {strides = array<i32>} : memref<24x128xf32, #tpu.memory_space<vmem>>, vector<16x128xf32>,
    %412 = math.tanh %410 : vector<16x128xf32>
    %413 = arith.mulf %406, %412 : vector<16x128xf32>
    %c0_253 = arith.constant 0 : index
    %c0_254 = arith.constant 0 : index
    %414 = vector.load %arg5[%c0_253, %c0_254] : memref<24x128xf32, #tpu.memory_space<vmem>>, vector<16x128xf32>
    tpu.vector_store %arg5[%c0_253, %c0_254], %413 {strides = array<i32>} : memref<24x128xf32, #tpu.memory_space<vmem>>, vector<16x128xf32>,
    %c144 = arith.constant 144 : index
    %c0_255 = arith.constant 0 : index
    %415 = vector.load %arg4[%c144, %c0_255] : memref<168x512xf32, #tpu.memory_space<vmem>>, vector<24x512xf32>
    %c0_256 = arith.constant 0 : index
    %c0_257 = arith.constant 0 : index
    %416 = vector.load %arg5[%c0_256, %c0_257] : memref<24x128xf32, #tpu.memory_space<vmem>>, vector<24x128xf32>
    %c304_258 = arith.constant 304 : index
    %c0_259 = arith.constant 0 : index
    %417 = vector.load %arg1[%c304_258, %c0_259] : memref<440x512xf32, #tpu.memory_space<vmem>>, vector<128x512xf32>
    %cst_260 = arith.constant dense<0.000000e+00> : vector<24x512xf32>
    %418 = tpu.matmul %416, %417, %cst_260 {dimension_numbers = #tpu.dot_dimension_numbers<[1], [0], [0], [1], [0, 0, 1, 1], [], []>} : vector<24x128xf32>, vector<128x512xf32>, vector<24x512xf32> -> vector<24x512xf32>
    %419 = arith.addf %415, %418 : vector<24x512xf32>
    %420 = arith.negf %419 : vector<24x512xf32>
    %421 = math.exp %420 : vector<24x512xf32>
    %cst_261 = arith.constant 1.000000e+00 : f32
    %422 = vector.broadcast %cst_261 : f32 to vector<24x512xf32>
    %423 = arith.addf %422, %421 : vector<24x512xf32>
    %424 = arith.divf %422, %423 : vector<24x512xf32>
    %425 = vector.extract_strided_slice %424 {offsets = [0, 0], sizes = [24, 128], strides = [1, 1]} : vector<24x512xf32> to vector<24x128xf32>
    %426 = vector.extract_strided_slice %424 {offsets = [0, 128], sizes = [24, 128], strides = [1, 1]} : vector<24x512xf32> to vector<24x128xf32>
    %427 = vector.extract_strided_slice %424 {offsets = [0, 256], sizes = [24, 128], strides = [1, 1]} : vector<24x512xf32> to vector<24x128xf32>
    %cst_262 = arith.constant 2.000000e+00 : f32
    %428 = vector.broadcast %cst_262 : f32 to vector<24x128xf32>
    %429 = arith.mulf %428, %427 : vector<24x128xf32>
    %cst_263 = arith.constant 1.000000e+00 : f32
    %430 = vector.broadcast %cst_263 : f32 to vector<24x128xf32>
    %431 = arith.subf %429, %430 : vector<24x128xf32>
    %432 = vector.extract_strided_slice %424 {offsets = [0, 384], sizes = [24, 128], strides = [1, 1]} : vector<24x512xf32> to vector<24x128xf32>
    %c0_264 = arith.constant 0 : index
    %c0_265 = arith.constant 0 : index
    %433 = vector.load %arg6[%c0_264, %c0_265] : memref<24x128xf32, #tpu.memory_space<vmem>>, vector<24x128xf32>
    %434 = arith.mulf %426, %433 : vector<24x128xf32>
    %435 = arith.mulf %425, %431 : vector<24x128xf32>
    %436 = arith.addf %434, %435 : vector<24x128xf32>
    %c0_266 = arith.constant 0 : index
    %c0_267 = arith.constant 0 : index
    %437 = vector.load %arg6[%c0_266, %c0_267] : memref<24x128xf32, #tpu.memory_space<vmem>>, vector<24x128xf32>
    tpu.vector_store %arg6[%c0_266, %c0_267], %436 {strides = array<i32>} : memref<24x128xf32, #tpu.memory_space<vmem>>, vector<24x128xf32>,
    %438 = math.tanh %436 : vector<24x128xf32>
    %439 = arith.mulf %432, %438 : vector<24x128xf32>
    %c0_268 = arith.constant 0 : index
    %c0_269 = arith.constant 0 : index
    %440 = vector.load %arg5[%c0_268, %c0_269] : memref<24x128xf32, #tpu.memory_space<vmem>>, vector<24x128xf32>
    tpu.vector_store %arg5[%c0_268, %c0_269], %439 {strides = array<i32>} : memref<24x128xf32, #tpu.memory_space<vmem>>, vector<24x128xf32>,
    %441 = tpu.iota {dimensions = array<i32: 1>} : vector<1x128xi32>
    %c50_i32 = arith.constant 50 : i32
    %442 = vector.broadcast %c50_i32 : i32 to vector<1x128xi32>
    %443 = arith.cmpi slt, %441, %442 : vector<1x128xi32>
    %444 = arith.extui %443 : vector<1x128xi1> to vector<1x128xi32>
    %445 = arith.sitofp %444 : vector<1x128xi32> to vector<1x128xf32>
    %c0_270 = arith.constant 0 : index
    %c0_271 = arith.constant 0 : index
    %446 = vector.load %arg5[%c0_270, %c0_271] : memref<24x128xf32, #tpu.memory_space<vmem>>, vector<2x128xf32>
    %c2 = arith.constant 2 : index
    %c0_272 = arith.constant 0 : index
    %447 = vector.load %arg5[%c2, %c0_272] : memref<24x128xf32, #tpu.memory_space<vmem>>, vector<2x128xf32>
    %448 = arith.subf %446, %447 : vector<2x128xf32>
    %449 = math.absf %448 : vector<2x128xf32>
    %450 = vector.broadcast %445 : vector<1x128xf32> to vector<2x128xf32>
    %451 = arith.mulf %449, %450 : vector<2x128xf32>
    %cst_273 = arith.constant dense<0.000000e+00> : vector<2xf32>
    %452 = vector.multi_reduction <add>, %451, %cst_273 [1] : vector<2x128xf32> to vector<2xf32>
    %453 = vector.shape_cast %452 : vector<2xf32> to vector<2x1xf32>
    %cst_274 = arith.constant 0.000000e+00 : f32
    %454 = vector.broadcast %cst_274 : f32 to vector<2x1xf32>
    %455 = arith.subf %454, %453 : vector<2x1xf32>
    %456 = math.exp %455 : vector<2x1xf32>
    %c8_275 = arith.constant 8 : index
    %c0_276 = arith.constant 0 : index
    %457 = vector.load %arg5[%c8_275, %c0_276] : memref<24x128xf32, #tpu.memory_space<vmem>>, vector<2x128xf32>
    %c10 = arith.constant 10 : index
    %c0_277 = arith.constant 0 : index
    %458 = vector.load %arg5[%c10, %c0_277] : memref<24x128xf32, #tpu.memory_space<vmem>>, vector<2x128xf32>
    %459 = arith.subf %457, %458 : vector<2x128xf32>
    %460 = math.absf %459 : vector<2x128xf32>
    %461 = vector.broadcast %445 : vector<1x128xf32> to vector<2x128xf32>
    %462 = arith.mulf %460, %461 : vector<2x128xf32>
    %cst_278 = arith.constant dense<0.000000e+00> : vector<2xf32>
    %463 = vector.multi_reduction <add>, %462, %cst_278 [1] : vector<2x128xf32> to vector<2xf32>
    %464 = vector.shape_cast %463 : vector<2xf32> to vector<2x1xf32>
    %cst_279 = arith.constant 0.000000e+00 : f32
    %465 = vector.broadcast %cst_279 : f32 to vector<2x1xf32>
    %466 = arith.subf %465, %464 : vector<2x1xf32>
    %467 = math.exp %466 : vector<2x1xf32>
    %c16_280 = arith.constant 16 : index
    %c0_281 = arith.constant 0 : index
    %468 = vector.load %arg5[%c16_280, %c0_281] : memref<24x128xf32, #tpu.memory_space<vmem>>, vector<2x128xf32>
    %c18 = arith.constant 18 : index
    %c0_282 = arith.constant 0 : index
    %469 = vector.load %arg5[%c18, %c0_282] : memref<24x128xf32, #tpu.memory_space<vmem>>, vector<2x128xf32>
    %470 = arith.subf %468, %469 : vector<2x128xf32>
    %471 = math.absf %470 : vector<2x128xf32>
    %472 = vector.broadcast %445 : vector<1x128xf32> to vector<2x128xf32>
    %473 = arith.mulf %471, %472 : vector<2x128xf32>
    %cst_283 = arith.constant dense<0.000000e+00> : vector<2xf32>
    %474 = vector.multi_reduction <add>, %473, %cst_283 [1] : vector<2x128xf32> to vector<2xf32>
    %475 = vector.shape_cast %474 : vector<2xf32> to vector<2x1xf32>
    %476 = math.exp %475 : vector<2x1xf32>
    tpu.wait_dma2 semaphore(%arg8 : memref<!tpu.dma_semaphore, #tpu.memory_space<semaphore_mem>>) src(%arg2 : memref<136x300xf32, #tpu.memory_space<any>>) dst(%arg7 : memref<136x300xf32, #tpu.memory_space<vmem>>)
    %c168 = arith.constant 168 : index
    %c0_284 = arith.constant 0 : index
    %477 = vector.load %arg0[%c168, %c0_284] : memref<176x300xf32, #tpu.memory_space<vmem>>, vector<2x128xf32>
    %c128_285 = arith.constant 128 : index
    %c0_286 = arith.constant 0 : index
    %478 = vector.load %arg7[%c128_285, %c0_286] : memref<136x300xf32, #tpu.memory_space<vmem>>, vector<1x300xf32>
    %479 = vector.broadcast %476 : vector<2x1xf32> to vector<2x300xf32>
    %480 = vector.broadcast %478 : vector<1x300xf32> to vector<2x300xf32>
    %481 = arith.mulf %479, %480 : vector<2x300xf32>
    %c129 = arith.constant 129 : index
    %c0_287 = arith.constant 0 : index
    %482 = vector.load %arg7[%c129, %c0_287] : memref<136x300xf32, #tpu.memory_space<vmem>>, vector<1x300xf32>
    %483 = vector.broadcast %467 : vector<2x1xf32> to vector<2x300xf32>
    %484 = vector.broadcast %482 : vector<1x300xf32> to vector<2x300xf32>
    %485 = arith.mulf %483, %484 : vector<2x300xf32>
    %486 = arith.addf %481, %485 : vector<2x300xf32>
    %c130 = arith.constant 130 : index
    %c0_288 = arith.constant 0 : index
    %487 = vector.load %arg7[%c130, %c0_288] : memref<136x300xf32, #tpu.memory_space<vmem>>, vector<1x300xf32>
    %488 = vector.broadcast %456 : vector<2x1xf32> to vector<2x300xf32>
    %489 = vector.broadcast %487 : vector<1x300xf32> to vector<2x300xf32>
    %490 = arith.mulf %488, %489 : vector<2x300xf32>
    %491 = arith.addf %486, %490 : vector<2x300xf32>
    %c0_289 = arith.constant 0 : index
    %c0_290 = arith.constant 0 : index
    %492 = vector.load %arg7[%c0_289, %c0_290] : memref<136x300xf32, #tpu.memory_space<vmem>>, vector<128x300xf32>
    %cst_291 = arith.constant dense<0.000000e+00> : vector<2x300xf32>
    %493 = tpu.matmul %477, %492, %cst_291 {dimension_numbers = #tpu.dot_dimension_numbers<[1], [0], [0], [1], [0, 0, 1, 1], [], []>} : vector<2x128xf32>, vector<128x300xf32>, vector<2x300xf32> -> vector<2x300xf32>
    %494 = arith.addf %491, %493 : vector<2x300xf32>
    %c131 = arith.constant 131 : index
    %c0_292 = arith.constant 0 : index
    %495 = vector.load %arg7[%c131, %c0_292] : memref<136x300xf32, #tpu.memory_space<vmem>>, vector<1x300xf32>
    %496 = vector.broadcast %495 : vector<1x300xf32> to vector<2x300xf32>
    %497 = arith.addf %494, %496 : vector<2x300xf32>
    %498 = math.tanh %497 : vector<2x300xf32>
    %c132 = arith.constant 132 : index
    %c0_293 = arith.constant 0 : index
    %499 = vector.load %arg7[%c132, %c0_293] : memref<136x300xf32, #tpu.memory_space<vmem>>, vector<1x300xf32>
    %500 = vector.broadcast %499 : vector<1x300xf32> to vector<2x300xf32>
    %501 = arith.mulf %498, %500 : vector<2x300xf32>
    %cst_294 = arith.constant dense<0.000000e+00> : vector<2xf32>
    %502 = vector.multi_reduction <add>, %501, %cst_294 [1] : vector<2x300xf32> to vector<2xf32>
    %503 = vector.shape_cast %502 : vector<2xf32> to vector<2x1xf32>
    %c133 = arith.constant 133 : index
    %c0_295 = arith.constant 0 : index
    %504 = vector.load %arg7[%c133, %c0_295] : memref<136x300xf32, #tpu.memory_space<vmem>>, vector<1x1xf32>
    %505 = vector.broadcast %504 : vector<1x1xf32> to vector<2x1xf32>
    %506 = arith.addf %503, %505 : vector<2x1xf32>
    %507 = arith.negf %506 : vector<2x1xf32>
    %508 = math.exp %507 : vector<2x1xf32>
    %cst_296 = arith.constant 1.000000e+00 : f32
    %509 = vector.broadcast %cst_296 : f32 to vector<2x1xf32>
    %510 = arith.addf %509, %508 : vector<2x1xf32>
    %511 = arith.divf %509, %510 : vector<2x1xf32>
    %c0_297 = arith.constant 0 : index
    %c0_298 = arith.constant 0 : index
    %512 = vector.load %arg3[%c0_297, %c0_298] : memref<2x1xf32, #tpu.memory_space<vmem>>, vector<2x1xf32>
    tpu.vector_store %arg3[%c0_297, %c0_298], %511 {strides = array<i32>} : memref<2x1xf32, #tpu.memory_space<vmem>>, vector<2x1xf32>,
    return
  }
}

</mosaic_0001>

<llo_original>
// kernel: sem_match_forward.1
$region0: #{sem_match_forward.1}
  #allocation0 [shape = 'u32[]', space=smem, size = 0x4, offset = 0x4, fixed_abs, tag = 'smem constant byte address 0x4 - core index']
  #allocation1 [shape = 'u32[144,128]{1,0:T(1,128)}', space=vmem, size = 0x12000, scoped, tag = 'internal scratch']
  #allocation2 [shape = 'f32[168,512]{1,0:T(8,128)}', space=vmem, size = 0x54000, scoped, tag = 'scratch operand']
  #allocation3 [shape = 'f32[24,128]{1,0:T(8,128)}', space=vmem, size = 0x3000, scoped, tag = 'scratch operand']
  #allocation4 [shape = 'f32[24,128]{1,0:T(8,128)}', space=vmem, size = 0x3000, scoped, tag = 'scratch operand']
  #allocation5 [shape = 'f32[136,300]{1,0:T(8,128)}', space=vmem, size = 0x33000, scoped, tag = 'scratch operand']
  #allocation6 [shape = 's32[1]{0}', space=sflag, size = 0x4, scoped, tag = 'scratch operand']
  #allocation7 [shape = 's32[]', space=sflag, size = 0x4, offset = 0, fixed_abs, tag = 'sflag constant byte address 0x0 - dummy sync flag']
  %s0 = inlined_call_operand.vmem [shape: f32[176,300], index: 0, kind: input, shape index: {}]
  %s1 = inlined_call_operand.vmem [shape: f32[440,512], index: 1, kind: input, shape index: {}]
  %s2 = inlined_call_operand.vmem [shape: f32[136,300], index: 2, kind: input, shape index: {}]
  %s3 = inlined_call_operand.vmem [shape: f32[2,1], index: 3, kind: output, shape index: {}]
  %s4 = sld [smem:[#allocation0]]
  $region52: #{sem_match_forward.1} parent=0
    _
  %s6 = ssub.s32 1, %s4
  %s7 = scalar_select 0, %s6, %s4
  // Predicated region
  $region2: #{sem_match_forward.1} parent=0 // pred_check
    _
  $region3: #{sem_match_forward.1} parent=0 // pred_check_branch
    %9 = sbr.rel (0) target = $region5
  $region4: #{sem_match_forward.1} parent=0 // pred_region
    _
  $region5: #{sem_match_forward.1} parent=0 // pred_fallthru
    _
  // Predicated region
  $region6: #{sem_match_forward.1} parent=0 // pred_check
    _
  $region7: #{sem_match_forward.1} parent=0 // pred_check_branch
    %11 = sbr.rel (0) target = $region9
  $region8: #{sem_match_forward.1} parent=0 // pred_region
    _
  $region9: #{sem_match_forward.1} parent=0 // pred_fallthru
    _
  %p13 = scmp.lt.u32.totalorder 408, 8
  %p14 = pneg %p13
  // Predicated region
  $region10: #{sem_match_forward.1} parent=0 // pred_check
    _
  $region11: #{sem_match_forward.1} parent=0 // pred_check_branch
    %16 = sbr.rel (%p13) target = $region13
  $region12: #{sem_match_forward.1} parent=0 // pred_region
    %s31 = sand.u32 408, 7
    %p32 = scmp.eq.s32.totalorder %s31, 0
    // Predicated region
    $region25: #{sem_match_forward.1} parent=12 // pred_check
      %p33 = pneg %p32
    $region26: #{sem_match_forward.1} parent=12 // pred_check_branch
      %35 = sbr.rel (%p33) target = $region28
    $region27: #{sem_match_forward.1} parent=12 // pred_region
      loop: start=0, step=1, limit=1
      $region29: #{sem_match_forward.1} parent=27 // loop_pre_header
        _
      $region30: #{sem_match_forward.1} parent=27 // loop_header
        %s37 = sphi 0, %s41
        %p38 = scmp.ge.s32.totalorder %s37, 1
        %s42 = sphi %s2, %s2
        %s43 = sphi [#allocation5], [#allocation5]
      $region31: #{sem_match_forward.1} parent=27 // loop_header_branch
        %40 = sbr.rel (%p38) target = $region35
      $region32: #{sem_match_forward.1} parent=27 // loop_body
        %v44 = vld [vmem:[%s42] sm:$0xff]
        %45 = vst [vmem:[%s43] sm:$0xff] %v44
        %v46 = vld [vmem:[%s42 + $0x8] sm:$0xff]
        %47 = vst [vmem:[%s43 + $0x8] sm:$0xff] %v46
        %v48 = vld [vmem:[%s42 + $0x10] sm:$0xff]
        %49 = vst [vmem:[%s43 + $0x10] sm:$0xff] %v48
        %v50 = vld [vmem:[%s42 + $0x18] sm:$0xff]
        %51 = vst [vmem:[%s43 + $0x18] sm:$0xff] %v50
        %v52 = vld [vmem:[%s42 + $0x20] sm:$0xff]
        %53 = vst [vmem:[%s43 + $0x20] sm:$0xff] %v52
        %v54 = vld [vmem:[%s42 + $0x28] sm:$0xff]
        %55 = vst [vmem:[%s43 + $0x28] sm:$0xff] %v54
        %v56 = vld [vmem:[%s42 + $0x30] sm:$0xff]
        %57 = vst [vmem:[%s43 + $0x30] sm:$0xff] %v56
        %v58 = vld [vmem:[%s42 + $0x38] sm:$0xff]
        %59 = vst [vmem:[%s43 + $0x38] sm:$0xff] %v58
        %v60 = vld [vmem:[%s42 + $0x40] sm:$0xff]
        %61 = vst [vmem:[%s43 + $0x40] sm:$0xff] %v60
        %v62 = vld [vmem:[%s42 + $0x48] sm:$0xff]
        %63 = vst [vmem:[%s43 + $0x48] sm:$0xff] %v62
        %v64 = vld [vmem:[%s42 + $0x50] sm:$0xff]
        %65 = vst [vmem:[%s43 + $0x50] sm:$0xff] %v64
        %v66 = vld [vmem:[%s42 + $0x58] sm:$0xff]
        %67 = vst [vmem:[%s43 + $0x58] sm:$0xff] %v66
        %v68 = vld [vmem:[%s42 + $0x60] sm:$0xff]
        %69 = vst [vmem:[%s43 + $0x60] sm:$0xff] %v68
        %v70 = vld [vmem:[%s42 + $0x68] sm:$0xff]
        %71 = vst [vmem:[%s43 + $0x68] sm:$0xff] %v70
        %v72 = vld [vmem:[%s42 + $0x70] sm:$0xff]
        %73 = vst [vmem:[%s43 + $0x70] sm:$0xff] %v72
        %v74 = vld [vmem:[%s42 + $0x78] sm:$0xff]
        %75 = vst [vmem:[%s43 + $0x78] sm:$0xff] %v74
        %v76 = vld [vmem:[%s42 + $0x80] sm:$0xff]
        %77 = vst [vmem:[%s43 + $0x80] sm:$0xff] %v76
        %v78 = vld [vmem:[%s42 + $0x88] sm:$0xff]
        %79 = vst [vmem:[%s43 + $0x88] sm:$0xff] %v78
        %v80 = vld [vmem:[%s42 + $0x90] sm:$0xff]
        %81 = vst [vmem:[%s43 + $0x90] sm:$0xff] %v80
        %v82 = vld [vmem:[%s42 + $0x98] sm:$0xff]
        %83 = vst [vmem:[%s43 + $0x98] sm:$0xff] %v82
        %v84 = vld [vmem:[%s42 + $0xa0] sm:$0xff]
        %85 = vst [vmem:[%s43 + $0xa0] sm:$0xff] %v84
        %v86 = vld [vmem:[%s42 + $0xa8] sm:$0xff]
        %87 = vst [vmem:[%s43 + $0xa8] sm:$0xff] %v86
        %v88 = vld [vmem:[%s42 + $0xb0] sm:$0xff]
        %89 = vst [vmem:[%s43 + $0xb0] sm:$0xff] %v88
        %v90 = vld [vmem:[%s42 + $0xb8] sm:$0xff]
        %91 = vst [vmem:[%s43 + $0xb8] sm:$0xff] %v90
        %v92 = vld [vmem:[%s42 + $0xc0] sm:$0xff]
        %93 = vst [vmem:[%s43 + $0xc0] sm:$0xff] %v92
        %v94 = vld [vmem:[%s42 + $0xc8] sm:$0xff]
        %95 = vst [vmem:[%s43 + $0xc8] sm:$0xff] %v94
        %v96 = vld [vmem:[%s42 + $0xd0] sm:$0xff]
        %97 = vst [vmem:[%s43 + $0xd0] sm:$0xff] %v96
        %v98 = vld [vmem:[%s42 + $0xd8] sm:$0xff]
        %99 = vst [vmem:[%s43 + $0xd8] sm:$0xff] %v98
        %v100 = vld [vmem:[%s42 + $0xe0] sm:$0xff]
        %101 = vst [vmem:[%s43 + $0xe0] sm:$0xff] %v100
        %v102 = vld [vmem:[%s42 + $0xe8] sm:$0xff]
        %103 = vst [vmem:[%s43 + $0xe8] sm:$0xff] %v102
        %v104 = vld [vmem:[%s42 + $0xf0] sm:$0xff]
        %105 = vst [vmem:[%s43 + $0xf0] sm:$0xff] %v104
        %v106 = vld [vmem:[%s42 + $0xf8] sm:$0xff]
        %107 = vst [vmem:[%s43 + $0xf8] sm:$0xff] %v106
        %v108 = vld [vmem:[%s42 + $0x100] sm:$0xff]
        %109 = vst [vmem:[%s43 + $0x100] sm:$0xff] %v108
        %v110 = vld [vmem:[%s42 + $0x108] sm:$0xff]
        %111 = vst [vmem:[%s43 + $0x108] sm:$0xff] %v110
        %v112 = vld [vmem:[%s42 + $0x110] sm:$0xff]
        %113 = vst [vmem:[%s43 + $0x110] sm:$0xff] %v112
        %v114 = vld [vmem:[%s42 + $0x118] sm:$0xff]
        %115 = vst [vmem:[%s43 + $0x118] sm:$0xff] %v114
        %v116 = vld [vmem:[%s42 + $0x120] sm:$0xff]
        %117 = vst [vmem:[%s43 + $0x120] sm:$0xff] %v116
        %v118 = vld [vmem:[%s42 + $0x128] sm:$0xff]
        %119 = vst [vmem:[%s43 + $0x128] sm:$0xff] %v118
        %v120 = vld [vmem:[%s42 + $0x130] sm:$0xff]
        %121 = vst [vmem:[%s43 + $0x130] sm:$0xff] %v120
        %v122 = vld [vmem:[%s42 + $0x138] sm:$0xff]
        %123 = vst [vmem:[%s43 + $0x138] sm:$0xff] %v122
        %v124 = vld [vmem:[%s42 + $0x140] sm:$0xff]
        %125 = vst [vmem:[%s43 + $0x140] sm:$0xff] %v124
        %v126 = vld [vmem:[%s42 + $0x148] sm:$0xff]
        %127 = vst [vmem:[%s43 + $0x148] sm:$0xff] %v126
        %v128 = vld [vmem:[%s42 + $0x150] sm:$0xff]
        %129 = vst [vmem:[%s43 + $0x150] sm:$0xff] %v128
        %v130 = vld [vmem:[%s42 + $0x158] sm:$0xff]
        %131 = vst [vmem:[%s43 + $0x158] sm:$0xff] %v130
        %v132 = vld [vmem:[%s42 + $0x160] sm:$0xff]
        %133 = vst [vmem:[%s43 + $0x160] sm:$0xff] %v132
        %v134 = vld [vmem:[%s42 + $0x168] sm:$0xff]
        %135 = vst [vmem:[%s43 + $0x168] sm:$0xff] %v134
        %v136 = vld [vmem:[%s42 + $0x170] sm:$0xff]
        %137 = vst [vmem:[%s43 + $0x170] sm:$0xff] %v136
        %v138 = vld [vmem:[%s42 + $0x178] sm:$0xff]
        %139 = vst [vmem:[%s43 + $0x178] sm:$0xff] %v138
        %v140 = vld [vmem:[%s42 + $0x180] sm:$0xff]
        %141 = vst [vmem:[%s43 + $0x180] sm:$0xff] %v140
        %v142 = vld [vmem:[%s42 + $0x188] sm:$0xff]
        %143 = vst [vmem:[%s43 + $0x188] sm:$0xff] %v142
        %v144 = vld [vmem:[%s42 + $0x190] sm:$0xff]
        %145 = vst [vmem:[%s43 + $0x190] sm:$0xff] %v144
      $region33: #{sem_match_forward.1} parent=27 // loop_footer
        %s41 = sadd.s32 1, %s37
      $region34: #{sem_match_forward.1} parent=27 // loop_footer_branch
        %36 = sbr.rel target = $region30
      $region35: #{sem_match_forward.1} parent=27 // loop_exit
        _
    $region28: #{sem_match_forward.1} parent=12 // pred_fallthru
      _
    %p146 = pneg %p32
    // Predicated region
    $region36: #{sem_match_forward.1} parent=12 // pred_check
      _
    $region37: #{sem_match_forward.1} parent=12 // pred_check_branch
      %148 = sbr.rel (%p32) target = $region39
    $region38: #{sem_match_forward.1} parent=12 // pred_region
      %s149 = sand.u32 408, 7
    $region39: #{sem_match_forward.1} parent=12 // pred_fallthru
      _
  $region13: #{sem_match_forward.1} parent=0 // pred_fallthru
    _
  // Predicated region
  $region14: #{sem_match_forward.1} parent=0 // pred_check
    %p17 = pneg %p13
  $region15: #{sem_match_forward.1} parent=0 // pred_check_branch
    %19 = sbr.rel (%p17) target = $region17
  $region16: #{sem_match_forward.1} parent=0 // pred_region
    %s20 = sshllo.u32 0, 408
    loop: start=0, step=1, limit=1
    $region18: #{sem_match_forward.1} parent=16 // loop_pre_header
      _
    $region19: #{sem_match_forward.1} parent=16 // loop_header
      %s22 = sphi 0, %s26
      %p23 = scmp.ge.s32.totalorder %s22, 1
      %s27 = sphi %s2, %s2
      %s28 = sphi [#allocation5], [#allocation5]
    $region20: #{sem_match_forward.1} parent=16 // loop_header_branch
      %25 = sbr.rel (%p23) target = $region24
    $region21: #{sem_match_forward.1} parent=16 // loop_body
      %v29 = vld [vmem:[%s27] sm:%s20]
      %30 = vst [vmem:[%s28] sm:%s20] %v29
    $region22: #{sem_match_forward.1} parent=16 // loop_footer
      %s26 = sadd.s32 1, %s22
    $region23: #{sem_match_forward.1} parent=16 // loop_footer_branch
      %21 = sbr.rel target = $region19
    $region24: #{sem_match_forward.1} parent=16 // loop_exit
      _
  $region17: #{sem_match_forward.1} parent=0 // pred_fallthru
    _
  // Predicated region
  $region40: #{sem_match_forward.1} parent=0 // pred_check
    _
  $region41: #{sem_match_forward.1} parent=0 // pred_check_branch
    %152 = sbr.rel (0) target = $region43
  $region42: #{sem_match_forward.1} parent=0 // pred_region
    %153 = vsyncadd [#allocation6], 6528
  $region43: #{sem_match_forward.1} parent=0 // pred_fallthru
    _
  %v154 = vld [vmem:[%s0] sm:$0xff]
  %v155 = vld [vmem:[%s0 + $0x8] sm:$0xff]
  %v156 = vld [vmem:[%s0 + $0x10] sm:$0xff]
  %v157 = vld [vmem:[%s0 + $0x18] sm:$0xff]
  %v158 = vld [vmem:[%s0 + $0x20] sm:$0xff]
  %v159 = vld [vmem:[%s0 + $0x28] sm:$0xff]
  %v160 = vld [vmem:[%s0 + $0x30] sm:$0xff]
  %v161 = vld [vmem:[%s0 + $0x38] sm:$0xff]
  %v162 = vld [vmem:[%s0 + $0x40] sm:$0xff]
  %v163 = vld [vmem:[%s0 + $0x48] sm:$0xff]
  %v164 = vld [vmem:[%s0 + $0x50] sm:$0xff]
  %v165 = vld [vmem:[%s0 + $0x58] sm:$0xff]
  %v166 = vld [vmem:[%s0 + $0x60] sm:$0xff]
  %v167 = vld [vmem:[%s0 + $0x68] sm:$0xff]
  %v168 = vld [vmem:[%s0 + $0x70] sm:$0xff]
  %v169 = vld [vmem:[%s0 + $0x78] sm:$0xff]
  %v170 = vld [vmem:[%s0 + $0x80] sm:$0xff]
  %v171 = vld [vmem:[%s0 + $0x88] sm:$0xff]
  %v172 = vld [vmem:[%s0 + $0x90] sm:$0xff]
  %v173 = vld [vmem:[%s0 + $0x98] sm:$0xff]
  %v174 = vld [vmem:[%s0 + $0xa0] sm:$0xff]
  %v175 = vld [vmem:[%s1] sm:$0xff]
  %v176 = vld [vmem:[%s1 + $0x8] sm:$0xff]
  %v177 = vld [vmem:[%s1 + $0x10] sm:$0xff]
  %v178 = vld [vmem:[%s1 + $0x18] sm:$0xff]
  %v179 = vld [vmem:[%s1 + $0x20] sm:$0xff]
  %v180 = vld [vmem:[%s1 + $0x28] sm:$0xff]
  %v181 = vld [vmem:[%s1 + $0x30] sm:$0xff]
  %v182 = vld [vmem:[%s1 + $0x38] sm:$0xff]
  %v183 = vld [vmem:[%s1 + $0x40] sm:$0xff]
  %v184 = vld [vmem:[%s1 + $0x48] sm:$0xff]
  %v185 = vld [vmem:[%s1 + $0x50] sm:$0xff]
  %v186 = vld [vmem:[%s1 + $0x58] sm:$0xff]
  %v187 = vld [vmem:[%s1 + $0x60] sm:$0xff]
  %v188 = vld [vmem:[%s1 + $0x68] sm:$0xff]
  %v189 = vld [vmem:[%s1 + $0x70] sm:$0xff]
  %v190 = vld [vmem:[%s1 + $0x78] sm:$0xff]
  %v191 = vld [vmem:[%s1 + $0x80] sm:$0xff]
  %v192 = vld [vmem:[%s1 + $0x88] sm:$0xff]
  %v193 = vld [vmem:[%s1 + $0x90] sm:$0xff]
  %v194 = vld [vmem:[%s1 + $0x98] sm:$0xff]
  %v195 = vld [vmem:[%s1 + $0xa0] sm:$0xff]
  %v196 = vld [vmem:[%s1 + $0xa8] sm:$0xff]
  %v197 = vld [vmem:[%s1 + $0xb0] sm:$0xff]
  %v198 = vld [vmem:[%s1 + $0xb8] sm:$0xff]
  %v199 = vld [vmem:[%s1 + $0xc0] sm:$0xff]
  %v200 = vld [vmem:[%s1 + $0xc8] sm:$0xff]
  %v201 = vld [vmem:[%s1 + $0xd0] sm:$0xff]
  %v202 = vld [vmem:[%s1 + $0xd8] sm:$0xff]
  %v203 = vld [vmem:[%s1 + $0xe0] sm:$0xff]
  %v204 = vld [vmem:[%s1 + $0xe8] sm:$0xff]
  %v205 = vld [vmem:[%s1 + $0xf0] sm:$0xff]
  %v206 = vld [vmem:[%s1 + $0xf8] sm:$0xff]
  %v207 = vld [vmem:[%s1 + $0x100] sm:$0xff]
  %v208 = vld [vmem:[%s1 + $0x108] sm:$0xff]
  %v209 = vld [vmem:[%s1 + $0x110] sm:$0xff]
  %v210 = vld [vmem:[%s1 + $0x118] sm:$0xff]
  %v211 = vld [vmem:[%s1 + $0x120] sm:$0xff]
  %v212 = vld [vmem:[%s1 + $0x128] sm:$0xff]
  %v213 = vld [vmem:[%s1 + $0x130] sm:$0xff]
  %v214 = vld [vmem:[%s1 + $0x138] sm:$0xff]
  %v215 = vld [vmem:[%s1 + $0x140] sm:$0xff]
  %v216 = vld [vmem:[%s1 + $0x148] sm:$0xff]
  %v217 = vld [vmem:[%s1 + $0x150] sm:$0xff]
  %v218 = vld [vmem:[%s1 + $0x158] sm:$0xff]
  %v219 = vld [vmem:[%s1 + $0x160] sm:$0xff]
  %v220 = vld [vmem:[%s1 + $0x168] sm:$0xff]
  %v221 = vld [vmem:[%s1 + $0x170] sm:$0xff]
  %v222 = vld [vmem:[%s1 + $0x178] sm:$0xff]
  %v223 = vld [vmem:[%s1 + $0x180] sm:$0xff]
  %v224 = vld [vmem:[%s1 + $0x188] sm:$0xff]
  %v225 = vld [vmem:[%s1 + $0x190] sm:$0xff]
  %v226 = vld [vmem:[%s1 + $0x198] sm:$0xff]
  %v227 = vld [vmem:[%s1 + $0x1a0] sm:$0xff]
  %v228 = vld [vmem:[%s1 + $0x1a8] sm:$0xff]
  %v229 = vld [vmem:[%s1 + $0x1b0] sm:$0xff]
  %v230 = vld [vmem:[%s1 + $0x1b8] sm:$0xff]
  %v231 = vld [vmem:[%s1 + $0x1c0] sm:$0xff]
  %v232 = vld [vmem:[%s1 + $0x1c8] sm:$0xff]
  %v233 = vld [vmem:[%s1 + $0x1d0] sm:$0xff]
  %v234 = vld [vmem:[%s1 + $0x1d8] sm:$0xff]
  %v235 = vld [vmem:[%s1 + $0x1e0] sm:$0xff]
  %v236 = vld [vmem:[%s1 + $0x1e8] sm:$0xff]
  %v237 = vld [vmem:[%s1 + $0x1f0] sm:$0xff]
  %v238 = vld [vmem:[%s1 + $0x1f8] sm:$0xff]
  %v239 = vld [vmem:[%s1 + $0x200] sm:$0xff]
  %v240 = vld [vmem:[%s1 + $0x208] sm:$0xff]
  %v241 = vld [vmem:[%s1 + $0x210] sm:$0xff]
  %v242 = vld [vmem:[%s1 + $0x218] sm:$0xff]
  %v243 = vld [vmem:[%s1 + $0x220] sm:$0xff]
  %v244 = vld [vmem:[%s1 + $0x228] sm:$0xff]
  %v245 = vld [vmem:[%s1 + $0x230] sm:$0xff]
  %v246 = vld [vmem:[%s1 + $0x238] sm:$0xff]
  %v247 = vld [vmem:[%s1 + $0x240] sm:$0xff]
  %v248 = vld [vmem:[%s1 + $0x248] sm:$0xff]
  %v249 = vld [vmem:[%s1 + $0x250] sm:$0xff]
  %v250 = vld [vmem:[%s1 + $0x258] sm:$0xff]
  %v251 = vld [vmem:[%s1 + $0x260] sm:$0xff]
  %v252 = vld [vmem:[%s1 + $0x268] sm:$0xff]
  %v253 = vld [vmem:[%s1 + $0x270] sm:$0xff]
  %v254 = vld [vmem:[%s1 + $0x278] sm:$0xff]
  %v255 = vld [vmem:[%s1 + $0x280] sm:$0xff]
  %v256 = vld [vmem:[%s1 + $0x288] sm:$0xff]
  %v257 = vld [vmem:[%s1 + $0x290] sm:$0xff]
  %v258 = vld [vmem:[%s1 + $0x298] sm:$0xff]
  %v259 = vld [vmem:[%s1 + $0x2a0] sm:$0xff]
  %v260 = vld [vmem:[%s1 + $0x2a8] sm:$0xff]
  %v261 = vld [vmem:[%s1 + $0x2b0] sm:$0xff]
  %v262 = vld [vmem:[%s1 + $0x2b8] sm:$0xff]
  %v263 = vld [vmem:[%s1 + $0x2c0] sm:$0xff]
  %v264 = vld [vmem:[%s1 + $0x2c8] sm:$0xff]
  %v265 = vld [vmem:[%s1 + $0x2d0] sm:$0xff]
  %v266 = vld [vmem:[%s1 + $0x2d8] sm:$0xff]
  %v267 = vld [vmem:[%s1 + $0x2e0] sm:$0xff]
  %v268 = vld [vmem:[%s1 + $0x2e8] sm:$0xff]
  %v269 = vld [vmem:[%s1 + $0x2f0] sm:$0xff]
  %v270 = vld [vmem:[%s1 + $0x2f8] sm:$0xff]
  %v271 = vld [vmem:[%s1 + $0x300] sm:$0xff]
  %v272 = vld [vmem:[%s1 + $0x308] sm:$0xff]
  %v273 = vld [vmem:[%s1 + $0x310] sm:$0xff]
  %v274 = vld [vmem:[%s1 + $0x318] sm:$0xff]
  %v275 = vld [vmem:[%s1 + $0x320] sm:$0xff]
  %v276 = vld [vmem:[%s1 + $0x328] sm:$0xff]
  %v277 = vld [vmem:[%s1 + $0x330] sm:$0xff]
  %v278 = vld [vmem:[%s1 + $0x338] sm:$0xff]
  %v279 = vld [vmem:[%s1 + $0x340] sm:$0xff]
  %v280 = vld [vmem:[%s1 + $0x348] sm:$0xff]
  %v281 = vld [vmem:[%s1 + $0x350] sm:$0xff]
  %v282 = vld [vmem:[%s1 + $0x358] sm:$0xff]
  %v283 = vld [vmem:[%s1 + $0x360] sm:$0xff]
  %v284 = vld [vmem:[%s1 + $0x368] sm:$0xff]
  %v285 = vld [vmem:[%s1 + $0x370] sm:$0xff]
  %v286 = vld [vmem:[%s1 + $0x378] sm:$0xff]
  %v287 = vld [vmem:[%s1 + $0x380] sm:$0xff]
  %v288 = vld [vmem:[%s1 + $0x388] sm:$0xff]
  %v289 = vld [vmem:[%s1 + $0x390] sm:$0xff]
  %v290 = vld [vmem:[%s1 + $0x398] sm:$0xff]
  %v291 = vld [vmem:[%s1 + $0x3a0] sm:$0xff]
  %v292 = vld [vmem:[%s1 + $0x3a8] sm:$0xff]
  %v293 = vld [vmem:[%s1 + $0x3b0] sm:$0xff]
  %v294 = vld [vmem:[%s1 + $0x3b8] sm:$0xff]
  %v295 = vld [vmem:[%s1 + $0x3c0] sm:$0xff]
  %v296 = vld [vmem:[%s1 + $0x3c8] sm:$0xff]
  %v297 = vld [vmem:[%s1 + $0x3d0] sm:$0xff]
  %v298 = vld [vmem:[%s1 + $0x3d8] sm:$0xff]
  %v299 = vld [vmem:[%s1 + $0x3e0] sm:$0xff]
  %v300 = vld [vmem:[%s1 + $0x3e8] sm:$0xff]
  %v301 = vld [vmem:[%s1 + $0x3f0] sm:$0xff]
  %v302 = vld [vmem:[%s1 + $0x3f8] sm:$0xff]
  %v303 = vld [vmem:[%s1 + $0x400] sm:$0xff]
  %v304 = vld [vmem:[%s1 + $0x408] sm:$0xff]
  %v305 = vld [vmem:[%s1 + $0x410] sm:$0xff]
  %v306 = vld [vmem:[%s1 + $0x418] sm:$0xff]
  %v307 = vld [vmem:[%s1 + $0x420] sm:$0xff]
  %v308 = vld [vmem:[%s1 + $0x428] sm:$0xff]
  %v309 = vld [vmem:[%s1 + $0x430] sm:$0xff]
  %v310 = vld [vmem:[%s1 + $0x438] sm:$0xff]
  %v311 = vld [vmem:[%s1 + $0x440] sm:$0xff]
  %v312 = vld [vmem:[%s1 + $0x448] sm:$0xff]
  %v313 = vld [vmem:[%s1 + $0x450] sm:$0xff]
  %v314 = vld [vmem:[%s1 + $0x458] sm:$0xff]
  %v315 = vld [vmem:[%s1 + $0x460] sm:$0xff]
  %v316 = vld [vmem:[%s1 + $0x468] sm:$0xff]
  %v317 = vld [vmem:[%s1 + $0x470] sm:$0xff]
  %v318 = vld [vmem:[%s1 + $0x478] sm:$0xff]
  %v319 = vld [vmem:[%s1 + $0x480] sm:$0xff]
  %v320 = vld [vmem:[%s1 + $0x488] sm:$0xff]
  %v321 = vld [vmem:[%s1 + $0x490] sm:$0xff]
  %v322 = vld [vmem:[%s1 + $0x498] sm:$0xff]
  %v323 = vld [vmem:[%s1 + $0x4a0] sm:$0xf]
  %v324 = vld [vmem:[%s1 + $0x4a8] sm:$0xf]
  %v325 = vld [vmem:[%s1 + $0x4b0] sm:$0xf]
  %v326 = vld [vmem:[%s1 + $0x4b8] sm:$0xf]
  %s327 = scalar_lea.vmem %s1, 1728
  %v328 = vld [vmem:[%s327] ss:$8 sm:$0xf]
  %v330 = vlaneseq
  %v331 = vshrl.u32 %v330, 7
  %v332 = vsub.s32 0, %v331
  %v333 = vrot.slane %v328, %v332
  %v334 = vlaneseq
  %v335 = vshrl.u32 %v334, 7
  %v336 = vsub.s32 1, %v335
  %v337 = vrot.slane %v328, %v336
  %v338 = vlaneseq
  %v339 = vshrl.u32 %v338, 7
  %v340 = vsub.s32 2, %v339
  %v341 = vrot.slane %v328, %v340
  %v342 = vlaneseq
  %v343 = vshrl.u32 %v342, 7
  %v344 = vsub.s32 3, %v343
  %v345 = vrot.slane %v328, %v344
  %vm350 = vcmask 359424
  %v352 = vsel %vm350, %v156, 0
  %v355 = vsel %vm350, %v159, 0
  %v358 = vsel %vm350, %v162, 0
  %v361 = vsel %vm350, %v165, 0
  %v364 = vsel %vm350, %v168, 0
  %v367 = vsel %vm350, %v171, 0
  %v370 = vsel %vm350, %v174, 0
  %vm372 = vcmask 1043456
  %v374 = vsel %vm372, %v323, 0
  %v377 = vsel %vm372, %v324, 0
  %v380 = vsel %vm372, %v325, 0
  %v383 = vsel %vm372, %v326, 0
  %385 = vmatprep.subr.mxu0 %v176
  %386 = vmatpush1.msra.mxu0 %v175
  %387 = vmatprep.subr.mxu0 %v180
  %388 = vmatpush1.msra.mxu0 %v179
  %389 = vmatprep.subr.mxu0 %v184
  %390 = vmatpush1.msra.mxu0 %v183
  %391 = vmatprep.subr.mxu0 %v188
  %392 = vmatpush1.msra.mxu0 %v187
  %393 = vmatprep.subr.mxu0 %v192
  %394 = vmatpush1.msra.mxu0 %v191
  %395 = vmatprep.subr.mxu0 %v196
  %396 = vmatpush1.msra.mxu0 %v195
  %397 = vmatprep.subr.mxu0 %v200
  %398 = vmatpush1.msra.mxu0 %v199
  %399 = vmatprep.subr.mxu0 %v204
  %400 = vmatpush1.msra.mxu0 %v203
  %401 = vmatprep.subr.mxu0 %v208
  %402 = vmatpush1.msra.mxu0 %v207
  %403 = vmatprep.subr.mxu0 %v212
  %404 = vmatpush1.msra.mxu0 %v211
  %405 = vmatprep.subr.mxu0 %v216
  %406 = vmatpush1.msra.mxu0 %v215
  %407 = vmatprep.subr.mxu0 %v220
  %408 = vmatpush1.msra.mxu0 %v219
  %409 = vmatprep.subr.mxu0 %v224
  %410 = vmatpush1.msra.mxu0 %v223
  %411 = vmatprep.subr.mxu0 %v228
  %412 = vmatpush1.msra.mxu0 %v227
  %413 = vmatprep.subr.mxu0 %v232
  %414 = vmatpush1.msra.mxu0 %v231
  %415 = vmatprep.subr.mxu0 %v236
  %416 = vmatpush1.msra.mxu0 %v235
  %417 = vmatprep.subr.mxu0 %v240
  %418 = vmatpush1.msra.mxu0 %v239
  %419 = vmatprep.subr.mxu0 %v244
  %420 = vmatpush1.msra.mxu0 %v243
  %421 = vmatprep.subr.mxu0 %v248
  %422 = vmatpush1.msra.mxu0 %v247
  %423 = vmatprep.subr.mxu0 %v252
  %424 = vmatpush1.msra.mxu0 %v251
  %425 = vmatprep.subr.mxu0 %v256
  %426 = vmatpush1.msra.mxu0 %v255
  %427 = vmatprep.subr.mxu0 %v260
  %428 = vmatpush1.msra.mxu0 %v259
  %429 = vmatprep.subr.mxu0 %v264
  %430 = vmatpush1.msra.mxu0 %v263
  %431 = vmatprep.subr.mxu0 %v268
  %432 = vmatpush1.msra.mxu0 %v267
  %433 = vmatprep.subr.mxu0 %v272
  %434 = vmatpush1.msra.mxu0 %v271
  %435 = vmatprep.subr.mxu0 %v276
  %436 = vmatpush1.msra.mxu0 %v275
  %437 = vmatprep.subr.mxu0 %v280
  %438 = vmatpush1.msra.mxu0 %v279
  %439 = vmatprep.subr.mxu0 %v284
  %440 = vmatpush1.msra.mxu0 %v283
  %441 = vmatprep.subr.mxu0 %v288
  %442 = vmatpush1.msra.mxu0 %v287
  %443 = vmatprep.subr.mxu0 %v292
  %444 = vmatpush1.msra.mxu0 %v291
  %445 = vmatprep.subr.mxu0 %v296
  %446 = vmatpush1.msra.mxu0 %v295
  %447 = vmatprep.subr.mxu0 %v300
  %448 = vmatpush1.msra.mxu0 %v299
  %449 = vmatprep.mubr.f32.mxu0 %v155
  %450 = vmatmul.mubr.f32.gmra.mrb[0].mxu0 %v154
  %v451 = vpop.f32.mrb[0].mxu0
  %v452 = vadd.f32 %v333, %v451
  %v453 = vpop.f32.mrb[0].mxu0
  %v454 = vadd.f32 %v337, %v453
  %455 = vmatprep.mubr.f32.mxu0 %v158
  %456 = vmatmul.mubr.f32.gmra.mrb[0].mxu0 %v157
  %v457 = vpop.f32.mrb[0].mxu0
  %v458 = vadd.f32 %v333, %v457
  %v459 = vpop.f32.mrb[0].mxu0
  %v460 = vadd.f32 %v337, %v459
  %461 = vmatprep.mubr.f32.mxu0 %v161
  %462 = vmatmul.mubr.f32.gmra.mrb[0].mxu0 %v160
  %v463 = vpop.f32.mrb[0].mxu0
  %v464 = vadd.f32 %v333, %v463
  %v465 = vpop.f32.mrb[0].mxu0
  %v466 = vadd.f32 %v337, %v465
  %467 = vmatprep.mubr.f32.mxu0 %v164
  %468 = vmatmul.mubr.f32.gmra.mrb[0].mxu0 %v163
  %v469 = vpop.f32.mrb[0].mxu0
  %v470 = vadd.f32 %v333, %v469
  %v471 = vpop.f32.mrb[0].mxu0
  %v472 = vadd.f32 %v337, %v471
  %473 = vmatprep.mubr.f32.mxu0 %v167
  %474 = vmatmul.mubr.f32.gmra.mrb[0].mxu0 %v166
  %v475 = vpop.f32.mrb[0].mxu0
  %v476 = vadd.f32 %v333, %v475
  %v477 = vpop.f32.mrb[0].mxu0
  %v478 = vadd.f32 %v337, %v477
  %479 = vmatprep.mubr.f32.mxu0 %v170
  %480 = vmatmul.mubr.f32.gmra.mrb[0].mxu0 %v169
  %v481 = vpop.f32.mrb[0].mxu0
  %v482 = vadd.f32 %v333, %v481
  %v483 = vpop.f32.mrb[0].mxu0
  %v484 = vadd.f32 %v337, %v483
  %485 = vmatprep.mubr.f32.mxu0 %v173
  %486 = vmatmul.mubr.f32.gmra.mrb[0].mxu0 %v172
  %v487 = vpop.f32.mrb[0].mxu0
  %v488 = vadd.f32 %v333, %v487
  %v489 = vpop.f32.mrb[0].mxu0
  %v490 = vadd.f32 %v337, %v489
  %491 = vdwg.mxu0
  %492 = vmatprep.subr.mxu0 %v304
  %493 = vmatpush1.msra.mxu0 %v303
  %494 = vmatprep.subr.mxu0 %v308
  %495 = vmatpush1.msra.mxu0 %v307
  %496 = vmatprep.subr.mxu0 %v312
  %497 = vmatpush1.msra.mxu0 %v311
  %498 = vmatprep.subr.mxu0 %v316
  %499 = vmatpush1.msra.mxu0 %v315
  %500 = vmatprep.subr.mxu0 %v320
  %501 = vmatpush1.msra.mxu0 %v319
  %502 = vmatprep.subr.mxu0 %v377
  %503 = vmatpush1.msra.mxu0 %v374
  %504 = vmatprep.subr.mxu0 0.0
  %505 = vmatpush1.msra.mxu0 0.0
  %506 = vmatprep.subr.mxu0 0.0
  %507 = vmatpush1.msra.mxu0 0.0
  %508 = vmatprep.subr.mxu0 0.0
  %509 = vmatpush1.msra.mxu0 0.0
  %510 = vmatprep.subr.mxu0 0.0
  %511 = vmatpush1.msra.mxu0 0.0
  %512 = vmatprep.subr.mxu0 0.0
  %513 = vmatpush1.msra.mxu0 0.0
  %514 = vmatprep.subr.mxu0 0.0
  %515 = vmatpush1.msra.mxu0 0.0
  %516 = vmatprep.subr.mxu0 0.0
  %517 = vmatpush1.msra.mxu0 0.0
  %518 = vmatprep.subr.mxu0 0.0
  %519 = vmatpush1.msra.mxu0 0.0
  %520 = vmatprep.subr.mxu0 0.0
  %521 = vmatpush1.msra.mxu0 0.0
  %522 = vmatprep.subr.mxu0 0.0
  %523 = vmatpush1.msra.mxu0 0.0
  %524 = vmatprep.subr.mxu0 0.0
  %525 = vmatpush1.msra.mxu0 0.0
  %526 = vmatprep.subr.mxu0 0.0
  %527 = vmatpush1.msra.mxu0 0.0
  %528 = vmatprep.subr.mxu0 0.0
  %529 = vmatpush1.msra.mxu0 0.0
  %530 = vmatprep.subr.mxu0 0.0
  %531 = vmatpush1.msra.mxu0 0.0
  %532 = vmatprep.subr.mxu0 0.0
  %533 = vmatpush1.msra.mxu0 0.0
  %534 = vmatprep.subr.mxu0 0.0
  %535 = vmatpush1.msra.mxu0 0.0
  %536 = vmatprep.subr.mxu0 0.0
  %537 = vmatpush1.msra.mxu0 0.0
  %538 = vmatprep.subr.mxu0 0.0
  %539 = vmatpush1.msra.mxu0 0.0
  %540 = vmatprep.subr.mxu0 0.0
  %541 = vmatpush1.msra.mxu0 0.0
  %542 = vmatprep.subr.mxu0 0.0
  %543 = vmatpush1.msra.mxu0 0.0
  %544 = vmatprep.subr.mxu0 0.0
  %545 = vmatpush1.msra.mxu0 0.0
  %546 = vmatprep.subr.mxu0 0.0
  %547 = vmatpush1.msra.mxu0 0.0
  %548 = vmatprep.subr.mxu0 0.0
  %549 = vmatpush1.msra.mxu0 0.0
  %550 = vmatprep.subr.mxu0 0.0
  %551 = vmatpush1.msra.mxu0 0.0
  %552 = vmatprep.subr.mxu0 0.0
  %553 = vmatpush1.msra.mxu0 0.0
  %554 = vmatprep.subr.mxu0 0.0
  %555 = vmatpush1.msra.mxu0 0.0
  %556 = vmatprep.mubr.f32.mxu0 0.0
  %557 = vmatmul.mubr.f32.gmra.mrb[0].mxu0 %v352
  %v558 = vpop.f32.mrb[0].mxu0
  %v559 = vadd.f32 %v452, %v558
  %v560 = vpop.f32.mrb[0].mxu0
  %v561 = vadd.f32 %v454, %v560
  %562 = vmatprep.mubr.f32.mxu0 0.0
  %563 = vmatmul.mubr.f32.gmra.mrb[0].mxu0 %v355
  %v564 = vpop.f32.mrb[0].mxu0
  %v565 = vadd.f32 %v458, %v564
  %v566 = vpop.f32.mrb[0].mxu0
  %v567 = vadd.f32 %v460, %v566
  %568 = vmatprep.mubr.f32.mxu0 0.0
  %569 = vmatmul.mubr.f32.gmra.mrb[0].mxu0 %v358
  %v570 = vpop.f32.mrb[0].mxu0
  %v571 = vadd.f32 %v464, %v570
  %v572 = vpop.f32.mrb[0].mxu0
  %v573 = vadd.f32 %v466, %v572
  %574 = vmatprep.mubr.f32.mxu0 0.0
  %575 = vmatmul.mubr.f32.gmra.mrb[0].mxu0 %v361
  %v576 = vpop.f32.mrb[0].mxu0
  %v577 = vadd.f32 %v470, %v576
  %v578 = vpop.f32.mrb[0].mxu0
  %v579 = vadd.f32 %v472, %v578
  %580 = vmatprep.mubr.f32.mxu0 0.0
  %581 = vmatmul.mubr.f32.gmra.mrb[0].mxu0 %v364
  %v582 = vpop.f32.mrb[0].mxu0
  %v583 = vadd.f32 %v476, %v582
  %v584 = vpop.f32.mrb[0].mxu0
  %v585 = vadd.f32 %v478, %v584
  %586 = vmatprep.mubr.f32.mxu0 0.0
  %587 = vmatmul.mubr.f32.gmra.mrb[0].mxu0 %v367
  %v588 = vpop.f32.mrb[0].mxu0
  %v589 = vadd.f32 %v482, %v588
  %v590 = vpop.f32.mrb[0].mxu0
  %v591 = vadd.f32 %v484, %v590
  %592 = vmatprep.mubr.f32.mxu0 0.0
  %593 = vmatmul.mubr.f32.gmra.mrb[0].mxu0 %v370
  %v594 = vpop.f32.mrb[0].mxu0
  %v595 = vadd.f32 %v488, %v594
  %v596 = vpop.f32.mrb[0].mxu0
  %v597 = vadd.f32 %v490, %v596
  %598 = vdwg.mxu0
  %599 = vmatprep.subr.mxu0 %v178
  %600 = vmatpush1.msra.mxu0 %v177
  %601 = vmatprep.subr.mxu0 %v182
  %602 = vmatpush1.msra.mxu0 %v181
  %603 = vmatprep.subr.mxu0 %v186
  %604 = vmatpush1.msra.mxu0 %v185
  %605 = vmatprep.subr.mxu0 %v190
  %606 = vmatpush1.msra.mxu0 %v189
  %607 = vmatprep.subr.mxu0 %v194
  %608 = vmatpush1.msra.mxu0 %v193
  %609 = vmatprep.subr.mxu0 %v198
  %610 = vmatpush1.msra.mxu0 %v197
  %611 = vmatprep.subr.mxu0 %v202
  %612 = vmatpush1.msra.mxu0 %v201
  %613 = vmatprep.subr.mxu0 %v206
  %614 = vmatpush1.msra.mxu0 %v205
  %615 = vmatprep.subr.mxu0 %v210
  %616 = vmatpush1.msra.mxu0 %v209
  %617 = vmatprep.subr.mxu0 %v214
  %618 = vmatpush1.msra.mxu0 %v213
  %619 = vmatprep.subr.mxu0 %v218
  %620 = vmatpush1.msra.mxu0 %v217
  %621 = vmatprep.subr.mxu0 %v222
  %622 = vmatpush1.msra.mxu0 %v221
  %623 = vmatprep.subr.mxu0 %v226
  %624 = vmatpush1.msra.mxu0 %v225
  %625 = vmatprep.subr.mxu0 %v230
  %626 = vmatpush1.msra.mxu0 %v229
  %627 = vmatprep.subr.mxu0 %v234
  %628 = vmatpush1.msra.mxu0 %v233
  %629 = vmatprep.subr.mxu0 %v238
  %630 = vmatpush1.msra.mxu0 %v237
  %631 = vmatprep.subr.mxu0 %v242
  %632 = vmatpush1.msra.mxu0 %v241
  %633 = vmatprep.subr.mxu0 %v246
  %634 = vmatpush1.msra.mxu0 %v245
  %635 = vmatprep.subr.mxu0 %v250
  %636 = vmatpush1.msra.mxu0 %v249
  %637 = vmatprep.subr.mxu0 %v254
  %638 = vmatpush1.msra.mxu0 %v253
  %639 = vmatprep.subr.mxu0 %v258
  %640 = vmatpush1.msra.mxu0 %v257
  %641 = vmatprep.subr.mxu0 %v262
  %642 = vmatpush1.msra.mxu0 %v261
  %643 = vmatprep.subr.mxu0 %v266
  %644 = vmatpush1.msra.mxu0 %v265
  %645 = vmatprep.subr.mxu0 %v270
  %646 = vmatpush1.msra.mxu0 %v269
  %647 = vmatprep.subr.mxu0 %v274
  %648 = vmatpush1.msra.mxu0 %v273
  %649 = vmatprep.subr.mxu0 %v278
  %650 = vmatpush1.msra.mxu0 %v277
  %651 = vmatprep.subr.mxu0 %v282
  %652 = vmatpush1.msra.mxu0 %v281
  %653 = vmatprep.subr.mxu0 %v286
  %654 = vmatpush1.msra.mxu0 %v285
  %655 = vmatprep.subr.mxu0 %v290
  %656 = vmatpush1.msra.mxu0 %v289
  %657 = vmatprep.subr.mxu0 %v294
  %658 = vmatpush1.msra.mxu0 %v293
  %659 = vmatprep.subr.mxu0 %v298
  %660 = vmatpush1.msra.mxu0 %v297
  %661 = vmatprep.subr.mxu0 %v302
  %662 = vmatpush1.msra.mxu0 %v301
  %663 = vmatprep.mubr.f32.mxu0 %v155
  %664 = vmatmul.mubr.f32.gmra.mrb[0].mxu0 %v154
  %v665 = vpop.f32.mrb[0].mxu0
  %v666 = vadd.f32 %v341, %v665
  %v667 = vpop.f32.mrb[0].mxu0
  %v668 = vadd.f32 %v345, %v667
  %669 = vmatprep.mubr.f32.mxu0 %v158
  %670 = vmatmul.mubr.f32.gmra.mrb[0].mxu0 %v157
  %v671 = vpop.f32.mrb[0].mxu0
  %v672 = vadd.f32 %v341, %v671
  %v673 = vpop.f32.mrb[0].mxu0
  %v674 = vadd.f32 %v345, %v673
  %675 = vmatprep.mubr.f32.mxu0 %v161
  %676 = vmatmul.mubr.f32.gmra.mrb[0].mxu0 %v160
  %v677 = vpop.f32.mrb[0].mxu0
  %v678 = vadd.f32 %v341, %v677
  %v679 = vpop.f32.mrb[0].mxu0
  %v680 = vadd.f32 %v345, %v679
  %681 = vmatprep.mubr.f32.mxu0 %v164
  %682 = vmatmul.mubr.f32.gmra.mrb[0].mxu0 %v163
  %v683 = vpop.f32.mrb[0].mxu0
  %v684 = vadd.f32 %v341, %v683
  %v685 = vpop.f32.mrb[0].mxu0
  %v686 = vadd.f32 %v345, %v685
  %687 = vmatprep.mubr.f32.mxu0 %v167
  %688 = vmatmul.mubr.f32.gmra.mrb[0].mxu0 %v166
  %v689 = vpop.f32.mrb[0].mxu0
  %v690 = vadd.f32 %v341, %v689
  %v691 = vpop.f32.mrb[0].mxu0
  %v692 = vadd.f32 %v345, %v691
  %693 = vmatprep.mubr.f32.mxu0 %v170
  %694 = vmatmul.mubr.f32.gmra.mrb[0].mxu0 %v169
  %v695 = vpop.f32.mrb[0].mxu0
  %v696 = vadd.f32 %v341, %v695
  %v697 = vpop.f32.mrb[0].mxu0
  %v698 = vadd.f32 %v345, %v697
  %699 = vmatprep.mubr.f32.mxu0 %v173
  %700 = vmatmul.mubr.f32.gmra.mrb[0].mxu0 %v172
  %v701 = vpop.f32.mrb[0].mxu0
  %v702 = vadd.f32 %v341, %v701
  %v703 = vpop.f32.mrb[0].mxu0
  %v704 = vadd.f32 %v345, %v703
  %705 = vdwg.mxu0
  %706 = vmatprep.subr.mxu0 %v306
  %707 = vmatpush1.msra.mxu0 %v305
  %708 = vmatprep.subr.mxu0 %v310
  %709 = vmatpush1.msra.mxu0 %v309
  %710 = vmatprep.subr.mxu0 %v314
  %711 = vmatpush1.msra.mxu0 %v313
  %712 = vmatprep.subr.mxu0 %v318
  %713 = vmatpush1.msra.mxu0 %v317
  %714 = vmatprep.subr.mxu0 %v322
  %715 = vmatpush1.msra.mxu0 %v321
  %716 = vmatprep.subr.mxu0 %v383
  %717 = vmatpush1.msra.mxu0 %v380
  %718 = vmatprep.subr.mxu0 0.0
  %719 = vmatpush1.msra.mxu0 0.0
  %720 = vmatprep.subr.mxu0 0.0
  %721 = vmatpush1.msra.mxu0 0.0
  %722 = vmatprep.subr.mxu0 0.0
  %723 = vmatpush1.msra.mxu0 0.0
  %724 = vmatprep.subr.mxu0 0.0
  %725 = vmatpush1.msra.mxu0 0.0
  %726 = vmatprep.subr.mxu0 0.0
  %727 = vmatpush1.msra.mxu0 0.0
  %728 = vmatprep.subr.mxu0 0.0
  %729 = vmatpush1.msra.mxu0 0.0
  %730 = vmatprep.subr.mxu0 0.0
  %731 = vmatpush1.msra.mxu0 0.0
  %732 = vmatprep.subr.mxu0 0.0
  %733 = vmatpush1.msra.mxu0 0.0
  %734 = vmatprep.subr.mxu0 0.0
  %735 = vmatpush1.msra.mxu0 0.0
  %736 = vmatprep.subr.mxu0 0.0
  %737 = vmatpush1.msra.mxu0 0.0
  %738 = vmatprep.subr.mxu0 0.0
  %739 = vmatpush1.msra.mxu0 0.0
  %740 = vmatprep.subr.mxu0 0.0
  %741 = vmatpush1.msra.mxu0 0.0
  %742 = vmatprep.subr.mxu0 0.0
  %743 = vmatpush1.msra.mxu0 0.0
  %744 = vmatprep.subr.mxu0 0.0
  %745 = vmatpush1.msra.mxu0 0.0
  %746 = vmatprep.subr.mxu0 0.0
  %747 = vmatpush1.msra.mxu0 0.0
  %748 = vmatprep.subr.mxu0 0.0
  %749 = vmatpush1.msra.mxu0 0.0
  %750 = vmatprep.subr.mxu0 0.0
  %751 = vmatpush1.msra.mxu0 0.0
  %752 = vmatprep.subr.mxu0 0.0
  %753 = vmatpush1.msra.mxu0 0.0
  %754 = vmatprep.subr.mxu0 0.0
  %755 = vmatpush1.msra.mxu0 0.0
  %756 = vmatprep.subr.mxu0 0.0
  %757 = vmatpush1.msra.mxu0 0.0
  %758 = vmatprep.subr.mxu0 0.0
  %759 = vmatpush1.msra.mxu0 0.0
  %760 = vmatprep.subr.mxu0 0.0
  %761 = vmatpush1.msra.mxu0 0.0
  %762 = vmatprep.subr.mxu0 0.0
  %763 = vmatpush1.msra.mxu0 0.0
  %764 = vmatprep.subr.mxu0 0.0
  %765 = vmatpush1.msra.mxu0 0.0
  %766 = vmatprep.subr.mxu0 0.0
  %767 = vmatpush1.msra.mxu0 0.0
  %768 = vmatprep.subr.mxu0 0.0
  %769 = vmatpush1.msra.mxu0 0.0
  %770 = vmatprep.mubr.f32.mxu0 0.0
  %771 = vmatmul.mubr.f32.gmra.mrb[0].mxu0 %v352
  %v772 = vpop.f32.mrb[0].mxu0
  %v773 = vadd.f32 %v666, %v772
  %v774 = vpop.f32.mrb[0].mxu0
  %v775 = vadd.f32 %v668, %v774
  %776 = vmatprep.mubr.f32.mxu0 0.0
  %777 = vmatmul.mubr.f32.gmra.mrb[0].mxu0 %v355
  %v778 = vpop.f32.mrb[0].mxu0
  %v779 = vadd.f32 %v672, %v778
  %v780 = vpop.f32.mrb[0].mxu0
  %v781 = vadd.f32 %v674, %v780
  %782 = vmatprep.mubr.f32.mxu0 0.0
  %783 = vmatmul.mubr.f32.gmra.mrb[0].mxu0 %v358
  %v784 = vpop.f32.mrb[0].mxu0
  %v785 = vadd.f32 %v678, %v784
  %v786 = vpop.f32.mrb[0].mxu0
  %v787 = vadd.f32 %v680, %v786
  %788 = vmatprep.mubr.f32.mxu0 0.0
  %789 = vmatmul.mubr.f32.gmra.mrb[0].mxu0 %v361
  %v790 = vpop.f32.mrb[0].mxu0
  %v791 = vadd.f32 %v684, %v790
  %v792 = vpop.f32.mrb[0].mxu0
  %v793 = vadd.f32 %v686, %v792
  %794 = vmatprep.mubr.f32.mxu0 0.0
  %795 = vmatmul.mubr.f32.gmra.mrb[0].mxu0 %v364
  %v796 = vpop.f32.mrb[0].mxu0
  %v797 = vadd.f32 %v690, %v796
  %v798 = vpop.f32.mrb[0].mxu0
  %v799 = vadd.f32 %v692, %v798
  %800 = vmatprep.mubr.f32.mxu0 0.0
  %801 = vmatmul.mubr.f32.gmra.mrb[0].mxu0 %v367
  %v802 = vpop.f32.mrb[0].mxu0
  %v803 = vadd.f32 %v696, %v802
  %v804 = vpop.f32.mrb[0].mxu0
  %v805 = vadd.f32 %v698, %v804
  %806 = vmatprep.mubr.f32.mxu0 0.0
  %807 = vmatmul.mubr.f32.gmra.mrb[0].mxu0 %v370
  %v808 = vpop.f32.mrb[0].mxu0
  %v809 = vadd.f32 %v702, %v808
  %v810 = vpop.f32.mrb[0].mxu0
  %v811 = vadd.f32 %v704, %v810
  %812 = vdwg.mxu0
  %813 = vst [vmem:[#allocation2] sm:$0xff] %v559
  %814 = vst [vmem:[#allocation2 + $0x8] sm:$0xff] %v561
  %815 = vst [vmem:[#allocation2 + $0x10] sm:$0xff] %v773
  %816 = vst [vmem:[#allocation2 + $0x18] sm:$0xff] %v775
  %817 = vst [vmem:[#allocation2 + $0x20] sm:$0xff] %v565
  %818 = vst [vmem:[#allocation2 + $0x28] sm:$0xff] %v567
  %819 = vst [vmem:[#allocation2 + $0x30] sm:$0xff] %v779
  %820 = vst [vmem:[#allocation2 + $0x38] sm:$0xff] %v781
  %821 = vst [vmem:[#allocation2 + $0x40] sm:$0xff] %v571
  %822 = vst [vmem:[#allocation2 + $0x48] sm:$0xff] %v573
  %823 = vst [vmem:[#allocation2 + $0x50] sm:$0xff] %v785
  %824 = vst [vmem:[#allocation2 + $0x58] sm:$0xff] %v787
  %825 = vst [vmem:[#allocation2 + $0x60] sm:$0xff] %v577
  %826 = vst [vmem:[#allocation2 + $0x68] sm:$0xff] %v579
  %827 = vst [vmem:[#allocation2 + $0x70] sm:$0xff] %v791
  %828 = vst [vmem:[#allocation2 + $0x78] sm:$0xff] %v793
  %829 = vst [vmem:[#allocation2 + $0x80] sm:$0xff] %v583
  %830 = vst [vmem:[#allocation2 + $0x88] sm:$0xff] %v585
  %831 = vst [vmem:[#allocation2 + $0x90] sm:$0xff] %v797
  %832 = vst [vmem:[#allocation2 + $0x98] sm:$0xff] %v799
  %833 = vst [vmem:[#allocation2 + $0xa0] sm:$0xff] %v589
  %834 = vst [vmem:[#allocation2 + $0xa8] sm:$0xff] %v591
  %835 = vst [vmem:[#allocation2 + $0xb0] sm:$0xff] %v803
  %836 = vst [vmem:[#allocation2 + $0xb8] sm:$0xff] %v805
  %837 = vst [vmem:[#allocation2 + $0xc0] sm:$0xff] %v595
  %838 = vst [vmem:[#allocation2 + $0xc8] sm:$0xff] %v597
  %839 = vst [vmem:[#allocation2 + $0xd0] sm:$0xff] %v809
  %840 = vst [vmem:[#allocation2 + $0xd8] sm:$0xff] %v811
  %v841 = vld [vmem:[%s0 + $0xa8] sm:$0xff]
  %v842 = vld [vmem:[%s0 + $0xb0] sm:$0xff]
  %v843 = vld [vmem:[%s0 + $0xb8] sm:$0xff]
  %v844 = vld [vmem:[%s0 + $0xc0] sm:$0xff]
  %v845 = vld [vmem:[%s0 + $0xc8] sm:$0xff]
  %v846 = vld [vmem:[%s0 + $0xd0] sm:$0xff]
  %v847 = vld [vmem:[%s0 + $0xd8] sm:$0xff]
  %v848 = vld [vmem:[%s0 + $0xe0] sm:$0xff]
  %v849 = vld [vmem:[%s0 + $0xe8] sm:$0xff]
  %v850 = vld [vmem:[%s0 + $0xf0] sm:$0xff]
  %v851 = vld [vmem:[%s0 + $0xf8] sm:$0xff]
  %v852 = vld [vmem:[%s0 + $0x100] sm:$0xff]
  %v853 = vld [vmem:[%s0 + $0x108] sm:$0xff]
  %v854 = vld [vmem:[%s0 + $0x110] sm:$0xff]
  %v855 = vld [vmem:[%s0 + $0x118] sm:$0xff]
  %v856 = vld [vmem:[%s0 + $0x120] sm:$0xff]
  %v857 = vld [vmem:[%s0 + $0x128] sm:$0xff]
  %v858 = vld [vmem:[%s0 + $0x130] sm:$0xff]
  %v859 = vld [vmem:[%s0 + $0x138] sm:$0xff]
  %v860 = vld [vmem:[%s0 + $0x140] sm:$0xff]
  %v861 = vld [vmem:[%s0 + $0x148] sm:$0xff]
  %v862 = vld [vmem:[%s1] sm:$0xff]
  %v863 = vld [vmem:[%s1 + $0x8] sm:$0xff]
  %v864 = vld [vmem:[%s1 + $0x10] sm:$0xff]
  %v865 = vld [vmem:[%s1 + $0x18] sm:$0xff]
  %v866 = vld [vmem:[%s1 + $0x20] sm:$0xff]
  %v867 = vld [vmem:[%s1 + $0x28] sm:$0xff]
  %v868 = vld [vmem:[%s1 + $0x30] sm:$0xff]
  %v869 = vld [vmem:[%s1 + $0x38] sm:$0xff]
  %v870 = vld [vmem:[%s1 + $0x40] sm:$0xff]
  %v871 = vld [vmem:[%s1 + $0x48] sm:$0xff]
  %v872 = vld [vmem:[%s1 + $0x50] sm:$0xff]
  %v873 = vld [vmem:[%s1 + $0x58] sm:$0xff]
  %v874 = vld [vmem:[%s1 + $0x60] sm:$0xff]
  %v875 = vld [vmem:[%s1 + $0x68] sm:$0xff]
  %v876 = vld [vmem:[%s1 + $0x70] sm:$0xff]
  %v877 = vld [vmem:[%s1 + $0x78] sm:$0xff]
  %v878 = vld [vmem:[%s1 + $0x80] sm:$0xff]
  %v879 = vld [vmem:[%s1 + $0x88] sm:$0xff]
  %v880 = vld [vmem:[%s1 + $0x90] sm:$0xff]
  %v881 = vld [vmem:[%s1 + $0x98] sm:$0xff]
  %v882 = vld [vmem:[%s1 + $0xa0] sm:$0xff]
  %v883 = vld [vmem:[%s1 + $0xa8] sm:$0xff]
  %v884 = vld [vmem:[%s1 + $0xb0] sm:$0xff]
  %v885 = vld [vmem:[%s1 + $0xb8] sm:$0xff]
  %v886 = vld [vmem:[%s1 + $0xc0] sm:$0xff]
  %v887 = vld [vmem:[%s1 + $0xc8] sm:$0xff]
  %v888 = vld [vmem:[%s1 + $0xd0] sm:$0xff]
  %v889 = vld [vmem:[%s1 + $0xd8] sm:$0xff]
  %v890 = vld [vmem:[%s1 + $0xe0] sm:$0xff]
  %v891 = vld [vmem:[%s1 + $0xe8] sm:$0xff]
  %v892 = vld [vmem:[%s1 + $0xf0] sm:$0xff]
  %v893 = vld [vmem:[%s1 + $0xf8] sm:$0xff]
  %v894 = vld [vmem:[%s1 + $0x100] sm:$0xff]
  %v895 = vld [vmem:[%s1 + $0x108] sm:$0xff]
  %v896 = vld [vmem:[%s1 + $0x110] sm:$0xff]
  %v897 = vld [vmem:[%s1 + $0x118] sm:$0xff]
  %v898 = vld [vmem:[%s1 + $0x120] sm:$0xff]
  %v899 = vld [vmem:[%s1 + $0x128] sm:$0xff]
  %v900 = vld [vmem:[%s1 + $0x130] sm:$0xff]
  %v901 = vld [vmem:[%s1 + $0x138] sm:$0xff]
  %v902 = vld [vmem:[%s1 + $0x140] sm:$0xff]
  %v903 = vld [vmem:[%s1 + $0x148] sm:$0xff]
  %v904 = vld [vmem:[%s1 + $0x150] sm:$0xff]
  %v905 = vld [vmem:[%s1 + $0x158] sm:$0xff]
  %v906 = vld [vmem:[%s1 + $0x160] sm:$0xff]
  %v907 = vld [vmem:[%s1 + $0x168] sm:$0xff]
  %v908 = vld [vmem:[%s1 + $0x170] sm:$0xff]
  %v909 = vld [vmem:[%s1 + $0x178] sm:$0xff]
  %v910 = vld [vmem:[%s1 + $0x180] sm:$0xff]
  %v911 = vld [vmem:[%s1 + $0x188] sm:$0xff]
  %v912 = vld [vmem:[%s1 + $0x190] sm:$0xff]
  %v913 = vld [vmem:[%s1 + $0x198] sm:$0xff]
  %v914 = vld [vmem:[%s1 + $0x1a0] sm:$0xff]
  %v915 = vld [vmem:[%s1 + $0x1a8] sm:$0xff]
  %v916 = vld [vmem:[%s1 + $0x1b0] sm:$0xff]
  %v917 = vld [vmem:[%s1 + $0x1b8] sm:$0xff]
  %v918 = vld [vmem:[%s1 + $0x1c0] sm:$0xff]
  %v919 = vld [vmem:[%s1 + $0x1c8] sm:$0xff]
  %v920 = vld [vmem:[%s1 + $0x1d0] sm:$0xff]
  %v921 = vld [vmem:[%s1 + $0x1d8] sm:$0xff]
  %v922 = vld [vmem:[%s1 + $0x1e0] sm:$0xff]
  %v923 = vld [vmem:[%s1 + $0x1e8] sm:$0xff]
  %v924 = vld [vmem:[%s1 + $0x1f0] sm:$0xff]
  %v925 = vld [vmem:[%s1 + $0x1f8] sm:$0xff]
  %v926 = vld [vmem:[%s1 + $0x200] sm:$0xff]
  %v927 = vld [vmem:[%s1 + $0x208] sm:$0xff]
  %v928 = vld [vmem:[%s1 + $0x210] sm:$0xff]
  %v929 = vld [vmem:[%s1 + $0x218] sm:$0xff]
  %v930 = vld [vmem:[%s1 + $0x220] sm:$0xff]
  %v931 = vld [vmem:[%s1 + $0x228] sm:$0xff]
  %v932 = vld [vmem:[%s1 + $0x230] sm:$0xff]
  %v933 = vld [vmem:[%s1 + $0x238] sm:$0xff]
  %v934 = vld [vmem:[%s1 + $0x240] sm:$0xff]
  %v935 = vld [vmem:[%s1 + $0x248] sm:$0xff]
  %v936 = vld [vmem:[%s1 + $0x250] sm:$0xff]
  %v937 = vld [vmem:[%s1 + $0x258] sm:$0xff]
  %v938 = vld [vmem:[%s1 + $0x260] sm:$0xff]
  %v939 = vld [vmem:[%s1 + $0x268] sm:$0xff]
  %v940 = vld [vmem:[%s1 + $0x270] sm:$0xff]
  %v941 = vld [vmem:[%s1 + $0x278] sm:$0xff]
  %v942 = vld [vmem:[%s1 + $0x280] sm:$0xff]
  %v943 = vld [vmem:[%s1 + $0x288] sm:$0xff]
  %v944 = vld [vmem:[%s1 + $0x290] sm:$0xff]
  %v945 = vld [vmem:[%s1 + $0x298] sm:$0xff]
  %v946 = vld [vmem:[%s1 + $0x2a0] sm:$0xff]
  %v947 = vld [vmem:[%s1 + $0x2a8] sm:$0xff]
  %v948 = vld [vmem:[%s1 + $0x2b0] sm:$0xff]
  %v949 = vld [vmem:[%s1 + $0x2b8] sm:$0xff]
  %v950 = vld [vmem:[%s1 + $0x2c0] sm:$0xff]
  %v951 = vld [vmem:[%s1 + $0x2c8] sm:$0xff]
  %v952 = vld [vmem:[%s1 + $0x2d0] sm:$0xff]
  %v953 = vld [vmem:[%s1 + $0x2d8] sm:$0xff]
  %v954 = vld [vmem:[%s1 + $0x2e0] sm:$0xff]
  %v955 = vld [vmem:[%s1 + $0x2e8] sm:$0xff]
  %v956 = vld [vmem:[%s1 + $0x2f0] sm:$0xff]
  %v957 = vld [vmem:[%s1 + $0x2f8] sm:$0xff]
  %v958 = vld [vmem:[%s1 + $0x300] sm:$0xff]
  %v959 = vld [vmem:[%s1 + $0x308] sm:$0xff]
  %v960 = vld [vmem:[%s1 + $0x310] sm:$0xff]
  %v961 = vld [vmem:[%s1 + $0x318] sm:$0xff]
  %v962 = vld [vmem:[%s1 + $0x320] sm:$0xff]
  %v963 = vld [vmem:[%s1 + $0x328] sm:$0xff]
  %v964 = vld [vmem:[%s1 + $0x330] sm:$0xff]
  %v965 = vld [vmem:[%s1 + $0x338] sm:$0xff]
  %v966 = vld [vmem:[%s1 + $0x340] sm:$0xff]
  %v967 = vld [vmem:[%s1 + $0x348] sm:$0xff]
  %v968 = vld [vmem:[%s1 + $0x350] sm:$0xff]
  %v969 = vld [vmem:[%s1 + $0x358] sm:$0xff]
  %v970 = vld [vmem:[%s1 + $0x360] sm:$0xff]
  %v971 = vld [vmem:[%s1 + $0x368] sm:$0xff]
  %v972 = vld [vmem:[%s1 + $0x370] sm:$0xff]
  %v973 = vld [vmem:[%s1 + $0x378] sm:$0xff]
  %v974 = vld [vmem:[%s1 + $0x380] sm:$0xff]
  %v975 = vld [vmem:[%s1 + $0x388] sm:$0xff]
  %v976 = vld [vmem:[%s1 + $0x390] sm:$0xff]
  %v977 = vld [vmem:[%s1 + $0x398] sm:$0xff]
  %v978 = vld [vmem:[%s1 + $0x3a0] sm:$0xff]
  %v979 = vld [vmem:[%s1 + $0x3a8] sm:$0xff]
  %v980 = vld [vmem:[%s1 + $0x3b0] sm:$0xff]
  %v981 = vld [vmem:[%s1 + $0x3b8] sm:$0xff]
  %v982 = vld [vmem:[%s1 + $0x3c0] sm:$0xff]
  %v983 = vld [vmem:[%s1 + $0x3c8] sm:$0xff]
  %v984 = vld [vmem:[%s1 + $0x3d0] sm:$0xff]
  %v985 = vld [vmem:[%s1 + $0x3d8] sm:$0xff]
  %v986 = vld [vmem:[%s1 + $0x3e0] sm:$0xff]
  %v987 = vld [vmem:[%s1 + $0x3e8] sm:$0xff]
  %v988 = vld [vmem:[%s1 + $0x3f0] sm:$0xff]
  %v989 = vld [vmem:[%s1 + $0x3f8] sm:$0xff]
  %v990 = vld [vmem:[%s1 + $0x400] sm:$0xff]
  %v991 = vld [vmem:[%s1 + $0x408] sm:$0xff]
  %v992 = vld [vmem:[%s1 + $0x410] sm:$0xff]
  %v993 = vld [vmem:[%s1 + $0x418] sm:$0xff]
  %v994 = vld [vmem:[%s1 + $0x420] sm:$0xff]
  %v995 = vld [vmem:[%s1 + $0x428] sm:$0xff]
  %v996 = vld [vmem:[%s1 + $0x430] sm:$0xff]
  %v997 = vld [vmem:[%s1 + $0x438] sm:$0xff]
  %v998 = vld [vmem:[%s1 + $0x440] sm:$0xff]
  %v999 = vld [vmem:[%s1 + $0x448] sm:$0xff]
  %v1000 = vld [vmem:[%s1 + $0x450] sm:$0xff]
  %v1001 = vld [vmem:[%s1 + $0x458] sm:$0xff]
  %v1002 = vld [vmem:[%s1 + $0x460] sm:$0xff]
  %v1003 = vld [vmem:[%s1 + $0x468] sm:$0xff]
  %v1004 = vld [vmem:[%s1 + $0x470] sm:$0xff]
  %v1005 = vld [vmem:[%s1 + $0x478] sm:$0xff]
  %v1006 = vld [vmem:[%s1 + $0x480] sm:$0xff]
  %v1007 = vld [vmem:[%s1 + $0x488] sm:$0xff]
  %v1008 = vld [vmem:[%s1 + $0x490] sm:$0xff]
  %v1009 = vld [vmem:[%s1 + $0x498] sm:$0xff]
  %v1010 = vld [vmem:[%s1 + $0x4a0] sm:$0xf]
  %v1011 = vld [vmem:[%s1 + $0x4a8] sm:$0xf]
  %v1012 = vld [vmem:[%s1 + $0x4b0] sm:$0xf]
  %v1013 = vld [vmem:[%s1 + $0x4b8] sm:$0xf]
  %v1014 = vld [vmem:[%s327] ss:$8 sm:$0xf]
  %v1016 = vlaneseq
  %v1017 = vshrl.u32 %v1016, 7
  %v1018 = vsub.s32 0, %v1017
  %v1019 = vrot.slane %v1014, %v1018
  %v1020 = vlaneseq
  %v1021 = vshrl.u32 %v1020, 7
  %v1022 = vsub.s32 1, %v1021
  %v1023 = vrot.slane %v1014, %v1022
  %v1024 = vlaneseq
  %v1025 = vshrl.u32 %v1024, 7
  %v1026 = vsub.s32 2, %v1025
  %v1027 = vrot.slane %v1014, %v1026
  %v1028 = vlaneseq
  %v1029 = vshrl.u32 %v1028, 7
  %v1030 = vsub.s32 3, %v1029
  %v1031 = vrot.slane %v1014, %v1030
  %v1037 = vsel %vm350, %v843, 0
  %v1040 = vsel %vm350, %v846, 0
  %v1043 = vsel %vm350, %v849, 0
  %v1046 = vsel %vm350, %v852, 0
  %v1049 = vsel %vm350, %v855, 0
  %v1052 = vsel %vm350, %v858, 0
  %v1055 = vsel %vm350, %v861, 0
  %v1058 = vsel %vm372, %v1010, 0
  %v1061 = vsel %vm372, %v1011, 0
  %v1064 = vsel %vm372, %v1012, 0
  %v1067 = vsel %vm372, %v1013, 0
  %1069 = vmatprep.subr.mxu0 %v863
  %1070 = vmatpush1.msra.mxu0 %v862
  %1071 = vmatprep.subr.mxu0 %v867
  %1072 = vmatpush1.msra.mxu0 %v866
  %1073 = vmatprep.subr.mxu0 %v871
  %1074 = vmatpush1.msra.mxu0 %v870
  %1075 = vmatprep.subr.mxu0 %v875
  %1076 = vmatpush1.msra.mxu0 %v874
  %1077 = vmatprep.subr.mxu0 %v879
  %1078 = vmatpush1.msra.mxu0 %v878
  %1079 = vmatprep.subr.mxu0 %v883
  %1080 = vmatpush1.msra.mxu0 %v882
  %1081 = vmatprep.subr.mxu0 %v887
  %1082 = vmatpush1.msra.mxu0 %v886
  %1083 = vmatprep.subr.mxu0 %v891
  %1084 = vmatpush1.msra.mxu0 %v890
  %1085 = vmatprep.subr.mxu0 %v895
  %1086 = vmatpush1.msra.mxu0 %v894
  %1087 = vmatprep.subr.mxu0 %v899
  %1088 = vmatpush1.msra.mxu0 %v898
  %1089 = vmatprep.subr.mxu0 %v903
  %1090 = vmatpush1.msra.mxu0 %v902
  %1091 = vmatprep.subr.mxu0 %v907
  %1092 = vmatpush1.msra.mxu0 %v906
  %1093 = vmatprep.subr.mxu0 %v911
  %1094 = vmatpush1.msra.mxu0 %v910
  %1095 = vmatprep.subr.mxu0 %v915
  %1096 = vmatpush1.msra.mxu0 %v914
  %1097 = vmatprep.subr.mxu0 %v919
  %1098 = vmatpush1.msra.mxu0 %v918
  %1099 = vmatprep.subr.mxu0 %v923
  %1100 = vmatpush1.msra.mxu0 %v922
  %1101 = vmatprep.subr.mxu0 %v927
  %1102 = vmatpush1.msra.mxu0 %v926
  %1103 = vmatprep.subr.mxu0 %v931
  %1104 = vmatpush1.msra.mxu0 %v930
  %1105 = vmatprep.subr.mxu0 %v935
  %1106 = vmatpush1.msra.mxu0 %v934
  %1107 = vmatprep.subr.mxu0 %v939
  %1108 = vmatpush1.msra.mxu0 %v938
  %1109 = vmatprep.subr.mxu0 %v943
  %1110 = vmatpush1.msra.mxu0 %v942
  %1111 = vmatprep.subr.mxu0 %v947
  %1112 = vmatpush1.msra.mxu0 %v946
  %1113 = vmatprep.subr.mxu0 %v951
  %1114 = vmatpush1.msra.mxu0 %v950
  %1115 = vmatprep.subr.mxu0 %v955
  %1116 = vmatpush1.msra.mxu0 %v954
  %1117 = vmatprep.subr.mxu0 %v959
  %1118 = vmatpush1.msra.mxu0 %v958
  %1119 = vmatprep.subr.mxu0 %v963
  %1120 = vmatpush1.msra.mxu0 %v962
  %1121 = vmatprep.subr.mxu0 %v967
  %1122 = vmatpush1.msra.mxu0 %v966
  %1123 = vmatprep.subr.mxu0 %v971
  %1124 = vmatpush1.msra.mxu0 %v970
  %1125 = vmatprep.subr.mxu0 %v975
  %1126 = vmatpush1.msra.mxu0 %v974
  %1127 = vmatprep.subr.mxu0 %v979
  %1128 = vmatpush1.msra.mxu0 %v978
  %1129 = vmatprep.subr.mxu0 %v983
  %1130 = vmatpush1.msra.mxu0 %v982
  %1131 = vmatprep.subr.mxu0 %v987
  %1132 = vmatpush1.msra.mxu0 %v986
  %1133 = vmatprep.mubr.f32.mxu0 %v842
  %1134 = vmatmul.mubr.f32.gmra.mrb[0].mxu0 %v841
  %v1135 = vpop.f32.mrb[0].mxu0
  %v1136 = vadd.f32 %v1019, %v1135
  %v1137 = vpop.f32.mrb[0].mxu0
  %v1138 = vadd.f32 %v1023, %v1137
  %1139 = vmatprep.mubr.f32.mxu0 %v845
  %1140 = vmatmul.mubr.f32.gmra.mrb[0].mxu0 %v844
  %v1141 = vpop.f32.mrb[0].mxu0
  %v1142 = vadd.f32 %v1019, %v1141
  %v1143 = vpop.f32.mrb[0].mxu0
  %v1144 = vadd.f32 %v1023, %v1143
  %1145 = vmatprep.mubr.f32.mxu0 %v848
  %1146 = vmatmul.mubr.f32.gmra.mrb[0].mxu0 %v847
  %v1147 = vpop.f32.mrb[0].mxu0
  %v1148 = vadd.f32 %v1019, %v1147
  %v1149 = vpop.f32.mrb[0].mxu0
  %v1150 = vadd.f32 %v1023, %v1149
  %1151 = vmatprep.mubr.f32.mxu0 %v851
  %1152 = vmatmul.mubr.f32.gmra.mrb[0].mxu0 %v850
  %v1153 = vpop.f32.mrb[0].mxu0
  %v1154 = vadd.f32 %v1019, %v1153
  %v1155 = vpop.f32.mrb[0].mxu0
  %v1156 = vadd.f32 %v1023, %v1155
  %1157 = vmatprep.mubr.f32.mxu0 %v854
  %1158 = vmatmul.mubr.f32.gmra.mrb[0].mxu0 %v853
  %v1159 = vpop.f32.mrb[0].mxu0
  %v1160 = vadd.f32 %v1019, %v1159
  %v1161 = vpop.f32.mrb[0].mxu0
  %v1162 = vadd.f32 %v1023, %v1161
  %1163 = vmatprep.mubr.f32.mxu0 %v857
  %1164 = vmatmul.mubr.f32.gmra.mrb[0].mxu0 %v856
  %v1165 = vpop.f32.mrb[0].mxu0
  %v1166 = vadd.f32 %v1019, %v1165
  %v1167 = vpop.f32.mrb[0].mxu0
  %v1168 = vadd.f32 %v1023, %v1167
  %1169 = vmatprep.mubr.f32.mxu0 %v860
  %1170 = vmatmul.mubr.f32.gmra.mrb[0].mxu0 %v859
  %v1171 = vpop.f32.mrb[0].mxu0
  %v1172 = vadd.f32 %v1019, %v1171
  %v1173 = vpop.f32.mrb[0].mxu0
  %v1174 = vadd.f32 %v1023, %v1173
  %1175 = vdwg.mxu0
  %1176 = vmatprep.subr.mxu0 %v991
  %1177 = vmatpush1.msra.mxu0 %v990
  %1178 = vmatprep.subr.mxu0 %v995
  %1179 = vmatpush1.msra.mxu0 %v994
  %1180 = vmatprep.subr.mxu0 %v999
  %1181 = vmatpush1.msra.mxu0 %v998
  %1182 = vmatprep.subr.mxu0 %v1003
  %1183 = vmatpush1.msra.mxu0 %v1002
  %1184 = vmatprep.subr.mxu0 %v1007
  %1185 = vmatpush1.msra.mxu0 %v1006
  %1186 = vmatprep.subr.mxu0 %v1061
  %1187 = vmatpush1.msra.mxu0 %v1058
  %1188 = vmatprep.subr.mxu0 0.0
  %1189 = vmatpush1.msra.mxu0 0.0
  %1190 = vmatprep.subr.mxu0 0.0
  %1191 = vmatpush1.msra.mxu0 0.0
  %1192 = vmatprep.subr.mxu0 0.0
  %1193 = vmatpush1.msra.mxu0 0.0
  %1194 = vmatprep.subr.mxu0 0.0
  %1195 = vmatpush1.msra.mxu0 0.0
  %1196 = vmatprep.subr.mxu0 0.0
  %1197 = vmatpush1.msra.mxu0 0.0
  %1198 = vmatprep.subr.mxu0 0.0
  %1199 = vmatpush1.msra.mxu0 0.0
  %1200 = vmatprep.subr.mxu0 0.0
  %1201 = vmatpush1.msra.mxu0 0.0
  %1202 = vmatprep.subr.mxu0 0.0
  %1203 = vmatpush1.msra.mxu0 0.0
  %1204 = vmatprep.subr.mxu0 0.0
  %1205 = vmatpush1.msra.mxu0 0.0
  %1206 = vmatprep.subr.mxu0 0.0
  %1207 = vmatpush1.msra.mxu0 0.0
  %1208 = vmatprep.subr.mxu0 0.0
  %1209 = vmatpush1.msra.mxu0 0.0
  %1210 = vmatprep.subr.mxu0 0.0
  %1211 = vmatpush1.msra.mxu0 0.0
  %1212 = vmatprep.subr.mxu0 0.0
  %1213 = vmatpush1.msra.mxu0 0.0
  %1214 = vmatprep.subr.mxu0 0.0
  %1215 = vmatpush1.msra.mxu0 0.0
  %1216 = vmatprep.subr.mxu0 0.0
  %1217 = vmatpush1.msra.mxu0 0.0
  %1218 = vmatprep.subr.mxu0 0.0
  %1219 = vmatpush1.msra.mxu0 0.0
  %1220 = vmatprep.subr.mxu0 0.0
  %1221 = vmatpush1.msra.mxu0 0.0
  %1222 = vmatprep.subr.mxu0 0.0
  %1223 = vmatpush1.msra.mxu0 0.0
  %1224 = vmatprep.subr.mxu0 0.0
  %1225 = vmatpush1.msra.mxu0 0.0
  %1226 = vmatprep.subr.mxu0 0.0
  %1227 = vmatpush1.msra.mxu0 0.0
  %1228 = vmatprep.subr.mxu0 0.0
  %1229 = vmatpush1.msra.mxu0 0.0
  %1230 = vmatprep.subr.mxu0 0.0
  %1231 = vmatpush1.msra.mxu0 0.0
  %1232 = vmatprep.subr.mxu0 0.0
  %1233 = vmatpush1.msra.mxu0 0.0
  %1234 = vmatprep.subr.mxu0 0.0
  %1235 = vmatpush1.msra.mxu0 0.0
  %1236 = vmatprep.subr.mxu0 0.0
  %1237 = vmatpush1.msra.mxu0 0.0
  %1238 = vmatprep.subr.mxu0 0.0
  %1239 = vmatpush1.msra.mxu0 0.0
  %1240 = vmatprep.mubr.f32.mxu0 0.0
  %1241 = vmatmul.mubr.f32.gmra.mrb[0].mxu0 %v1037
  %v1242 = vpop.f32.mrb[0].mxu0
  %v1243 = vadd.f32 %v1136, %v1242
  %v1244 = vpop.f32.mrb[0].mxu0
  %v1245 = vadd.f32 %v1138, %v1244
  %1246 = vmatprep.mubr.f32.mxu0 0.0
  %1247 = vmatmul.mubr.f32.gmra.mrb[0].mxu0 %v1040
  %v1248 = vpop.f32.mrb[0].mxu0
  %v1249 = vadd.f32 %v1142, %v1248
  %v1250 = vpop.f32.mrb[0].mxu0
  %v1251 = vadd.f32 %v1144, %v1250
  %1252 = vmatprep.mubr.f32.mxu0 0.0
  %1253 = vmatmul.mubr.f32.gmra.mrb[0].mxu0 %v1043
  %v1254 = vpop.f32.mrb[0].mxu0
  %v1255 = vadd.f32 %v1148, %v1254
  %v1256 = vpop.f32.mrb[0].mxu0
  %v1257 = vadd.f32 %v1150, %v1256
  %1258 = vmatprep.mubr.f32.mxu0 0.0
  %1259 = vmatmul.mubr.f32.gmra.mrb[0].mxu0 %v1046
  %v1260 = vpop.f32.mrb[0].mxu0
  %v1261 = vadd.f32 %v1154, %v1260
  %v1262 = vpop.f32.mrb[0].mxu0
  %v1263 = vadd.f32 %v1156, %v1262
  %1264 = vmatprep.mubr.f32.mxu0 0.0
  %1265 = vmatmul.mubr.f32.gmra.mrb[0].mxu0 %v1049
  %v1266 = vpop.f32.mrb[0].mxu0
  %v1267 = vadd.f32 %v1160, %v1266
  %v1268 = vpop.f32.mrb[0].mxu0
  %v1269 = vadd.f32 %v1162, %v1268
  %1270 = vmatprep.mubr.f32.mxu0 0.0
  %1271 = vmatmul.mubr.f32.gmra.mrb[0].mxu0 %v1052
  %v1272 = vpop.f32.mrb[0].mxu0
  %v1273 = vadd.f32 %v1166, %v1272
  %v1274 = vpop.f32.mrb[0].mxu0
  %v1275 = vadd.f32 %v1168, %v1274
  %1276 = vmatprep.mubr.f32.mxu0 0.0
  %1277 = vmatmul.mubr.f32.gmra.mrb[0].mxu0 %v1055
  %v1278 = vpop.f32.mrb[0].mxu0
  %v1279 = vadd.f32 %v1172, %v1278
  %v1280 = vpop.f32.mrb[0].mxu0
  %v1281 = vadd.f32 %v1174, %v1280
  %1282 = vdwg.mxu0
  %1283 = vmatprep.subr.mxu0 %v865
  %1284 = vmatpush1.msra.mxu0 %v864
  %1285 = vmatprep.subr.mxu0 %v869
  %1286 = vmatpush1.msra.mxu0 %v868
  %1287 = vmatprep.subr.mxu0 %v873
  %1288 = vmatpush1.msra.mxu0 %v872
  %1289 = vmatprep.subr.mxu0 %v877
  %1290 = vmatpush1.msra.mxu0 %v876
  %1291 = vmatprep.subr.mxu0 %v881
  %1292 = vmatpush1.msra.mxu0 %v880
  %1293 = vmatprep.subr.mxu0 %v885
  %1294 = vmatpush1.msra.mxu0 %v884
  %1295 = vmatprep.subr.mxu0 %v889
  %1296 = vmatpush1.msra.mxu0 %v888
  %1297 = vmatprep.subr.mxu0 %v893
  %1298 = vmatpush1.msra.mxu0 %v892
  %1299 = vmatprep.subr.mxu0 %v897
  %1300 = vmatpush1.msra.mxu0 %v896
  %1301 = vmatprep.subr.mxu0 %v901
  %1302 = vmatpush1.msra.mxu0 %v900
  %1303 = vmatprep.subr.mxu0 %v905
  %1304 = vmatpush1.msra.mxu0 %v904
  %1305 = vmatprep.subr.mxu0 %v909
  %1306 = vmatpush1.msra.mxu0 %v908
  %1307 = vmatprep.subr.mxu0 %v913
  %1308 = vmatpush1.msra.mxu0 %v912
  %1309 = vmatprep.subr.mxu0 %v917
  %1310 = vmatpush1.msra.mxu0 %v916
  %1311 = vmatprep.subr.mxu0 %v921
  %1312 = vmatpush1.msra.mxu0 %v920
  %1313 = vmatprep.subr.mxu0 %v925
  %1314 = vmatpush1.msra.mxu0 %v924
  %1315 = vmatprep.subr.mxu0 %v929
  %1316 = vmatpush1.msra.mxu0 %v928
  %1317 = vmatprep.subr.mxu0 %v933
  %1318 = vmatpush1.msra.mxu0 %v932
  %1319 = vmatprep.subr.mxu0 %v937
  %1320 = vmatpush1.msra.mxu0 %v936
  %1321 = vmatprep.subr.mxu0 %v941
  %1322 = vmatpush1.msra.mxu0 %v940
  %1323 = vmatprep.subr.mxu0 %v945
  %1324 = vmatpush1.msra.mxu0 %v944
  %1325 = vmatprep.subr.mxu0 %v949
  %1326 = vmatpush1.msra.mxu0 %v948
  %1327 = vmatprep.subr.mxu0 %v953
  %1328 = vmatpush1.msra.mxu0 %v952
  %1329 = vmatprep.subr.mxu0 %v957
  %1330 = vmatpush1.msra.mxu0 %v956
  %1331 = vmatprep.subr.mxu0 %v961
  %1332 = vmatpush1.msra.mxu0 %v960
  %1333 = vmatprep.subr.mxu0 %v965
  %1334 = vmatpush1.msra.mxu0 %v964
  %1335 = vmatprep.subr.mxu0 %v969
  %1336 = vmatpush1.msra.mxu0 %v968
  %1337 = vmatprep.subr.mxu0 %v973
  %1338 = vmatpush1.msra.mxu0 %v972
  %1339 = vmatprep.subr.mxu0 %v977
  %1340 = vmatpush1.msra.mxu0 %v976
  %1341 = vmatprep.subr.mxu0 %v981
  %1342 = vmatpush1.msra.mxu0 %v980
  %1343 = vmatprep.subr.mxu0 %v985
  %1344 = vmatpush1.msra.mxu0 %v984
  %1345 = vmatprep.subr.mxu0 %v989
  %1346 = vmatpush1.msra.mxu0 %v988
  %1347 = vmatprep.mubr.f32.mxu0 %v842
  %1348 = vmatmul.mubr.f32.gmra.mrb[0].mxu0 %v841
  %v1349 = vpop.f32.mrb[0].mxu0
  %v1350 = vadd.f32 %v1027, %v1349
  %v1351 = vpop.f32.mrb[0].mxu0
  %v1352 = vadd.f32 %v1031, %v1351
  %1353 = vmatprep.mubr.f32.mxu0 %v845
  %1354 = vmatmul.mubr.f32.gmra.mrb[0].mxu0 %v844
  %v1355 = vpop.f32.mrb[0].mxu0
  %v1356 = vadd.f32 %v1027, %v1355
  %v1357 = vpop.f32.mrb[0].mxu0
  %v1358 = vadd.f32 %v1031, %v1357
  %1359 = vmatprep.mubr.f32.mxu0 %v848
  %1360 = vmatmul.mubr.f32.gmra.mrb[0].mxu0 %v847
  %v1361 = vpop.f32.mrb[0].mxu0
  %v1362 = vadd.f32 %v1027, %v1361
  %v1363 = vpop.f32.mrb[0].mxu0
  %v1364 = vadd.f32 %v1031, %v1363
  %1365 = vmatprep.mubr.f32.mxu0 %v851
  %1366 = vmatmul.mubr.f32.gmra.mrb[0].mxu0 %v850
  %v1367 = vpop.f32.mrb[0].mxu0
  %v1368 = vadd.f32 %v1027, %v1367
  %v1369 = vpop.f32.mrb[0].mxu0
  %v1370 = vadd.f32 %v1031, %v1369
  %1371 = vmatprep.mubr.f32.mxu0 %v854
  %1372 = vmatmul.mubr.f32.gmra.mrb[0].mxu0 %v853
  %v1373 = vpop.f32.mrb[0].mxu0
  %v1374 = vadd.f32 %v1027, %v1373
  %v1375 = vpop.f32.mrb[0].mxu0
  %v1376 = vadd.f32 %v1031, %v1375
  %1377 = vmatprep.mubr.f32.mxu0 %v857
  %1378 = vmatmul.mubr.f32.gmra.mrb[0].mxu0 %v856
  %v1379 = vpop.f32.mrb[0].mxu0
  %v1380 = vadd.f32 %v1027, %v1379
  %v1381 = vpop.f32.mrb[0].mxu0
  %v1382 = vadd.f32 %v1031, %v1381
  %1383 = vmatprep.mubr.f32.mxu0 %v860
  %1384 = vmatmul.mubr.f32.gmra.mrb[0].mxu0 %v859
  %v1385 = vpop.f32.mrb[0].mxu0
  %v1386 = vadd.f32 %v1027, %v1385
  %v1387 = vpop.f32.mrb[0].mxu0
  %v1388 = vadd.f32 %v1031, %v1387
  %1389 = vdwg.mxu0
  %1390 = vmatprep.subr.mxu0 %v993
  %1391 = vmatpush1.msra.mxu0 %v992
  %1392 = vmatprep.subr.mxu0 %v997
  %1393 = vmatpush1.msra.mxu0 %v996
  %1394 = vmatprep.subr.mxu0 %v1001
  %1395 = vmatpush1.msra.mxu0 %v1000
  %1396 = vmatprep.subr.mxu0 %v1005
  %1397 = vmatpush1.msra.mxu0 %v1004
  %1398 = vmatprep.subr.mxu0 %v1009
  %1399 = vmatpush1.msra.mxu0 %v1008
  %1400 = vmatprep.subr.mxu0 %v1067
  %1401 = vmatpush1.msra.mxu0 %v1064
  %1402 = vmatprep.subr.mxu0 0.0
  %1403 = vmatpush1.msra.mxu0 0.0
  %1404 = vmatprep.subr.mxu0 0.0
  %1405 = vmatpush1.msra.mxu0 0.0
  %1406 = vmatprep.subr.mxu0 0.0
  %1407 = vmatpush1.msra.mxu0 0.0
  %1408 = vmatprep.subr.mxu0 0.0
  %1409 = vmatpush1.msra.mxu0 0.0
  %1410 = vmatprep.subr.mxu0 0.0
  %1411 = vmatpush1.msra.mxu0 0.0
  %1412 = vmatprep.subr.mxu0 0.0
  %1413 = vmatpush1.msra.mxu0 0.0
  %1414 = vmatprep.subr.mxu0 0.0
  %1415 = vmatpush1.msra.mxu0 0.0
  %1416 = vmatprep.subr.mxu0 0.0
  %1417 = vmatpush1.msra.mxu0 0.0
  %1418 = vmatprep.subr.mxu0 0.0
  %1419 = vmatpush1.msra.mxu0 0.0
  %1420 = vmatprep.subr.mxu0 0.0
  %1421 = vmatpush1.msra.mxu0 0.0
  %1422 = vmatprep.subr.mxu0 0.0
  %1423 = vmatpush1.msra.mxu0 0.0
  %1424 = vmatprep.subr.mxu0 0.0
  %1425 = vmatpush1.msra.mxu0 0.0
  %1426 = vmatprep.subr.mxu0 0.0
  %1427 = vmatpush1.msra.mxu0 0.0
  %1428 = vmatprep.subr.mxu0 0.0
  %1429 = vmatpush1.msra.mxu0 0.0
  %1430 = vmatprep.subr.mxu0 0.0
  %1431 = vmatpush1.msra.mxu0 0.0
  %1432 = vmatprep.subr.mxu0 0.0
  %1433 = vmatpush1.msra.mxu0 0.0
  %1434 = vmatprep.subr.mxu0 0.0
  %1435 = vmatpush1.msra.mxu0 0.0
  %1436 = vmatprep.subr.mxu0 0.0
  %1437 = vmatpush1.msra.mxu0 0.0
  %1438 = vmatprep.subr.mxu0 0.0
  %1439 = vmatpush1.msra.mxu0 0.0
  %1440 = vmatprep.subr.mxu0 0.0
  %1441 = vmatpush1.msra.mxu0 0.0
  %1442 = vmatprep.subr.mxu0 0.0
  %1443 = vmatpush1.msra.mxu0 0.0
  %1444 = vmatprep.subr.mxu0 0.0
  %1445 = vmatpush1.msra.mxu0 0.0
  %1446 = vmatprep.subr.mxu0 0.0
  %1447 = vmatpush1.msra.mxu0 0.0
  %1448 = vmatprep.subr.mxu0 0.0
  %1449 = vmatpush1.msra.mxu0 0.0
  %1450 = vmatprep.subr.mxu0 0.0
  %1451 = vmatpush1.msra.mxu0 0.0
  %1452 = vmatprep.subr.mxu0 0.0
  %1453 = vmatpush1.msra.mxu0 0.0
  %1454 = vmatprep.mubr.f32.mxu0 0.0
  %1455 = vmatmul.mubr.f32.gmra.mrb[0].mxu0 %v1037
  %v1456 = vpop.f32.mrb[0].mxu0
  %v1457 = vadd.f32 %v1350, %v1456
  %v1458 = vpop.f32.mrb[0].mxu0
  %v1459 = vadd.f32 %v1352, %v1458
  %1460 = vmatprep.mubr.f32.mxu0 0.0
  %1461 = vmatmul.mubr.f32.gmra.mrb[0].mxu0 %v1040
  %v1462 = vpop.f32.mrb[0].mxu0
  %v1463 = vadd.f32 %v1356, %v1462
  %v1464 = vpop.f32.mrb[0].mxu0
  %v1465 = vadd.f32 %v1358, %v1464
  %1466 = vmatprep.mubr.f32.mxu0 0.0
  %1467 = vmatmul.mubr.f32.gmra.mrb[0].mxu0 %v1043
  %v1468 = vpop.f32.mrb[0].mxu0
  %v1469 = vadd.f32 %v1362, %v1468
  %v1470 = vpop.f32.mrb[0].mxu0
  %v1471 = vadd.f32 %v1364, %v1470
  %1472 = vmatprep.mubr.f32.mxu0 0.0
  %1473 = vmatmul.mubr.f32.gmra.mrb[0].mxu0 %v1046
  %v1474 = vpop.f32.mrb[0].mxu0
  %v1475 = vadd.f32 %v1368, %v1474
  %v1476 = vpop.f32.mrb[0].mxu0
  %v1477 = vadd.f32 %v1370, %v1476
  %1478 = vmatprep.mubr.f32.mxu0 0.0
  %1479 = vmatmul.mubr.f32.gmra.mrb[0].mxu0 %v1049
  %v1480 = vpop.f32.mrb[0].mxu0
  %v1481 = vadd.f32 %v1374, %v1480
  %v1482 = vpop.f32.mrb[0].mxu0
  %v1483 = vadd.f32 %v1376, %v1482
  %1484 = vmatprep.mubr.f32.mxu0 0.0
  %1485 = vmatmul.mubr.f32.gmra.mrb[0].mxu0 %v1052
  %v1486 = vpop.f32.mrb[0].mxu0
  %v1487 = vadd.f32 %v1380, %v1486
  %v1488 = vpop.f32.mrb[0].mxu0
  %v1489 = vadd.f32 %v1382, %v1488
  %1490 = vmatprep.mubr.f32.mxu0 0.0
  %1491 = vmatmul.mubr.f32.gmra.mrb[0].mxu0 %v1055
  %v1492 = vpop.f32.mrb[0].mxu0
  %v1493 = vadd.f32 %v1386, %v1492
  %v1494 = vpop.f32.mrb[0].mxu0
  %v1495 = vadd.f32 %v1388, %v1494
  %1496 = vdwg.mxu0
  %1497 = vst [vmem:[#allocation2 + $0xe0] sm:$0xff] %v1243
  %1498 = vst [vmem:[#allocation2 + $0xe8] sm:$0xff] %v1245
  %1499 = vst [vmem:[#allocation2 + $0xf0] sm:$0xff] %v1457
  %1500 = vst [vmem:[#allocation2 + $0xf8] sm:$0xff] %v1459
  %1501 = vst [vmem:[#allocation2 + $0x100] sm:$0xff] %v1249
  %1502 = vst [vmem:[#allocation2 + $0x108] sm:$0xff] %v1251
  %1503 = vst [vmem:[#allocation2 + $0x110] sm:$0xff] %v1463
  %1504 = vst [vmem:[#allocation2 + $0x118] sm:$0xff] %v1465
  %1505 = vst [vmem:[#allocation2 + $0x120] sm:$0xff] %v1255
  %1506 = vst [vmem:[#allocation2 + $0x128] sm:$0xff] %v1257
  %1507 = vst [vmem:[#allocation2 + $0x130] sm:$0xff] %v1469
  %1508 = vst [vmem:[#allocation2 + $0x138] sm:$0xff] %v1471
  %1509 = vst [vmem:[#allocation2 + $0x140] sm:$0xff] %v1261
  %1510 = vst [vmem:[#allocation2 + $0x148] sm:$0xff] %v1263
  %1511 = vst [vmem:[#allocation2 + $0x150] sm:$0xff] %v1475
  %1512 = vst [vmem:[#allocation2 + $0x158] sm:$0xff] %v1477
  %1513 = vst [vmem:[#allocation2 + $0x160] sm:$0xff] %v1267
  %1514 = vst [vmem:[#allocation2 + $0x168] sm:$0xff] %v1269
  %1515 = vst [vmem:[#allocation2 + $0x170] sm:$0xff] %v1481
  %1516 = vst [vmem:[#allocation2 + $0x178] sm:$0xff] %v1483
  %1517 = vst [vmem:[#allocation2 + $0x180] sm:$0xff] %v1273
  %1518 = vst [vmem:[#allocation2 + $0x188] sm:$0xff] %v1275
  %1519 = vst [vmem:[#allocation2 + $0x190] sm:$0xff] %v1487
  %1520 = vst [vmem:[#allocation2 + $0x198] sm:$0xff] %v1489
  %1521 = vst [vmem:[#allocation2 + $0x1a0] sm:$0xff] %v1279
  %1522 = vst [vmem:[#allocation2 + $0x1a8] sm:$0xff] %v1281
  %1523 = vst [vmem:[#allocation2 + $0x1b0] sm:$0xff] %v1493
  %1524 = vst [vmem:[#allocation2 + $0x1b8] sm:$0xff] %v1495
  %v1525 = vld [vmem:[%s0 + $0x150] sm:$0xff]
  %v1526 = vld [vmem:[%s0 + $0x158] sm:$0xff]
  %v1527 = vld [vmem:[%s0 + $0x160] sm:$0xff]
  %v1528 = vld [vmem:[%s0 + $0x168] sm:$0xff]
  %v1529 = vld [vmem:[%s0 + $0x170] sm:$0xff]
  %v1530 = vld [vmem:[%s0 + $0x178] sm:$0xff]
  %v1531 = vld [vmem:[%s0 + $0x180] sm:$0xff]
  %v1532 = vld [vmem:[%s0 + $0x188] sm:$0xff]
  %v1533 = vld [vmem:[%s0 + $0x190] sm:$0xff]
  %v1534 = vld [vmem:[%s0 + $0x198] sm:$0xff]
  %v1535 = vld [vmem:[%s0 + $0x1a0] sm:$0xff]
  %v1536 = vld [vmem:[%s0 + $0x1a8] sm:$0xff]
  %v1537 = vld [vmem:[%s0 + $0x1b0] sm:$0xff]
  %v1538 = vld [vmem:[%s0 + $0x1b8] sm:$0xff]
  %v1539 = vld [vmem:[%s0 + $0x1c0] sm:$0xff]
  %v1540 = vld [vmem:[%s0 + $0x1c8] sm:$0xff]
  %v1541 = vld [vmem:[%s0 + $0x1d0] sm:$0xff]
  %v1542 = vld [vmem:[%s0 + $0x1d8] sm:$0xff]
  %v1543 = vld [vmem:[%s0 + $0x1e0] sm:$0xff]
  %v1544 = vld [vmem:[%s0 + $0x1e8] sm:$0xff]
  %v1545 = vld [vmem:[%s0 + $0x1f0] sm:$0xff]
  %v1546 = vld [vmem:[%s1] sm:$0xff]
  %v1547 = vld [vmem:[%s1 + $0x8] sm:$0xff]
  %v1548 = vld [vmem:[%s1 + $0x10] sm:$0xff]
  %v1549 = vld [vmem:[%s1 + $0x18] sm:$0xff]
  %v1550 = vld [vmem:[%s1 + $0x20] sm:$0xff]
  %v1551 = vld [vmem:[%s1 + $0x28] sm:$0xff]
  %v1552 = vld [vmem:[%s1 + $0x30] sm:$0xff]
  %v1553 = vld [vmem:[%s1 + $0x38] sm:$0xff]
  %v1554 = vld [vmem:[%s1 + $0x40] sm:$0xff]
  %v1555 = vld [vmem:[%s1 + $0x48] sm:$0xff]
  %v1556 = vld [vmem:[%s1 + $0x50] sm:$0xff]
  %v1557 = vld [vmem:[%s1 + $0x58] sm:$0xff]
  %v1558 = vld [vmem:[%s1 + $0x60] sm:$0xff]
  %v1559 = vld [vmem:[%s1 + $0x68] sm:$0xff]
  %v1560 = vld [vmem:[%s1 + $0x70] sm:$0xff]
  %v1561 = vld [vmem:[%s1 + $0x78] sm:$0xff]
  %v1562 = vld [vmem:[%s1 + $0x80] sm:$0xff]
  %v1563 = vld [vmem:[%s1 + $0x88] sm:$0xff]
  %v1564 = vld [vmem:[%s1 + $0x90] sm:$0xff]
  %v1565 = vld [vmem:[%s1 + $0x98] sm:$0xff]
  %v1566 = vld [vmem:[%s1 + $0xa0] sm:$0xff]
  %v1567 = vld [vmem:[%s1 + $0xa8] sm:$0xff]
  %v1568 = vld [vmem:[%s1 + $0xb0] sm:$0xff]
  %v1569 = vld [vmem:[%s1 + $0xb8] sm:$0xff]
  %v1570 = vld [vmem:[%s1 + $0xc0] sm:$0xff]
  %v1571 = vld [vmem:[%s1 + $0xc8] sm:$0xff]
  %v1572 = vld [vmem:[%s1 + $0xd0] sm:$0xff]
  %v1573 = vld [vmem:[%s1 + $0xd8] sm:$0xff]
  %v1574 = vld [vmem:[%s1 + $0xe0] sm:$0xff]
  %v1575 = vld [vmem:[%s1 + $0xe8] sm:$0xff]
  %v1576 = vld [vmem:[%s1 + $0xf0] sm:$0xff]
  %v1577 = vld [vmem:[%s1 + $0xf8] sm:$0xff]
  %v1578 = vld [vmem:[%s1 + $0x100] sm:$0xff]
  %v1579 = vld [vmem:[%s1 + $0x108] sm:$0xff]
  %v1580 = vld [vmem:[%s1 + $0x110] sm:$0xff]
  %v1581 = vld [vmem:[%s1 + $0x118] sm:$0xff]
  %v1582 = vld [vmem:[%s1 + $0x120] sm:$0xff]
  %v1583 = vld [vmem:[%s1 + $0x128] sm:$0xff]
  %v1584 = vld [vmem:[%s1 + $0x130] sm:$0xff]
  %v1585 = vld [vmem:[%s1 + $0x138] sm:$0xff]
  %v1586 = vld [vmem:[%s1 + $0x140] sm:$0xff]
  %v1587 = vld [vmem:[%s1 + $0x148] sm:$0xff]
  %v1588 = vld [vmem:[%s1 + $0x150] sm:$0xff]
  %v1589 = vld [vmem:[%s1 + $0x158] sm:$0xff]
  %v1590 = vld [vmem:[%s1 + $0x160] sm:$0xff]
  %v1591 = vld [vmem:[%s1 + $0x168] sm:$0xff]
  %v1592 = vld [vmem:[%s1 + $0x170] sm:$0xff]
  %v1593 = vld [vmem:[%s1 + $0x178] sm:$0xff]
  %v1594 = vld [vmem:[%s1 + $0x180] sm:$0xff]
  %v1595 = vld [vmem:[%s1 + $0x188] sm:$0xff]
  %v1596 = vld [vmem:[%s1 + $0x190] sm:$0xff]
  %v1597 = vld [vmem:[%s1 + $0x198] sm:$0xff]
  %v1598 = vld [vmem:[%s1 + $0x1a0] sm:$0xff]
  %v1599 = vld [vmem:[%s1 + $0x1a8] sm:$0xff]
  %v1600 = vld [vmem:[%s1 + $0x1b0] sm:$0xff]
  %v1601 = vld [vmem:[%s1 + $0x1b8] sm:$0xff]
  %v1602 = vld [vmem:[%s1 + $0x1c0] sm:$0xff]
  %v1603 = vld [vmem:[%s1 + $0x1c8] sm:$0xff]
  %v1604 = vld [vmem:[%s1 + $0x1d0] sm:$0xff]
  %v1605 = vld [vmem:[%s1 + $0x1d8] sm:$0xff]
  %v1606 = vld [vmem:[%s1 + $0x1e0] sm:$0xff]
  %v1607 = vld [vmem:[%s1 + $0x1e8] sm:$0xff]
  %v1608 = vld [vmem:[%s1 + $0x1f0] sm:$0xff]
  %v1609 = vld [vmem:[%s1 + $0x1f8] sm:$0xff]
  %v1610 = vld [vmem:[%s1 + $0x200] sm:$0xff]
  %v1611 = vld [vmem:[%s1 + $0x208] sm:$0xff]
  %v1612 = vld [vmem:[%s1 + $0x210] sm:$0xff]
  %v1613 = vld [vmem:[%s1 + $0x218] sm:$0xff]
  %v1614 = vld [vmem:[%s1 + $0x220] sm:$0xff]
  %v1615 = vld [vmem:[%s1 + $0x228] sm:$0xff]
  %v1616 = vld [vmem:[%s1 + $0x230] sm:$0xff]
  %v1617 = vld [vmem:[%s1 + $0x238] sm:$0xff]
  %v1618 = vld [vmem:[%s1 + $0x240] sm:$0xff]
  %v1619 = vld [vmem:[%s1 + $0x248] sm:$0xff]
  %v1620 = vld [vmem:[%s1 + $0x250] sm:$0xff]
  %v1621 = vld [vmem:[%s1 + $0x258] sm:$0xff]
  %v1622 = vld [vmem:[%s1 + $0x260] sm:$0xff]
  %v1623 = vld [vmem:[%s1 + $0x268] sm:$0xff]
  %v1624 = vld [vmem:[%s1 + $0x270] sm:$0xff]
  %v1625 = vld [vmem:[%s1 + $0x278] sm:$0xff]
  %v1626 = vld [vmem:[%s1 + $0x280] sm:$0xff]
  %v1627 = vld [vmem:[%s1 + $0x288] sm:$0xff]
  %v1628 = vld [vmem:[%s1 + $0x290] sm:$0xff]
  %v1629 = vld [vmem:[%s1 + $0x298] sm:$0xff]
  %v1630 = vld [vmem:[%s1 + $0x2a0] sm:$0xff]
  %v1631 = vld [vmem:[%s1 + $0x2a8] sm:$0xff]
  %v1632 = vld [vmem:[%s1 + $0x2b0] sm:$0xff]
  %v1633 = vld [vmem:[%s1 + $0x2b8] sm:$0xff]
  %v1634 = vld [vmem:[%s1 + $0x2c0] sm:$0xff]
  %v1635 = vld [vmem:[%s1 + $0x2c8] sm:$0xff]
  %v1636 = vld [vmem:[%s1 + $0x2d0] sm:$0xff]
  %v1637 = vld [vmem:[%s1 + $0x2d8] sm:$0xff]
  %v1638 = vld [vmem:[%s1 + $0x2e0] sm:$0xff]
  %v1639 = vld [vmem:[%s1 + $0x2e8] sm:$0xff]
  %v1640 = vld [vmem:[%s1 + $0x2f0] sm:$0xff]
  %v1641 = vld [vmem:[%s1 + $0x2f8] sm:$0xff]
  %v1642 = vld [vmem:[%s1 + $0x300] sm:$0xff]
  %v1643 = vld [vmem:[%s1 + $0x308] sm:$0xff]
  %v1644 = vld [vmem:[%s1 + $0x310] sm:$0xff]
  %v1645 = vld [vmem:[%s1 + $0x318] sm:$0xff]
  %v1646 = vld [vmem:[%s1 + $0x320] sm:$0xff]
  %v1647 = vld [vmem:[%s1 + $0x328] sm:$0xff]
  %v1648 = vld [vmem:[%s1 + $0x330] sm:$0xff]
  %v1649 = vld [vmem:[%s1 + $0x338] sm:$0xff]
  %v1650 = vld [vmem:[%s1 + $0x340] sm:$0xff]
  %v1651 = vld [vmem:[%s1 + $0x348] sm:$0xff]
  %v1652 = vld [vmem:[%s1 + $0x350] sm:$0xff]
  %v1653 = vld [vmem:[%s1 + $0x358] sm:$0xff]
  %v1654 = vld [vmem:[%s1 + $0x360] sm:$0xff]
  %v1655 = vld [vmem:[%s1 + $0x368] sm:$0xff]
  %v1656 = vld [vmem:[%s1 + $0x370] sm:$0xff]
  %v1657 = vld [vmem:[%s1 + $0x378] sm:$0xff]
  %v1658 = vld [vmem:[%s1 + $0x380] sm:$0xff]
  %v1659 = vld [vmem:[%s1 + $0x388] sm:$0xff]
  %v1660 = vld [vmem:[%s1 + $0x390] sm:$0xff]
  %v1661 = vld [vmem:[%s1 + $0x398] sm:$0xff]
  %v1662 = vld [vmem:[%s1 + $0x3a0] sm:$0xff]
  %v1663 = vld [vmem:[%s1 + $0x3a8] sm:$0xff]
  %v1664 = vld [vmem:[%s1 + $0x3b0] sm:$0xff]
  %v1665 = vld [vmem:[%s1 + $0x3b8] sm:$0xff]
  %v1666 = vld [vmem:[%s1 + $0x3c0] sm:$0xff]
  %v1667 = vld [vmem:[%s1 + $0x3c8] sm:$0xff]
  %v1668 = vld [vmem:[%s1 + $0x3d0] sm:$0xff]
  %v1669 = vld [vmem:[%s1 + $0x3d8] sm:$0xff]
  %v1670 = vld [vmem:[%s1 + $0x3e0] sm:$0xff]
  %v1671 = vld [vmem:[%s1 + $0x3e8] sm:$0xff]
  %v1672 = vld [vmem:[%s1 + $0x3f0] sm:$0xff]
  %v1673 = vld [vmem:[%s1 + $0x3f8] sm:$0xff]
  %v1674 = vld [vmem:[%s1 + $0x400] sm:$0xff]
  %v1675 = vld [vmem:[%s1 + $0x408] sm:$0xff]
  %v1676 = vld [vmem:[%s1 + $0x410] sm:$0xff]
  %v1677 = vld [vmem:[%s1 + $0x418] sm:$0xff]
  %v1678 = vld [vmem:[%s1 + $0x420] sm:$0xff]
  %v1679 = vld [vmem:[%s1 + $0x428] sm:$0xff]
  %v1680 = vld [vmem:[%s1 + $0x430] sm:$0xff]
  %v1681 = vld [vmem:[%s1 + $0x438] sm:$0xff]
  %v1682 = vld [vmem:[%s1 + $0x440] sm:$0xff]
  %v1683 = vld [vmem:[%s1 + $0x448] sm:$0xff]
  %v1684 = vld [vmem:[%s1 + $0x450] sm:$0xff]
  %v1685 = vld [vmem:[%s1 + $0x458] sm:$0xff]
  %v1686 = vld [vmem:[%s1 + $0x460] sm:$0xff]
  %v1687 = vld [vmem:[%s1 + $0x468] sm:$0xff]
  %v1688 = vld [vmem:[%s1 + $0x470] sm:$0xff]
  %v1689 = vld [vmem:[%s1 + $0x478] sm:$0xff]
  %v1690 = vld [vmem:[%s1 + $0x480] sm:$0xff]
  %v1691 = vld [vmem:[%s1 + $0x488] sm:$0xff]
  %v1692 = vld [vmem:[%s1 + $0x490] sm:$0xff]
  %v1693 = vld [vmem:[%s1 + $0x498] sm:$0xff]
  %v1694 = vld [vmem:[%s1 + $0x4a0] sm:$0xf]
  %v1695 = vld [vmem:[%s1 + $0x4a8] sm:$0xf]
  %v1696 = vld [vmem:[%s1 + $0x4b0] sm:$0xf]
  %v1697 = vld [vmem:[%s1 + $0x4b8] sm:$0xf]
  %v1698 = vld [vmem:[%s327] ss:$8 sm:$0xf]
  %v1700 = vlaneseq
  %v1701 = vshrl.u32 %v1700, 7
  %v1702 = vsub.s32 0, %v1701
  %v1703 = vrot.slane %v1698, %v1702
  %v1704 = vlaneseq
  %v1705 = vshrl.u32 %v1704, 7
  %v1706 = vsub.s32 1, %v1705
  %v1707 = vrot.slane %v1698, %v1706
  %v1708 = vlaneseq
  %v1709 = vshrl.u32 %v1708, 7
  %v1710 = vsub.s32 2, %v1709
  %v1711 = vrot.slane %v1698, %v1710
  %v1712 = vlaneseq
  %v1713 = vshrl.u32 %v1712, 7
  %v1714 = vsub.s32 3, %v1713
  %v1715 = vrot.slane %v1698, %v1714
  %v1721 = vsel %vm350, %v1527, 0
  %v1724 = vsel %vm350, %v1530, 0
  %v1727 = vsel %vm350, %v1533, 0
  %v1730 = vsel %vm350, %v1536, 0
  %v1733 = vsel %vm350, %v1539, 0
  %v1736 = vsel %vm350, %v1542, 0
  %v1739 = vsel %vm350, %v1545, 0
  %v1742 = vsel %vm372, %v1694, 0
  %v1745 = vsel %vm372, %v1695, 0
  %v1748 = vsel %vm372, %v1696, 0
  %v1751 = vsel %vm372, %v1697, 0
  %1753 = vmatprep.subr.mxu0 %v1547
  %1754 = vmatpush1.msra.mxu0 %v1546
  %1755 = vmatprep.subr.mxu0 %v1551
  %1756 = vmatpush1.msra.mxu0 %v1550
  %1757 = vmatprep.subr.mxu0 %v1555
  %1758 = vmatpush1.msra.mxu0 %v1554
  %1759 = vmatprep.subr.mxu0 %v1559
  %1760 = vmatpush1.msra.mxu0 %v1558
  %1761 = vmatprep.subr.mxu0 %v1563
  %1762 = vmatpush1.msra.mxu0 %v1562
  %1763 = vmatprep.subr.mxu0 %v1567
  %1764 = vmatpush1.msra.mxu0 %v1566
  %1765 = vmatprep.subr.mxu0 %v1571
  %1766 = vmatpush1.msra.mxu0 %v1570
  %1767 = vmatprep.subr.mxu0 %v1575
  %1768 = vmatpush1.msra.mxu0 %v1574
  %1769 = vmatprep.subr.mxu0 %v1579
  %1770 = vmatpush1.msra.mxu0 %v1578
  %1771 = vmatprep.subr.mxu0 %v1583
  %1772 = vmatpush1.msra.mxu0 %v1582
  %1773 = vmatprep.subr.mxu0 %v1587
  %1774 = vmatpush1.msra.mxu0 %v1586
  %1775 = vmatprep.subr.mxu0 %v1591
  %1776 = vmatpush1.msra.mxu0 %v1590
  %1777 = vmatprep.subr.mxu0 %v1595
  %1778 = vmatpush1.msra.mxu0 %v1594
  %1779 = vmatprep.subr.mxu0 %v1599
  %1780 = vmatpush1.msra.mxu0 %v1598
  %1781 = vmatprep.subr.mxu0 %v1603
  %1782 = vmatpush1.msra.mxu0 %v1602
  %1783 = vmatprep.subr.mxu0 %v1607
  %1784 = vmatpush1.msra.mxu0 %v1606
  %1785 = vmatprep.subr.mxu0 %v1611
  %1786 = vmatpush1.msra.mxu0 %v1610
  %1787 = vmatprep.subr.mxu0 %v1615
  %1788 = vmatpush1.msra.mxu0 %v1614
  %1789 = vmatprep.subr.mxu0 %v1619
  %1790 = vmatpush1.msra.mxu0 %v1618
  %1791 = vmatprep.subr.mxu0 %v1623
  %1792 = vmatpush1.msra.mxu0 %v1622
  %1793 = vmatprep.subr.mxu0 %v1627
  %1794 = vmatpush1.msra.mxu0 %v1626
  %1795 = vmatprep.subr.mxu0 %v1631
  %1796 = vmatpush1.msra.mxu0 %v1630
  %1797 = vmatprep.subr.mxu0 %v1635
  %1798 = vmatpush1.msra.mxu0 %v1634
  %1799 = vmatprep.subr.mxu0 %v1639
  %1800 = vmatpush1.msra.mxu0 %v1638
  %1801 = vmatprep.subr.mxu0 %v1643
  %1802 = vmatpush1.msra.mxu0 %v1642
  %1803 = vmatprep.subr.mxu0 %v1647
  %1804 = vmatpush1.msra.mxu0 %v1646
  %1805 = vmatprep.subr.mxu0 %v1651
  %1806 = vmatpush1.msra.mxu0 %v1650
  %1807 = vmatprep.subr.mxu0 %v1655
  %1808 = vmatpush1.msra.mxu0 %v1654
  %1809 = vmatprep.subr.mxu0 %v1659
  %1810 = vmatpush1.msra.mxu0 %v1658
  %1811 = vmatprep.subr.mxu0 %v1663
  %1812 = vmatpush1.msra.mxu0 %v1662
  %1813 = vmatprep.subr.mxu0 %v1667
  %1814 = vmatpush1.msra.mxu0 %v1666
  %1815 = vmatprep.subr.mxu0 %v1671
  %1816 = vmatpush1.msra.mxu0 %v1670
  %1817 = vmatprep.mubr.f32.mxu0 %v1526
  %1818 = vmatmul.mubr.f32.gmra.mrb[0].mxu0 %v1525
  %v1819 = vpop.f32.mrb[0].mxu0
  %v1820 = vadd.f32 %v1703, %v1819
  %v1821 = vpop.f32.mrb[0].mxu0
  %v1822 = vadd.f32 %v1707, %v1821
  %1823 = vmatprep.mubr.f32.mxu0 %v1529
  %1824 = vmatmul.mubr.f32.gmra.mrb[0].mxu0 %v1528
  %v1825 = vpop.f32.mrb[0].mxu0
  %v1826 = vadd.f32 %v1703, %v1825
  %v1827 = vpop.f32.mrb[0].mxu0
  %v1828 = vadd.f32 %v1707, %v1827
  %1829 = vmatprep.mubr.f32.mxu0 %v1532
  %1830 = vmatmul.mubr.f32.gmra.mrb[0].mxu0 %v1531
  %v1831 = vpop.f32.mrb[0].mxu0
  %v1832 = vadd.f32 %v1703, %v1831
  %v1833 = vpop.f32.mrb[0].mxu0
  %v1834 = vadd.f32 %v1707, %v1833
  %1835 = vmatprep.mubr.f32.mxu0 %v1535
  %1836 = vmatmul.mubr.f32.gmra.mrb[0].mxu0 %v1534
  %v1837 = vpop.f32.mrb[0].mxu0
  %v1838 = vadd.f32 %v1703, %v1837
  %v1839 = vpop.f32.mrb[0].mxu0
  %v1840 = vadd.f32 %v1707, %v1839
  %1841 = vmatprep.mubr.f32.mxu0 %v1538
  %1842 = vmatmul.mubr.f32.gmra.mrb[0].mxu0 %v1537
  %v1843 = vpop.f32.mrb[0].mxu0
  %v1844 = vadd.f32 %v1703, %v1843
  %v1845 = vpop.f32.mrb[0].mxu0
  %v1846 = vadd.f32 %v1707, %v1845
  %1847 = vmatprep.mubr.f32.mxu0 %v1541
  %1848 = vmatmul.mubr.f32.gmra.mrb[0].mxu0 %v1540
  %v1849 = vpop.f32.mrb[0].mxu0
  %v1850 = vadd.f32 %v1703, %v1849
  %v1851 = vpop.f32.mrb[0].mxu0
  %v1852 = vadd.f32 %v1707, %v1851
  %1853 = vmatprep.mubr.f32.mxu0 %v1544
  %1854 = vmatmul.mubr.f32.gmra.mrb[0].mxu0 %v1543
  %v1855 = vpop.f32.mrb[0].mxu0
  %v1856 = vadd.f32 %v1703, %v1855
  %v1857 = vpop.f32.mrb[0].mxu0
  %v1858 = vadd.f32 %v1707, %v1857
  %1859 = vdwg.mxu0
  %1860 = vmatprep.subr.mxu0 %v1675
  %1861 = vmatpush1.msra.mxu0 %v1674
  %1862 = vmatprep.subr.mxu0 %v1679
  %1863 = vmatpush1.msra.mxu0 %v1678
  %1864 = vmatprep.subr.mxu0 %v1683
  %1865 = vmatpush1.msra.mxu0 %v1682
  %1866 = vmatprep.subr.mxu0 %v1687
  %1867 = vmatpush1.msra.mxu0 %v1686
  %1868 = vmatprep.subr.mxu0 %v1691
  %1869 = vmatpush1.msra.mxu0 %v1690
  %1870 = vmatprep.subr.mxu0 %v1745
  %1871 = vmatpush1.msra.mxu0 %v1742
  %1872 = vmatprep.subr.mxu0 0.0
  %1873 = vmatpush1.msra.mxu0 0.0
  %1874 = vmatprep.subr.mxu0 0.0
  %1875 = vmatpush1.msra.mxu0 0.0
  %1876 = vmatprep.subr.mxu0 0.0
  %1877 = vmatpush1.msra.mxu0 0.0
  %1878 = vmatprep.subr.mxu0 0.0
  %1879 = vmatpush1.msra.mxu0 0.0
  %1880 = vmatprep.subr.mxu0 0.0
  %1881 = vmatpush1.msra.mxu0 0.0
  %1882 = vmatprep.subr.mxu0 0.0
  %1883 = vmatpush1.msra.mxu0 0.0
  %1884 = vmatprep.subr.mxu0 0.0
  %1885 = vmatpush1.msra.mxu0 0.0
  %1886 = vmatprep.subr.mxu0 0.0
  %1887 = vmatpush1.msra.mxu0 0.0
  %1888 = vmatprep.subr.mxu0 0.0
  %1889 = vmatpush1.msra.mxu0 0.0
  %1890 = vmatprep.subr.mxu0 0.0
  %1891 = vmatpush1.msra.mxu0 0.0
  %1892 = vmatprep.subr.mxu0 0.0
  %1893 = vmatpush1.msra.mxu0 0.0
  %1894 = vmatprep.subr.mxu0 0.0
  %1895 = vmatpush1.msra.mxu0 0.0
  %1896 = vmatprep.subr.mxu0 0.0
  %1897 = vmatpush1.msra.mxu0 0.0
  %1898 = vmatprep.subr.mxu0 0.0
  %1899 = vmatpush1.msra.mxu0 0.0
  %1900 = vmatprep.subr.mxu0 0.0
  %1901 = vmatpush1.msra.mxu0 0.0
  %1902 = vmatprep.subr.mxu0 0.0
  %1903 = vmatpush1.msra.mxu0 0.0
  %1904 = vmatprep.subr.mxu0 0.0
  %1905 = vmatpush1.msra.mxu0 0.0
  %1906 = vmatprep.subr.mxu0 0.0
  %1907 = vmatpush1.msra.mxu0 0.0
  %1908 = vmatprep.subr.mxu0 0.0
  %1909 = vmatpush1.msra.mxu0 0.0
  %1910 = vmatprep.subr.mxu0 0.0
  %1911 = vmatpush1.msra.mxu0 0.0
  %1912 = vmatprep.subr.mxu0 0.0
  %1913 = vmatpush1.msra.mxu0 0.0
  %1914 = vmatprep.subr.mxu0 0.0
  %1915 = vmatpush1.msra.mxu0 0.0
  %1916 = vmatprep.subr.mxu0 0.0
  %1917 = vmatpush1.msra.mxu0 0.0
  %1918 = vmatprep.subr.mxu0 0.0
  %1919 = vmatpush1.msra.mxu0 0.0
  %1920 = vmatprep.subr.mxu0 0.0
  %1921 = vmatpush1.msra.mxu0 0.0
  %1922 = vmatprep.subr.mxu0 0.0
  %1923 = vmatpush1.msra.mxu0 0.0
  %1924 = vmatprep.mubr.f32.mxu0 0.0
  %1925 = vmatmul.mubr.f32.gmra.mrb[0].mxu0 %v1721
  %v1926 = vpop.f32.mrb[0].mxu0
  %v1927 = vadd.f32 %v1820, %v1926
  %v1928 = vpop.f32.mrb[0].mxu0
  %v1929 = vadd.f32 %v1822, %v1928
  %1930 = vmatprep.mubr.f32.mxu0 0.0
  %1931 = vmatmul.mubr.f32.gmra.mrb[0].mxu0 %v1724
  %v1932 = vpop.f32.mrb[0].mxu0
  %v1933 = vadd.f32 %v1826, %v1932
  %v1934 = vpop.f32.mrb[0].mxu0
  %v1935 = vadd.f32 %v1828, %v1934
  %1936 = vmatprep.mubr.f32.mxu0 0.0
  %1937 = vmatmul.mubr.f32.gmra.mrb[0].mxu0 %v1727
  %v1938 = vpop.f32.mrb[0].mxu0
  %v1939 = vadd.f32 %v1832, %v1938
  %v1940 = vpop.f32.mrb[0].mxu0
  %v1941 = vadd.f32 %v1834, %v1940
  %1942 = vmatprep.mubr.f32.mxu0 0.0
  %1943 = vmatmul.mubr.f32.gmra.mrb[0].mxu0 %v1730
  %v1944 = vpop.f32.mrb[0].mxu0
  %v1945 = vadd.f32 %v1838, %v1944
  %v1946 = vpop.f32.mrb[0].mxu0
  %v1947 = vadd.f32 %v1840, %v1946
  %1948 = vmatprep.mubr.f32.mxu0 0.0
  %1949 = vmatmul.mubr.f32.gmra.mrb[0].mxu0 %v1733
  %v1950 = vpop.f32.mrb[0].mxu0
  %v1951 = vadd.f32 %v1844, %v1950
  %v1952 = vpop.f32.mrb[0].mxu0
  %v1953 = vadd.f32 %v1846, %v1952
  %1954 = vmatprep.mubr.f32.mxu0 0.0
  %1955 = vmatmul.mubr.f32.gmra.mrb[0].mxu0 %v1736
  %v1956 = vpop.f32.mrb[0].mxu0
  %v1957 = vadd.f32 %v1850, %v1956
  %v1958 = vpop.f32.mrb[0].mxu0
  %v1959 = vadd.f32 %v1852, %v1958
  %1960 = vmatprep.mubr.f32.mxu0 0.0
  %1961 = vmatmul.mubr.f32.gmra.mrb[0].mxu0 %v1739
  %v1962 = vpop.f32.mrb[0].mxu0
  %v1963 = vadd.f32 %v1856, %v1962
  %v1964 = vpop.f32.mrb[0].mxu0
  %v1965 = vadd.f32 %v1858, %v1964
  %1966 = vdwg.mxu0
  %1967 = vmatprep.subr.mxu0 %v1549
  %1968 = vmatpush1.msra.mxu0 %v1548
  %1969 = vmatprep.subr.mxu0 %v1553
  %1970 = vmatpush1.msra.mxu0 %v1552
  %1971 = vmatprep.subr.mxu0 %v1557
  %1972 = vmatpush1.msra.mxu0 %v1556
  %1973 = vmatprep.subr.mxu0 %v1561
  %1974 = vmatpush1.msra.mxu0 %v1560
  %1975 = vmatprep.subr.mxu0 %v1565
  %1976 = vmatpush1.msra.mxu0 %v1564
  %1977 = vmatprep.subr.mxu0 %v1569
  %1978 = vmatpush1.msra.mxu0 %v1568
  %1979 = vmatprep.subr.mxu0 %v1573
  %1980 = vmatpush1.msra.mxu0 %v1572
  %1981 = vmatprep.subr.mxu0 %v1577
  %1982 = vmatpush1.msra.mxu0 %v1576
  %1983 = vmatprep.subr.mxu0 %v1581
  %1984 = vmatpush1.msra.mxu0 %v1580
  %1985 = vmatprep.subr.mxu0 %v1585
  %1986 = vmatpush1.msra.mxu0 %v1584
  %1987 = vmatprep.subr.mxu0 %v1589
  %1988 = vmatpush1.msra.mxu0 %v1588
  %1989 = vmatprep.subr.mxu0 %v1593
  %1990 = vmatpush1.msra.mxu0 %v1592
  %1991 = vmatprep.subr.mxu0 %v1597
  %1992 = vmatpush1.msra.mxu0 %v1596
  %1993 = vmatprep.subr.mxu0 %v1601
  %1994 = vmatpush1.msra.mxu0 %v1600
  %1995 = vmatprep.subr.mxu0 %v1605
  %1996 = vmatpush1.msra.mxu0 %v1604
  %1997 = vmatprep.subr.mxu0 %v1609
  %1998 = vmatpush1.msra.mxu0 %v1608
  %1999 = vmatprep.subr.mxu0 %v1613
  %2000 = vmatpush1.msra.mxu0 %v1612
  %2001 = vmatprep.subr.mxu0 %v1617
  %2002 = vmatpush1.msra.mxu0 %v1616
  %2003 = vmatprep.subr.mxu0 %v1621
  %2004 = vmatpush1.msra.mxu0 %v1620
  %2005 = vmatprep.subr.mxu0 %v1625
  %2006 = vmatpush1.msra.mxu0 %v1624
  %2007 = vmatprep.subr.mxu0 %v1629
  %2008 = vmatpush1.msra.mxu0 %v1628
  %2009 = vmatprep.subr.mxu0 %v1633
  %2010 = vmatpush1.msra.mxu0 %v1632
  %2011 = vmatprep.subr.mxu0 %v1637
  %2012 = vmatpush1.msra.mxu0 %v1636
  %2013 = vmatprep.subr.mxu0 %v1641
  %2014 = vmatpush1.msra.mxu0 %v1640
  %2015 = vmatprep.subr.mxu0 %v1645
  %2016 = vmatpush1.msra.mxu0 %v1644
  %2017 = vmatprep.subr.mxu0 %v1649
  %2018 = vmatpush1.msra.mxu0 %v1648
  %2019 = vmatprep.subr.mxu0 %v1653
  %2020 = vmatpush1.msra.mxu0 %v1652
  %2021 = vmatprep.subr.mxu0 %v1657
  %2022 = vmatpush1.msra.mxu0 %v1656
  %2023 = vmatprep.subr.mxu0 %v1661
  %2024 = vmatpush1.msra.mxu0 %v1660
  %2025 = vmatprep.subr.mxu0 %v1665
  %2026 = vmatpush1.msra.mxu0 %v1664
  %2027 = vmatprep.subr.mxu0 %v1669
  %2028 = vmatpush1.msra.mxu0 %v1668
  %2029 = vmatprep.subr.mxu0 %v1673
  %2030 = vmatpush1.msra.mxu0 %v1672
  %2031 = vmatprep.mubr.f32.mxu0 %v1526
  %2032 = vmatmul.mubr.f32.gmra.mrb[0].mxu0 %v1525
  %v2033 = vpop.f32.mrb[0].mxu0
  %v2034 = vadd.f32 %v1711, %v2033
  %v2035 = vpop.f32.mrb[0].mxu0
  %v2036 = vadd.f32 %v1715, %v2035
  %2037 = vmatprep.mubr.f32.mxu0 %v1529
  %2038 = vmatmul.mubr.f32.gmra.mrb[0].mxu0 %v1528
  %v2039 = vpop.f32.mrb[0].mxu0
  %v2040 = vadd.f32 %v1711, %v2039
  %v2041 = vpop.f32.mrb[0].mxu0
  %v2042 = vadd.f32 %v1715, %v2041
  %2043 = vmatprep.mubr.f32.mxu0 %v1532
  %2044 = vmatmul.mubr.f32.gmra.mrb[0].mxu0 %v1531
  %v2045 = vpop.f32.mrb[0].mxu0
  %v2046 = vadd.f32 %v1711, %v2045
  %v2047 = vpop.f32.mrb[0].mxu0
  %v2048 = vadd.f32 %v1715, %v2047
  %2049 = vmatprep.mubr.f32.mxu0 %v1535
  %2050 = vmatmul.mubr.f32.gmra.mrb[0].mxu0 %v1534
  %v2051 = vpop.f32.mrb[0].mxu0
  %v2052 = vadd.f32 %v1711, %v2051
  %v2053 = vpop.f32.mrb[0].mxu0
  %v2054 = vadd.f32 %v1715, %v2053
  %2055 = vmatprep.mubr.f32.mxu0 %v1538
  %2056 = vmatmul.mubr.f32.gmra.mrb[0].mxu0 %v1537
  %v2057 = vpop.f32.mrb[0].mxu0
  %v2058 = vadd.f32 %v1711, %v2057
  %v2059 = vpop.f32.mrb[0].mxu0
  %v2060 = vadd.f32 %v1715, %v2059
  %2061 = vmatprep.mubr.f32.mxu0 %v1541
  %2062 = vmatmul.mubr.f32.gmra.mrb[0].mxu0 %v1540
  %v2063 = vpop.f32.mrb[0].mxu0
  %v2064 = vadd.f32 %v1711, %v2063
  %v2065 = vpop.f32.mrb[0].mxu0
  %v2066 = vadd.f32 %v1715, %v2065
  %2067 = vmatprep.mubr.f32.mxu0 %v1544
  %2068 = vmatmul.mubr.f32.gmra.mrb[0].mxu0 %v1543
  %v2069 = vpop.f32.mrb[0].mxu0
  %v2070 = vadd.f32 %v1711, %v2069
  %v2071 = vpop.f32.mrb[0].mxu0
  %v2072 = vadd.f32 %v1715, %v2071
  %2073 = vdwg.mxu0
  %2074 = vmatprep.subr.mxu0 %v1677
  %2075 = vmatpush1.msra.mxu0 %v1676
  %2076 = vmatprep.subr.mxu0 %v1681
  %2077 = vmatpush1.msra.mxu0 %v1680
  %2078 = vmatprep.subr.mxu0 %v1685
  %2079 = vmatpush1.msra.mxu0 %v1684
  %2080 = vmatprep.subr.mxu0 %v1689
  %2081 = vmatpush1.msra.mxu0 %v1688
  %2082 = vmatprep.subr.mxu0 %v1693
  %2083 = vmatpush1.msra.mxu0 %v1692
  %2084 = vmatprep.subr.mxu0 %v1751
  %2085 = vmatpush1.msra.mxu0 %v1748
  %2086 = vmatprep.subr.mxu0 0.0
  %2087 = vmatpush1.msra.mxu0 0.0
  %2088 = vmatprep.subr.mxu0 0.0
  %2089 = vmatpush1.msra.mxu0 0.0
  %2090 = vmatprep.subr.mxu0 0.0
  %2091 = vmatpush1.msra.mxu0 0.0
  %2092 = vmatprep.subr.mxu0 0.0
  %2093 = vmatpush1.msra.mxu0 0.0
  %2094 = vmatprep.subr.mxu0 0.0
  %2095 = vmatpush1.msra.mxu0 0.0
  %2096 = vmatprep.subr.mxu0 0.0
  %2097 = vmatpush1.msra.mxu0 0.0
  %2098 = vmatprep.subr.mxu0 0.0
  %2099 = vmatpush1.msra.mxu0 0.0
  %2100 = vmatprep.subr.mxu0 0.0
  %2101 = vmatpush1.msra.mxu0 0.0
  %2102 = vmatprep.subr.mxu0 0.0
  %2103 = vmatpush1.msra.mxu0 0.0
  %2104 = vmatprep.subr.mxu0 0.0
  %2105 = vmatpush1.msra.mxu0 0.0
  %2106 = vmatprep.subr.mxu0 0.0
  %2107 = vmatpush1.msra.mxu0 0.0
  %2108 = vmatprep.subr.mxu0 0.0
  %2109 = vmatpush1.msra.mxu0 0.0
  %2110 = vmatprep.subr.mxu0 0.0
  %2111 = vmatpush1.msra.mxu0 0.0
  %2112 = vmatprep.subr.mxu0 0.0
  %2113 = vmatpush1.msra.mxu0 0.0
  %2114 = vmatprep.subr.mxu0 0.0
  %2115 = vmatpush1.msra.mxu0 0.0
  %2116 = vmatprep.subr.mxu0 0.0
  %2117 = vmatpush1.msra.mxu0 0.0
  %2118 = vmatprep.subr.mxu0 0.0
  %2119 = vmatpush1.msra.mxu0 0.0
  %2120 = vmatprep.subr.mxu0 0.0
  %2121 = vmatpush1.msra.mxu0 0.0
  %2122 = vmatprep.subr.mxu0 0.0
  %2123 = vmatpush1.msra.mxu0 0.0
  %2124 = vmatprep.subr.mxu0 0.0
  %2125 = vmatpush1.msra.mxu0 0.0
  %2126 = vmatprep.subr.mxu0 0.0
  %2127 = vmatpush1.msra.mxu0 0.0
  %2128 = vmatprep.subr.mxu0 0.0
  %2129 = vmatpush1.msra.mxu0 0.0
  %2130 = vmatprep.subr.mxu0 0.0
  %2131 = vmatpush1.msra.mxu0 0.0
  %2132 = vmatprep.subr.mxu0 0.0
  %2133 = vmatpush1.msra.mxu0 0.0
  %2134 = vmatprep.subr.mxu0 0.0
  %2135 = vmatpush1.msra.mxu0 0.0
  %2136 = vmatprep.subr.mxu0 0.0
  %2137 = vmatpush1.msra.mxu0 0.0
  %2138 = vmatprep.mubr.f32.mxu0 0.0
  %2139 = vmatmul.mubr.f32.gmra.mrb[0].mxu0 %v1721
  %v2140 = vpop.f32.mrb[0].mxu0
  %v2141 = vadd.f32 %v2034, %v2140
  %v2142 = vpop.f32.mrb[0].mxu0
  %v2143 = vadd.f32 %v2036, %v2142
  %2144 = vmatprep.mubr.f32.mxu0 0.0
  %2145 = vmatmul.mubr.f32.gmra.mrb[0].mxu0 %v1724
  %v2146 = vpop.f32.mrb[0].mxu0
  %v2147 = vadd.f32 %v2040, %v2146
  %v2148 = vpop.f32.mrb[0].mxu0
  %v2149 = vadd.f32 %v2042, %v2148
  %2150 = vmatprep.mubr.f32.mxu0 0.0
  %2151 = vmatmul.mubr.f32.gmra.mrb[0].mxu0 %v1727
  %v2152 = vpop.f32.mrb[0].mxu0
  %v2153 = vadd.f32 %v2046, %v2152
  %v2154 = vpop.f32.mrb[0].mxu0
  %v2155 = vadd.f32 %v2048, %v2154
  %2156 = vmatprep.mubr.f32.mxu0 0.0
  %2157 = vmatmul.mubr.f32.gmra.mrb[0].mxu0 %v1730
  %v2158 = vpop.f32.mrb[0].mxu0
  %v2159 = vadd.f32 %v2052, %v2158
  %v2160 = vpop.f32.mrb[0].mxu0
  %v2161 = vadd.f32 %v2054, %v2160
  %2162 = vmatprep.mubr.f32.mxu0 0.0
  %2163 = vmatmul.mubr.f32.gmra.mrb[0].mxu0 %v1733
  %v2164 = vpop.f32.mrb[0].mxu0
  %v2165 = vadd.f32 %v2058, %v2164
  %v2166 = vpop.f32.mrb[0].mxu0
  %v2167 = vadd.f32 %v2060, %v2166
  %2168 = vmatprep.mubr.f32.mxu0 0.0
  %2169 = vmatmul.mubr.f32.gmra.mrb[0].mxu0 %v1736
  %v2170 = vpop.f32.mrb[0].mxu0
  %v2171 = vadd.f32 %v2064, %v2170
  %v2172 = vpop.f32.mrb[0].mxu0
  %v2173 = vadd.f32 %v2066, %v2172
  %2174 = vmatprep.mubr.f32.mxu0 0.0
  %2175 = vmatmul.mubr.f32.gmra.mrb[0].mxu0 %v1739
  %v2176 = vpop.f32.mrb[0].mxu0
  %v2177 = vadd.f32 %v2070, %v2176
  %v2178 = vpop.f32.mrb[0].mxu0
  %v2179 = vadd.f32 %v2072, %v2178
  %2180 = vdwg.mxu0
  %2181 = vst [vmem:[#allocation2 + $0x1c0] sm:$0xff] %v1927
  %2182 = vst [vmem:[#allocation2 + $0x1c8] sm:$0xff] %v1929
  %2183 = vst [vmem:[#allocation2 + $0x1d0] sm:$0xff] %v2141
  %2184 = vst [vmem:[#allocation2 + $0x1d8] sm:$0xff] %v2143
  %2185 = vst [vmem:[#allocation2 + $0x1e0] sm:$0xff] %v1933
  %2186 = vst [vmem:[#allocation2 + $0x1e8] sm:$0xff] %v1935
  %2187 = vst [vmem:[#allocation2 + $0x1f0] sm:$0xff] %v2147
  %2188 = vst [vmem:[#allocation2 + $0x1f8] sm:$0xff] %v2149
  %2189 = vst [vmem:[#allocation2 + $0x200] sm:$0xff] %v1939
  %2190 = vst [vmem:[#allocation2 + $0x208] sm:$0xff] %v1941
  %2191 = vst [vmem:[#allocation2 + $0x210] sm:$0xff] %v2153
  %2192 = vst [vmem:[#allocation2 + $0x218] sm:$0xff] %v2155
  %2193 = vst [vmem:[#allocation2 + $0x220] sm:$0xff] %v1945
  %2194 = vst [vmem:[#allocation2 + $0x228] sm:$0xff] %v1947
  %2195 = vst [vmem:[#allocation2 + $0x230] sm:$0xff] %v2159
  %2196 = vst [vmem:[#allocation2 + $0x238] sm:$0xff] %v2161
  %2197 = vst [vmem:[#allocation2 + $0x240] sm:$0xff] %v1951
  %2198 = vst [vmem:[#allocation2 + $0x248] sm:$0xff] %v1953
  %2199 = vst [vmem:[#allocation2 + $0x250] sm:$0xff] %v2165
  %2200 = vst [vmem:[#allocation2 + $0x258] sm:$0xff] %v2167
  %2201 = vst [vmem:[#allocation2 + $0x260] sm:$0xff] %v1957
  %2202 = vst [vmem:[#allocation2 + $0x268] sm:$0xff] %v1959
  %2203 = vst [vmem:[#allocation2 + $0x270] sm:$0xff] %v2171
  %2204 = vst [vmem:[#allocation2 + $0x278] sm:$0xff] %v2173
  %2205 = vst [vmem:[#allocation2 + $0x280] sm:$0xff] %v1963
  %2206 = vst [vmem:[#allocation2 + $0x288] sm:$0xff] %v1965
  %2207 = vst [vmem:[#allocation2 + $0x290] sm:$0xff] %v2177
  %2208 = vst [vmem:[#allocation2 + $0x298] sm:$0xff] %v2179
  %2209 = vst [vmem:[#allocation3] sm:$0xff] 0.0
  %2210 = vst [vmem:[#allocation3 + $0x8] sm:$0xff] 0.0
  %2211 = vst [vmem:[#allocation3 + $0x10] sm:$0xff] 0.0
  %2212 = vst [vmem:[#allocation4] sm:$0xff] 0.0
  %2213 = vst [vmem:[#allocation4 + $0x8] sm:$0xff] 0.0
  %2214 = vst [vmem:[#allocation4 + $0x10] sm:$0xff] 0.0
  %v2215 = vld [vmem:[#allocation2] sm:$0xff]
  %v2216 = vld [vmem:[#allocation2 + $0x8] sm:$0xff]
  %v2217 = vld [vmem:[#allocation2 + $0x10] sm:$0xff]
  %v2218 = vld [vmem:[#allocation2 + $0x18] sm:$0xff]
  %v2219 = vld [vmem:[#allocation3] sm:$0xff]
  %v2220 = vld [vmem:[%s1 + $0x4c0] sm:$0xff]
  %v2221 = vld [vmem:[%s1 + $0x4c8] sm:$0xff]
  %v2222 = vld [vmem:[%s1 + $0x4d0] sm:$0xff]
  %v2223 = vld [vmem:[%s1 + $0x4d8] sm:$0xff]
  %v2224 = vld [vmem:[%s1 + $0x4e0] sm:$0xff]
  %v2225 = vld [vmem:[%s1 + $0x4e8] sm:$0xff]
  %v2226 = vld [vmem:[%s1 + $0x4f0] sm:$0xff]
  %v2227 = vld [vmem:[%s1 + $0x4f8] sm:$0xff]
  %v2228 = vld [vmem:[%s1 + $0x500] sm:$0xff]
  %v2229 = vld [vmem:[%s1 + $0x508] sm:$0xff]
  %v2230 = vld [vmem:[%s1 + $0x510] sm:$0xff]
  %v2231 = vld [vmem:[%s1 + $0x518] sm:$0xff]
  %v2232 = vld [vmem:[%s1 + $0x520] sm:$0xff]
  %v2233 = vld [vmem:[%s1 + $0x528] sm:$0xff]
  %v2234 = vld [vmem:[%s1 + $0x530] sm:$0xff]
  %v2235 = vld [vmem:[%s1 + $0x538] sm:$0xff]
  %v2236 = vld [vmem:[%s1 + $0x540] sm:$0xff]
  %v2237 = vld [vmem:[%s1 + $0x548] sm:$0xff]
  %v2238 = vld [vmem:[%s1 + $0x550] sm:$0xff]
  %v2239 = vld [vmem:[%s1 + $0x558] sm:$0xff]
  %v2240 = vld [vmem:[%s1 + $0x560] sm:$0xff]
  %v2241 = vld [vmem:[%s1 + $0x568] sm:$0xff]
  %v2242 = vld [vmem:[%s1 + $0x570] sm:$0xff]
  %v2243 = vld [vmem:[%s1 + $0x578] sm:$0xff]
  %v2244 = vld [vmem:[%s1 + $0x580] sm:$0xff]
  %v2245 = vld [vmem:[%s1 + $0x588] sm:$0xff]
  %v2246 = vld [vmem:[%s1 + $0x590] sm:$0xff]
  %v2247 = vld [vmem:[%s1 + $0x598] sm:$0xff]
  %v2248 = vld [vmem:[%s1 + $0x5a0] sm:$0xff]
  %v2249 = vld [vmem:[%s1 + $0x5a8] sm:$0xff]
  %v2250 = vld [vmem:[%s1 + $0x5b0] sm:$0xff]
  %v2251 = vld [vmem:[%s1 + $0x5b8] sm:$0xff]
  %v2252 = vld [vmem:[%s1 + $0x5c0] sm:$0xff]
  %v2253 = vld [vmem:[%s1 + $0x5c8] sm:$0xff]
  %v2254 = vld [vmem:[%s1 + $0x5d0] sm:$0xff]
  %v2255 = vld [vmem:[%s1 + $0x5d8] sm:$0xff]
  %v2256 = vld [vmem:[%s1 + $0x5e0] sm:$0xff]
  %v2257 = vld [vmem:[%s1 + $0x5e8] sm:$0xff]
  %v2258 = vld [vmem:[%s1 + $0x5f0] sm:$0xff]
  %v2259 = vld [vmem:[%s1 + $0x5f8] sm:$0xff]
  %v2260 = vld [vmem:[%s1 + $0x600] sm:$0xff]
  %v2261 = vld [vmem:[%s1 + $0x608] sm:$0xff]
  %v2262 = vld [vmem:[%s1 + $0x610] sm:$0xff]
  %v2263 = vld [vmem:[%s1 + $0x618] sm:$0xff]
  %v2264 = vld [vmem:[%s1 + $0x620] sm:$0xff]
  %v2265 = vld [vmem:[%s1 + $0x628] sm:$0xff]
  %v2266 = vld [vmem:[%s1 + $0x630] sm:$0xff]
  %v2267 = vld [vmem:[%s1 + $0x638] sm:$0xff]
  %v2268 = vld [vmem:[%s1 + $0x640] sm:$0xff]
  %v2269 = vld [vmem:[%s1 + $0x648] sm:$0xff]
  %v2270 = vld [vmem:[%s1 + $0x650] sm:$0xff]
  %v2271 = vld [vmem:[%s1 + $0x658] sm:$0xff]
  %v2272 = vld [vmem:[%s1 + $0x660] sm:$0xff]
  %v2273 = vld [vmem:[%s1 + $0x668] sm:$0xff]
  %v2274 = vld [vmem:[%s1 + $0x670] sm:$0xff]
  %v2275 = vld [vmem:[%s1 + $0x678] sm:$0xff]
  %v2276 = vld [vmem:[%s1 + $0x680] sm:$0xff]
  %v2277 = vld [vmem:[%s1 + $0x688] sm:$0xff]
  %v2278 = vld [vmem:[%s1 + $0x690] sm:$0xff]
  %v2279 = vld [vmem:[%s1 + $0x698] sm:$0xff]
  %v2280 = vld [vmem:[%s1 + $0x6a0] sm:$0xff]
  %v2281 = vld [vmem:[%s1 + $0x6a8] sm:$0xff]
  %v2282 = vld [vmem:[%s1 + $0x6b0] sm:$0xff]
  %v2283 = vld [vmem:[%s1 + $0x6b8] sm:$0xff]
  %2284 = vmatprep.subr.mxu0 %v2221
  %2285 = vmatpush1.msra.mxu0 %v2220
  %2286 = vmatprep.subr.mxu0 %v2225
  %2287 = vmatpush1.msra.mxu0 %v2224
  %2288 = vmatprep.subr.mxu0 %v2229
  %2289 = vmatpush1.msra.mxu0 %v2228
  %2290 = vmatprep.subr.mxu0 %v2233
  %2291 = vmatpush1.msra.mxu0 %v2232
  %2292 = vmatprep.subr.mxu0 %v2237
  %2293 = vmatpush1.msra.mxu0 %v2236
  %2294 = vmatprep.subr.mxu0 %v2241
  %2295 = vmatpush1.msra.mxu0 %v2240
  %2296 = vmatprep.subr.mxu0 %v2245
  %2297 = vmatpush1.msra.mxu0 %v2244
  %2298 = vmatprep.subr.mxu0 %v2249
  %2299 = vmatpush1.msra.mxu0 %v2248
  %2300 = vmatprep.subr.mxu0 %v2253
  %2301 = vmatpush1.msra.mxu0 %v2252
  %2302 = vmatprep.subr.mxu0 %v2257
  %2303 = vmatpush1.msra.mxu0 %v2256
  %2304 = vmatprep.subr.mxu0 %v2261
  %2305 = vmatpush1.msra.mxu0 %v2260
  %2306 = vmatprep.subr.mxu0 %v2265
  %2307 = vmatpush1.msra.mxu0 %v2264
  %2308 = vmatprep.subr.mxu0 %v2269
  %2309 = vmatpush1.msra.mxu0 %v2268
  %2310 = vmatprep.subr.mxu0 %v2273
  %2311 = vmatpush1.msra.mxu0 %v2272
  %2312 = vmatprep.subr.mxu0 %v2277
  %2313 = vmatpush1.msra.mxu0 %v2276
  %2314 = vmatprep.subr.mxu0 %v2281
  %2315 = vmatpush1.msra.mxu0 %v2280
  %2316 = vmatprep.subr.mxu0 0.0
  %2317 = vmatpush1.msra.mxu0 0.0
  %2318 = vmatprep.subr.mxu0 0.0
  %2319 = vmatpush1.msra.mxu0 0.0
  %2320 = vmatprep.subr.mxu0 0.0
  %2321 = vmatpush1.msra.mxu0 0.0
  %2322 = vmatprep.subr.mxu0 0.0
  %2323 = vmatpush1.msra.mxu0 0.0
  %2324 = vmatprep.subr.mxu0 0.0
  %2325 = vmatpush1.msra.mxu0 0.0
  %2326 = vmatprep.subr.mxu0 0.0
  %2327 = vmatpush1.msra.mxu0 0.0
  %2328 = vmatprep.subr.mxu0 0.0
  %2329 = vmatpush1.msra.mxu0 0.0
  %2330 = vmatprep.subr.mxu0 0.0
  %2331 = vmatpush1.msra.mxu0 0.0
  %2332 = vmatprep.subr.mxu0 0.0
  %2333 = vmatpush1.msra.mxu0 0.0
  %2334 = vmatprep.subr.mxu0 0.0
  %2335 = vmatpush1.msra.mxu0 0.0
  %2336 = vmatprep.subr.mxu0 0.0
  %2337 = vmatpush1.msra.mxu0 0.0
  %2338 = vmatprep.subr.mxu0 0.0
  %2339 = vmatpush1.msra.mxu0 0.0
  %2340 = vmatprep.subr.mxu0 0.0
  %2341 = vmatpush1.msra.mxu0 0.0
  %2342 = vmatprep.subr.mxu0 0.0
  %2343 = vmatpush1.msra.mxu0 0.0
  %2344 = vmatprep.subr.mxu0 0.0
  %2345 = vmatpush1.msra.mxu0 0.0
  %2346 = vmatprep.subr.mxu0 0.0
  %2347 = vmatpush1.msra.mxu0 0.0
  %2348 = vmatprep.mubr.f32.mxu0 0.0
  %2349 = vmatmul.mubr.f32.gmra.mrb[0].mxu0 %v2219
  %v2350 = vpop.f32.mrb[0].mxu0
  %v2351 = vadd.f32 0.0, %v2350
  %v2352 = vpop.f32.mrb[0].mxu0
  %v2353 = vadd.f32 0.0, %v2352
  %2354 = vdwg.mxu0
  %2355 = vmatprep.subr.mxu0 %v2223
  %2356 = vmatpush1.msra.mxu0 %v2222
  %2357 = vmatprep.subr.mxu0 %v2227
  %2358 = vmatpush1.msra.mxu0 %v2226
  %2359 = vmatprep.subr.mxu0 %v2231
  %2360 = vmatpush1.msra.mxu0 %v2230
  %2361 = vmatprep.subr.mxu0 %v2235
  %2362 = vmatpush1.msra.mxu0 %v2234
  %2363 = vmatprep.subr.mxu0 %v2239
  %2364 = vmatpush1.msra.mxu0 %v2238
  %2365 = vmatprep.subr.mxu0 %v2243
  %2366 = vmatpush1.msra.mxu0 %v2242
  %2367 = vmatprep.subr.mxu0 %v2247
  %2368 = vmatpush1.msra.mxu0 %v2246
  %2369 = vmatprep.subr.mxu0 %v2251
  %2370 = vmatpush1.msra.mxu0 %v2250
  %2371 = vmatprep.subr.mxu0 %v2255
  %2372 = vmatpush1.msra.mxu0 %v2254
  %2373 = vmatprep.subr.mxu0 %v2259
  %2374 = vmatpush1.msra.mxu0 %v2258
  %2375 = vmatprep.subr.mxu0 %v2263
  %2376 = vmatpush1.msra.mxu0 %v2262
  %2377 = vmatprep.subr.mxu0 %v2267
  %2378 = vmatpush1.msra.mxu0 %v2266
  %2379 = vmatprep.subr.mxu0 %v2271
  %2380 = vmatpush1.msra.mxu0 %v2270
  %2381 = vmatprep.subr.mxu0 %v2275
  %2382 = vmatpush1.msra.mxu0 %v2274
  %2383 = vmatprep.subr.mxu0 %v2279
  %2384 = vmatpush1.msra.mxu0 %v2278
  %2385 = vmatprep.subr.mxu0 %v2283
  %2386 = vmatpush1.msra.mxu0 %v2282
  %2387 = vmatprep.subr.mxu0 0.0
  %2388 = vmatpush1.msra.mxu0 0.0
  %2389 = vmatprep.subr.mxu0 0.0
  %2390 = vmatpush1.msra.mxu0 0.0
  %2391 = vmatprep.subr.mxu0 0.0
  %2392 = vmatpush1.msra.mxu0 0.0
  %2393 = vmatprep.subr.mxu0 0.0
  %2394 = vmatpush1.msra.mxu0 0.0
  %2395 = vmatprep.subr.mxu0 0.0
  %2396 = vmatpush1.msra.mxu0 0.0
  %2397 = vmatprep.subr.mxu0 0.0
  %2398 = vmatpush1.msra.mxu0 0.0
  %2399 = vmatprep.subr.mxu0 0.0
  %2400 = vmatpush1.msra.mxu0 0.0
  %2401 = vmatprep.subr.mxu0 0.0
  %2402 = vmatpush1.msra.mxu0 0.0
  %2403 = vmatprep.subr.mxu0 0.0
  %2404 = vmatpush1.msra.mxu0 0.0
  %2405 = vmatprep.subr.mxu0 0.0
  %2406 = vmatpush1.msra.mxu0 0.0
  %2407 = vmatprep.subr.mxu0 0.0
  %2408 = vmatpush1.msra.mxu0 0.0
  %2409 = vmatprep.subr.mxu0 0.0
  %2410 = vmatpush1.msra.mxu0 0.0
  %2411 = vmatprep.subr.mxu0 0.0
  %2412 = vmatpush1.msra.mxu0 0.0
  %2413 = vmatprep.subr.mxu0 0.0
  %2414 = vmatpush1.msra.mxu0 0.0
  %2415 = vmatprep.subr.mxu0 0.0
  %2416 = vmatpush1.msra.mxu0 0.0
  %2417 = vmatprep.subr.mxu0 0.0
  %2418 = vmatpush1.msra.mxu0 0.0
  %2419 = vmatprep.mubr.f32.mxu0 0.0
  %2420 = vmatmul.mubr.f32.gmra.mrb[0].mxu0 %v2219
  %v2421 = vpop.f32.mrb[0].mxu0
  %v2422 = vadd.f32 0.0, %v2421
  %v2423 = vpop.f32.mrb[0].mxu0
  %v2424 = vadd.f32 0.0, %v2423
  %2425 = vdwg.mxu0
  %v2426 = vadd.f32 %v2215, %v2351
  %v2427 = vadd.f32 %v2216, %v2353
  %v2428 = vadd.f32 %v2217, %v2422
  %v2429 = vadd.f32 %v2218, %v2424
  %v2430 = vxor.u32 %v2426, 2147483648
  %v2431 = vxor.u32 %v2427, 2147483648
  %v2432 = vxor.u32 %v2428, 2147483648
  %v2433 = vxor.u32 %v2429, 2147483648
  %v2434 = vmul.f32 %v2430, 1.442695
  %v2435 = vpow.pop %v2434
  %v2436 = vmul.f32 %v2431, 1.442695
  %v2437 = vpow.pop %v2436
  %v2438 = vmul.f32 %v2432, 1.442695
  %v2439 = vpow.pop %v2438
  %v2440 = vmul.f32 %v2433, 1.442695
  %v2441 = vpow.pop %v2440
  %v2442 = vadd.f32 %v2435, 1.0
  %v2443 = vadd.f32 %v2437, 1.0
  %v2444 = vadd.f32 %v2439, 1.0
  %v2445 = vadd.f32 %v2441, 1.0
  %v2446 = vrcp.pop %v2442
  %v2447 = vmul.f32 1.0, %v2446
  %v2448 = vrcp.pop %v2443
  %v2449 = vmul.f32 1.0, %v2448
  %v2450 = vrcp.pop %v2444
  %v2451 = vmul.f32 1.0, %v2450
  %v2452 = vrcp.pop %v2445
  %v2453 = vmul.f32 1.0, %v2452
  %v2454 = vmul.f32 %v2451, 2.0
  %v2455 = vsub.f32 %v2454, 1.0
  %v2456 = vld [vmem:[#allocation4] sm:$0xff]
  %v2457 = vmul.f32 %v2449, %v2456
  %v2458 = vmul.f32 %v2447, %v2455
  %v2459 = vadd.f32 %v2457, %v2458
  %2460 = vst [vmem:[#allocation4] sm:$0xff] %v2459
  %v2461 = vtanh.pop %v2459
  %v2462 = vmul.f32 %v2453, %v2461
  %2463 = vst [vmem:[#allocation3] sm:$0xff] %v2462
  %v2464 = vld [vmem:[#allocation2 + $0x20] sm:$0xff]
  %v2465 = vld [vmem:[#allocation2 + $0x28] sm:$0xff]
  %v2466 = vld [vmem:[#allocation2 + $0x30] sm:$0xff]
  %v2467 = vld [vmem:[#allocation2 + $0x38] sm:$0xff]
  %v2468 = vld [vmem:[#allocation3] sm:$0xff]
  %v2469 = vld [vmem:[%s1 + $0x4c0] sm:$0xff]
  %v2470 = vld [vmem:[%s1 + $0x4c8] sm:$0xff]
  %v2471 = vld [vmem:[%s1 + $0x4d0] sm:$0xff]
  %v2472 = vld [vmem:[%s1 + $0x4d8] sm:$0xff]
  %v2473 = vld [vmem:[%s1 + $0x4e0] sm:$0xff]
  %v2474 = vld [vmem:[%s1 + $0x4e8] sm:$0xff]
  %v2475 = vld [vmem:[%s1 + $0x4f0] sm:$0xff]
  %v2476 = vld [vmem:[%s1 + $0x4f8] sm:$0xff]
  %v2477 = vld [vmem:[%s1 + $0x500] sm:$0xff]
  %v2478 = vld [vmem:[%s1 + $0x508] sm:$0xff]
  %v2479 = vld [vmem:[%s1 + $0x510] sm:$0xff]
  %v2480 = vld [vmem:[%s1 + $0x518] sm:$0xff]
  %v2481 = vld [vmem:[%s1 + $0x520] sm:$0xff]
  %v2482 = vld [vmem:[%s1 + $0x528] sm:$0xff]
  %v2483 = vld [vmem:[%s1 + $0x530] sm:$0xff]
  %v2484 = vld [vmem:[%s1 + $0x538] sm:$0xff]
  %v2485 = vld [vmem:[%s1 + $0x540] sm:$0xff]
  %v2486 = vld [vmem:[%s1 + $0x548] sm:$0xff]
  %v2487 = vld [vmem:[%s1 + $0x550] sm:$0xff]
  %v2488 = vld [vmem:[%s1 + $0x558] sm:$0xff]
  %v2489 = vld [vmem:[%s1 + $0x560] sm:$0xff]
  %v2490 = vld [vmem:[%s1 + $0x568] sm:$0xff]
  %v2491 = vld [vmem:[%s1 + $0x570] sm:$0xff]
  %v2492 = vld [vmem:[%s1 + $0x578] sm:$0xff]
  %v2493 = vld [vmem:[%s1 + $0x580] sm:$0xff]
  %v2494 = vld [vmem:[%s1 + $0x588] sm:$0xff]
  %v2495 = vld [vmem:[%s1 + $0x590] sm:$0xff]
  %v2496 = vld [vmem:[%s1 + $0x598] sm:$0xff]
  %v2497 = vld [vmem:[%s1 + $0x5a0] sm:$0xff]
  %v2498 = vld [vmem:[%s1 + $0x5a8] sm:$0xff]
  %v2499 = vld [vmem:[%s1 + $0x5b0] sm:$0xff]
  %v2500 = vld [vmem:[%s1 + $0x5b8] sm:$0xff]
  %v2501 = vld [vmem:[%s1 + $0x5c0] sm:$0xff]
  %v2502 = vld [vmem:[%s1 + $0x5c8] sm:$0xff]
  %v2503 = vld [vmem:[%s1 + $0x5d0] sm:$0xff]
  %v2504 = vld [vmem:[%s1 + $0x5d8] sm:$0xff]
  %v2505 = vld [vmem:[%s1 + $0x5e0] sm:$0xff]
  %v2506 = vld [vmem:[%s1 + $0x5e8] sm:$0xff]
  %v2507 = vld [vmem:[%s1 + $0x5f0] sm:$0xff]
  %v2508 = vld [vmem:[%s1 + $0x5f8] sm:$0xff]
  %v2509 = vld [vmem:[%s1 + $0x600] sm:$0xff]
  %v2510 = vld [vmem:[%s1 + $0x608] sm:$0xff]
  %v2511 = vld [vmem:[%s1 + $0x610] sm:$0xff]
  %v2512 = vld [vmem:[%s1 + $0x618] sm:$0xff]
  %v2513 = vld [vmem:[%s1 + $0x620] sm:$0xff]
  %v2514 = vld [vmem:[%s1 + $0x628] sm:$0xff]
  %v2515 = vld [vmem:[%s1 + $0x630] sm:$0xff]
  %v2516 = vld [vmem:[%s1 + $0x638] sm:$0xff]
  %v2517 = vld [vmem:[%s1 + $0x640] sm:$0xff]
  %v2518 = vld [vmem:[%s1 + $0x648] sm:$0xff]
  %v2519 = vld [vmem:[%s1 + $0x650] sm:$0xff]
  %v2520 = vld [vmem:[%s1 + $0x658] sm:$0xff]
  %v2521 = vld [vmem:[%s1 + $0x660] sm:$0xff]
  %v2522 = vld [vmem:[%s1 + $0x668] sm:$0xff]
  %v2523 = vld [vmem:[%s1 + $0x670] sm:$0xff]
  %v2524 = vld [vmem:[%s1 + $0x678] sm:$0xff]
  %v2525 = vld [vmem:[%s1 + $0x680] sm:$0xff]
  %v2526 = vld [vmem:[%s1 + $0x688] sm:$0xff]
  %v2527 = vld [vmem:[%s1 + $0x690] sm:$0xff]
  %v2528 = vld [vmem:[%s1 + $0x698] sm:$0xff]
  %v2529 = vld [vmem:[%s1 + $0x6a0] sm:$0xff]
  %v2530 = vld [vmem:[%s1 + $0x6a8] sm:$0xff]
  %v2531 = vld [vmem:[%s1 + $0x6b0] sm:$0xff]
  %v2532 = vld [vmem:[%s1 + $0x6b8] sm:$0xff]
  %2533 = vmatprep.subr.mxu0 %v2470
  %2534 = vmatpush1.msra.mxu0 %v2469
  %2535 = vmatprep.subr.mxu0 %v2474
  %2536 = vmatpush1.msra.mxu0 %v2473
  %2537 = vmatprep.subr.mxu0 %v2478
  %2538 = vmatpush1.msra.mxu0 %v2477
  %2539 = vmatprep.subr.mxu0 %v2482
  %2540 = vmatpush1.msra.mxu0 %v2481
  %2541 = vmatprep.subr.mxu0 %v2486
  %2542 = vmatpush1.msra.mxu0 %v2485
  %2543 = vmatprep.subr.mxu0 %v2490
  %2544 = vmatpush1.msra.mxu0 %v2489
  %2545 = vmatprep.subr.mxu0 %v2494
  %2546 = vmatpush1.msra.mxu0 %v2493
  %2547 = vmatprep.subr.mxu0 %v2498
  %2548 = vmatpush1.msra.mxu0 %v2497
  %2549 = vmatprep.subr.mxu0 %v2502
  %2550 = vmatpush1.msra.mxu0 %v2501
  %2551 = vmatprep.subr.mxu0 %v2506
  %2552 = vmatpush1.msra.mxu0 %v2505
  %2553 = vmatprep.subr.mxu0 %v2510
  %2554 = vmatpush1.msra.mxu0 %v2509
  %2555 = vmatprep.subr.mxu0 %v2514
  %2556 = vmatpush1.msra.mxu0 %v2513
  %2557 = vmatprep.subr.mxu0 %v2518
  %2558 = vmatpush1.msra.mxu0 %v2517
  %2559 = vmatprep.subr.mxu0 %v2522
  %2560 = vmatpush1.msra.mxu0 %v2521
  %2561 = vmatprep.subr.mxu0 %v2526
  %2562 = vmatpush1.msra.mxu0 %v2525
  %2563 = vmatprep.subr.mxu0 %v2530
  %2564 = vmatpush1.msra.mxu0 %v2529
  %2565 = vmatprep.subr.mxu0 0.0
  %2566 = vmatpush1.msra.mxu0 0.0
  %2567 = vmatprep.subr.mxu0 0.0
  %2568 = vmatpush1.msra.mxu0 0.0
  %2569 = vmatprep.subr.mxu0 0.0
  %2570 = vmatpush1.msra.mxu0 0.0
  %2571 = vmatprep.subr.mxu0 0.0
  %2572 = vmatpush1.msra.mxu0 0.0
  %2573 = vmatprep.subr.mxu0 0.0
  %2574 = vmatpush1.msra.mxu0 0.0
  %2575 = vmatprep.subr.mxu0 0.0
  %2576 = vmatpush1.msra.mxu0 0.0
  %2577 = vmatprep.subr.mxu0 0.0
  %2578 = vmatpush1.msra.mxu0 0.0
  %2579 = vmatprep.subr.mxu0 0.0
  %2580 = vmatpush1.msra.mxu0 0.0
  %2581 = vmatprep.subr.mxu0 0.0
  %2582 = vmatpush1.msra.mxu0 0.0
  %2583 = vmatprep.subr.mxu0 0.0
  %2584 = vmatpush1.msra.mxu0 0.0
  %2585 = vmatprep.subr.mxu0 0.0
  %2586 = vmatpush1.msra.mxu0 0.0
  %2587 = vmatprep.subr.mxu0 0.0
  %2588 = vmatpush1.msra.mxu0 0.0
  %2589 = vmatprep.subr.mxu0 0.0
  %2590 = vmatpush1.msra.mxu0 0.0
  %2591 = vmatprep.subr.mxu0 0.0
  %2592 = vmatpush1.msra.mxu0 0.0
  %2593 = vmatprep.subr.mxu0 0.0
  %2594 = vmatpush1.msra.mxu0 0.0
  %2595 = vmatprep.subr.mxu0 0.0
  %2596 = vmatpush1.msra.mxu0 0.0
  %2597 = vmatprep.mubr.f32.mxu0 0.0
  %2598 = vmatmul.mubr.f32.gmra.mrb[0].mxu0 %v2468
  %v2599 = vpop.f32.mrb[0].mxu0
  %v2600 = vadd.f32 0.0, %v2599
  %v2601 = vpop.f32.mrb[0].mxu0
  %v2602 = vadd.f32 0.0, %v2601
  %2603 = vdwg.mxu0
  %2604 = vmatprep.subr.mxu0 %v2472
  %2605 = vmatpush1.msra.mxu0 %v2471
  %2606 = vmatprep.subr.mxu0 %v2476
  %2607 = vmatpush1.msra.mxu0 %v2475
  %2608 = vmatprep.subr.mxu0 %v2480
  %2609 = vmatpush1.msra.mxu0 %v2479
  %2610 = vmatprep.subr.mxu0 %v2484
  %2611 = vmatpush1.msra.mxu0 %v2483
  %2612 = vmatprep.subr.mxu0 %v2488
  %2613 = vmatpush1.msra.mxu0 %v2487
  %2614 = vmatprep.subr.mxu0 %v2492
  %2615 = vmatpush1.msra.mxu0 %v2491
  %2616 = vmatprep.subr.mxu0 %v2496
  %2617 = vmatpush1.msra.mxu0 %v2495
  %2618 = vmatprep.subr.mxu0 %v2500
  %2619 = vmatpush1.msra.mxu0 %v2499
  %2620 = vmatprep.subr.mxu0 %v2504
  %2621 = vmatpush1.msra.mxu0 %v2503
  %2622 = vmatprep.subr.mxu0 %v2508
  %2623 = vmatpush1.msra.mxu0 %v2507
  %2624 = vmatprep.subr.mxu0 %v2512
  %2625 = vmatpush1.msra.mxu0 %v2511
  %2626 = vmatprep.subr.mxu0 %v2516
  %2627 = vmatpush1.msra.mxu0 %v2515
  %2628 = vmatprep.subr.mxu0 %v2520
  %2629 = vmatpush1.msra.mxu0 %v2519
  %2630 = vmatprep.subr.mxu0 %v2524
  %2631 = vmatpush1.msra.mxu0 %v2523
  %2632 = vmatprep.subr.mxu0 %v2528
  %2633 = vmatpush1.msra.mxu0 %v2527
  %2634 = vmatprep.subr.mxu0 %v2532
  %2635 = vmatpush1.msra.mxu0 %v2531
  %2636 = vmatprep.subr.mxu0 0.0
  %2637 = vmatpush1.msra.mxu0 0.0
  %2638 = vmatprep.subr.mxu0 0.0
  %2639 = vmatpush1.msra.mxu0 0.0
  %2640 = vmatprep.subr.mxu0 0.0
  %2641 = vmatpush1.msra.mxu0 0.0
  %2642 = vmatprep.subr.mxu0 0.0
  %2643 = vmatpush1.msra.mxu0 0.0
  %2644 = vmatprep.subr.mxu0 0.0
  %2645 = vmatpush1.msra.mxu0 0.0
  %2646 = vmatprep.subr.mxu0 0.0
  %2647 = vmatpush1.msra.mxu0 0.0
  %2648 = vmatprep.subr.mxu0 0.0
  %2649 = vmatpush1.msra.mxu0 0.0
  %2650 = vmatprep.subr.mxu0 0.0
  %2651 = vmatpush1.msra.mxu0 0.0
  %2652 = vmatprep.subr.mxu0 0.0
  %2653 = vmatpush1.msra.mxu0 0.0
  %2654 = vmatprep.subr.mxu0 0.0
  %2655 = vmatpush1.msra.mxu0 0.0
  %2656 = vmatprep.subr.mxu0 0.0
  %2657 = vmatpush1.msra.mxu0 0.0
  %2658 = vmatprep.subr.mxu0 0.0
  %2659 = vmatpush1.msra.mxu0 0.0
  %2660 = vmatprep.subr.mxu0 0.0
  %2661 = vmatpush1.msra.mxu0 0.0
  %2662 = vmatprep.subr.mxu0 0.0
  %2663 = vmatpush1.msra.mxu0 0.0
  %2664 = vmatprep.subr.mxu0 0.0
  %2665 = vmatpush1.msra.mxu0 0.0
  %2666 = vmatprep.subr.mxu0 0.0
  %2667 = vmatpush1.msra.mxu0 0.0
  %2668 = vmatprep.mubr.f32.mxu0 0.0
  %2669 = vmatmul.mubr.f32.gmra.mrb[0].mxu0 %v2468
  %v2670 = vpop.f32.mrb[0].mxu0
  %v2671 = vadd.f32 0.0, %v2670
  %v2672 = vpop.f32.mrb[0].mxu0
  %v2673 = vadd.f32 0.0, %v2672
  %2674 = vdwg.mxu0
  %v2675 = vadd.f32 %v2464, %v2600
  %v2676 = vadd.f32 %v2465, %v2602
  %v2677 = vadd.f32 %v2466, %v2671
  %v2678 = vadd.f32 %v2467, %v2673
  %v2679 = vxor.u32 %v2675, 2147483648
  %v2680 = vxor.u32 %v2676, 2147483648
  %v2681 = vxor.u32 %v2677, 2147483648
  %v2682 = vxor.u32 %v2678, 2147483648
  %v2683 = vmul.f32 %v2679, 1.442695
  %v2684 = vpow.pop %v2683
  %v2685 = vmul.f32 %v2680, 1.442695
  %v2686 = vpow.pop %v2685
  %v2687 = vmul.f32 %v2681, 1.442695
  %v2688 = vpow.pop %v2687
  %v2689 = vmul.f32 %v2682, 1.442695
  %v2690 = vpow.pop %v2689
  %v2691 = vadd.f32 %v2684, 1.0
  %v2692 = vadd.f32 %v2686, 1.0
  %v2693 = vadd.f32 %v2688, 1.0
  %v2694 = vadd.f32 %v2690, 1.0
  %v2695 = vrcp.pop %v2691
  %v2696 = vmul.f32 1.0, %v2695
  %v2697 = vrcp.pop %v2692
  %v2698 = vmul.f32 1.0, %v2697
  %v2699 = vrcp.pop %v2693
  %v2700 = vmul.f32 1.0, %v2699
  %v2701 = vrcp.pop %v2694
  %v2702 = vmul.f32 1.0, %v2701
  %v2703 = vmul.f32 %v2700, 2.0
  %v2704 = vsub.f32 %v2703, 1.0
  %v2705 = vld [vmem:[#allocation4] sm:$0xff]
  %v2706 = vmul.f32 %v2698, %v2705
  %v2707 = vmul.f32 %v2696, %v2704
  %v2708 = vadd.f32 %v2706, %v2707
  %2709 = vst [vmem:[#allocation4] sm:$0xff] %v2708
  %v2710 = vtanh.pop %v2708
  %v2711 = vmul.f32 %v2702, %v2710
  %2712 = vst [vmem:[#allocation3] sm:$0xff] %v2711
  %v2713 = vld [vmem:[#allocation2 + $0x40] sm:$0xff]
  %v2714 = vld [vmem:[#allocation2 + $0x48] sm:$0xff]
  %v2715 = vld [vmem:[#allocation2 + $0x50] sm:$0xff]
  %v2716 = vld [vmem:[#allocation2 + $0x58] sm:$0xff]
  %v2717 = vld [vmem:[#allocation3] sm:$0xff]
  %v2718 = vld [vmem:[%s1 + $0x4c0] sm:$0xff]
  %v2719 = vld [vmem:[%s1 + $0x4c8] sm:$0xff]
  %v2720 = vld [vmem:[%s1 + $0x4d0] sm:$0xff]
  %v2721 = vld [vmem:[%s1 + $0x4d8] sm:$0xff]
  %v2722 = vld [vmem:[%s1 + $0x4e0] sm:$0xff]
  %v2723 = vld [vmem:[%s1 + $0x4e8] sm:$0xff]
  %v2724 = vld [vmem:[%s1 + $0x4f0] sm:$0xff]
  %v2725 = vld [vmem:[%s1 + $0x4f8] sm:$0xff]
  %v2726 = vld [vmem:[%s1 + $0x500] sm:$0xff]
  %v2727 = vld [vmem:[%s1 + $0x508] sm:$0xff]
  %v2728 = vld [vmem:[%s1 + $0x510] sm:$0xff]
  %v2729 = vld [vmem:[%s1 + $0x518] sm:$0xff]
  %v2730 = vld [vmem:[%s1 + $0x520] sm:$0xff]
  %v2731 = vld [vmem:[%s1 + $0x528] sm:$0xff]
  %v2732 = vld [vmem:[%s1 + $0x530] sm:$0xff]
  %v2733 = vld [vmem:[%s1 + $0x538] sm:$0xff]
  %v2734 = vld [vmem:[%s1 + $0x540] sm:$0xff]
  %v2735 = vld [vmem:[%s1 + $0x548] sm:$0xff]
  %v2736 = vld [vmem:[%s1 + $0x550] sm:$0xff]
  %v2737 = vld [vmem:[%s1 + $0x558] sm:$0xff]
  %v2738 = vld [vmem:[%s1 + $0x560] sm:$0xff]
  %v2739 = vld [vmem:[%s1 + $0x568] sm:$0xff]
  %v2740 = vld [vmem:[%s1 + $0x570] sm:$0xff]
  %v2741 = vld [vmem:[%s1 + $0x578] sm:$0xff]
  %v2742 = vld [vmem:[%s1 + $0x580] sm:$0xff]
  %v2743 = vld [vmem:[%s1 + $0x588] sm:$0xff]
  %v2744 = vld [vmem:[%s1 + $0x590] sm:$0xff]
  %v2745 = vld [vmem:[%s1 + $0x598] sm:$0xff]
  %v2746 = vld [vmem:[%s1 + $0x5a0] sm:$0xff]
  %v2747 = vld [vmem:[%s1 + $0x5a8] sm:$0xff]
  %v2748 = vld [vmem:[%s1 + $0x5b0] sm:$0xff]
  %v2749 = vld [vmem:[%s1 + $0x5b8] sm:$0xff]
  %v2750 = vld [vmem:[%s1 + $0x5c0] sm:$0xff]
  %v2751 = vld [vmem:[%s1 + $0x5c8] sm:$0xff]
  %v2752 = vld [vmem:[%s1 + $0x5d0] sm:$0xff]
  %v2753 = vld [vmem:[%s1 + $0x5d8] sm:$0xff]
  %v2754 = vld [vmem:[%s1 + $0x5e0] sm:$0xff]
  %v2755 = vld [vmem:[%s1 + $0x5e8] sm:$0xff]
  %v2756 = vld [vmem:[%s1 + $0x5f0] sm:$0xff]
  %v2757 = vld [vmem:[%s1 + $0x5f8] sm:$0xff]
  %v2758 = vld [vmem:[%s1 + $0x600] sm:$0xff]
  %v2759 = vld [vmem:[%s1 + $0x608] sm:$0xff]
  %v2760 = vld [vmem:[%s1 + $0x610] sm:$0xff]
  %v2761 = vld [vmem:[%s1 + $0x618] sm:$0xff]
  %v2762 = vld [vmem:[%s1 + $0x620] sm:$0xff]
  %v2763 = vld [vmem:[%s1 + $0x628] sm:$0xff]
  %v2764 = vld [vmem:[%s1 + $0x630] sm:$0xff]
  %v2765 = vld [vmem:[%s1 + $0x638] sm:$0xff]
  %v2766 = vld [vmem:[%s1 + $0x640] sm:$0xff]
  %v2767 = vld [vmem:[%s1 + $0x648] sm:$0xff]
  %v2768 = vld [vmem:[%s1 + $0x650] sm:$0xff]
  %v2769 = vld [vmem:[%s1 + $0x658] sm:$0xff]
  %v2770 = vld [vmem:[%s1 + $0x660] sm:$0xff]
  %v2771 = vld [vmem:[%s1 + $0x668] sm:$0xff]
  %v2772 = vld [vmem:[%s1 + $0x670] sm:$0xff]
  %v2773 = vld [vmem:[%s1 + $0x678] sm:$0xff]
  %v2774 = vld [vmem:[%s1 + $0x680] sm:$0xff]
  %v2775 = vld [vmem:[%s1 + $0x688] sm:$0xff]
  %v2776 = vld [vmem:[%s1 + $0x690] sm:$0xff]
  %v2777 = vld [vmem:[%s1 + $0x698] sm:$0xff]
  %v2778 = vld [vmem:[%s1 + $0x6a0] sm:$0xff]
  %v2779 = vld [vmem:[%s1 + $0x6a8] sm:$0xff]
  %v2780 = vld [vmem:[%s1 + $0x6b0] sm:$0xff]
  %v2781 = vld [vmem:[%s1 + $0x6b8] sm:$0xff]
  %2782 = vmatprep.subr.mxu0 %v2719
  %2783 = vmatpush1.msra.mxu0 %v2718
  %2784 = vmatprep.subr.mxu0 %v2723
  %2785 = vmatpush1.msra.mxu0 %v2722
  %2786 = vmatprep.subr.mxu0 %v2727
  %2787 = vmatpush1.msra.mxu0 %v2726
  %2788 = vmatprep.subr.mxu0 %v2731
  %2789 = vmatpush1.msra.mxu0 %v2730
  %2790 = vmatprep.subr.mxu0 %v2735
  %2791 = vmatpush1.msra.mxu0 %v2734
  %2792 = vmatprep.subr.mxu0 %v2739
  %2793 = vmatpush1.msra.mxu0 %v2738
  %2794 = vmatprep.subr.mxu0 %v2743
  %2795 = vmatpush1.msra.mxu0 %v2742
  %2796 = vmatprep.subr.mxu0 %v2747
  %2797 = vmatpush1.msra.mxu0 %v2746
  %2798 = vmatprep.subr.mxu0 %v2751
  %2799 = vmatpush1.msra.mxu0 %v2750
  %2800 = vmatprep.subr.mxu0 %v2755
  %2801 = vmatpush1.msra.mxu0 %v2754
  %2802 = vmatprep.subr.mxu0 %v2759
  %2803 = vmatpush1.msra.mxu0 %v2758
  %2804 = vmatprep.subr.mxu0 %v2763
  %2805 = vmatpush1.msra.mxu0 %v2762
  %2806 = vmatprep.subr.mxu0 %v2767
  %2807 = vmatpush1.msra.mxu0 %v2766
  %2808 = vmatprep.subr.mxu0 %v2771
  %2809 = vmatpush1.msra.mxu0 %v2770
  %2810 = vmatprep.subr.mxu0 %v2775
  %2811 = vmatpush1.msra.mxu0 %v2774
  %2812 = vmatprep.subr.mxu0 %v2779
  %2813 = vmatpush1.msra.mxu0 %v2778
  %2814 = vmatprep.subr.mxu0 0.0
  %2815 = vmatpush1.msra.mxu0 0.0
  %2816 = vmatprep.subr.mxu0 0.0
  %2817 = vmatpush1.msra.mxu0 0.0
  %2818 = vmatprep.subr.mxu0 0.0
  %2819 = vmatpush1.msra.mxu0 0.0
  %2820 = vmatprep.subr.mxu0 0.0
  %2821 = vmatpush1.msra.mxu0 0.0
  %2822 = vmatprep.subr.mxu0 0.0
  %2823 = vmatpush1.msra.mxu0 0.0
  %2824 = vmatprep.subr.mxu0 0.0
  %2825 = vmatpush1.msra.mxu0 0.0
  %2826 = vmatprep.subr.mxu0 0.0
  %2827 = vmatpush1.msra.mxu0 0.0
  %2828 = vmatprep.subr.mxu0 0.0
  %2829 = vmatpush1.msra.mxu0 0.0
  %2830 = vmatprep.subr.mxu0 0.0
  %2831 = vmatpush1.msra.mxu0 0.0
  %2832 = vmatprep.subr.mxu0 0.0
  %2833 = vmatpush1.msra.mxu0 0.0
  %2834 = vmatprep.subr.mxu0 0.0
  %2835 = vmatpush1.msra.mxu0 0.0
  %2836 = vmatprep.subr.mxu0 0.0
  %2837 = vmatpush1.msra.mxu0 0.0
  %2838 = vmatprep.subr.mxu0 0.0
  %2839 = vmatpush1.msra.mxu0 0.0
  %2840 = vmatprep.subr.mxu0 0.0
  %2841 = vmatpush1.msra.mxu0 0.0
  %2842 = vmatprep.subr.mxu0 0.0
  %2843 = vmatpush1.msra.mxu0 0.0
  %2844 = vmatprep.subr.mxu0 0.0
  %2845 = vmatpush1.msra.mxu0 0.0
  %2846 = vmatprep.mubr.f32.mxu0 0.0
  %2847 = vmatmul.mubr.f32.gmra.mrb[0].mxu0 %v2717
  %v2848 = vpop.f32.mrb[0].mxu0
  %v2849 = vadd.f32 0.0, %v2848
  %v2850 = vpop.f32.mrb[0].mxu0
  %v2851 = vadd.f32 0.0, %v2850
  %2852 = vdwg.mxu0
  %2853 = vmatprep.subr.mxu0 %v2721
  %2854 = vmatpush1.msra.mxu0 %v2720
  %2855 = vmatprep.subr.mxu0 %v2725
  %2856 = vmatpush1.msra.mxu0 %v2724
  %2857 = vmatprep.subr.mxu0 %v2729
  %2858 = vmatpush1.msra.mxu0 %v2728
  %2859 = vmatprep.subr.mxu0 %v2733
  %2860 = vmatpush1.msra.mxu0 %v2732
  %2861 = vmatprep.subr.mxu0 %v2737
  %2862 = vmatpush1.msra.mxu0 %v2736
  %2863 = vmatprep.subr.mxu0 %v2741
  %2864 = vmatpush1.msra.mxu0 %v2740
  %2865 = vmatprep.subr.mxu0 %v2745
  %2866 = vmatpush1.msra.mxu0 %v2744
  %2867 = vmatprep.subr.mxu0 %v2749
  %2868 = vmatpush1.msra.mxu0 %v2748
  %2869 = vmatprep.subr.mxu0 %v2753
  %2870 = vmatpush1.msra.mxu0 %v2752
  %2871 = vmatprep.subr.mxu0 %v2757
  %2872 = vmatpush1.msra.mxu0 %v2756
  %2873 = vmatprep.subr.mxu0 %v2761
  %2874 = vmatpush1.msra.mxu0 %v2760
  %2875 = vmatprep.subr.mxu0 %v2765
  %2876 = vmatpush1.msra.mxu0 %v2764
  %2877 = vmatprep.subr.mxu0 %v2769
  %2878 = vmatpush1.msra.mxu0 %v2768
  %2879 = vmatprep.subr.mxu0 %v2773
  %2880 = vmatpush1.msra.mxu0 %v2772
  %2881 = vmatprep.subr.mxu0 %v2777
  %2882 = vmatpush1.msra.mxu0 %v2776
  %2883 = vmatprep.subr.mxu0 %v2781
  %2884 = vmatpush1.msra.mxu0 %v2780
  %2885 = vmatprep.subr.mxu0 0.0
  %2886 = vmatpush1.msra.mxu0 0.0
  %2887 = vmatprep.subr.mxu0 0.0
  %2888 = vmatpush1.msra.mxu0 0.0
  %2889 = vmatprep.subr.mxu0 0.0
  %2890 = vmatpush1.msra.mxu0 0.0
  %2891 = vmatprep.subr.mxu0 0.0
  %2892 = vmatpush1.msra.mxu0 0.0
  %2893 = vmatprep.subr.mxu0 0.0
  %2894 = vmatpush1.msra.mxu0 0.0
  %2895 = vmatprep.subr.mxu0 0.0
  %2896 = vmatpush1.msra.mxu0 0.0
  %2897 = vmatprep.subr.mxu0 0.0
  %2898 = vmatpush1.msra.mxu0 0.0
  %2899 = vmatprep.subr.mxu0 0.0
  %2900 = vmatpush1.msra.mxu0 0.0
  %2901 = vmatprep.subr.mxu0 0.0
  %2902 = vmatpush1.msra.mxu0 0.0
  %2903 = vmatprep.subr.mxu0 0.0
  %2904 = vmatpush1.msra.mxu0 0.0
  %2905 = vmatprep.subr.mxu0 0.0
  %2906 = vmatpush1.msra.mxu0 0.0
  %2907 = vmatprep.subr.mxu0 0.0
  %2908 = vmatpush1.msra.mxu0 0.0
  %2909 = vmatprep.subr.mxu0 0.0
  %2910 = vmatpush1.msra.mxu0 0.0
  %2911 = vmatprep.subr.mxu0 0.0
  %2912 = vmatpush1.msra.mxu0 0.0
  %2913 = vmatprep.subr.mxu0 0.0
  %2914 = vmatpush1.msra.mxu0 0.0
  %2915 = vmatprep.subr.mxu0 0.0
  %2916 = vmatpush1.msra.mxu0 0.0
  %2917 = vmatprep.mubr.f32.mxu0 0.0
  %2918 = vmatmul.mubr.f32.gmra.mrb[0].mxu0 %v2717
  %v2919 = vpop.f32.mrb[0].mxu0
  %v2920 = vadd.f32 0.0, %v2919
  %v2921 = vpop.f32.mrb[0].mxu0
  %v2922 = vadd.f32 0.0, %v2921
  %2923 = vdwg.mxu0
  %v2924 = vadd.f32 %v2713, %v2849
  %v2925 = vadd.f32 %v2714, %v2851
  %v2926 = vadd.f32 %v2715, %v2920
  %v2927 = vadd.f32 %v2716, %v2922
  %v2928 = vxor.u32 %v2924, 2147483648
  %v2929 = vxor.u32 %v2925, 2147483648
  %v2930 = vxor.u32 %v2926, 2147483648
  %v2931 = vxor.u32 %v2927, 2147483648
  %v2932 = vmul.f32 %v2928, 1.442695
  %v2933 = vpow.pop %v2932
  %v2934 = vmul.f32 %v2929, 1.442695
  %v2935 = vpow.pop %v2934
  %v2936 = vmul.f32 %v2930, 1.442695
  %v2937 = vpow.pop %v2936
  %v2938 = vmul.f32 %v2931, 1.442695
  %v2939 = vpow.pop %v2938
  %v2940 = vadd.f32 %v2933, 1.0
  %v2941 = vadd.f32 %v2935, 1.0
  %v2942 = vadd.f32 %v2937, 1.0
  %v2943 = vadd.f32 %v2939, 1.0
  %v2944 = vrcp.pop %v2940
  %v2945 = vmul.f32 1.0, %v2944
  %v2946 = vrcp.pop %v2941
  %v2947 = vmul.f32 1.0, %v2946
  %v2948 = vrcp.pop %v2942
  %v2949 = vmul.f32 1.0, %v2948
  %v2950 = vrcp.pop %v2943
  %v2951 = vmul.f32 1.0, %v2950
  %v2952 = vmul.f32 %v2949, 2.0
  %v2953 = vsub.f32 %v2952, 1.0
  %v2954 = vld [vmem:[#allocation4] sm:$0xff]
  %v2955 = vmul.f32 %v2947, %v2954
  %v2956 = vmul.f32 %v2945, %v2953
  %v2957 = vadd.f32 %v2955, %v2956
  %2958 = vst [vmem:[#allocation4] sm:$0xff] %v2957
  %v2959 = vtanh.pop %v2957
  %v2960 = vmul.f32 %v2951, %v2959
  %2961 = vst [vmem:[#allocation3] sm:$0xff] %v2960
  %v2962 = vld [vmem:[#allocation2 + $0x60] sm:$0xff]
  %v2963 = vld [vmem:[#allocation2 + $0x68] sm:$0xff]
  %v2964 = vld [vmem:[#allocation2 + $0x70] sm:$0xff]
  %v2965 = vld [vmem:[#allocation2 + $0x78] sm:$0xff]
  %v2966 = vld [vmem:[#allocation3] sm:$0xff]
  %v2967 = vld [vmem:[%s1 + $0x4c0] sm:$0xff]
  %v2968 = vld [vmem:[%s1 + $0x4c8] sm:$0xff]
  %v2969 = vld [vmem:[%s1 + $0x4d0] sm:$0xff]
  %v2970 = vld [vmem:[%s1 + $0x4d8] sm:$0xff]
  %v2971 = vld [vmem:[%s1 + $0x4e0] sm:$0xff]
  %v2972 = vld [vmem:[%s1 + $0x4e8] sm:$0xff]
  %v2973 = vld [vmem:[%s1 + $0x4f0] sm:$0xff]
  %v2974 = vld [vmem:[%s1 + $0x4f8] sm:$0xff]
  %v2975 = vld [vmem:[%s1 + $0x500] sm:$0xff]
  %v2976 = vld [vmem:[%s1 + $0x508] sm:$0xff]
  %v2977 = vld [vmem:[%s1 + $0x510] sm:$0xff]
  %v2978 = vld [vmem:[%s1 + $0x518] sm:$0xff]
  %v2979 = vld [vmem:[%s1 + $0x520] sm:$0xff]
  %v2980 = vld [vmem:[%s1 + $0x528] sm:$0xff]
  %v2981 = vld [vmem:[%s1 + $0x530] sm:$0xff]
  %v2982 = vld [vmem:[%s1 + $0x538] sm:$0xff]
  %v2983 = vld [vmem:[%s1 + $0x540] sm:$0xff]
  %v2984 = vld [vmem:[%s1 + $0x548] sm:$0xff]
  %v2985 = vld [vmem:[%s1 + $0x550] sm:$0xff]
  %v2986 = vld [vmem:[%s1 + $0x558] sm:$0xff]
  %v2987 = vld [vmem:[%s1 + $0x560] sm:$0xff]
  %v2988 = vld [vmem:[%s1 + $0x568] sm:$0xff]
  %v2989 = vld [vmem:[%s1 + $0x570] sm:$0xff]
  %v2990 = vld [vmem:[%s1 + $0x578] sm:$0xff]
  %v2991 = vld [vmem:[%s1 + $0x580] sm:$0xff]
  %v2992 = vld [vmem:[%s1 + $0x588] sm:$0xff]
  %v2993 = vld [vmem:[%s1 + $0x590] sm:$0xff]
  %v2994 = vld [vmem:[%s1 + $0x598] sm:$0xff]
  %v2995 = vld [vmem:[%s1 + $0x5a0] sm:$0xff]
  %v2996 = vld [vmem:[%s1 + $0x5a8] sm:$0xff]
  %v2997 = vld [vmem:[%s1 + $0x5b0] sm:$0xff]
  %v2998 = vld [vmem:[%s1 + $0x5b8] sm:$0xff]
  %v2999 = vld [vmem:[%s1 + $0x5c0] sm:$0xff]
  %v3000 = vld [vmem:[%s1 + $0x5c8] sm:$0xff]
  %v3001 = vld [vmem:[%s1 + $0x5d0] sm:$0xff]
  %v3002 = vld [vmem:[%s1 + $0x5d8] sm:$0xff]
  %v3003 = vld [vmem:[%s1 + $0x5e0] sm:$0xff]
  %v3004 = vld [vmem:[%s1 + $0x5e8] sm:$0xff]
  %v3005 = vld [vmem:[%s1 + $0x5f0] sm:$0xff]
  %v3006 = vld [vmem:[%s1 + $0x5f8] sm:$0xff]
  %v3007 = vld [vmem:[%s1 + $0x600] sm:$0xff]
  %v3008 = vld [vmem:[%s1 + $0x608] sm:$0xff]
  %v3009 = vld [vmem:[%s1 + $0x610] sm:$0xff]
  %v3010 = vld [vmem:[%s1 + $0x618] sm:$0xff]
  %v3011 = vld [vmem:[%s1 + $0x620] sm:$0xff]
  %v3012 = vld [vmem:[%s1 + $0x628] sm:$0xff]
  %v3013 = vld [vmem:[%s1 + $0x630] sm:$0xff]
  %v3014 = vld [vmem:[%s1 + $0x638] sm:$0xff]
  %v3015 = vld [vmem:[%s1 + $0x640] sm:$0xff]
  %v3016 = vld [vmem:[%s1 + $0x648] sm:$0xff]
  %v3017 = vld [vmem:[%s1 + $0x650] sm:$0xff]
  %v3018 = vld [vmem:[%s1 + $0x658] sm:$0xff]
  %v3019 = vld [vmem:[%s1 + $0x660] sm:$0xff]
  %v3020 = vld [vmem:[%s1 + $0x668] sm:$0xff]
  %v3021 = vld [vmem:[%s1 + $0x670] sm:$0xff]
  %v3022 = vld [vmem:[%s1 + $0x678] sm:$0xff]
  %v3023 = vld [vmem:[%s1 + $0x680] sm:$0xff]
  %v3024 = vld [vmem:[%s1 + $0x688] sm:$0xff]
  %v3025 = vld [vmem:[%s1 + $0x690] sm:$0xff]
  %v3026 = vld [vmem:[%s1 + $0x698] sm:$0xff]
  %v3027 = vld [vmem:[%s1 + $0x6a0] sm:$0xff]
  %v3028 = vld [vmem:[%s1 + $0x6a8] sm:$0xff]
  %v3029 = vld [vmem:[%s1 + $0x6b0] sm:$0xff]
  %v3030 = vld [vmem:[%s1 + $0x6b8] sm:$0xff]
  %3031 = vmatprep.subr.mxu0 %v2968
  %3032 = vmatpush1.msra.mxu0 %v2967
  %3033 = vmatprep.subr.mxu0 %v2972
  %3034 = vmatpush1.msra.mxu0 %v2971
  %3035 = vmatprep.subr.mxu0 %v2976
  %3036 = vmatpush1.msra.mxu0 %v2975
  %3037 = vmatprep.subr.mxu0 %v2980
  %3038 = vmatpush1.msra.mxu0 %v2979
  %3039 = vmatprep.subr.mxu0 %v2984
  %3040 = vmatpush1.msra.mxu0 %v2983
  %3041 = vmatprep.subr.mxu0 %v2988
  %3042 = vmatpush1.msra.mxu0 %v2987
  %3043 = vmatprep.subr.mxu0 %v2992
  %3044 = vmatpush1.msra.mxu0 %v2991
  %3045 = vmatprep.subr.mxu0 %v2996
  %3046 = vmatpush1.msra.mxu0 %v2995
  %3047 = vmatprep.subr.mxu0 %v3000
  %3048 = vmatpush1.msra.mxu0 %v2999
  %3049 = vmatprep.subr.mxu0 %v3004
  %3050 = vmatpush1.msra.mxu0 %v3003
  %3051 = vmatprep.subr.mxu0 %v3008
  %3052 = vmatpush1.msra.mxu0 %v3007
  %3053 = vmatprep.subr.mxu0 %v3012
  %3054 = vmatpush1.msra.mxu0 %v3011
  %3055 = vmatprep.subr.mxu0 %v3016
  %3056 = vmatpush1.msra.mxu0 %v3015
  %3057 = vmatprep.subr.mxu0 %v3020
  %3058 = vmatpush1.msra.mxu0 %v3019
  %3059 = vmatprep.subr.mxu0 %v3024
  %3060 = vmatpush1.msra.mxu0 %v3023
  %3061 = vmatprep.subr.mxu0 %v3028
  %3062 = vmatpush1.msra.mxu0 %v3027
  %3063 = vmatprep.subr.mxu0 0.0
  %3064 = vmatpush1.msra.mxu0 0.0
  %3065 = vmatprep.subr.mxu0 0.0
  %3066 = vmatpush1.msra.mxu0 0.0
  %3067 = vmatprep.subr.mxu0 0.0
  %3068 = vmatpush1.msra.mxu0 0.0
  %3069 = vmatprep.subr.mxu0 0.0
  %3070 = vmatpush1.msra.mxu0 0.0
  %3071 = vmatprep.subr.mxu0 0.0
  %3072 = vmatpush1.msra.mxu0 0.0
  %3073 = vmatprep.subr.mxu0 0.0
  %3074 = vmatpush1.msra.mxu0 0.0
  %3075 = vmatprep.subr.mxu0 0.0
  %3076 = vmatpush1.msra.mxu0 0.0
  %3077 = vmatprep.subr.mxu0 0.0
  %3078 = vmatpush1.msra.mxu0 0.0
  %3079 = vmatprep.subr.mxu0 0.0
  %3080 = vmatpush1.msra.mxu0 0.0
  %3081 = vmatprep.subr.mxu0 0.0
  %3082 = vmatpush1.msra.mxu0 0.0
  %3083 = vmatprep.subr.mxu0 0.0
  %3084 = vmatpush1.msra.mxu0 0.0
  %3085 = vmatprep.subr.mxu0 0.0
  %3086 = vmatpush1.msra.mxu0 0.0
  %3087 = vmatprep.subr.mxu0 0.0
  %3088 = vmatpush1.msra.mxu0 0.0
  %3089 = vmatprep.subr.mxu0 0.0
  %3090 = vmatpush1.msra.mxu0 0.0
  %3091 = vmatprep.subr.mxu0 0.0
  %3092 = vmatpush1.msra.mxu0 0.0
  %3093 = vmatprep.subr.mxu0 0.0
  %3094 = vmatpush1.msra.mxu0 0.0
  %3095 = vmatprep.mubr.f32.mxu0 0.0
  %3096 = vmatmul.mubr.f32.gmra.mrb[0].mxu0 %v2966
  %v3097 = vpop.f32.mrb[0].mxu0
  %v3098 = vadd.f32 0.0, %v3097
  %v3099 = vpop.f32.mrb[0].mxu0
  %v3100 = vadd.f32 0.0, %v3099
  %3101 = vdwg.mxu0
  %3102 = vmatprep.subr.mxu0 %v2970
  %3103 = vmatpush1.msra.mxu0 %v2969
  %3104 = vmatprep.subr.mxu0 %v2974
  %3105 = vmatpush1.msra.mxu0 %v2973
  %3106 = vmatprep.subr.mxu0 %v2978
  %3107 = vmatpush1.msra.mxu0 %v2977
  %3108 = vmatprep.subr.mxu0 %v2982
  %3109 = vmatpush1.msra.mxu0 %v2981
  %3110 = vmatprep.subr.mxu0 %v2986
  %3111 = vmatpush1.msra.mxu0 %v2985
  %3112 = vmatprep.subr.mxu0 %v2990
  %3113 = vmatpush1.msra.mxu0 %v2989
  %3114 = vmatprep.subr.mxu0 %v2994
  %3115 = vmatpush1.msra.mxu0 %v2993
  %3116 = vmatprep.subr.mxu0 %v2998
  %3117 = vmatpush1.msra.mxu0 %v2997
  %3118 = vmatprep.subr.mxu0 %v3002
  %3119 = vmatpush1.msra.mxu0 %v3001
  %3120 = vmatprep.subr.mxu0 %v3006
  %3121 = vmatpush1.msra.mxu0 %v3005
  %3122 = vmatprep.subr.mxu0 %v3010
  %3123 = vmatpush1.msra.mxu0 %v3009
  %3124 = vmatprep.subr.mxu0 %v3014
  %3125 = vmatpush1.msra.mxu0 %v3013
  %3126 = vmatprep.subr.mxu0 %v3018
  %3127 = vmatpush1.msra.mxu0 %v3017
  %3128 = vmatprep.subr.mxu0 %v3022
  %3129 = vmatpush1.msra.mxu0 %v3021
  %3130 = vmatprep.subr.mxu0 %v3026
  %3131 = vmatpush1.msra.mxu0 %v3025
  %3132 = vmatprep.subr.mxu0 %v3030
  %3133 = vmatpush1.msra.mxu0 %v3029
  %3134 = vmatprep.subr.mxu0 0.0
  %3135 = vmatpush1.msra.mxu0 0.0
  %3136 = vmatprep.subr.mxu0 0.0
  %3137 = vmatpush1.msra.mxu0 0.0
  %3138 = vmatprep.subr.mxu0 0.0
  %3139 = vmatpush1.msra.mxu0 0.0
  %3140 = vmatprep.subr.mxu0 0.0
  %3141 = vmatpush1.msra.mxu0 0.0
  %3142 = vmatprep.subr.mxu0 0.0
  %3143 = vmatpush1.msra.mxu0 0.0
  %3144 = vmatprep.subr.mxu0 0.0
  %3145 = vmatpush1.msra.mxu0 0.0
  %3146 = vmatprep.subr.mxu0 0.0
  %3147 = vmatpush1.msra.mxu0 0.0
  %3148 = vmatprep.subr.mxu0 0.0
  %3149 = vmatpush1.msra.mxu0 0.0
  %3150 = vmatprep.subr.mxu0 0.0
  %3151 = vmatpush1.msra.mxu0 0.0
  %3152 = vmatprep.subr.mxu0 0.0
  %3153 = vmatpush1.msra.mxu0 0.0
  %3154 = vmatprep.subr.mxu0 0.0
  %3155 = vmatpush1.msra.mxu0 0.0
  %3156 = vmatprep.subr.mxu0 0.0
  %3157 = vmatpush1.msra.mxu0 0.0
  %3158 = vmatprep.subr.mxu0 0.0
  %3159 = vmatpush1.msra.mxu0 0.0
  %3160 = vmatprep.subr.mxu0 0.0
  %3161 = vmatpush1.msra.mxu0 0.0
  %3162 = vmatprep.subr.mxu0 0.0
  %3163 = vmatpush1.msra.mxu0 0.0
  %3164 = vmatprep.subr.mxu0 0.0
  %3165 = vmatpush1.msra.mxu0 0.0
  %3166 = vmatprep.mubr.f32.mxu0 0.0
  %3167 = vmatmul.mubr.f32.gmra.mrb[0].mxu0 %v2966
  %v3168 = vpop.f32.mrb[0].mxu0
  %v3169 = vadd.f32 0.0, %v3168
  %v3170 = vpop.f32.mrb[0].mxu0
  %v3171 = vadd.f32 0.0, %v3170
  %3172 = vdwg.mxu0
  %v3173 = vadd.f32 %v2962, %v3098
  %v3174 = vadd.f32 %v2963, %v3100
  %v3175 = vadd.f32 %v2964, %v3169
  %v3176 = vadd.f32 %v2965, %v3171
  %v3177 = vxor.u32 %v3173, 2147483648
  %v3178 = vxor.u32 %v3174, 2147483648
  %v3179 = vxor.u32 %v3175, 2147483648
  %v3180 = vxor.u32 %v3176, 2147483648
  %v3181 = vmul.f32 %v3177, 1.442695
  %v3182 = vpow.pop %v3181
  %v3183 = vmul.f32 %v3178, 1.442695
  %v3184 = vpow.pop %v3183
  %v3185 = vmul.f32 %v3179, 1.442695
  %v3186 = vpow.pop %v3185
  %v3187 = vmul.f32 %v3180, 1.442695
  %v3188 = vpow.pop %v3187
  %v3189 = vadd.f32 %v3182, 1.0
  %v3190 = vadd.f32 %v3184, 1.0
  %v3191 = vadd.f32 %v3186, 1.0
  %v3192 = vadd.f32 %v3188, 1.0
  %v3193 = vrcp.pop %v3189
  %v3194 = vmul.f32 1.0, %v3193
  %v3195 = vrcp.pop %v3190
  %v3196 = vmul.f32 1.0, %v3195
  %v3197 = vrcp.pop %v3191
  %v3198 = vmul.f32 1.0, %v3197
  %v3199 = vrcp.pop %v3192
  %v3200 = vmul.f32 1.0, %v3199
  %v3201 = vmul.f32 %v3198, 2.0
  %v3202 = vsub.f32 %v3201, 1.0
  %v3203 = vld [vmem:[#allocation4] sm:$0xff]
  %v3204 = vmul.f32 %v3196, %v3203
  %v3205 = vmul.f32 %v3194, %v3202
  %v3206 = vadd.f32 %v3204, %v3205
  %3207 = vst [vmem:[#allocation4] sm:$0xff] %v3206
  %v3208 = vtanh.pop %v3206
  %v3209 = vmul.f32 %v3200, %v3208
  %3210 = vst [vmem:[#allocation3] sm:$0xff] %v3209
  %v3211 = vld [vmem:[#allocation2 + $0x80] sm:$0xff]
  %v3212 = vld [vmem:[#allocation2 + $0x88] sm:$0xff]
  %v3213 = vld [vmem:[#allocation2 + $0x90] sm:$0xff]
  %v3214 = vld [vmem:[#allocation2 + $0x98] sm:$0xff]
  %v3215 = vld [vmem:[#allocation3] sm:$0xff]
  %v3216 = vld [vmem:[%s1 + $0x4c0] sm:$0xff]
  %v3217 = vld [vmem:[%s1 + $0x4c8] sm:$0xff]
  %v3218 = vld [vmem:[%s1 + $0x4d0] sm:$0xff]
  %v3219 = vld [vmem:[%s1 + $0x4d8] sm:$0xff]
  %v3220 = vld [vmem:[%s1 + $0x4e0] sm:$0xff]
  %v3221 = vld [vmem:[%s1 + $0x4e8] sm:$0xff]
  %v3222 = vld [vmem:[%s1 + $0x4f0] sm:$0xff]
  %v3223 = vld [vmem:[%s1 + $0x4f8] sm:$0xff]
  %v3224 = vld [vmem:[%s1 + $0x500] sm:$0xff]
  %v3225 = vld [vmem:[%s1 + $0x508] sm:$0xff]
  %v3226 = vld [vmem:[%s1 + $0x510] sm:$0xff]
  %v3227 = vld [vmem:[%s1 + $0x518] sm:$0xff]
  %v3228 = vld [vmem:[%s1 + $0x520] sm:$0xff]
  %v3229 = vld [vmem:[%s1 + $0x528] sm:$0xff]
  %v3230 = vld [vmem:[%s1 + $0x530] sm:$0xff]
  %v3231 = vld [vmem:[%s1 + $0x538] sm:$0xff]
  %v3232 = vld [vmem:[%s1 + $0x540] sm:$0xff]
  %v3233 = vld [vmem:[%s1 + $0x548] sm:$0xff]
  %v3234 = vld [vmem:[%s1 + $0x550] sm:$0xff]
  %v3235 = vld [vmem:[%s1 + $0x558] sm:$0xff]
  %v3236 = vld [vmem:[%s1 + $0x560] sm:$0xff]
  %v3237 = vld [vmem:[%s1 + $0x568] sm:$0xff]
  %v3238 = vld [vmem:[%s1 + $0x570] sm:$0xff]
  %v3239 = vld [vmem:[%s1 + $0x578] sm:$0xff]
  %v3240 = vld [vmem:[%s1 + $0x580] sm:$0xff]
  %v3241 = vld [vmem:[%s1 + $0x588] sm:$0xff]
  %v3242 = vld [vmem:[%s1 + $0x590] sm:$0xff]
  %v3243 = vld [vmem:[%s1 + $0x598] sm:$0xff]
  %v3244 = vld [vmem:[%s1 + $0x5a0] sm:$0xff]
  %v3245 = vld [vmem:[%s1 + $0x5a8] sm:$0xff]
  %v3246 = vld [vmem:[%s1 + $0x5b0] sm:$0xff]
  %v3247 = vld [vmem:[%s1 + $0x5b8] sm:$0xff]
  %v3248 = vld [vmem:[%s1 + $0x5c0] sm:$0xff]
  %v3249 = vld [vmem:[%s1 + $0x5c8] sm:$0xff]
  %v3250 = vld [vmem:[%s1 + $0x5d0] sm:$0xff]
  %v3251 = vld [vmem:[%s1 + $0x5d8] sm:$0xff]
  %v3252 = vld [vmem:[%s1 + $0x5e0] sm:$0xff]
  %v3253 = vld [vmem:[%s1 + $0x5e8] sm:$0xff]
  %v3254 = vld [vmem:[%s1 + $0x5f0] sm:$0xff]
  %v3255 = vld [vmem:[%s1 + $0x5f8] sm:$0xff]
  %v3256 = vld [vmem:[%s1 + $0x600] sm:$0xff]
  %v3257 = vld [vmem:[%s1 + $0x608] sm:$0xff]
  %v3258 = vld [vmem:[%s1 + $0x610] sm:$0xff]
  %v3259 = vld [vmem:[%s1 + $0x618] sm:$0xff]
  %v3260 = vld [vmem:[%s1 + $0x620] sm:$0xff]
  %v3261 = vld [vmem:[%s1 + $0x628] sm:$0xff]
  %v3262 = vld [vmem:[%s1 + $0x630] sm:$0xff]
  %v3263 = vld [vmem:[%s1 + $0x638] sm:$0xff]
  %v3264 = vld [vmem:[%s1 + $0x640] sm:$0xff]
  %v3265 = vld [vmem:[%s1 + $0x648] sm:$0xff]
  %v3266 = vld [vmem:[%s1 + $0x650] sm:$0xff]
  %v3267 = vld [vmem:[%s1 + $0x658] sm:$0xff]
  %v3268 = vld [vmem:[%s1 + $0x660] sm:$0xff]
  %v3269 = vld [vmem:[%s1 + $0x668] sm:$0xff]
  %v3270 = vld [vmem:[%s1 + $0x670] sm:$0xff]
  %v3271 = vld [vmem:[%s1 + $0x678] sm:$0xff]
  %v3272 = vld [vmem:[%s1 + $0x680] sm:$0xff]
  %v3273 = vld [vmem:[%s1 + $0x688] sm:$0xff]
  %v3274 = vld [vmem:[%s1 + $0x690] sm:$0xff]
  %v3275 = vld [vmem:[%s1 + $0x698] sm:$0xff]
  %v3276 = vld [vmem:[%s1 + $0x6a0] sm:$0xff]
  %v3277 = vld [vmem:[%s1 + $0x6a8] sm:$0xff]
  %v3278 = vld [vmem:[%s1 + $0x6b0] sm:$0xff]
  %v3279 = vld [vmem:[%s1 + $0x6b8] sm:$0xff]
  %3280 = vmatprep.subr.mxu0 %v3217
  %3281 = vmatpush1.msra.mxu0 %v3216
  %3282 = vmatprep.subr.mxu0 %v3221
  %3283 = vmatpush1.msra.mxu0 %v3220
  %3284 = vmatprep.subr.mxu0 %v3225
  %3285 = vmatpush1.msra.mxu0 %v3224
  %3286 = vmatprep.subr.mxu0 %v3229
  %3287 = vmatpush1.msra.mxu0 %v3228
  %3288 = vmatprep.subr.mxu0 %v3233
  %3289 = vmatpush1.msra.mxu0 %v3232
  %3290 = vmatprep.subr.mxu0 %v3237
  %3291 = vmatpush1.msra.mxu0 %v3236
  %3292 = vmatprep.subr.mxu0 %v3241
  %3293 = vmatpush1.msra.mxu0 %v3240
  %3294 = vmatprep.subr.mxu0 %v3245
  %3295 = vmatpush1.msra.mxu0 %v3244
  %3296 = vmatprep.subr.mxu0 %v3249
  %3297 = vmatpush1.msra.mxu0 %v3248
  %3298 = vmatprep.subr.mxu0 %v3253
  %3299 = vmatpush1.msra.mxu0 %v3252
  %3300 = vmatprep.subr.mxu0 %v3257
  %3301 = vmatpush1.msra.mxu0 %v3256
  %3302 = vmatprep.subr.mxu0 %v3261
  %3303 = vmatpush1.msra.mxu0 %v3260
  %3304 = vmatprep.subr.mxu0 %v3265
  %3305 = vmatpush1.msra.mxu0 %v3264
  %3306 = vmatprep.subr.mxu0 %v3269
  %3307 = vmatpush1.msra.mxu0 %v3268
  %3308 = vmatprep.subr.mxu0 %v3273
  %3309 = vmatpush1.msra.mxu0 %v3272
  %3310 = vmatprep.subr.mxu0 %v3277
  %3311 = vmatpush1.msra.mxu0 %v3276
  %3312 = vmatprep.subr.mxu0 0.0
  %3313 = vmatpush1.msra.mxu0 0.0
  %3314 = vmatprep.subr.mxu0 0.0
  %3315 = vmatpush1.msra.mxu0 0.0
  %3316 = vmatprep.subr.mxu0 0.0
  %3317 = vmatpush1.msra.mxu0 0.0
  %3318 = vmatprep.subr.mxu0 0.0
  %3319 = vmatpush1.msra.mxu0 0.0
  %3320 = vmatprep.subr.mxu0 0.0
  %3321 = vmatpush1.msra.mxu0 0.0
  %3322 = vmatprep.subr.mxu0 0.0
  %3323 = vmatpush1.msra.mxu0 0.0
  %3324 = vmatprep.subr.mxu0 0.0
  %3325 = vmatpush1.msra.mxu0 0.0
  %3326 = vmatprep.subr.mxu0 0.0
  %3327 = vmatpush1.msra.mxu0 0.0
  %3328 = vmatprep.subr.mxu0 0.0
  %3329 = vmatpush1.msra.mxu0 0.0
  %3330 = vmatprep.subr.mxu0 0.0
  %3331 = vmatpush1.msra.mxu0 0.0
  %3332 = vmatprep.subr.mxu0 0.0
  %3333 = vmatpush1.msra.mxu0 0.0
  %3334 = vmatprep.subr.mxu0 0.0
  %3335 = vmatpush1.msra.mxu0 0.0
  %3336 = vmatprep.subr.mxu0 0.0
  %3337 = vmatpush1.msra.mxu0 0.0
  %3338 = vmatprep.subr.mxu0 0.0
  %3339 = vmatpush1.msra.mxu0 0.0
  %3340 = vmatprep.subr.mxu0 0.0
  %3341 = vmatpush1.msra.mxu0 0.0
  %3342 = vmatprep.subr.mxu0 0.0
  %3343 = vmatpush1.msra.mxu0 0.0
  %3344 = vmatprep.mubr.f32.mxu0 0.0
  %3345 = vmatmul.mubr.f32.gmra.mrb[0].mxu0 %v3215
  %v3346 = vpop.f32.mrb[0].mxu0
  %v3347 = vadd.f32 0.0, %v3346
  %v3348 = vpop.f32.mrb[0].mxu0
  %v3349 = vadd.f32 0.0, %v3348
  %3350 = vdwg.mxu0
  %3351 = vmatprep.subr.mxu0 %v3219
  %3352 = vmatpush1.msra.mxu0 %v3218
  %3353 = vmatprep.subr.mxu0 %v3223
  %3354 = vmatpush1.msra.mxu0 %v3222
  %3355 = vmatprep.subr.mxu0 %v3227
  %3356 = vmatpush1.msra.mxu0 %v3226
  %3357 = vmatprep.subr.mxu0 %v3231
  %3358 = vmatpush1.msra.mxu0 %v3230
  %3359 = vmatprep.subr.mxu0 %v3235
  %3360 = vmatpush1.msra.mxu0 %v3234
  %3361 = vmatprep.subr.mxu0 %v3239
  %3362 = vmatpush1.msra.mxu0 %v3238
  %3363 = vmatprep.subr.mxu0 %v3243
  %3364 = vmatpush1.msra.mxu0 %v3242
  %3365 = vmatprep.subr.mxu0 %v3247
  %3366 = vmatpush1.msra.mxu0 %v3246
  %3367 = vmatprep.subr.mxu0 %v3251
  %3368 = vmatpush1.msra.mxu0 %v3250
  %3369 = vmatprep.subr.mxu0 %v3255
  %3370 = vmatpush1.msra.mxu0 %v3254
  %3371 = vmatprep.subr.mxu0 %v3259
  %3372 = vmatpush1.msra.mxu0 %v3258
  %3373 = vmatprep.subr.mxu0 %v3263
  %3374 = vmatpush1.msra.mxu0 %v3262
  %3375 = vmatprep.subr.mxu0 %v3267
  %3376 = vmatpush1.msra.mxu0 %v3266
  %3377 = vmatprep.subr.mxu0 %v3271
  %3378 = vmatpush1.msra.mxu0 %v3270
  %3379 = vmatprep.subr.mxu0 %v3275
  %3380 = vmatpush1.msra.mxu0 %v3274
  %3381 = vmatprep.subr.mxu0 %v3279
  %3382 = vmatpush1.msra.mxu0 %v3278
  %3383 = vmatprep.subr.mxu0 0.0
  %3384 = vmatpush1.msra.mxu0 0.0
  %3385 = vmatprep.subr.mxu0 0.0
  %3386 = vmatpush1.msra.mxu0 0.0
  %3387 = vmatprep.subr.mxu0 0.0
  %3388 = vmatpush1.msra.mxu0 0.0
  %3389 = vmatprep.subr.mxu0 0.0
  %3390 = vmatpush1.msra.mxu0 0.0
  %3391 = vmatprep.subr.mxu0 0.0
  %3392 = vmatpush1.msra.mxu0 0.0
  %3393 = vmatprep.subr.mxu0 0.0
  %3394 = vmatpush1.msra.mxu0 0.0
  %3395 = vmatprep.subr.mxu0 0.0
  %3396 = vmatpush1.msra.mxu0 0.0
  %3397 = vmatprep.subr.mxu0 0.0
  %3398 = vmatpush1.msra.mxu0 0.0
  %3399 = vmatprep.subr.mxu0 0.0
  %3400 = vmatpush1.msra.mxu0 0.0
  %3401 = vmatprep.subr.mxu0 0.0
  %3402 = vmatpush1.msra.mxu0 0.0
  %3403 = vmatprep.subr.mxu0 0.0
  %3404 = vmatpush1.msra.mxu0 0.0
  %3405 = vmatprep.subr.mxu0 0.0
  %3406 = vmatpush1.msra.mxu0 0.0
  %3407 = vmatprep.subr.mxu0 0.0
  %3408 = vmatpush1.msra.mxu0 0.0
  %3409 = vmatprep.subr.mxu0 0.0
  %3410 = vmatpush1.msra.mxu0 0.0
  %3411 = vmatprep.subr.mxu0 0.0
  %3412 = vmatpush1.msra.mxu0 0.0
  %3413 = vmatprep.subr.mxu0 0.0
  %3414 = vmatpush1.msra.mxu0 0.0
  %3415 = vmatprep.mubr.f32.mxu0 0.0
  %3416 = vmatmul.mubr.f32.gmra.mrb[0].mxu0 %v3215
  %v3417 = vpop.f32.mrb[0].mxu0
  %v3418 = vadd.f32 0.0, %v3417
  %v3419 = vpop.f32.mrb[0].mxu0
  %v3420 = vadd.f32 0.0, %v3419
  %3421 = vdwg.mxu0
  %v3422 = vadd.f32 %v3211, %v3347
  %v3423 = vadd.f32 %v3212, %v3349
  %v3424 = vadd.f32 %v3213, %v3418
  %v3425 = vadd.f32 %v3214, %v3420
  %v3426 = vxor.u32 %v3422, 2147483648
  %v3427 = vxor.u32 %v3423, 2147483648
  %v3428 = vxor.u32 %v3424, 2147483648
  %v3429 = vxor.u32 %v3425, 2147483648
  %v3430 = vmul.f32 %v3426, 1.442695
  %v3431 = vpow.pop %v3430
  %v3432 = vmul.f32 %v3427, 1.442695
  %v3433 = vpow.pop %v3432
  %v3434 = vmul.f32 %v3428, 1.442695
  %v3435 = vpow.pop %v3434
  %v3436 = vmul.f32 %v3429, 1.442695
  %v3437 = vpow.pop %v3436
  %v3438 = vadd.f32 %v3431, 1.0
  %v3439 = vadd.f32 %v3433, 1.0
  %v3440 = vadd.f32 %v3435, 1.0
  %v3441 = vadd.f32 %v3437, 1.0
  %v3442 = vrcp.pop %v3438
  %v3443 = vmul.f32 1.0, %v3442
  %v3444 = vrcp.pop %v3439
  %v3445 = vmul.f32 1.0, %v3444
  %v3446 = vrcp.pop %v3440
  %v3447 = vmul.f32 1.0, %v3446
  %v3448 = vrcp.pop %v3441
  %v3449 = vmul.f32 1.0, %v3448
  %v3450 = vmul.f32 %v3447, 2.0
  %v3451 = vsub.f32 %v3450, 1.0
  %v3452 = vld [vmem:[#allocation4] sm:$0xff]
  %v3453 = vmul.f32 %v3445, %v3452
  %v3454 = vmul.f32 %v3443, %v3451
  %v3455 = vadd.f32 %v3453, %v3454
  %3456 = vst [vmem:[#allocation4] sm:$0xff] %v3455
  %v3457 = vtanh.pop %v3455
  %v3458 = vmul.f32 %v3449, %v3457
  %3459 = vst [vmem:[#allocation3] sm:$0xff] %v3458
  %v3460 = vld [vmem:[#allocation2 + $0xa0] sm:$0xff]
  %v3461 = vld [vmem:[#allocation2 + $0xa8] sm:$0xff]
  %v3462 = vld [vmem:[#allocation2 + $0xb0] sm:$0xff]
  %v3463 = vld [vmem:[#allocation2 + $0xb8] sm:$0xff]
  %v3464 = vld [vmem:[#allocation3] sm:$0xff]
  %v3465 = vld [vmem:[%s1 + $0x4c0] sm:$0xff]
  %v3466 = vld [vmem:[%s1 + $0x4c8] sm:$0xff]
  %v3467 = vld [vmem:[%s1 + $0x4d0] sm:$0xff]
  %v3468 = vld [vmem:[%s1 + $0x4d8] sm:$0xff]
  %v3469 = vld [vmem:[%s1 + $0x4e0] sm:$0xff]
  %v3470 = vld [vmem:[%s1 + $0x4e8] sm:$0xff]
  %v3471 = vld [vmem:[%s1 + $0x4f0] sm:$0xff]
  %v3472 = vld [vmem:[%s1 + $0x4f8] sm:$0xff]
  %v3473 = vld [vmem:[%s1 + $0x500] sm:$0xff]
  %v3474 = vld [vmem:[%s1 + $0x508] sm:$0xff]
  %v3475 = vld [vmem:[%s1 + $0x510] sm:$0xff]
  %v3476 = vld [vmem:[%s1 + $0x518] sm:$0xff]
  %v3477 = vld [vmem:[%s1 + $0x520] sm:$0xff]
  %v3478 = vld [vmem:[%s1 + $0x528] sm:$0xff]
  %v3479 = vld [vmem:[%s1 + $0x530] sm:$0xff]
  %v3480 = vld [vmem:[%s1 + $0x538] sm:$0xff]
  %v3481 = vld [vmem:[%s1 + $0x540] sm:$0xff]
  %v3482 = vld [vmem:[%s1 + $0x548] sm:$0xff]
  %v3483 = vld [vmem:[%s1 + $0x550] sm:$0xff]
  %v3484 = vld [vmem:[%s1 + $0x558] sm:$0xff]
  %v3485 = vld [vmem:[%s1 + $0x560] sm:$0xff]
  %v3486 = vld [vmem:[%s1 + $0x568] sm:$0xff]
  %v3487 = vld [vmem:[%s1 + $0x570] sm:$0xff]
  %v3488 = vld [vmem:[%s1 + $0x578] sm:$0xff]
  %v3489 = vld [vmem:[%s1 + $0x580] sm:$0xff]
  %v3490 = vld [vmem:[%s1 + $0x588] sm:$0xff]
  %v3491 = vld [vmem:[%s1 + $0x590] sm:$0xff]
  %v3492 = vld [vmem:[%s1 + $0x598] sm:$0xff]
  %v3493 = vld [vmem:[%s1 + $0x5a0] sm:$0xff]
  %v3494 = vld [vmem:[%s1 + $0x5a8] sm:$0xff]
  %v3495 = vld [vmem:[%s1 + $0x5b0] sm:$0xff]
  %v3496 = vld [vmem:[%s1 + $0x5b8] sm:$0xff]
  %v3497 = vld [vmem:[%s1 + $0x5c0] sm:$0xff]
  %v3498 = vld [vmem:[%s1 + $0x5c8] sm:$0xff]
  %v3499 = vld [vmem:[%s1 + $0x5d0] sm:$0xff]
  %v3500 = vld [vmem:[%s1 + $0x5d8] sm:$0xff]
  %v3501 = vld [vmem:[%s1 + $0x5e0] sm:$0xff]
  %v3502 = vld [vmem:[%s1 + $0x5e8] sm:$0xff]
  %v3503 = vld [vmem:[%s1 + $0x5f0] sm:$0xff]
  %v3504 = vld [vmem:[%s1 + $0x5f8] sm:$0xff]
  %v3505 = vld [vmem:[%s1 + $0x600] sm:$0xff]
  %v3506 = vld [vmem:[%s1 + $0x608] sm:$0xff]
  %v3507 = vld [vmem:[%s1 + $0x610] sm:$0xff]
  %v3508 = vld [vmem:[%s1 + $0x618] sm:$0xff]
  %v3509 = vld [vmem:[%s1 + $0x620] sm:$0xff]
  %v3510 = vld [vmem:[%s1 + $0x628] sm:$0xff]
  %v3511 = vld [vmem:[%s1 + $0x630] sm:$0xff]
  %v3512 = vld [vmem:[%s1 + $0x638] sm:$0xff]
  %v3513 = vld [vmem:[%s1 + $0x640] sm:$0xff]
  %v3514 = vld [vmem:[%s1 + $0x648] sm:$0xff]
  %v3515 = vld [vmem:[%s1 + $0x650] sm:$0xff]
  %v3516 = vld [vmem:[%s1 + $0x658] sm:$0xff]
  %v3517 = vld [vmem:[%s1 + $0x660] sm:$0xff]
  %v3518 = vld [vmem:[%s1 + $0x668] sm:$0xff]
  %v3519 = vld [vmem:[%s1 + $0x670] sm:$0xff]
  %v3520 = vld [vmem:[%s1 + $0x678] sm:$0xff]
  %v3521 = vld [vmem:[%s1 + $0x680] sm:$0xff]
  %v3522 = vld [vmem:[%s1 + $0x688] sm:$0xff]
  %v3523 = vld [vmem:[%s1 + $0x690] sm:$0xff]
  %v3524 = vld [vmem:[%s1 + $0x698] sm:$0xff]
  %v3525 = vld [vmem:[%s1 + $0x6a0] sm:$0xff]
  %v3526 = vld [vmem:[%s1 + $0x6a8] sm:$0xff]
  %v3527 = vld [vmem:[%s1 + $0x6b0] sm:$0xff]
  %v3528 = vld [vmem:[%s1 + $0x6b8] sm:$0xff]
  %3529 = vmatprep.subr.mxu0 %v3466
  %3530 = vmatpush1.msra.mxu0 %v3465
  %3531 = vmatprep.subr.mxu0 %v3470
  %3532 = vmatpush1.msra.mxu0 %v3469
  %3533 = vmatprep.subr.mxu0 %v3474
  %3534 = vmatpush1.msra.mxu0 %v3473
  %3535 = vmatprep.subr.mxu0 %v3478
  %3536 = vmatpush1.msra.mxu0 %v3477
  %3537 = vmatprep.subr.mxu0 %v3482
  %3538 = vmatpush1.msra.mxu0 %v3481
  %3539 = vmatprep.subr.mxu0 %v3486
  %3540 = vmatpush1.msra.mxu0 %v3485
  %3541 = vmatprep.subr.mxu0 %v3490
  %3542 = vmatpush1.msra.mxu0 %v3489
  %3543 = vmatprep.subr.mxu0 %v3494
  %3544 = vmatpush1.msra.mxu0 %v3493
  %3545 = vmatprep.subr.mxu0 %v3498
  %3546 = vmatpush1.msra.mxu0 %v3497
  %3547 = vmatprep.subr.mxu0 %v3502
  %3548 = vmatpush1.msra.mxu0 %v3501
  %3549 = vmatprep.subr.mxu0 %v3506
  %3550 = vmatpush1.msra.mxu0 %v3505
  %3551 = vmatprep.subr.mxu0 %v3510
  %3552 = vmatpush1.msra.mxu0 %v3509
  %3553 = vmatprep.subr.mxu0 %v3514
  %3554 = vmatpush1.msra.mxu0 %v3513
  %3555 = vmatprep.subr.mxu0 %v3518
  %3556 = vmatpush1.msra.mxu0 %v3517
  %3557 = vmatprep.subr.mxu0 %v3522
  %3558 = vmatpush1.msra.mxu0 %v3521
  %3559 = vmatprep.subr.mxu0 %v3526
  %3560 = vmatpush1.msra.mxu0 %v3525
  %3561 = vmatprep.subr.mxu0 0.0
  %3562 = vmatpush1.msra.mxu0 0.0
  %3563 = vmatprep.subr.mxu0 0.0
  %3564 = vmatpush1.msra.mxu0 0.0
  %3565 = vmatprep.subr.mxu0 0.0
  %3566 = vmatpush1.msra.mxu0 0.0
  %3567 = vmatprep.subr.mxu0 0.0
  %3568 = vmatpush1.msra.mxu0 0.0
  %3569 = vmatprep.subr.mxu0 0.0
  %3570 = vmatpush1.msra.mxu0 0.0
  %3571 = vmatprep.subr.mxu0 0.0
  %3572 = vmatpush1.msra.mxu0 0.0
  %3573 = vmatprep.subr.mxu0 0.0
  %3574 = vmatpush1.msra.mxu0 0.0
  %3575 = vmatprep.subr.mxu0 0.0
  %3576 = vmatpush1.msra.mxu0 0.0
  %3577 = vmatprep.subr.mxu0 0.0
  %3578 = vmatpush1.msra.mxu0 0.0
  %3579 = vmatprep.subr.mxu0 0.0
  %3580 = vmatpush1.msra.mxu0 0.0
  %3581 = vmatprep.subr.mxu0 0.0
  %3582 = vmatpush1.msra.mxu0 0.0
  %3583 = vmatprep.subr.mxu0 0.0
  %3584 = vmatpush1.msra.mxu0 0.0
  %3585 = vmatprep.subr.mxu0 0.0
  %3586 = vmatpush1.msra.mxu0 0.0
  %3587 = vmatprep.subr.mxu0 0.0
  %3588 = vmatpush1.msra.mxu0 0.0
  %3589 = vmatprep.subr.mxu0 0.0
  %3590 = vmatpush1.msra.mxu0 0.0
  %3591 = vmatprep.subr.mxu0 0.0
  %3592 = vmatpush1.msra.mxu0 0.0
  %3593 = vmatprep.mubr.f32.mxu0 0.0
  %3594 = vmatmul.mubr.f32.gmra.mrb[0].mxu0 %v3464
  %v3595 = vpop.f32.mrb[0].mxu0
  %v3596 = vadd.f32 0.0, %v3595
  %v3597 = vpop.f32.mrb[0].mxu0
  %v3598 = vadd.f32 0.0, %v3597
  %3599 = vdwg.mxu0
  %3600 = vmatprep.subr.mxu0 %v3468
  %3601 = vmatpush1.msra.mxu0 %v3467
  %3602 = vmatprep.subr.mxu0 %v3472
  %3603 = vmatpush1.msra.mxu0 %v3471
  %3604 = vmatprep.subr.mxu0 %v3476
  %3605 = vmatpush1.msra.mxu0 %v3475
  %3606 = vmatprep.subr.mxu0 %v3480
  %3607 = vmatpush1.msra.mxu0 %v3479
  %3608 = vmatprep.subr.mxu0 %v3484
  %3609 = vmatpush1.msra.mxu0 %v3483
  %3610 = vmatprep.subr.mxu0 %v3488
  %3611 = vmatpush1.msra.mxu0 %v3487
  %3612 = vmatprep.subr.mxu0 %v3492
  %3613 = vmatpush1.msra.mxu0 %v3491
  %3614 = vmatprep.subr.mxu0 %v3496
  %3615 = vmatpush1.msra.mxu0 %v3495
  %3616 = vmatprep.subr.mxu0 %v3500
  %3617 = vmatpush1.msra.mxu0 %v3499
  %3618 = vmatprep.subr.mxu0 %v3504
  %3619 = vmatpush1.msra.mxu0 %v3503
  %3620 = vmatprep.subr.mxu0 %v3508
  %3621 = vmatpush1.msra.mxu0 %v3507
  %3622 = vmatprep.subr.mxu0 %v3512
  %3623 = vmatpush1.msra.mxu0 %v3511
  %3624 = vmatprep.subr.mxu0 %v3516
  %3625 = vmatpush1.msra.mxu0 %v3515
  %3626 = vmatprep.subr.mxu0 %v3520
  %3627 = vmatpush1.msra.mxu0 %v3519
  %3628 = vmatprep.subr.mxu0 %v3524
  %3629 = vmatpush1.msra.mxu0 %v3523
  %3630 = vmatprep.subr.mxu0 %v3528
  %3631 = vmatpush1.msra.mxu0 %v3527
  %3632 = vmatprep.subr.mxu0 0.0
  %3633 = vmatpush1.msra.mxu0 0.0
  %3634 = vmatprep.subr.mxu0 0.0
  %3635 = vmatpush1.msra.mxu0 0.0
  %3636 = vmatprep.subr.mxu0 0.0
  %3637 = vmatpush1.msra.mxu0 0.0
  %3638 = vmatprep.subr.mxu0 0.0
  %3639 = vmatpush1.msra.mxu0 0.0
  %3640 = vmatprep.subr.mxu0 0.0
  %3641 = vmatpush1.msra.mxu0 0.0
  %3642 = vmatprep.subr.mxu0 0.0
  %3643 = vmatpush1.msra.mxu0 0.0
  %3644 = vmatprep.subr.mxu0 0.0
  %3645 = vmatpush1.msra.mxu0 0.0
  %3646 = vmatprep.subr.mxu0 0.0
  %3647 = vmatpush1.msra.mxu0 0.0
  %3648 = vmatprep.subr.mxu0 0.0
  %3649 = vmatpush1.msra.mxu0 0.0
  %3650 = vmatprep.subr.mxu0 0.0
  %3651 = vmatpush1.msra.mxu0 0.0
  %3652 = vmatprep.subr.mxu0 0.0
  %3653 = vmatpush1.msra.mxu0 0.0
  %3654 = vmatprep.subr.mxu0 0.0
  %3655 = vmatpush1.msra.mxu0 0.0
  %3656 = vmatprep.subr.mxu0 0.0
  %3657 = vmatpush1.msra.mxu0 0.0
  %3658 = vmatprep.subr.mxu0 0.0
  %3659 = vmatpush1.msra.mxu0 0.0
  %3660 = vmatprep.subr.mxu0 0.0
  %3661 = vmatpush1.msra.mxu0 0.0
  %3662 = vmatprep.subr.mxu0 0.0
  %3663 = vmatpush1.msra.mxu0 0.0
  %3664 = vmatprep.mubr.f32.mxu0 0.0
  %3665 = vmatmul.mubr.f32.gmra.mrb[0].mxu0 %v3464
  %v3666 = vpop.f32.mrb[0].mxu0
  %v3667 = vadd.f32 0.0, %v3666
  %v3668 = vpop.f32.mrb[0].mxu0
  %v3669 = vadd.f32 0.0, %v3668
  %3670 = vdwg.mxu0
  %v3671 = vadd.f32 %v3460, %v3596
  %v3672 = vadd.f32 %v3461, %v3598
  %v3673 = vadd.f32 %v3462, %v3667
  %v3674 = vadd.f32 %v3463, %v3669
  %v3675 = vxor.u32 %v3671, 2147483648
  %v3676 = vxor.u32 %v3672, 2147483648
  %v3677 = vxor.u32 %v3673, 2147483648
  %v3678 = vxor.u32 %v3674, 2147483648
  %v3679 = vmul.f32 %v3675, 1.442695
  %v3680 = vpow.pop %v3679
  %v3681 = vmul.f32 %v3676, 1.442695
  %v3682 = vpow.pop %v3681
  %v3683 = vmul.f32 %v3677, 1.442695
  %v3684 = vpow.pop %v3683
  %v3685 = vmul.f32 %v3678, 1.442695
  %v3686 = vpow.pop %v3685
  %v3687 = vadd.f32 %v3680, 1.0
  %v3688 = vadd.f32 %v3682, 1.0
  %v3689 = vadd.f32 %v3684, 1.0
  %v3690 = vadd.f32 %v3686, 1.0
  %v3691 = vrcp.pop %v3687
  %v3692 = vmul.f32 1.0, %v3691
  %v3693 = vrcp.pop %v3688
  %v3694 = vmul.f32 1.0, %v3693
  %v3695 = vrcp.pop %v3689
  %v3696 = vmul.f32 1.0, %v3695
  %v3697 = vrcp.pop %v3690
  %v3698 = vmul.f32 1.0, %v3697
  %v3699 = vmul.f32 %v3696, 2.0
  %v3700 = vsub.f32 %v3699, 1.0
  %v3701 = vld [vmem:[#allocation4] sm:$0xff]
  %v3702 = vmul.f32 %v3694, %v3701
  %v3703 = vmul.f32 %v3692, %v3700
  %v3704 = vadd.f32 %v3702, %v3703
  %3705 = vst [vmem:[#allocation4] sm:$0xff] %v3704
  %v3706 = vtanh.pop %v3704
  %v3707 = vmul.f32 %v3698, %v3706
  %3708 = vst [vmem:[#allocation3] sm:$0xff] %v3707
  %v3709 = vld [vmem:[#allocation2 + $0xc0] sm:$0xff]
  %v3710 = vld [vmem:[#allocation2 + $0xc8] sm:$0xff]
  %v3711 = vld [vmem:[#allocation2 + $0xd0] sm:$0xff]
  %v3712 = vld [vmem:[#allocation2 + $0xd8] sm:$0xff]
  %v3713 = vld [vmem:[#allocation3] sm:$0xff]
  %v3714 = vld [vmem:[%s1 + $0x4c0] sm:$0xff]
  %v3715 = vld [vmem:[%s1 + $0x4c8] sm:$0xff]
  %v3716 = vld [vmem:[%s1 + $0x4d0] sm:$0xff]
  %v3717 = vld [vmem:[%s1 + $0x4d8] sm:$0xff]
  %v3718 = vld [vmem:[%s1 + $0x4e0] sm:$0xff]
  %v3719 = vld [vmem:[%s1 + $0x4e8] sm:$0xff]
  %v3720 = vld [vmem:[%s1 + $0x4f0] sm:$0xff]
  %v3721 = vld [vmem:[%s1 + $0x4f8] sm:$0xff]
  %v3722 = vld [vmem:[%s1 + $0x500] sm:$0xff]
  %v3723 = vld [vmem:[%s1 + $0x508] sm:$0xff]
  %v3724 = vld [vmem:[%s1 + $0x510] sm:$0xff]
  %v3725 = vld [vmem:[%s1 + $0x518] sm:$0xff]
  %v3726 = vld [vmem:[%s1 + $0x520] sm:$0xff]
  %v3727 = vld [vmem:[%s1 + $0x528] sm:$0xff]
  %v3728 = vld [vmem:[%s1 + $0x530] sm:$0xff]
  %v3729 = vld [vmem:[%s1 + $0x538] sm:$0xff]
  %v3730 = vld [vmem:[%s1 + $0x540] sm:$0xff]
  %v3731 = vld [vmem:[%s1 + $0x548] sm:$0xff]
  %v3732 = vld [vmem:[%s1 + $0x550] sm:$0xff]
  %v3733 = vld [vmem:[%s1 + $0x558] sm:$0xff]
  %v3734 = vld [vmem:[%s1 + $0x560] sm:$0xff]
  %v3735 = vld [vmem:[%s1 + $0x568] sm:$0xff]
  %v3736 = vld [vmem:[%s1 + $0x570] sm:$0xff]
  %v3737 = vld [vmem:[%s1 + $0x578] sm:$0xff]
  %v3738 = vld [vmem:[%s1 + $0x580] sm:$0xff]
  %v3739 = vld [vmem:[%s1 + $0x588] sm:$0xff]
  %v3740 = vld [vmem:[%s1 + $0x590] sm:$0xff]
  %v3741 = vld [vmem:[%s1 + $0x598] sm:$0xff]
  %v3742 = vld [vmem:[%s1 + $0x5a0] sm:$0xff]
  %v3743 = vld [vmem:[%s1 + $0x5a8] sm:$0xff]
  %v3744 = vld [vmem:[%s1 + $0x5b0] sm:$0xff]
  %v3745 = vld [vmem:[%s1 + $0x5b8] sm:$0xff]
  %v3746 = vld [vmem:[%s1 + $0x5c0] sm:$0xff]
  %v3747 = vld [vmem:[%s1 + $0x5c8] sm:$0xff]
  %v3748 = vld [vmem:[%s1 + $0x5d0] sm:$0xff]
  %v3749 = vld [vmem:[%s1 + $0x5d8] sm:$0xff]
  %v3750 = vld [vmem:[%s1 + $0x5e0] sm:$0xff]
  %v3751 = vld [vmem:[%s1 + $0x5e8] sm:$0xff]
  %v3752 = vld [vmem:[%s1 + $0x5f0] sm:$0xff]
  %v3753 = vld [vmem:[%s1 + $0x5f8] sm:$0xff]
  %v3754 = vld [vmem:[%s1 + $0x600] sm:$0xff]
  %v3755 = vld [vmem:[%s1 + $0x608] sm:$0xff]
  %v3756 = vld [vmem:[%s1 + $0x610] sm:$0xff]
  %v3757 = vld [vmem:[%s1 + $0x618] sm:$0xff]
  %v3758 = vld [vmem:[%s1 + $0x620] sm:$0xff]
  %v3759 = vld [vmem:[%s1 + $0x628] sm:$0xff]
  %v3760 = vld [vmem:[%s1 + $0x630] sm:$0xff]
  %v3761 = vld [vmem:[%s1 + $0x638] sm:$0xff]
  %v3762 = vld [vmem:[%s1 + $0x640] sm:$0xff]
  %v3763 = vld [vmem:[%s1 + $0x648] sm:$0xff]
  %v3764 = vld [vmem:[%s1 + $0x650] sm:$0xff]
  %v3765 = vld [vmem:[%s1 + $0x658] sm:$0xff]
  %v3766 = vld [vmem:[%s1 + $0x660] sm:$0xff]
  %v3767 = vld [vmem:[%s1 + $0x668] sm:$0xff]
  %v3768 = vld [vmem:[%s1 + $0x670] sm:$0xff]
  %v3769 = vld [vmem:[%s1 + $0x678] sm:$0xff]
  %v3770 = vld [vmem:[%s1 + $0x680] sm:$0xff]
  %v3771 = vld [vmem:[%s1 + $0x688] sm:$0xff]
  %v3772 = vld [vmem:[%s1 + $0x690] sm:$0xff]
  %v3773 = vld [vmem:[%s1 + $0x698] sm:$0xff]
  %v3774 = vld [vmem:[%s1 + $0x6a0] sm:$0xff]
  %v3775 = vld [vmem:[%s1 + $0x6a8] sm:$0xff]
  %v3776 = vld [vmem:[%s1 + $0x6b0] sm:$0xff]
  %v3777 = vld [vmem:[%s1 + $0x6b8] sm:$0xff]
  %3778 = vmatprep.subr.mxu0 %v3715
  %3779 = vmatpush1.msra.mxu0 %v3714
  %3780 = vmatprep.subr.mxu0 %v3719
  %3781 = vmatpush1.msra.mxu0 %v3718
  %3782 = vmatprep.subr.mxu0 %v3723
  %3783 = vmatpush1.msra.mxu0 %v3722
  %3784 = vmatprep.subr.mxu0 %v3727
  %3785 = vmatpush1.msra.mxu0 %v3726
  %3786 = vmatprep.subr.mxu0 %v3731
  %3787 = vmatpush1.msra.mxu0 %v3730
  %3788 = vmatprep.subr.mxu0 %v3735
  %3789 = vmatpush1.msra.mxu0 %v3734
  %3790 = vmatprep.subr.mxu0 %v3739
  %3791 = vmatpush1.msra.mxu0 %v3738
  %3792 = vmatprep.subr.mxu0 %v3743
  %3793 = vmatpush1.msra.mxu0 %v3742
  %3794 = vmatprep.subr.mxu0 %v3747
  %3795 = vmatpush1.msra.mxu0 %v3746
  %3796 = vmatprep.subr.mxu0 %v3751
  %3797 = vmatpush1.msra.mxu0 %v3750
  %3798 = vmatprep.subr.mxu0 %v3755
  %3799 = vmatpush1.msra.mxu0 %v3754
  %3800 = vmatprep.subr.mxu0 %v3759
  %3801 = vmatpush1.msra.mxu0 %v3758
  %3802 = vmatprep.subr.mxu0 %v3763
  %3803 = vmatpush1.msra.mxu0 %v3762
  %3804 = vmatprep.subr.mxu0 %v3767
  %3805 = vmatpush1.msra.mxu0 %v3766
  %3806 = vmatprep.subr.mxu0 %v3771
  %3807 = vmatpush1.msra.mxu0 %v3770
  %3808 = vmatprep.subr.mxu0 %v3775
  %3809 = vmatpush1.msra.mxu0 %v3774
  %3810 = vmatprep.subr.mxu0 0.0
  %3811 = vmatpush1.msra.mxu0 0.0
  %3812 = vmatprep.subr.mxu0 0.0
  %3813 = vmatpush1.msra.mxu0 0.0
  %3814 = vmatprep.subr.mxu0 0.0
  %3815 = vmatpush1.msra.mxu0 0.0
  %3816 = vmatprep.subr.mxu0 0.0
  %3817 = vmatpush1.msra.mxu0 0.0
  %3818 = vmatprep.subr.mxu0 0.0
  %3819 = vmatpush1.msra.mxu0 0.0
  %3820 = vmatprep.subr.mxu0 0.0
  %3821 = vmatpush1.msra.mxu0 0.0
  %3822 = vmatprep.subr.mxu0 0.0
  %3823 = vmatpush1.msra.mxu0 0.0
  %3824 = vmatprep.subr.mxu0 0.0
  %3825 = vmatpush1.msra.mxu0 0.0
  %3826 = vmatprep.subr.mxu0 0.0
  %3827 = vmatpush1.msra.mxu0 0.0
  %3828 = vmatprep.subr.mxu0 0.0
  %3829 = vmatpush1.msra.mxu0 0.0
  %3830 = vmatprep.subr.mxu0 0.0
  %3831 = vmatpush1.msra.mxu0 0.0
  %3832 = vmatprep.subr.mxu0 0.0
  %3833 = vmatpush1.msra.mxu0 0.0
  %3834 = vmatprep.subr.mxu0 0.0
  %3835 = vmatpush1.msra.mxu0 0.0
  %3836 = vmatprep.subr.mxu0 0.0
  %3837 = vmatpush1.msra.mxu0 0.0
  %3838 = vmatprep.subr.mxu0 0.0
  %3839 = vmatpush1.msra.mxu0 0.0
  %3840 = vmatprep.subr.mxu0 0.0
  %3841 = vmatpush1.msra.mxu0 0.0
  %3842 = vmatprep.mubr.f32.mxu0 0.0
  %3843 = vmatmul.mubr.f32.gmra.mrb[0].mxu0 %v3713
  %v3844 = vpop.f32.mrb[0].mxu0
  %v3845 = vadd.f32 0.0, %v3844
  %v3846 = vpop.f32.mrb[0].mxu0
  %v3847 = vadd.f32 0.0, %v3846
  %3848 = vdwg.mxu0
  %3849 = vmatprep.subr.mxu0 %v3717
  %3850 = vmatpush1.msra.mxu0 %v3716
  %3851 = vmatprep.subr.mxu0 %v3721
  %3852 = vmatpush1.msra.mxu0 %v3720
  %3853 = vmatprep.subr.mxu0 %v3725
  %3854 = vmatpush1.msra.mxu0 %v3724
  %3855 = vmatprep.subr.mxu0 %v3729
  %3856 = vmatpush1.msra.mxu0 %v3728
  %3857 = vmatprep.subr.mxu0 %v3733
  %3858 = vmatpush1.msra.mxu0 %v3732
  %3859 = vmatprep.subr.mxu0 %v3737
  %3860 = vmatpush1.msra.mxu0 %v3736
  %3861 = vmatprep.subr.mxu0 %v3741
  %3862 = vmatpush1.msra.mxu0 %v3740
  %3863 = vmatprep.subr.mxu0 %v3745
  %3864 = vmatpush1.msra.mxu0 %v3744
  %3865 = vmatprep.subr.mxu0 %v3749
  %3866 = vmatpush1.msra.mxu0 %v3748
  %3867 = vmatprep.subr.mxu0 %v3753
  %3868 = vmatpush1.msra.mxu0 %v3752
  %3869 = vmatprep.subr.mxu0 %v3757
  %3870 = vmatpush1.msra.mxu0 %v3756
  %3871 = vmatprep.subr.mxu0 %v3761
  %3872 = vmatpush1.msra.mxu0 %v3760
  %3873 = vmatprep.subr.mxu0 %v3765
  %3874 = vmatpush1.msra.mxu0 %v3764
  %3875 = vmatprep.subr.mxu0 %v3769
  %3876 = vmatpush1.msra.mxu0 %v3768
  %3877 = vmatprep.subr.mxu0 %v3773
  %3878 = vmatpush1.msra.mxu0 %v3772
  %3879 = vmatprep.subr.mxu0 %v3777
  %3880 = vmatpush1.msra.mxu0 %v3776
  %3881 = vmatprep.subr.mxu0 0.0
  %3882 = vmatpush1.msra.mxu0 0.0
  %3883 = vmatprep.subr.mxu0 0.0
  %3884 = vmatpush1.msra.mxu0 0.0
  %3885 = vmatprep.subr.mxu0 0.0
  %3886 = vmatpush1.msra.mxu0 0.0
  %3887 = vmatprep.subr.mxu0 0.0
  %3888 = vmatpush1.msra.mxu0 0.0
  %3889 = vmatprep.subr.mxu0 0.0
  %3890 = vmatpush1.msra.mxu0 0.0
  %3891 = vmatprep.subr.mxu0 0.0
  %3892 = vmatpush1.msra.mxu0 0.0
  %3893 = vmatprep.subr.mxu0 0.0
  %3894 = vmatpush1.msra.mxu0 0.0
  %3895 = vmatprep.subr.mxu0 0.0
  %3896 = vmatpush1.msra.mxu0 0.0
  %3897 = vmatprep.subr.mxu0 0.0
  %3898 = vmatpush1.msra.mxu0 0.0
  %3899 = vmatprep.subr.mxu0 0.0
  %3900 = vmatpush1.msra.mxu0 0.0
  %3901 = vmatprep.subr.mxu0 0.0
  %3902 = vmatpush1.msra.mxu0 0.0
  %3903 = vmatprep.subr.mxu0 0.0
  %3904 = vmatpush1.msra.mxu0 0.0
  %3905 = vmatprep.subr.mxu0 0.0
  %3906 = vmatpush1.msra.mxu0 0.0
  %3907 = vmatprep.subr.mxu0 0.0
  %3908 = vmatpush1.msra.mxu0 0.0
  %3909 = vmatprep.subr.mxu0 0.0
  %3910 = vmatpush1.msra.mxu0 0.0
  %3911 = vmatprep.subr.mxu0 0.0
  %3912 = vmatpush1.msra.mxu0 0.0
  %3913 = vmatprep.mubr.f32.mxu0 0.0
  %3914 = vmatmul.mubr.f32.gmra.mrb[0].mxu0 %v3713
  %v3915 = vpop.f32.mrb[0].mxu0
  %v3916 = vadd.f32 0.0, %v3915
  %v3917 = vpop.f32.mrb[0].mxu0
  %v3918 = vadd.f32 0.0, %v3917
  %3919 = vdwg.mxu0
  %v3920 = vadd.f32 %v3709, %v3845
  %v3921 = vadd.f32 %v3710, %v3847
  %v3922 = vadd.f32 %v3711, %v3916
  %v3923 = vadd.f32 %v3712, %v3918
  %v3924 = vxor.u32 %v3920, 2147483648
  %v3925 = vxor.u32 %v3921, 2147483648
  %v3926 = vxor.u32 %v3922, 2147483648
  %v3927 = vxor.u32 %v3923, 2147483648
  %v3928 = vmul.f32 %v3924, 1.442695
  %v3929 = vpow.pop %v3928
  %v3930 = vmul.f32 %v3925, 1.442695
  %v3931 = vpow.pop %v3930
  %v3932 = vmul.f32 %v3926, 1.442695
  %v3933 = vpow.pop %v3932
  %v3934 = vmul.f32 %v3927, 1.442695
  %v3935 = vpow.pop %v3934
  %v3936 = vadd.f32 %v3929, 1.0
  %v3937 = vadd.f32 %v3931, 1.0
  %v3938 = vadd.f32 %v3933, 1.0
  %v3939 = vadd.f32 %v3935, 1.0
  %v3940 = vrcp.pop %v3936
  %v3941 = vmul.f32 1.0, %v3940
  %v3942 = vrcp.pop %v3937
  %v3943 = vmul.f32 1.0, %v3942
  %v3944 = vrcp.pop %v3938
  %v3945 = vmul.f32 1.0, %v3944
  %v3946 = vrcp.pop %v3939
  %v3947 = vmul.f32 1.0, %v3946
  %v3948 = vmul.f32 %v3945, 2.0
  %v3949 = vsub.f32 %v3948, 1.0
  %v3950 = vld [vmem:[#allocation4] sm:$0xff]
  %v3951 = vmul.f32 %v3943, %v3950
  %v3952 = vmul.f32 %v3941, %v3949
  %v3953 = vadd.f32 %v3951, %v3952
  %3954 = vst [vmem:[#allocation4] sm:$0xff] %v3953
  %v3955 = vtanh.pop %v3953
  %v3956 = vmul.f32 %v3947, %v3955
  %3957 = vst [vmem:[#allocation3] sm:$0xff] %v3956
  %v3958 = vld [vmem:[#allocation2 + $0xe0] sm:$0xff]
  %v3959 = vld [vmem:[#allocation2 + $0xe8] sm:$0xff]
  %v3960 = vld [vmem:[#allocation2 + $0xf0] sm:$0xff]
  %v3961 = vld [vmem:[#allocation2 + $0xf8] sm:$0xff]
  %v3962 = vld [vmem:[#allocation3] sm:$0xff]
  %v3963 = vld [vmem:[%s1 + $0x4c0] sm:$0xff]
  %v3964 = vld [vmem:[%s1 + $0x4c8] sm:$0xff]
  %v3965 = vld [vmem:[%s1 + $0x4d0] sm:$0xff]
  %v3966 = vld [vmem:[%s1 + $0x4d8] sm:$0xff]
  %v3967 = vld [vmem:[%s1 + $0x4e0] sm:$0xff]
  %v3968 = vld [vmem:[%s1 + $0x4e8] sm:$0xff]
  %v3969 = vld [vmem:[%s1 + $0x4f0] sm:$0xff]
  %v3970 = vld [vmem:[%s1 + $0x4f8] sm:$0xff]
  %v3971 = vld [vmem:[%s1 + $0x500] sm:$0xff]
  %v3972 = vld [vmem:[%s1 + $0x508] sm:$0xff]
  %v3973 = vld [vmem:[%s1 + $0x510] sm:$0xff]
  %v3974 = vld [vmem:[%s1 + $0x518] sm:$0xff]
  %v3975 = vld [vmem:[%s1 + $0x520] sm:$0xff]
  %v3976 = vld [vmem:[%s1 + $0x528] sm:$0xff]
  %v3977 = vld [vmem:[%s1 + $0x530] sm:$0xff]
  %v3978 = vld [vmem:[%s1 + $0x538] sm:$0xff]
  %v3979 = vld [vmem:[%s1 + $0x540] sm:$0xff]
  %v3980 = vld [vmem:[%s1 + $0x548] sm:$0xff]
  %v3981 = vld [vmem:[%s1 + $0x550] sm:$0xff]
  %v3982 = vld [vmem:[%s1 + $0x558] sm:$0xff]
  %v3983 = vld [vmem:[%s1 + $0x560] sm:$0xff]
  %v3984 = vld [vmem:[%s1 + $0x568] sm:$0xff]
  %v3985 = vld [vmem:[%s1 + $0x570] sm:$0xff]
  %v3986 = vld [vmem:[%s1 + $0x578] sm:$0xff]
  %v3987 = vld [vmem:[%s1 + $0x580] sm:$0xff]
  %v3988 = vld [vmem:[%s1 + $0x588] sm:$0xff]
  %v3989 = vld [vmem:[%s1 + $0x590] sm:$0xff]
  %v3990 = vld [vmem:[%s1 + $0x598] sm:$0xff]
  %v3991 = vld [vmem:[%s1 + $0x5a0] sm:$0xff]
  %v3992 = vld [vmem:[%s1 + $0x5a8] sm:$0xff]
  %v3993 = vld [vmem:[%s1 + $0x5b0] sm:$0xff]
  %v3994 = vld [vmem:[%s1 + $0x5b8] sm:$0xff]
  %v3995 = vld [vmem:[%s1 + $0x5c0] sm:$0xff]
  %v3996 = vld [vmem:[%s1 + $0x5c8] sm:$0xff]
  %v3997 = vld [vmem:[%s1 + $0x5d0] sm:$0xff]
  %v3998 = vld [vmem:[%s1 + $0x5d8] sm:$0xff]
  %v3999 = vld [vmem:[%s1 + $0x5e0] sm:$0xff]
  %v4000 = vld [vmem:[%s1 + $0x5e8] sm:$0xff]
  %v4001 = vld [vmem:[%s1 + $0x5f0] sm:$0xff]
  %v4002 = vld [vmem:[%s1 + $0x5f8] sm:$0xff]
  %v4003 = vld [vmem:[%s1 + $0x600] sm:$0xff]
  %v4004 = vld [vmem:[%s1 + $0x608] sm:$0xff]
  %v4005 = vld [vmem:[%s1 + $0x610] sm:$0xff]
  %v4006 = vld [vmem:[%s1 + $0x618] sm:$0xff]
  %v4007 = vld [vmem:[%s1 + $0x620] sm:$0xff]
  %v4008 = vld [vmem:[%s1 + $0x628] sm:$0xff]
  %v4009 = vld [vmem:[%s1 + $0x630] sm:$0xff]
  %v4010 = vld [vmem:[%s1 + $0x638] sm:$0xff]
  %v4011 = vld [vmem:[%s1 + $0x640] sm:$0xff]
  %v4012 = vld [vmem:[%s1 + $0x648] sm:$0xff]
  %v4013 = vld [vmem:[%s1 + $0x650] sm:$0xff]
  %v4014 = vld [vmem:[%s1 + $0x658] sm:$0xff]
  %v4015 = vld [vmem:[%s1 + $0x660] sm:$0xff]
  %v4016 = vld [vmem:[%s1 + $0x668] sm:$0xff]
  %v4017 = vld [vmem:[%s1 + $0x670] sm:$0xff]
  %v4018 = vld [vmem:[%s1 + $0x678] sm:$0xff]
  %v4019 = vld [vmem:[%s1 + $0x680] sm:$0xff]
  %v4020 = vld [vmem:[%s1 + $0x688] sm:$0xff]
  %v4021 = vld [vmem:[%s1 + $0x690] sm:$0xff]
  %v4022 = vld [vmem:[%s1 + $0x698] sm:$0xff]
  %v4023 = vld [vmem:[%s1 + $0x6a0] sm:$0xff]
  %v4024 = vld [vmem:[%s1 + $0x6a8] sm:$0xff]
  %v4025 = vld [vmem:[%s1 + $0x6b0] sm:$0xff]
  %v4026 = vld [vmem:[%s1 + $0x6b8] sm:$0xff]
  %4027 = vmatprep.subr.mxu0 %v3964
  %4028 = vmatpush1.msra.mxu0 %v3963
  %4029 = vmatprep.subr.mxu0 %v3968
  %4030 = vmatpush1.msra.mxu0 %v3967
  %4031 = vmatprep.subr.mxu0 %v3972
  %4032 = vmatpush1.msra.mxu0 %v3971
  %4033 = vmatprep.subr.mxu0 %v3976
  %4034 = vmatpush1.msra.mxu0 %v3975
  %4035 = vmatprep.subr.mxu0 %v3980
  %4036 = vmatpush1.msra.mxu0 %v3979
  %4037 = vmatprep.subr.mxu0 %v3984
  %4038 = vmatpush1.msra.mxu0 %v3983
  %4039 = vmatprep.subr.mxu0 %v3988
  %4040 = vmatpush1.msra.mxu0 %v3987
  %4041 = vmatprep.subr.mxu0 %v3992
  %4042 = vmatpush1.msra.mxu0 %v3991
  %4043 = vmatprep.subr.mxu0 %v3996
  %4044 = vmatpush1.msra.mxu0 %v3995
  %4045 = vmatprep.subr.mxu0 %v4000
  %4046 = vmatpush1.msra.mxu0 %v3999
  %4047 = vmatprep.subr.mxu0 %v4004
  %4048 = vmatpush1.msra.mxu0 %v4003
  %4049 = vmatprep.subr.mxu0 %v4008
  %4050 = vmatpush1.msra.mxu0 %v4007
  %4051 = vmatprep.subr.mxu0 %v4012
  %4052 = vmatpush1.msra.mxu0 %v4011
  %4053 = vmatprep.subr.mxu0 %v4016
  %4054 = vmatpush1.msra.mxu0 %v4015
  %4055 = vmatprep.subr.mxu0 %v4020
  %4056 = vmatpush1.msra.mxu0 %v4019
  %4057 = vmatprep.subr.mxu0 %v4024
  %4058 = vmatpush1.msra.mxu0 %v4023
  %4059 = vmatprep.subr.mxu0 0.0
  %4060 = vmatpush1.msra.mxu0 0.0
  %4061 = vmatprep.subr.mxu0 0.0
  %4062 = vmatpush1.msra.mxu0 0.0
  %4063 = vmatprep.subr.mxu0 0.0
  %4064 = vmatpush1.msra.mxu0 0.0
  %4065 = vmatprep.subr.mxu0 0.0
  %4066 = vmatpush1.msra.mxu0 0.0
  %4067 = vmatprep.subr.mxu0 0.0
  %4068 = vmatpush1.msra.mxu0 0.0
  %4069 = vmatprep.subr.mxu0 0.0
  %4070 = vmatpush1.msra.mxu0 0.0
  %4071 = vmatprep.subr.mxu0 0.0
  %4072 = vmatpush1.msra.mxu0 0.0
  %4073 = vmatprep.subr.mxu0 0.0
  %4074 = vmatpush1.msra.mxu0 0.0
  %4075 = vmatprep.subr.mxu0 0.0
  %4076 = vmatpush1.msra.mxu0 0.0
  %4077 = vmatprep.subr.mxu0 0.0
  %4078 = vmatpush1.msra.mxu0 0.0
  %4079 = vmatprep.subr.mxu0 0.0
  %4080 = vmatpush1.msra.mxu0 0.0
  %4081 = vmatprep.subr.mxu0 0.0
  %4082 = vmatpush1.msra.mxu0 0.0
  %4083 = vmatprep.subr.mxu0 0.0
  %4084 = vmatpush1.msra.mxu0 0.0
  %4085 = vmatprep.subr.mxu0 0.0
  %4086 = vmatpush1.msra.mxu0 0.0
  %4087 = vmatprep.subr.mxu0 0.0
  %4088 = vmatpush1.msra.mxu0 0.0
  %4089 = vmatprep.subr.mxu0 0.0
  %4090 = vmatpush1.msra.mxu0 0.0
  %4091 = vmatprep.mubr.f32.mxu0 0.0
  %4092 = vmatmul.mubr.f32.gmra.mrb[0].mxu0 %v3962
  %v4093 = vpop.f32.mrb[0].mxu0
  %v4094 = vadd.f32 0.0, %v4093
  %v4095 = vpop.f32.mrb[0].mxu0
  %v4096 = vadd.f32 0.0, %v4095
  %4097 = vdwg.mxu0
  %4098 = vmatprep.subr.mxu0 %v3966
  %4099 = vmatpush1.msra.mxu0 %v3965
  %4100 = vmatprep.subr.mxu0 %v3970
  %4101 = vmatpush1.msra.mxu0 %v3969
  %4102 = vmatprep.subr.mxu0 %v3974
  %4103 = vmatpush1.msra.mxu0 %v3973
  %4104 = vmatprep.subr.mxu0 %v3978
  %4105 = vmatpush1.msra.mxu0 %v3977
  %4106 = vmatprep.subr.mxu0 %v3982
  %4107 = vmatpush1.msra.mxu0 %v3981
  %4108 = vmatprep.subr.mxu0 %v3986
  %4109 = vmatpush1.msra.mxu0 %v3985
  %4110 = vmatprep.subr.mxu0 %v3990
  %4111 = vmatpush1.msra.mxu0 %v3989
  %4112 = vmatprep.subr.mxu0 %v3994
  %4113 = vmatpush1.msra.mxu0 %v3993
  %4114 = vmatprep.subr.mxu0 %v3998
  %4115 = vmatpush1.msra.mxu0 %v3997
  %4116 = vmatprep.subr.mxu0 %v4002
  %4117 = vmatpush1.msra.mxu0 %v4001
  %4118 = vmatprep.subr.mxu0 %v4006
  %4119 = vmatpush1.msra.mxu0 %v4005
  %4120 = vmatprep.subr.mxu0 %v4010
  %4121 = vmatpush1.msra.mxu0 %v4009
  %4122 = vmatprep.subr.mxu0 %v4014
  %4123 = vmatpush1.msra.mxu0 %v4013
  %4124 = vmatprep.subr.mxu0 %v4018
  %4125 = vmatpush1.msra.mxu0 %v4017
  %4126 = vmatprep.subr.mxu0 %v4022
  %4127 = vmatpush1.msra.mxu0 %v4021
  %4128 = vmatprep.subr.mxu0 %v4026
  %4129 = vmatpush1.msra.mxu0 %v4025
  %4130 = vmatprep.subr.mxu0 0.0
  %4131 = vmatpush1.msra.mxu0 0.0
  %4132 = vmatprep.subr.mxu0 0.0
  %4133 = vmatpush1.msra.mxu0 0.0
  %4134 = vmatprep.subr.mxu0 0.0
  %4135 = vmatpush1.msra.mxu0 0.0
  %4136 = vmatprep.subr.mxu0 0.0
  %4137 = vmatpush1.msra.mxu0 0.0
  %4138 = vmatprep.subr.mxu0 0.0
  %4139 = vmatpush1.msra.mxu0 0.0
  %4140 = vmatprep.subr.mxu0 0.0
  %4141 = vmatpush1.msra.mxu0 0.0
  %4142 = vmatprep.subr.mxu0 0.0
  %4143 = vmatpush1.msra.mxu0 0.0
  %4144 = vmatprep.subr.mxu0 0.0
  %4145 = vmatpush1.msra.mxu0 0.0
  %4146 = vmatprep.subr.mxu0 0.0
  %4147 = vmatpush1.msra.mxu0 0.0
  %4148 = vmatprep.subr.mxu0 0.0
  %4149 = vmatpush1.msra.mxu0 0.0
  %4150 = vmatprep.subr.mxu0 0.0
  %4151 = vmatpush1.msra.mxu0 0.0
  %4152 = vmatprep.subr.mxu0 0.0
  %4153 = vmatpush1.msra.mxu0 0.0
  %4154 = vmatprep.subr.mxu0 0.0
  %4155 = vmatpush1.msra.mxu0 0.0
  %4156 = vmatprep.subr.mxu0 0.0
  %4157 = vmatpush1.msra.mxu0 0.0
  %4158 = vmatprep.subr.mxu0 0.0
  %4159 = vmatpush1.msra.mxu0 0.0
  %4160 = vmatprep.subr.mxu0 0.0
  %4161 = vmatpush1.msra.mxu0 0.0
  %4162 = vmatprep.mubr.f32.mxu0 0.0
  %4163 = vmatmul.mubr.f32.gmra.mrb[0].mxu0 %v3962
  %v4164 = vpop.f32.mrb[0].mxu0
  %v4165 = vadd.f32 0.0, %v4164
  %v4166 = vpop.f32.mrb[0].mxu0
  %v4167 = vadd.f32 0.0, %v4166
  %4168 = vdwg.mxu0
  %v4169 = vadd.f32 %v3958, %v4094
  %v4170 = vadd.f32 %v3959, %v4096
  %v4171 = vadd.f32 %v3960, %v4165
  %v4172 = vadd.f32 %v3961, %v4167
  %v4173 = vxor.u32 %v4169, 2147483648
  %v4174 = vxor.u32 %v4170, 2147483648
  %v4175 = vxor.u32 %v4171, 2147483648
  %v4176 = vxor.u32 %v4172, 2147483648
  %v4177 = vmul.f32 %v4173, 1.442695
  %v4178 = vpow.pop %v4177
  %v4179 = vmul.f32 %v4174, 1.442695
  %v4180 = vpow.pop %v4179
  %v4181 = vmul.f32 %v4175, 1.442695
  %v4182 = vpow.pop %v4181
  %v4183 = vmul.f32 %v4176, 1.442695
  %v4184 = vpow.pop %v4183
  %v4185 = vadd.f32 %v4178, 1.0
  %v4186 = vadd.f32 %v4180, 1.0
  %v4187 = vadd.f32 %v4182, 1.0
  %v4188 = vadd.f32 %v4184, 1.0
  %v4189 = vrcp.pop %v4185
  %v4190 = vmul.f32 1.0, %v4189
  %v4191 = vrcp.pop %v4186
  %v4192 = vmul.f32 1.0, %v4191
  %v4193 = vrcp.pop %v4187
  %v4194 = vmul.f32 1.0, %v4193
  %v4195 = vrcp.pop %v4188
  %v4196 = vmul.f32 1.0, %v4195
  %v4197 = vmul.f32 %v4194, 2.0
  %v4198 = vsub.f32 %v4197, 1.0
  %v4199 = vld [vmem:[#allocation4] sm:$0xff]
  %v4200 = vmul.f32 %v4192, %v4199
  %v4201 = vmul.f32 %v4190, %v4198
  %v4202 = vadd.f32 %v4200, %v4201
  %4203 = vst [vmem:[#allocation4] sm:$0xff] %v4202
  %v4204 = vtanh.pop %v4202
  %v4205 = vmul.f32 %v4196, %v4204
  %4206 = vst [vmem:[#allocation3] sm:$0xff] %v4205
  %v4207 = vld [vmem:[#allocation2 + $0x100] sm:$0xff]
  %v4208 = vld [vmem:[#allocation2 + $0x108] sm:$0xff]
  %v4209 = vld [vmem:[#allocation2 + $0x110] sm:$0xff]
  %v4210 = vld [vmem:[#allocation2 + $0x118] sm:$0xff]
  %v4211 = vld [vmem:[#allocation3] sm:$0xff]
  %v4212 = vld [vmem:[%s1 + $0x4c0] sm:$0xff]
  %v4213 = vld [vmem:[%s1 + $0x4c8] sm:$0xff]
  %v4214 = vld [vmem:[%s1 + $0x4d0] sm:$0xff]
  %v4215 = vld [vmem:[%s1 + $0x4d8] sm:$0xff]
  %v4216 = vld [vmem:[%s1 + $0x4e0] sm:$0xff]
  %v4217 = vld [vmem:[%s1 + $0x4e8] sm:$0xff]
  %v4218 = vld [vmem:[%s1 + $0x4f0] sm:$0xff]
  %v4219 = vld [vmem:[%s1 + $0x4f8] sm:$0xff]
  %v4220 = vld [vmem:[%s1 + $0x500] sm:$0xff]
  %v4221 = vld [vmem:[%s1 + $0x508] sm:$0xff]
  %v4222 = vld [vmem:[%s1 + $0x510] sm:$0xff]
  %v4223 = vld [vmem:[%s1 + $0x518] sm:$0xff]
  %v4224 = vld [vmem:[%s1 + $0x520] sm:$0xff]
  %v4225 = vld [vmem:[%s1 + $0x528] sm:$0xff]
  %v4226 = vld [vmem:[%s1 + $0x530] sm:$0xff]
  %v4227 = vld [vmem:[%s1 + $0x538] sm:$0xff]
  %v4228 = vld [vmem:[%s1 + $0x540] sm:$0xff]
  %v4229 = vld [vmem:[%s1 + $0x548] sm:$0xff]
  %v4230 = vld [vmem:[%s1 + $0x550] sm:$0xff]
  %v4231 = vld [vmem:[%s1 + $0x558] sm:$0xff]
  %v4232 = vld [vmem:[%s1 + $0x560] sm:$0xff]
  %v4233 = vld [vmem:[%s1 + $0x568] sm:$0xff]
  %v4234 = vld [vmem:[%s1 + $0x570] sm:$0xff]
  %v4235 = vld [vmem:[%s1 + $0x578] sm:$0xff]
  %v4236 = vld [vmem:[%s1 + $0x580] sm:$0xff]
  %v4237 = vld [vmem:[%s1 + $0x588] sm:$0xff]
  %v4238 = vld [vmem:[%s1 + $0x590] sm:$0xff]
  %v4239 = vld [vmem:[%s1 + $0x598] sm:$0xff]
  %v4240 = vld [vmem:[%s1 + $0x5a0] sm:$0xff]
  %v4241 = vld [vmem:[%s1 + $0x5a8] sm:$0xff]
  %v4242 = vld [vmem:[%s1 + $0x5b0] sm:$0xff]
  %v4243 = vld [vmem:[%s1 + $0x5b8] sm:$0xff]
  %v4244 = vld [vmem:[%s1 + $0x5c0] sm:$0xff]
  %v4245 = vld [vmem:[%s1 + $0x5c8] sm:$0xff]
  %v4246 = vld [vmem:[%s1 + $0x5d0] sm:$0xff]
  %v4247 = vld [vmem:[%s1 + $0x5d8] sm:$0xff]
  %v4248 = vld [vmem:[%s1 + $0x5e0] sm:$0xff]
  %v4249 = vld [vmem:[%s1 + $0x5e8] sm:$0xff]
  %v4250 = vld [vmem:[%s1 + $0x5f0] sm:$0xff]
  %v4251 = vld [vmem:[%s1 + $0x5f8] sm:$0xff]
  %v4252 = vld [vmem:[%s1 + $0x600] sm:$0xff]
  %v4253 = vld [vmem:[%s1 + $0x608] sm:$0xff]
  %v4254 = vld [vmem:[%s1 + $0x610] sm:$0xff]
  %v4255 = vld [vmem:[%s1 + $0x618] sm:$0xff]
  %v4256 = vld [vmem:[%s1 + $0x620] sm:$0xff]
  %v4257 = vld [vmem:[%s1 + $0x628] sm:$0xff]
  %v4258 = vld [vmem:[%s1 + $0x630] sm:$0xff]
  %v4259 = vld [vmem:[%s1 + $0x638] sm:$0xff]
  %v4260 = vld [vmem:[%s1 + $0x640] sm:$0xff]
  %v4261 = vld [vmem:[%s1 + $0x648] sm:$0xff]
  %v4262 = vld [vmem:[%s1 + $0x650] sm:$0xff]
  %v4263 = vld [vmem:[%s1 + $0x658] sm:$0xff]
  %v4264 = vld [vmem:[%s1 + $0x660] sm:$0xff]
  %v4265 = vld [vmem:[%s1 + $0x668] sm:$0xff]
  %v4266 = vld [vmem:[%s1 + $0x670] sm:$0xff]
  %v4267 = vld [vmem:[%s1 + $0x678] sm:$0xff]
  %v4268 = vld [vmem:[%s1 + $0x680] sm:$0xff]
  %v4269 = vld [vmem:[%s1 + $0x688] sm:$0xff]
  %v4270 = vld [vmem:[%s1 + $0x690] sm:$0xff]
  %v4271 = vld [vmem:[%s1 + $0x698] sm:$0xff]
  %v4272 = vld [vmem:[%s1 + $0x6a0] sm:$0xff]
  %v4273 = vld [vmem:[%s1 + $0x6a8] sm:$0xff]
  %v4274 = vld [vmem:[%s1 + $0x6b0] sm:$0xff]
  %v4275 = vld [vmem:[%s1 + $0x6b8] sm:$0xff]
  %4276 = vmatprep.subr.mxu0 %v4213
  %4277 = vmatpush1.msra.mxu0 %v4212
  %4278 = vmatprep.subr.mxu0 %v4217
  %4279 = vmatpush1.msra.mxu0 %v4216
  %4280 = vmatprep.subr.mxu0 %v4221
  %4281 = vmatpush1.msra.mxu0 %v4220
  %4282 = vmatprep.subr.mxu0 %v4225
  %4283 = vmatpush1.msra.mxu0 %v4224
  %4284 = vmatprep.subr.mxu0 %v4229
  %4285 = vmatpush1.msra.mxu0 %v4228
  %4286 = vmatprep.subr.mxu0 %v4233
  %4287 = vmatpush1.msra.mxu0 %v4232
  %4288 = vmatprep.subr.mxu0 %v4237
  %4289 = vmatpush1.msra.mxu0 %v4236
  %4290 = vmatprep.subr.mxu0 %v4241
  %4291 = vmatpush1.msra.mxu0 %v4240
  %4292 = vmatprep.subr.mxu0 %v4245
  %4293 = vmatpush1.msra.mxu0 %v4244
  %4294 = vmatprep.subr.mxu0 %v4249
  %4295 = vmatpush1.msra.mxu0 %v4248
  %4296 = vmatprep.subr.mxu0 %v4253
  %4297 = vmatpush1.msra.mxu0 %v4252
  %4298 = vmatprep.subr.mxu0 %v4257
  %4299 = vmatpush1.msra.mxu0 %v4256
  %4300 = vmatprep.subr.mxu0 %v4261
  %4301 = vmatpush1.msra.mxu0 %v4260
  %4302 = vmatprep.subr.mxu0 %v4265
  %4303 = vmatpush1.msra.mxu0 %v4264
  %4304 = vmatprep.subr.mxu0 %v4269
  %4305 = vmatpush1.msra.mxu0 %v4268
  %4306 = vmatprep.subr.mxu0 %v4273
  %4307 = vmatpush1.msra.mxu0 %v4272
  %4308 = vmatprep.subr.mxu0 0.0
  %4309 = vmatpush1.msra.mxu0 0.0
  %4310 = vmatprep.subr.mxu0 0.0
  %4311 = vmatpush1.msra.mxu0 0.0
  %4312 = vmatprep.subr.mxu0 0.0
  %4313 = vmatpush1.msra.mxu0 0.0
  %4314 = vmatprep.subr.mxu0 0.0
  %4315 = vmatpush1.msra.mxu0 0.0
  %4316 = vmatprep.subr.mxu0 0.0
  %4317 = vmatpush1.msra.mxu0 0.0
  %4318 = vmatprep.subr.mxu0 0.0
  %4319 = vmatpush1.msra.mxu0 0.0
  %4320 = vmatprep.subr.mxu0 0.0
  %4321 = vmatpush1.msra.mxu0 0.0
  %4322 = vmatprep.subr.mxu0 0.0
  %4323 = vmatpush1.msra.mxu0 0.0
  %4324 = vmatprep.subr.mxu0 0.0
  %4325 = vmatpush1.msra.mxu0 0.0
  %4326 = vmatprep.subr.mxu0 0.0
  %4327 = vmatpush1.msra.mxu0 0.0
  %4328 = vmatprep.subr.mxu0 0.0
  %4329 = vmatpush1.msra.mxu0 0.0
  %4330 = vmatprep.subr.mxu0 0.0
  %4331 = vmatpush1.msra.mxu0 0.0
  %4332 = vmatprep.subr.mxu0 0.0
  %4333 = vmatpush1.msra.mxu0 0.0
  %4334 = vmatprep.subr.mxu0 0.0
  %4335 = vmatpush1.msra.mxu0 0.0
  %4336 = vmatprep.subr.mxu0 0.0
  %4337 = vmatpush1.msra.mxu0 0.0
  %4338 = vmatprep.subr.mxu0 0.0
  %4339 = vmatpush1.msra.mxu0 0.0
  %4340 = vmatprep.mubr.f32.mxu0 0.0
  %4341 = vmatmul.mubr.f32.gmra.mrb[0].mxu0 %v4211
  %v4342 = vpop.f32.mrb[0].mxu0
  %v4343 = vadd.f32 0.0, %v4342
  %v4344 = vpop.f32.mrb[0].mxu0
  %v4345 = vadd.f32 0.0, %v4344
  %4346 = vdwg.mxu0
  %4347 = vmatprep.subr.mxu0 %v4215
  %4348 = vmatpush1.msra.mxu0 %v4214
  %4349 = vmatprep.subr.mxu0 %v4219
  %4350 = vmatpush1.msra.mxu0 %v4218
  %4351 = vmatprep.subr.mxu0 %v4223
  %4352 = vmatpush1.msra.mxu0 %v4222
  %4353 = vmatprep.subr.mxu0 %v4227
  %4354 = vmatpush1.msra.mxu0 %v4226
  %4355 = vmatprep.subr.mxu0 %v4231
  %4356 = vmatpush1.msra.mxu0 %v4230
  %4357 = vmatprep.subr.mxu0 %v4235
  %4358 = vmatpush1.msra.mxu0 %v4234
  %4359 = vmatprep.subr.mxu0 %v4239
  %4360 = vmatpush1.msra.mxu0 %v4238
  %4361 = vmatprep.subr.mxu0 %v4243
  %4362 = vmatpush1.msra.mxu0 %v4242
  %4363 = vmatprep.subr.mxu0 %v4247
  %4364 = vmatpush1.msra.mxu0 %v4246
  %4365 = vmatprep.subr.mxu0 %v4251
  %4366 = vmatpush1.msra.mxu0 %v4250
  %4367 = vmatprep.subr.mxu0 %v4255
  %4368 = vmatpush1.msra.mxu0 %v4254
  %4369 = vmatprep.subr.mxu0 %v4259
  %4370 = vmatpush1.msra.mxu0 %v4258
  %4371 = vmatprep.subr.mxu0 %v4263
  %4372 = vmatpush1.msra.mxu0 %v4262
  %4373 = vmatprep.subr.mxu0 %v4267
  %4374 = vmatpush1.msra.mxu0 %v4266
  %4375 = vmatprep.subr.mxu0 %v4271
  %4376 = vmatpush1.msra.mxu0 %v4270
  %4377 = vmatprep.subr.mxu0 %v4275
  %4378 = vmatpush1.msra.mxu0 %v4274
  %4379 = vmatprep.subr.mxu0 0.0
  %4380 = vmatpush1.msra.mxu0 0.0
  %4381 = vmatprep.subr.mxu0 0.0
  %4382 = vmatpush1.msra.mxu0 0.0
  %4383 = vmatprep.subr.mxu0 0.0
  %4384 = vmatpush1.msra.mxu0 0.0
  %4385 = vmatprep.subr.mxu0 0.0
  %4386 = vmatpush1.msra.mxu0 0.0
  %4387 = vmatprep.subr.mxu0 0.0
  %4388 = vmatpush1.msra.mxu0 0.0
  %4389 = vmatprep.subr.mxu0 0.0
  %4390 = vmatpush1.msra.mxu0 0.0
  %4391 = vmatprep.subr.mxu0 0.0
  %4392 = vmatpush1.msra.mxu0 0.0
  %4393 = vmatprep.subr.mxu0 0.0
  %4394 = vmatpush1.msra.mxu0 0.0
  %4395 = vmatprep.subr.mxu0 0.0
  %4396 = vmatpush1.msra.mxu0 0.0
  %4397 = vmatprep.subr.mxu0 0.0
  %4398 = vmatpush1.msra.mxu0 0.0
  %4399 = vmatprep.subr.mxu0 0.0
  %4400 = vmatpush1.msra.mxu0 0.0
  %4401 = vmatprep.subr.mxu0 0.0
  %4402 = vmatpush1.msra.mxu0 0.0
  %4403 = vmatprep.subr.mxu0 0.0
  %4404 = vmatpush1.msra.mxu0 0.0
  %4405 = vmatprep.subr.mxu0 0.0
  %4406 = vmatpush1.msra.mxu0 0.0
  %4407 = vmatprep.subr.mxu0 0.0
  %4408 = vmatpush1.msra.mxu0 0.0
  %4409 = vmatprep.subr.mxu0 0.0
  %4410 = vmatpush1.msra.mxu0 0.0
  %4411 = vmatprep.mubr.f32.mxu0 0.0
  %4412 = vmatmul.mubr.f32.gmra.mrb[0].mxu0 %v4211
  %v4413 = vpop.f32.mrb[0].mxu0
  %v4414 = vadd.f32 0.0, %v4413
  %v4415 = vpop.f32.mrb[0].mxu0
  %v4416 = vadd.f32 0.0, %v4415
  %4417 = vdwg.mxu0
  %v4418 = vadd.f32 %v4207, %v4343
  %v4419 = vadd.f32 %v4208, %v4345
  %v4420 = vadd.f32 %v4209, %v4414
  %v4421 = vadd.f32 %v4210, %v4416
  %v4422 = vxor.u32 %v4418, 2147483648
  %v4423 = vxor.u32 %v4419, 2147483648
  %v4424 = vxor.u32 %v4420, 2147483648
  %v4425 = vxor.u32 %v4421, 2147483648
  %v4426 = vmul.f32 %v4422, 1.442695
  %v4427 = vpow.pop %v4426
  %v4428 = vmul.f32 %v4423, 1.442695
  %v4429 = vpow.pop %v4428
  %v4430 = vmul.f32 %v4424, 1.442695
  %v4431 = vpow.pop %v4430
  %v4432 = vmul.f32 %v4425, 1.442695
  %v4433 = vpow.pop %v4432
  %v4434 = vadd.f32 %v4427, 1.0
  %v4435 = vadd.f32 %v4429, 1.0
  %v4436 = vadd.f32 %v4431, 1.0
  %v4437 = vadd.f32 %v4433, 1.0
  %v4438 = vrcp.pop %v4434
  %v4439 = vmul.f32 1.0, %v4438
  %v4440 = vrcp.pop %v4435
  %v4441 = vmul.f32 1.0, %v4440
  %v4442 = vrcp.pop %v4436
  %v4443 = vmul.f32 1.0, %v4442
  %v4444 = vrcp.pop %v4437
  %v4445 = vmul.f32 1.0, %v4444
  %v4446 = vmul.f32 %v4443, 2.0
  %v4447 = vsub.f32 %v4446, 1.0
  %v4448 = vld [vmem:[#allocation4] sm:$0xff]
  %v4449 = vmul.f32 %v4441, %v4448
  %v4450 = vmul.f32 %v4439, %v4447
  %v4451 = vadd.f32 %v4449, %v4450
  %4452 = vst [vmem:[#allocation4] sm:$0xff] %v4451
  %v4453 = vtanh.pop %v4451
  %v4454 = vmul.f32 %v4445, %v4453
  %4455 = vst [vmem:[#allocation3] sm:$0xff] %v4454
  %v4456 = vld [vmem:[#allocation2 + $0x120] sm:$0xff]
  %v4457 = vld [vmem:[#allocation2 + $0x128] sm:$0xff]
  %v4458 = vld [vmem:[#allocation2 + $0x130] sm:$0xff]
  %v4459 = vld [vmem:[#allocation2 + $0x138] sm:$0xff]
  %v4460 = vld [vmem:[#allocation3] sm:$0xff]
  %v4461 = vld [vmem:[%s1 + $0x4c0] sm:$0xff]
  %v4462 = vld [vmem:[%s1 + $0x4c8] sm:$0xff]
  %v4463 = vld [vmem:[%s1 + $0x4d0] sm:$0xff]
  %v4464 = vld [vmem:[%s1 + $0x4d8] sm:$0xff]
  %v4465 = vld [vmem:[%s1 + $0x4e0] sm:$0xff]
  %v4466 = vld [vmem:[%s1 + $0x4e8] sm:$0xff]
  %v4467 = vld [vmem:[%s1 + $0x4f0] sm:$0xff]
  %v4468 = vld [vmem:[%s1 + $0x4f8] sm:$0xff]
  %v4469 = vld [vmem:[%s1 + $0x500] sm:$0xff]
  %v4470 = vld [vmem:[%s1 + $0x508] sm:$0xff]
  %v4471 = vld [vmem:[%s1 + $0x510] sm:$0xff]
  %v4472 = vld [vmem:[%s1 + $0x518] sm:$0xff]
  %v4473 = vld [vmem:[%s1 + $0x520] sm:$0xff]
  %v4474 = vld [vmem:[%s1 + $0x528] sm:$0xff]
  %v4475 = vld [vmem:[%s1 + $0x530] sm:$0xff]
  %v4476 = vld [vmem:[%s1 + $0x538] sm:$0xff]
  %v4477 = vld [vmem:[%s1 + $0x540] sm:$0xff]
  %v4478 = vld [vmem:[%s1 + $0x548] sm:$0xff]
  %v4479 = vld [vmem:[%s1 + $0x550] sm:$0xff]
  %v4480 = vld [vmem:[%s1 + $0x558] sm:$0xff]
  %v4481 = vld [vmem:[%s1 + $0x560] sm:$0xff]
  %v4482 = vld [vmem:[%s1 + $0x568] sm:$0xff]
  %v4483 = vld [vmem:[%s1 + $0x570] sm:$0xff]
  %v4484 = vld [vmem:[%s1 + $0x578] sm:$0xff]
  %v4485 = vld [vmem:[%s1 + $0x580] sm:$0xff]
  %v4486 = vld [vmem:[%s1 + $0x588] sm:$0xff]
  %v4487 = vld [vmem:[%s1 + $0x590] sm:$0xff]
  %v4488 = vld [vmem:[%s1 + $0x598] sm:$0xff]
  %v4489 = vld [vmem:[%s1 + $0x5a0] sm:$0xff]
  %v4490 = vld [vmem:[%s1 + $0x5a8] sm:$0xff]
  %v4491 = vld [vmem:[%s1 + $0x5b0] sm:$0xff]
  %v4492 = vld [vmem:[%s1 + $0x5b8] sm:$0xff]
  %v4493 = vld [vmem:[%s1 + $0x5c0] sm:$0xff]
  %v4494 = vld [vmem:[%s1 + $0x5c8] sm:$0xff]
  %v4495 = vld [vmem:[%s1 + $0x5d0] sm:$0xff]
  %v4496 = vld [vmem:[%s1 + $0x5d8] sm:$0xff]
  %v4497 = vld [vmem:[%s1 + $0x5e0] sm:$0xff]
  %v4498 = vld [vmem:[%s1 + $0x5e8] sm:$0xff]
  %v4499 = vld [vmem:[%s1 + $0x5f0] sm:$0xff]
  %v4500 = vld [vmem:[%s1 + $0x5f8] sm:$0xff]
  %v4501 = vld [vmem:[%s1 + $0x600] sm:$0xff]
  %v4502 = vld [vmem:[%s1 + $0x608] sm:$0xff]
  %v4503 = vld [vmem:[%s1 + $0x610] sm:$0xff]
  %v4504 = vld [vmem:[%s1 + $0x618] sm:$0xff]
  %v4505 = vld [vmem:[%s1 + $0x620] sm:$0xff]
  %v4506 = vld [vmem:[%s1 + $0x628] sm:$0xff]
  %v4507 = vld [vmem:[%s1 + $0x630] sm:$0xff]
  %v4508 = vld [vmem:[%s1 + $0x638] sm:$0xff]
  %v4509 = vld [vmem:[%s1 + $0x640] sm:$0xff]
  %v4510 = vld [vmem:[%s1 + $0x648] sm:$0xff]
  %v4511 = vld [vmem:[%s1 + $0x650] sm:$0xff]
  %v4512 = vld [vmem:[%s1 + $0x658] sm:$0xff]
  %v4513 = vld [vmem:[%s1 + $0x660] sm:$0xff]
  %v4514 = vld [vmem:[%s1 + $0x668] sm:$0xff]
  %v4515 = vld [vmem:[%s1 + $0x670] sm:$0xff]
  %v4516 = vld [vmem:[%s1 + $0x678] sm:$0xff]
  %v4517 = vld [vmem:[%s1 + $0x680] sm:$0xff]
  %v4518 = vld [vmem:[%s1 + $0x688] sm:$0xff]
  %v4519 = vld [vmem:[%s1 + $0x690] sm:$0xff]
  %v4520 = vld [vmem:[%s1 + $0x698] sm:$0xff]
  %v4521 = vld [vmem:[%s1 + $0x6a0] sm:$0xff]
  %v4522 = vld [vmem:[%s1 + $0x6a8] sm:$0xff]
  %v4523 = vld [vmem:[%s1 + $0x6b0] sm:$0xff]
  %v4524 = vld [vmem:[%s1 + $0x6b8] sm:$0xff]
  %4525 = vmatprep.subr.mxu0 %v4462
  %4526 = vmatpush1.msra.mxu0 %v4461
  %4527 = vmatprep.subr.mxu0 %v4466
  %4528 = vmatpush1.msra.mxu0 %v4465
  %4529 = vmatprep.subr.mxu0 %v4470
  %4530 = vmatpush1.msra.mxu0 %v4469
  %4531 = vmatprep.subr.mxu0 %v4474
  %4532 = vmatpush1.msra.mxu0 %v4473
  %4533 = vmatprep.subr.mxu0 %v4478
  %4534 = vmatpush1.msra.mxu0 %v4477
  %4535 = vmatprep.subr.mxu0 %v4482
  %4536 = vmatpush1.msra.mxu0 %v4481
  %4537 = vmatprep.subr.mxu0 %v4486
  %4538 = vmatpush1.msra.mxu0 %v4485
  %4539 = vmatprep.subr.mxu0 %v4490
  %4540 = vmatpush1.msra.mxu0 %v4489
  %4541 = vmatprep.subr.mxu0 %v4494
  %4542 = vmatpush1.msra.mxu0 %v4493
  %4543 = vmatprep.subr.mxu0 %v4498
  %4544 = vmatpush1.msra.mxu0 %v4497
  %4545 = vmatprep.subr.mxu0 %v4502
  %4546 = vmatpush1.msra.mxu0 %v4501
  %4547 = vmatprep.subr.mxu0 %v4506
  %4548 = vmatpush1.msra.mxu0 %v4505
  %4549 = vmatprep.subr.mxu0 %v4510
  %4550 = vmatpush1.msra.mxu0 %v4509
  %4551 = vmatprep.subr.mxu0 %v4514
  %4552 = vmatpush1.msra.mxu0 %v4513
  %4553 = vmatprep.subr.mxu0 %v4518
  %4554 = vmatpush1.msra.mxu0 %v4517
  %4555 = vmatprep.subr.mxu0 %v4522
  %4556 = vmatpush1.msra.mxu0 %v4521
  %4557 = vmatprep.subr.mxu0 0.0
  %4558 = vmatpush1.msra.mxu0 0.0
  %4559 = vmatprep.subr.mxu0 0.0
  %4560 = vmatpush1.msra.mxu0 0.0
  %4561 = vmatprep.subr.mxu0 0.0
  %4562 = vmatpush1.msra.mxu0 0.0
  %4563 = vmatprep.subr.mxu0 0.0
  %4564 = vmatpush1.msra.mxu0 0.0
  %4565 = vmatprep.subr.mxu0 0.0
  %4566 = vmatpush1.msra.mxu0 0.0
  %4567 = vmatprep.subr.mxu0 0.0
  %4568 = vmatpush1.msra.mxu0 0.0
  %4569 = vmatprep.subr.mxu0 0.0
  %4570 = vmatpush1.msra.mxu0 0.0
  %4571 = vmatprep.subr.mxu0 0.0
  %4572 = vmatpush1.msra.mxu0 0.0
  %4573 = vmatprep.subr.mxu0 0.0
  %4574 = vmatpush1.msra.mxu0 0.0
  %4575 = vmatprep.subr.mxu0 0.0
  %4576 = vmatpush1.msra.mxu0 0.0
  %4577 = vmatprep.subr.mxu0 0.0
  %4578 = vmatpush1.msra.mxu0 0.0
  %4579 = vmatprep.subr.mxu0 0.0
  %4580 = vmatpush1.msra.mxu0 0.0
  %4581 = vmatprep.subr.mxu0 0.0
  %4582 = vmatpush1.msra.mxu0 0.0
  %4583 = vmatprep.subr.mxu0 0.0
  %4584 = vmatpush1.msra.mxu0 0.0
  %4585 = vmatprep.subr.mxu0 0.0
  %4586 = vmatpush1.msra.mxu0 0.0
  %4587 = vmatprep.subr.mxu0 0.0
  %4588 = vmatpush1.msra.mxu0 0.0
  %4589 = vmatprep.mubr.f32.mxu0 0.0
  %4590 = vmatmul.mubr.f32.gmra.mrb[0].mxu0 %v4460
  %v4591 = vpop.f32.mrb[0].mxu0
  %v4592 = vadd.f32 0.0, %v4591
  %v4593 = vpop.f32.mrb[0].mxu0
  %v4594 = vadd.f32 0.0, %v4593
  %4595 = vdwg.mxu0
  %4596 = vmatprep.subr.mxu0 %v4464
  %4597 = vmatpush1.msra.mxu0 %v4463
  %4598 = vmatprep.subr.mxu0 %v4468
  %4599 = vmatpush1.msra.mxu0 %v4467
  %4600 = vmatprep.subr.mxu0 %v4472
  %4601 = vmatpush1.msra.mxu0 %v4471
  %4602 = vmatprep.subr.mxu0 %v4476
  %4603 = vmatpush1.msra.mxu0 %v4475
  %4604 = vmatprep.subr.mxu0 %v4480
  %4605 = vmatpush1.msra.mxu0 %v4479
  %4606 = vmatprep.subr.mxu0 %v4484
  %4607 = vmatpush1.msra.mxu0 %v4483
  %4608 = vmatprep.subr.mxu0 %v4488
  %4609 = vmatpush1.msra.mxu0 %v4487
  %4610 = vmatprep.subr.mxu0 %v4492
  %4611 = vmatpush1.msra.mxu0 %v4491
  %4612 = vmatprep.subr.mxu0 %v4496
  %4613 = vmatpush1.msra.mxu0 %v4495
  %4614 = vmatprep.subr.mxu0 %v4500
  %4615 = vmatpush1.msra.mxu0 %v4499
  %4616 = vmatprep.subr.mxu0 %v4504
  %4617 = vmatpush1.msra.mxu0 %v4503
  %4618 = vmatprep.subr.mxu0 %v4508
  %4619 = vmatpush1.msra.mxu0 %v4507
  %4620 = vmatprep.subr.mxu0 %v4512
  %4621 = vmatpush1.msra.mxu0 %v4511
  %4622 = vmatprep.subr.mxu0 %v4516
  %4623 = vmatpush1.msra.mxu0 %v4515
  %4624 = vmatprep.subr.mxu0 %v4520
  %4625 = vmatpush1.msra.mxu0 %v4519
  %4626 = vmatprep.subr.mxu0 %v4524
  %4627 = vmatpush1.msra.mxu0 %v4523
  %4628 = vmatprep.subr.mxu0 0.0
  %4629 = vmatpush1.msra.mxu0 0.0
  %4630 = vmatprep.subr.mxu0 0.0
  %4631 = vmatpush1.msra.mxu0 0.0
  %4632 = vmatprep.subr.mxu0 0.0
  %4633 = vmatpush1.msra.mxu0 0.0
  %4634 = vmatprep.subr.mxu0 0.0
  %4635 = vmatpush1.msra.mxu0 0.0
  %4636 = vmatprep.subr.mxu0 0.0
  %4637 = vmatpush1.msra.mxu0 0.0
  %4638 = vmatprep.subr.mxu0 0.0
  %4639 = vmatpush1.msra.mxu0 0.0
  %4640 = vmatprep.subr.mxu0 0.0
  %4641 = vmatpush1.msra.mxu0 0.0
  %4642 = vmatprep.subr.mxu0 0.0
  %4643 = vmatpush1.msra.mxu0 0.0
  %4644 = vmatprep.subr.mxu0 0.0
  %4645 = vmatpush1.msra.mxu0 0.0
  %4646 = vmatprep.subr.mxu0 0.0
  %4647 = vmatpush1.msra.mxu0 0.0
  %4648 = vmatprep.subr.mxu0 0.0
  %4649 = vmatpush1.msra.mxu0 0.0
  %4650 = vmatprep.subr.mxu0 0.0
  %4651 = vmatpush1.msra.mxu0 0.0
  %4652 = vmatprep.subr.mxu0 0.0
  %4653 = vmatpush1.msra.mxu0 0.0
  %4654 = vmatprep.subr.mxu0 0.0
  %4655 = vmatpush1.msra.mxu0 0.0
  %4656 = vmatprep.subr.mxu0 0.0
  %4657 = vmatpush1.msra.mxu0 0.0
  %4658 = vmatprep.subr.mxu0 0.0
  %4659 = vmatpush1.msra.mxu0 0.0
  %4660 = vmatprep.mubr.f32.mxu0 0.0
  %4661 = vmatmul.mubr.f32.gmra.mrb[0].mxu0 %v4460
  %v4662 = vpop.f32.mrb[0].mxu0
  %v4663 = vadd.f32 0.0, %v4662
  %v4664 = vpop.f32.mrb[0].mxu0
  %v4665 = vadd.f32 0.0, %v4664
  %4666 = vdwg.mxu0
  %v4667 = vadd.f32 %v4456, %v4592
  %v4668 = vadd.f32 %v4457, %v4594
  %v4669 = vadd.f32 %v4458, %v4663
  %v4670 = vadd.f32 %v4459, %v4665
  %v4671 = vxor.u32 %v4667, 2147483648
  %v4672 = vxor.u32 %v4668, 2147483648
  %v4673 = vxor.u32 %v4669, 2147483648
  %v4674 = vxor.u32 %v4670, 2147483648
  %v4675 = vmul.f32 %v4671, 1.442695
  %v4676 = vpow.pop %v4675
  %v4677 = vmul.f32 %v4672, 1.442695
  %v4678 = vpow.pop %v4677
  %v4679 = vmul.f32 %v4673, 1.442695
  %v4680 = vpow.pop %v4679
  %v4681 = vmul.f32 %v4674, 1.442695
  %v4682 = vpow.pop %v4681
  %v4683 = vadd.f32 %v4676, 1.0
  %v4684 = vadd.f32 %v4678, 1.0
  %v4685 = vadd.f32 %v4680, 1.0
  %v4686 = vadd.f32 %v4682, 1.0
  %v4687 = vrcp.pop %v4683
  %v4688 = vmul.f32 1.0, %v4687
  %v4689 = vrcp.pop %v4684
  %v4690 = vmul.f32 1.0, %v4689
  %v4691 = vrcp.pop %v4685
  %v4692 = vmul.f32 1.0, %v4691
  %v4693 = vrcp.pop %v4686
  %v4694 = vmul.f32 1.0, %v4693
  %v4695 = vmul.f32 %v4692, 2.0
  %v4696 = vsub.f32 %v4695, 1.0
  %v4697 = vld [vmem:[#allocation4] sm:$0xff]
  %v4698 = vmul.f32 %v4690, %v4697
  %v4699 = vmul.f32 %v4688, %v4696
  %v4700 = vadd.f32 %v4698, %v4699
  %4701 = vst [vmem:[#allocation4] sm:$0xff] %v4700
  %v4702 = vtanh.pop %v4700
  %v4703 = vmul.f32 %v4694, %v4702
  %4704 = vst [vmem:[#allocation3] sm:$0xff] %v4703
  %v4705 = vld [vmem:[#allocation2 + $0x140] sm:$0xff]
  %v4706 = vld [vmem:[#allocation2 + $0x148] sm:$0xff]
  %v4707 = vld [vmem:[#allocation2 + $0x150] sm:$0xff]
  %v4708 = vld [vmem:[#allocation2 + $0x158] sm:$0xff]
  %v4709 = vld [vmem:[#allocation3] sm:$0xff]
  %v4710 = vld [vmem:[%s1 + $0x4c0] sm:$0xff]
  %v4711 = vld [vmem:[%s1 + $0x4c8] sm:$0xff]
  %v4712 = vld [vmem:[%s1 + $0x4d0] sm:$0xff]
  %v4713 = vld [vmem:[%s1 + $0x4d8] sm:$0xff]
  %v4714 = vld [vmem:[%s1 + $0x4e0] sm:$0xff]
  %v4715 = vld [vmem:[%s1 + $0x4e8] sm:$0xff]
  %v4716 = vld [vmem:[%s1 + $0x4f0] sm:$0xff]
  %v4717 = vld [vmem:[%s1 + $0x4f8] sm:$0xff]
  %v4718 = vld [vmem:[%s1 + $0x500] sm:$0xff]
  %v4719 = vld [vmem:[%s1 + $0x508] sm:$0xff]
  %v4720 = vld [vmem:[%s1 + $0x510] sm:$0xff]
  %v4721 = vld [vmem:[%s1 + $0x518] sm:$0xff]
  %v4722 = vld [vmem:[%s1 + $0x520] sm:$0xff]
  %v4723 = vld [vmem:[%s1 + $0x528] sm:$0xff]
  %v4724 = vld [vmem:[%s1 + $0x530] sm:$0xff]
  %v4725 = vld [vmem:[%s1 + $0x538] sm:$0xff]
  %v4726 = vld [vmem:[%s1 + $0x540] sm:$0xff]
  %v4727 = vld [vmem:[%s1 + $0x548] sm:$0xff]
  %v4728 = vld [vmem:[%s1 + $0x550] sm:$0xff]
  %v4729 = vld [vmem:[%s1 + $0x558] sm:$0xff]
  %v4730 = vld [vmem:[%s1 + $0x560] sm:$0xff]
  %v4731 = vld [vmem:[%s1 + $0x568] sm:$0xff]
  %v4732 = vld [vmem:[%s1 + $0x570] sm:$0xff]
  %v4733 = vld [vmem:[%s1 + $0x578] sm:$0xff]
  %v4734 = vld [vmem:[%s1 + $0x580] sm:$0xff]
  %v4735 = vld [vmem:[%s1 + $0x588] sm:$0xff]
  %v4736 = vld [vmem:[%s1 + $0x590] sm:$0xff]
  %v4737 = vld [vmem:[%s1 + $0x598] sm:$0xff]
  %v4738 = vld [vmem:[%s1 + $0x5a0] sm:$0xff]
  %v4739 = vld [vmem:[%s1 + $0x5a8] sm:$0xff]
  %v4740 = vld [vmem:[%s1 + $0x5b0] sm:$0xff]
  %v4741 = vld [vmem:[%s1 + $0x5b8] sm:$0xff]
  %v4742 = vld [vmem:[%s1 + $0x5c0] sm:$0xff]
  %v4743 = vld [vmem:[%s1 + $0x5c8] sm:$0xff]
  %v4744 = vld [vmem:[%s1 + $0x5d0] sm:$0xff]
  %v4745 = vld [vmem:[%s1 + $0x5d8] sm:$0xff]
  %v4746 = vld [vmem:[%s1 + $0x5e0] sm:$0xff]
  %v4747 = vld [vmem:[%s1 + $0x5e8] sm:$0xff]
  %v4748 = vld [vmem:[%s1 + $0x5f0] sm:$0xff]
  %v4749 = vld [vmem:[%s1 + $0x5f8] sm:$0xff]
  %v4750 = vld [vmem:[%s1 + $0x600] sm:$0xff]
  %v4751 = vld [vmem:[%s1 + $0x608] sm:$0xff]
  %v4752 = vld [vmem:[%s1 + $0x610] sm:$0xff]
  %v4753 = vld [vmem:[%s1 + $0x618] sm:$0xff]
  %v4754 = vld [vmem:[%s1 + $0x620] sm:$0xff]
  %v4755 = vld [vmem:[%s1 + $0x628] sm:$0xff]
  %v4756 = vld [vmem:[%s1 + $0x630] sm:$0xff]
  %v4757 = vld [vmem:[%s1 + $0x638] sm:$0xff]
  %v4758 = vld [vmem:[%s1 + $0x640] sm:$0xff]
  %v4759 = vld [vmem:[%s1 + $0x648] sm:$0xff]
  %v4760 = vld [vmem:[%s1 + $0x650] sm:$0xff]
  %v4761 = vld [vmem:[%s1 + $0x658] sm:$0xff]
  %v4762 = vld [vmem:[%s1 + $0x660] sm:$0xff]
  %v4763 = vld [vmem:[%s1 + $0x668] sm:$0xff]
  %v4764 = vld [vmem:[%s1 + $0x670] sm:$0xff]
  %v4765 = vld [vmem:[%s1 + $0x678] sm:$0xff]
  %v4766 = vld [vmem:[%s1 + $0x680] sm:$0xff]
  %v4767 = vld [vmem:[%s1 + $0x688] sm:$0xff]
  %v4768 = vld [vmem:[%s1 + $0x690] sm:$0xff]
  %v4769 = vld [vmem:[%s1 + $0x698] sm:$0xff]
  %v4770 = vld [vmem:[%s1 + $0x6a0] sm:$0xff]
  %v4771 = vld [vmem:[%s1 + $0x6a8] sm:$0xff]
  %v4772 = vld [vmem:[%s1 + $0x6b0] sm:$0xff]
  %v4773 = vld [vmem:[%s1 + $0x6b8] sm:$0xff]
  %4774 = vmatprep.subr.mxu0 %v4711
  %4775 = vmatpush1.msra.mxu0 %v4710
  %4776 = vmatprep.subr.mxu0 %v4715
  %4777 = vmatpush1.msra.mxu0 %v4714
  %4778 = vmatprep.subr.mxu0 %v4719
  %4779 = vmatpush1.msra.mxu0 %v4718
  %4780 = vmatprep.subr.mxu0 %v4723
  %4781 = vmatpush1.msra.mxu0 %v4722
  %4782 = vmatprep.subr.mxu0 %v4727
  %4783 = vmatpush1.msra.mxu0 %v4726
  %4784 = vmatprep.subr.mxu0 %v4731
  %4785 = vmatpush1.msra.mxu0 %v4730
  %4786 = vmatprep.subr.mxu0 %v4735
  %4787 = vmatpush1.msra.mxu0 %v4734
  %4788 = vmatprep.subr.mxu0 %v4739
  %4789 = vmatpush1.msra.mxu0 %v4738
  %4790 = vmatprep.subr.mxu0 %v4743
  %4791 = vmatpush1.msra.mxu0 %v4742
  %4792 = vmatprep.subr.mxu0 %v4747
  %4793 = vmatpush1.msra.mxu0 %v4746
  %4794 = vmatprep.subr.mxu0 %v4751
  %4795 = vmatpush1.msra.mxu0 %v4750
  %4796 = vmatprep.subr.mxu0 %v4755
  %4797 = vmatpush1.msra.mxu0 %v4754
  %4798 = vmatprep.subr.mxu0 %v4759
  %4799 = vmatpush1.msra.mxu0 %v4758
  %4800 = vmatprep.subr.mxu0 %v4763
  %4801 = vmatpush1.msra.mxu0 %v4762
  %4802 = vmatprep.subr.mxu0 %v4767
  %4803 = vmatpush1.msra.mxu0 %v4766
  %4804 = vmatprep.subr.mxu0 %v4771
  %4805 = vmatpush1.msra.mxu0 %v4770
  %4806 = vmatprep.subr.mxu0 0.0
  %4807 = vmatpush1.msra.mxu0 0.0
  %4808 = vmatprep.subr.mxu0 0.0
  %4809 = vmatpush1.msra.mxu0 0.0
  %4810 = vmatprep.subr.mxu0 0.0
  %4811 = vmatpush1.msra.mxu0 0.0
  %4812 = vmatprep.subr.mxu0 0.0
  %4813 = vmatpush1.msra.mxu0 0.0
  %4814 = vmatprep.subr.mxu0 0.0
  %4815 = vmatpush1.msra.mxu0 0.0
  %4816 = vmatprep.subr.mxu0 0.0
  %4817 = vmatpush1.msra.mxu0 0.0
  %4818 = vmatprep.subr.mxu0 0.0
  %4819 = vmatpush1.msra.mxu0 0.0
  %4820 = vmatprep.subr.mxu0 0.0
  %4821 = vmatpush1.msra.mxu0 0.0
  %4822 = vmatprep.subr.mxu0 0.0
  %4823 = vmatpush1.msra.mxu0 0.0
  %4824 = vmatprep.subr.mxu0 0.0
  %4825 = vmatpush1.msra.mxu0 0.0
  %4826 = vmatprep.subr.mxu0 0.0
  %4827 = vmatpush1.msra.mxu0 0.0
  %4828 = vmatprep.subr.mxu0 0.0
  %4829 = vmatpush1.msra.mxu0 0.0
  %4830 = vmatprep.subr.mxu0 0.0
  %4831 = vmatpush1.msra.mxu0 0.0
  %4832 = vmatprep.subr.mxu0 0.0
  %4833 = vmatpush1.msra.mxu0 0.0
  %4834 = vmatprep.subr.mxu0 0.0
  %4835 = vmatpush1.msra.mxu0 0.0
  %4836 = vmatprep.subr.mxu0 0.0
  %4837 = vmatpush1.msra.mxu0 0.0
  %4838 = vmatprep.mubr.f32.mxu0 0.0
  %4839 = vmatmul.mubr.f32.gmra.mrb[0].mxu0 %v4709
  %v4840 = vpop.f32.mrb[0].mxu0
  %v4841 = vadd.f32 0.0, %v4840
  %v4842 = vpop.f32.mrb[0].mxu0
  %v4843 = vadd.f32 0.0, %v4842
  %4844 = vdwg.mxu0
  %4845 = vmatprep.subr.mxu0 %v4713
  %4846 = vmatpush1.msra.mxu0 %v4712
  %4847 = vmatprep.subr.mxu0 %v4717
  %4848 = vmatpush1.msra.mxu0 %v4716
  %4849 = vmatprep.subr.mxu0 %v4721
  %4850 = vmatpush1.msra.mxu0 %v4720
  %4851 = vmatprep.subr.mxu0 %v4725
  %4852 = vmatpush1.msra.mxu0 %v4724
  %4853 = vmatprep.subr.mxu0 %v4729
  %4854 = vmatpush1.msra.mxu0 %v4728
  %4855 = vmatprep.subr.mxu0 %v4733
  %4856 = vmatpush1.msra.mxu0 %v4732
  %4857 = vmatprep.subr.mxu0 %v4737
  %4858 = vmatpush1.msra.mxu0 %v4736
  %4859 = vmatprep.subr.mxu0 %v4741
  %4860 = vmatpush1.msra.mxu0 %v4740
  %4861 = vmatprep.subr.mxu0 %v4745
  %4862 = vmatpush1.msra.mxu0 %v4744
  %4863 = vmatprep.subr.mxu0 %v4749
  %4864 = vmatpush1.msra.mxu0 %v4748
  %4865 = vmatprep.subr.mxu0 %v4753
  %4866 = vmatpush1.msra.mxu0 %v4752
  %4867 = vmatprep.subr.mxu0 %v4757
  %4868 = vmatpush1.msra.mxu0 %v4756
  %4869 = vmatprep.subr.mxu0 %v4761
  %4870 = vmatpush1.msra.mxu0 %v4760
  %4871 = vmatprep.subr.mxu0 %v4765
  %4872 = vmatpush1.msra.mxu0 %v4764
  %4873 = vmatprep.subr.mxu0 %v4769
  %4874 = vmatpush1.msra.mxu0 %v4768
  %4875 = vmatprep.subr.mxu0 %v4773
  %4876 = vmatpush1.msra.mxu0 %v4772
  %4877 = vmatprep.subr.mxu0 0.0
  %4878 = vmatpush1.msra.mxu0 0.0
  %4879 = vmatprep.subr.mxu0 0.0
  %4880 = vmatpush1.msra.mxu0 0.0
  %4881 = vmatprep.subr.mxu0 0.0
  %4882 = vmatpush1.msra.mxu0 0.0
  %4883 = vmatprep.subr.mxu0 0.0
  %4884 = vmatpush1.msra.mxu0 0.0
  %4885 = vmatprep.subr.mxu0 0.0
  %4886 = vmatpush1.msra.mxu0 0.0
  %4887 = vmatprep.subr.mxu0 0.0
  %4888 = vmatpush1.msra.mxu0 0.0
  %4889 = vmatprep.subr.mxu0 0.0
  %4890 = vmatpush1.msra.mxu0 0.0
  %4891 = vmatprep.subr.mxu0 0.0
  %4892 = vmatpush1.msra.mxu0 0.0
  %4893 = vmatprep.subr.mxu0 0.0
  %4894 = vmatpush1.msra.mxu0 0.0
  %4895 = vmatprep.subr.mxu0 0.0
  %4896 = vmatpush1.msra.mxu0 0.0
  %4897 = vmatprep.subr.mxu0 0.0
  %4898 = vmatpush1.msra.mxu0 0.0
  %4899 = vmatprep.subr.mxu0 0.0
  %4900 = vmatpush1.msra.mxu0 0.0
  %4901 = vmatprep.subr.mxu0 0.0
  %4902 = vmatpush1.msra.mxu0 0.0
  %4903 = vmatprep.subr.mxu0 0.0
  %4904 = vmatpush1.msra.mxu0 0.0
  %4905 = vmatprep.subr.mxu0 0.0
  %4906 = vmatpush1.msra.mxu0 0.0
  %4907 = vmatprep.subr.mxu0 0.0
  %4908 = vmatpush1.msra.mxu0 0.0
  %4909 = vmatprep.mubr.f32.mxu0 0.0
  %4910 = vmatmul.mubr.f32.gmra.mrb[0].mxu0 %v4709
  %v4911 = vpop.f32.mrb[0].mxu0
  %v4912 = vadd.f32 0.0, %v4911
  %v4913 = vpop.f32.mrb[0].mxu0
  %v4914 = vadd.f32 0.0, %v4913
  %4915 = vdwg.mxu0
  %v4916 = vadd.f32 %v4705, %v4841
  %v4917 = vadd.f32 %v4706, %v4843
  %v4918 = vadd.f32 %v4707, %v4912
  %v4919 = vadd.f32 %v4708, %v4914
  %v4920 = vxor.u32 %v4916, 2147483648
  %v4921 = vxor.u32 %v4917, 2147483648
  %v4922 = vxor.u32 %v4918, 2147483648
  %v4923 = vxor.u32 %v4919, 2147483648
  %v4924 = vmul.f32 %v4920, 1.442695
  %v4925 = vpow.pop %v4924
  %v4926 = vmul.f32 %v4921, 1.442695
  %v4927 = vpow.pop %v4926
  %v4928 = vmul.f32 %v4922, 1.442695
  %v4929 = vpow.pop %v4928
  %v4930 = vmul.f32 %v4923, 1.442695
  %v4931 = vpow.pop %v4930
  %v4932 = vadd.f32 %v4925, 1.0
  %v4933 = vadd.f32 %v4927, 1.0
  %v4934 = vadd.f32 %v4929, 1.0
  %v4935 = vadd.f32 %v4931, 1.0
  %v4936 = vrcp.pop %v4932
  %v4937 = vmul.f32 1.0, %v4936
  %v4938 = vrcp.pop %v4933
  %v4939 = vmul.f32 1.0, %v4938
  %v4940 = vrcp.pop %v4934
  %v4941 = vmul.f32 1.0, %v4940
  %v4942 = vrcp.pop %v4935
  %v4943 = vmul.f32 1.0, %v4942
  %v4944 = vmul.f32 %v4941, 2.0
  %v4945 = vsub.f32 %v4944, 1.0
  %v4946 = vld [vmem:[#allocation4] sm:$0xff]
  %v4947 = vmul.f32 %v4939, %v4946
  %v4948 = vmul.f32 %v4937, %v4945
  %v4949 = vadd.f32 %v4947, %v4948
  %4950 = vst [vmem:[#allocation4] sm:$0xff] %v4949
  %v4951 = vtanh.pop %v4949
  %v4952 = vmul.f32 %v4943, %v4951
  %4953 = vst [vmem:[#allocation3] sm:$0xff] %v4952
  %v4954 = vld [vmem:[#allocation2 + $0x160] sm:$0xff]
  %v4955 = vld [vmem:[#allocation2 + $0x168] sm:$0xff]
  %v4956 = vld [vmem:[#allocation2 + $0x170] sm:$0xff]
  %v4957 = vld [vmem:[#allocation2 + $0x178] sm:$0xff]
  %v4958 = vld [vmem:[#allocation3] sm:$0xff]
  %v4959 = vld [vmem:[%s1 + $0x4c0] sm:$0xff]
  %v4960 = vld [vmem:[%s1 + $0x4c8] sm:$0xff]
  %v4961 = vld [vmem:[%s1 + $0x4d0] sm:$0xff]
  %v4962 = vld [vmem:[%s1 + $0x4d8] sm:$0xff]
  %v4963 = vld [vmem:[%s1 + $0x4e0] sm:$0xff]
  %v4964 = vld [vmem:[%s1 + $0x4e8] sm:$0xff]
  %v4965 = vld [vmem:[%s1 + $0x4f0] sm:$0xff]
  %v4966 = vld [vmem:[%s1 + $0x4f8] sm:$0xff]
  %v4967 = vld [vmem:[%s1 + $0x500] sm:$0xff]
  %v4968 = vld [vmem:[%s1 + $0x508] sm:$0xff]
  %v4969 = vld [vmem:[%s1 + $0x510] sm:$0xff]
  %v4970 = vld [vmem:[%s1 + $0x518] sm:$0xff]
  %v4971 = vld [vmem:[%s1 + $0x520] sm:$0xff]
  %v4972 = vld [vmem:[%s1 + $0x528] sm:$0xff]
  %v4973 = vld [vmem:[%s1 + $0x530] sm:$0xff]
  %v4974 = vld [vmem:[%s1 + $0x538] sm:$0xff]
  %v4975 = vld [vmem:[%s1 + $0x540] sm:$0xff]
  %v4976 = vld [vmem:[%s1 + $0x548] sm:$0xff]
  %v4977 = vld [vmem:[%s1 + $0x550] sm:$0xff]
  %v4978 = vld [vmem:[%s1 + $0x558] sm:$0xff]
  %v4979 = vld [vmem:[%s1 + $0x560] sm:$0xff]
  %v4980 = vld [vmem:[%s1 + $0x568] sm:$0xff]
  %v4981 = vld [vmem:[%s1 + $0x570] sm:$0xff]
  %v4982 = vld [vmem:[%s1 + $0x578] sm:$0xff]
  %v4983 = vld [vmem:[%s1 + $0x580] sm:$0xff]
  %v4984 = vld [vmem:[%s1 + $0x588] sm:$0xff]
  %v4985 = vld [vmem:[%s1 + $0x590] sm:$0xff]
  %v4986 = vld [vmem:[%s1 + $0x598] sm:$0xff]
  %v4987 = vld [vmem:[%s1 + $0x5a0] sm:$0xff]
  %v4988 = vld [vmem:[%s1 + $0x5a8] sm:$0xff]
  %v4989 = vld [vmem:[%s1 + $0x5b0] sm:$0xff]
  %v4990 = vld [vmem:[%s1 + $0x5b8] sm:$0xff]
  %v4991 = vld [vmem:[%s1 + $0x5c0] sm:$0xff]
  %v4992 = vld [vmem:[%s1 + $0x5c8] sm:$0xff]
  %v4993 = vld [vmem:[%s1 + $0x5d0] sm:$0xff]
  %v4994 = vld [vmem:[%s1 + $0x5d8] sm:$0xff]
  %v4995 = vld [vmem:[%s1 + $0x5e0] sm:$0xff]
  %v4996 = vld [vmem:[%s1 + $0x5e8] sm:$0xff]
  %v4997 = vld [vmem:[%s1 + $0x5f0] sm:$0xff]
  %v4998 = vld [vmem:[%s1 + $0x5f8] sm:$0xff]
  %v4999 = vld [vmem:[%s1 + $0x600] sm:$0xff]
  %v5000 = vld [vmem:[%s1 + $0x608] sm:$0xff]
  %v5001 = vld [vmem:[%s1 + $0x610] sm:$0xff]
  %v5002 = vld [vmem:[%s1 + $0x618] sm:$0xff]
  %v5003 = vld [vmem:[%s1 + $0x620] sm:$0xff]
  %v5004 = vld [vmem:[%s1 + $0x628] sm:$0xff]
  %v5005 = vld [vmem:[%s1 + $0x630] sm:$0xff]
  %v5006 = vld [vmem:[%s1 + $0x638] sm:$0xff]
  %v5007 = vld [vmem:[%s1 + $0x640] sm:$0xff]
  %v5008 = vld [vmem:[%s1 + $0x648] sm:$0xff]
  %v5009 = vld [vmem:[%s1 + $0x650] sm:$0xff]
  %v5010 = vld [vmem:[%s1 + $0x658] sm:$0xff]
  %v5011 = vld [vmem:[%s1 + $0x660] sm:$0xff]
  %v5012 = vld [vmem:[%s1 + $0x668] sm:$0xff]
  %v5013 = vld [vmem:[%s1 + $0x670] sm:$0xff]
  %v5014 = vld [vmem:[%s1 + $0x678] sm:$0xff]
  %v5015 = vld [vmem:[%s1 + $0x680] sm:$0xff]
  %v5016 = vld [vmem:[%s1 + $0x688] sm:$0xff]
  %v5017 = vld [vmem:[%s1 + $0x690] sm:$0xff]
  %v5018 = vld [vmem:[%s1 + $0x698] sm:$0xff]
  %v5019 = vld [vmem:[%s1 + $0x6a0] sm:$0xff]
  %v5020 = vld [vmem:[%s1 + $0x6a8] sm:$0xff]
  %v5021 = vld [vmem:[%s1 + $0x6b0] sm:$0xff]
  %v5022 = vld [vmem:[%s1 + $0x6b8] sm:$0xff]
  %5023 = vmatprep.subr.mxu0 %v4960
  %5024 = vmatpush1.msra.mxu0 %v4959
  %5025 = vmatprep.subr.mxu0 %v4964
  %5026 = vmatpush1.msra.mxu0 %v4963
  %5027 = vmatprep.subr.mxu0 %v4968
  %5028 = vmatpush1.msra.mxu0 %v4967
  %5029 = vmatprep.subr.mxu0 %v4972
  %5030 = vmatpush1.msra.mxu0 %v4971
  %5031 = vmatprep.subr.mxu0 %v4976
  %5032 = vmatpush1.msra.mxu0 %v4975
  %5033 = vmatprep.subr.mxu0 %v4980
  %5034 = vmatpush1.msra.mxu0 %v4979
  %5035 = vmatprep.subr.mxu0 %v4984
  %5036 = vmatpush1.msra.mxu0 %v4983
  %5037 = vmatprep.subr.mxu0 %v4988
  %5038 = vmatpush1.msra.mxu0 %v4987
  %5039 = vmatprep.subr.mxu0 %v4992
  %5040 = vmatpush1.msra.mxu0 %v4991
  %5041 = vmatprep.subr.mxu0 %v4996
  %5042 = vmatpush1.msra.mxu0 %v4995
  %5043 = vmatprep.subr.mxu0 %v5000
  %5044 = vmatpush1.msra.mxu0 %v4999
  %5045 = vmatprep.subr.mxu0 %v5004
  %5046 = vmatpush1.msra.mxu0 %v5003
  %5047 = vmatprep.subr.mxu0 %v5008
  %5048 = vmatpush1.msra.mxu0 %v5007
  %5049 = vmatprep.subr.mxu0 %v5012
  %5050 = vmatpush1.msra.mxu0 %v5011
  %5051 = vmatprep.subr.mxu0 %v5016
  %5052 = vmatpush1.msra.mxu0 %v5015
  %5053 = vmatprep.subr.mxu0 %v5020
  %5054 = vmatpush1.msra.mxu0 %v5019
  %5055 = vmatprep.subr.mxu0 0.0
  %5056 = vmatpush1.msra.mxu0 0.0
  %5057 = vmatprep.subr.mxu0 0.0
  %5058 = vmatpush1.msra.mxu0 0.0
  %5059 = vmatprep.subr.mxu0 0.0
  %5060 = vmatpush1.msra.mxu0 0.0
  %5061 = vmatprep.subr.mxu0 0.0
  %5062 = vmatpush1.msra.mxu0 0.0
  %5063 = vmatprep.subr.mxu0 0.0
  %5064 = vmatpush1.msra.mxu0 0.0
  %5065 = vmatprep.subr.mxu0 0.0
  %5066 = vmatpush1.msra.mxu0 0.0
  %5067 = vmatprep.subr.mxu0 0.0
  %5068 = vmatpush1.msra.mxu0 0.0
  %5069 = vmatprep.subr.mxu0 0.0
  %5070 = vmatpush1.msra.mxu0 0.0
  %5071 = vmatprep.subr.mxu0 0.0
  %5072 = vmatpush1.msra.mxu0 0.0
  %5073 = vmatprep.subr.mxu0 0.0
  %5074 = vmatpush1.msra.mxu0 0.0
  %5075 = vmatprep.subr.mxu0 0.0
  %5076 = vmatpush1.msra.mxu0 0.0
  %5077 = vmatprep.subr.mxu0 0.0
  %5078 = vmatpush1.msra.mxu0 0.0
  %5079 = vmatprep.subr.mxu0 0.0
  %5080 = vmatpush1.msra.mxu0 0.0
  %5081 = vmatprep.subr.mxu0 0.0
  %5082 = vmatpush1.msra.mxu0 0.0
  %5083 = vmatprep.subr.mxu0 0.0
  %5084 = vmatpush1.msra.mxu0 0.0
  %5085 = vmatprep.subr.mxu0 0.0
  %5086 = vmatpush1.msra.mxu0 0.0
  %5087 = vmatprep.mubr.f32.mxu0 0.0
  %5088 = vmatmul.mubr.f32.gmra.mrb[0].mxu0 %v4958
  %v5089 = vpop.f32.mrb[0].mxu0
  %v5090 = vadd.f32 0.0, %v5089
  %v5091 = vpop.f32.mrb[0].mxu0
  %v5092 = vadd.f32 0.0, %v5091
  %5093 = vdwg.mxu0
  %5094 = vmatprep.subr.mxu0 %v4962
  %5095 = vmatpush1.msra.mxu0 %v4961
  %5096 = vmatprep.subr.mxu0 %v4966
  %5097 = vmatpush1.msra.mxu0 %v4965
  %5098 = vmatprep.subr.mxu0 %v4970
  %5099 = vmatpush1.msra.mxu0 %v4969
  %5100 = vmatprep.subr.mxu0 %v4974
  %5101 = vmatpush1.msra.mxu0 %v4973
  %5102 = vmatprep.subr.mxu0 %v4978
  %5103 = vmatpush1.msra.mxu0 %v4977
  %5104 = vmatprep.subr.mxu0 %v4982
  %5105 = vmatpush1.msra.mxu0 %v4981
  %5106 = vmatprep.subr.mxu0 %v4986
  %5107 = vmatpush1.msra.mxu0 %v4985
  %5108 = vmatprep.subr.mxu0 %v4990
  %5109 = vmatpush1.msra.mxu0 %v4989
  %5110 = vmatprep.subr.mxu0 %v4994
  %5111 = vmatpush1.msra.mxu0 %v4993
  %5112 = vmatprep.subr.mxu0 %v4998
  %5113 = vmatpush1.msra.mxu0 %v4997
  %5114 = vmatprep.subr.mxu0 %v5002
  %5115 = vmatpush1.msra.mxu0 %v5001
  %5116 = vmatprep.subr.mxu0 %v5006
  %5117 = vmatpush1.msra.mxu0 %v5005
  %5118 = vmatprep.subr.mxu0 %v5010
  %5119 = vmatpush1.msra.mxu0 %v5009
  %5120 = vmatprep.subr.mxu0 %v5014
  %5121 = vmatpush1.msra.mxu0 %v5013
  %5122 = vmatprep.subr.mxu0 %v5018
  %5123 = vmatpush1.msra.mxu0 %v5017
  %5124 = vmatprep.subr.mxu0 %v5022
  %5125 = vmatpush1.msra.mxu0 %v5021
  %5126 = vmatprep.subr.mxu0 0.0
  %5127 = vmatpush1.msra.mxu0 0.0
  %5128 = vmatprep.subr.mxu0 0.0
  %5129 = vmatpush1.msra.mxu0 0.0
  %5130 = vmatprep.subr.mxu0 0.0
  %5131 = vmatpush1.msra.mxu0 0.0
  %5132 = vmatprep.subr.mxu0 0.0
  %5133 = vmatpush1.msra.mxu0 0.0
  %5134 = vmatprep.subr.mxu0 0.0
  %5135 = vmatpush1.msra.mxu0 0.0
  %5136 = vmatprep.subr.mxu0 0.0
  %5137 = vmatpush1.msra.mxu0 0.0
  %5138 = vmatprep.subr.mxu0 0.0
  %5139 = vmatpush1.msra.mxu0 0.0
  %5140 = vmatprep.subr.mxu0 0.0
  %5141 = vmatpush1.msra.mxu0 0.0
  %5142 = vmatprep.subr.mxu0 0.0
  %5143 = vmatpush1.msra.mxu0 0.0
  %5144 = vmatprep.subr.mxu0 0.0
  %5145 = vmatpush1.msra.mxu0 0.0
  %5146 = vmatprep.subr.mxu0 0.0
  %5147 = vmatpush1.msra.mxu0 0.0
  %5148 = vmatprep.subr.mxu0 0.0
  %5149 = vmatpush1.msra.mxu0 0.0
  %5150 = vmatprep.subr.mxu0 0.0
  %5151 = vmatpush1.msra.mxu0 0.0
  %5152 = vmatprep.subr.mxu0 0.0
  %5153 = vmatpush1.msra.mxu0 0.0
  %5154 = vmatprep.subr.mxu0 0.0
  %5155 = vmatpush1.msra.mxu0 0.0
  %5156 = vmatprep.subr.mxu0 0.0
  %5157 = vmatpush1.msra.mxu0 0.0
  %5158 = vmatprep.mubr.f32.mxu0 0.0
  %5159 = vmatmul.mubr.f32.gmra.mrb[0].mxu0 %v4958
  %v5160 = vpop.f32.mrb[0].mxu0
  %v5161 = vadd.f32 0.0, %v5160
  %v5162 = vpop.f32.mrb[0].mxu0
  %v5163 = vadd.f32 0.0, %v5162
  %5164 = vdwg.mxu0
  %v5165 = vadd.f32 %v4954, %v5090
  %v5166 = vadd.f32 %v4955, %v5092
  %v5167 = vadd.f32 %v4956, %v5161
  %v5168 = vadd.f32 %v4957, %v5163
  %v5169 = vxor.u32 %v5165, 2147483648
  %v5170 = vxor.u32 %v5166, 2147483648
  %v5171 = vxor.u32 %v5167, 2147483648
  %v5172 = vxor.u32 %v5168, 2147483648
  %v5173 = vmul.f32 %v5169, 1.442695
  %v5174 = vpow.pop %v5173
  %v5175 = vmul.f32 %v5170, 1.442695
  %v5176 = vpow.pop %v5175
  %v5177 = vmul.f32 %v5171, 1.442695
  %v5178 = vpow.pop %v5177
  %v5179 = vmul.f32 %v5172, 1.442695
  %v5180 = vpow.pop %v5179
  %v5181 = vadd.f32 %v5174, 1.0
  %v5182 = vadd.f32 %v5176, 1.0
  %v5183 = vadd.f32 %v5178, 1.0
  %v5184 = vadd.f32 %v5180, 1.0
  %v5185 = vrcp.pop %v5181
  %v5186 = vmul.f32 1.0, %v5185
  %v5187 = vrcp.pop %v5182
  %v5188 = vmul.f32 1.0, %v5187
  %v5189 = vrcp.pop %v5183
  %v5190 = vmul.f32 1.0, %v5189
  %v5191 = vrcp.pop %v5184
  %v5192 = vmul.f32 1.0, %v5191
  %v5193 = vmul.f32 %v5190, 2.0
  %v5194 = vsub.f32 %v5193, 1.0
  %v5195 = vld [vmem:[#allocation4] sm:$0xff]
  %v5196 = vmul.f32 %v5188, %v5195
  %v5197 = vmul.f32 %v5186, %v5194
  %v5198 = vadd.f32 %v5196, %v5197
  %5199 = vst [vmem:[#allocation4] sm:$0xff] %v5198
  %v5200 = vtanh.pop %v5198
  %v5201 = vmul.f32 %v5192, %v5200
  %5202 = vst [vmem:[#allocation3] sm:$0xff] %v5201
  %v5203 = vld [vmem:[#allocation2 + $0x180] sm:$0xff]
  %v5204 = vld [vmem:[#allocation2 + $0x188] sm:$0xff]
  %v5205 = vld [vmem:[#allocation2 + $0x190] sm:$0xff]
  %v5206 = vld [vmem:[#allocation2 + $0x198] sm:$0xff]
  %v5207 = vld [vmem:[#allocation2 + $0x1a0] sm:$0xff]
  %v5208 = vld [vmem:[#allocation2 + $0x1a8] sm:$0xff]
  %v5209 = vld [vmem:[#allocation2 + $0x1b0] sm:$0xff]
  %v5210 = vld [vmem:[#allocation2 + $0x1b8] sm:$0xff]
  %v5211 = vld [vmem:[#allocation3] sm:$0xff]
  %v5212 = vld [vmem:[#allocation3 + $0x8] sm:$0xff]
  %v5213 = vld [vmem:[%s1 + $0x4c0] sm:$0xff]
  %v5214 = vld [vmem:[%s1 + $0x4c8] sm:$0xff]
  %v5215 = vld [vmem:[%s1 + $0x4d0] sm:$0xff]
  %v5216 = vld [vmem:[%s1 + $0x4d8] sm:$0xff]
  %v5217 = vld [vmem:[%s1 + $0x4e0] sm:$0xff]
  %v5218 = vld [vmem:[%s1 + $0x4e8] sm:$0xff]
  %v5219 = vld [vmem:[%s1 + $0x4f0] sm:$0xff]
  %v5220 = vld [vmem:[%s1 + $0x4f8] sm:$0xff]
  %v5221 = vld [vmem:[%s1 + $0x500] sm:$0xff]
  %v5222 = vld [vmem:[%s1 + $0x508] sm:$0xff]
  %v5223 = vld [vmem:[%s1 + $0x510] sm:$0xff]
  %v5224 = vld [vmem:[%s1 + $0x518] sm:$0xff]
  %v5225 = vld [vmem:[%s1 + $0x520] sm:$0xff]
  %v5226 = vld [vmem:[%s1 + $0x528] sm:$0xff]
  %v5227 = vld [vmem:[%s1 + $0x530] sm:$0xff]
  %v5228 = vld [vmem:[%s1 + $0x538] sm:$0xff]
  %v5229 = vld [vmem:[%s1 + $0x540] sm:$0xff]
  %v5230 = vld [vmem:[%s1 + $0x548] sm:$0xff]
  %v5231 = vld [vmem:[%s1 + $0x550] sm:$0xff]
  %v5232 = vld [vmem:[%s1 + $0x558] sm:$0xff]
  %v5233 = vld [vmem:[%s1 + $0x560] sm:$0xff]
  %v5234 = vld [vmem:[%s1 + $0x568] sm:$0xff]
  %v5235 = vld [vmem:[%s1 + $0x570] sm:$0xff]
  %v5236 = vld [vmem:[%s1 + $0x578] sm:$0xff]
  %v5237 = vld [vmem:[%s1 + $0x580] sm:$0xff]
  %v5238 = vld [vmem:[%s1 + $0x588] sm:$0xff]
  %v5239 = vld [vmem:[%s1 + $0x590] sm:$0xff]
  %v5240 = vld [vmem:[%s1 + $0x598] sm:$0xff]
  %v5241 = vld [vmem:[%s1 + $0x5a0] sm:$0xff]
  %v5242 = vld [vmem:[%s1 + $0x5a8] sm:$0xff]
  %v5243 = vld [vmem:[%s1 + $0x5b0] sm:$0xff]
  %v5244 = vld [vmem:[%s1 + $0x5b8] sm:$0xff]
  %v5245 = vld [vmem:[%s1 + $0x5c0] sm:$0xff]
  %v5246 = vld [vmem:[%s1 + $0x5c8] sm:$0xff]
  %v5247 = vld [vmem:[%s1 + $0x5d0] sm:$0xff]
  %v5248 = vld [vmem:[%s1 + $0x5d8] sm:$0xff]
  %v5249 = vld [vmem:[%s1 + $0x5e0] sm:$0xff]
  %v5250 = vld [vmem:[%s1 + $0x5e8] sm:$0xff]
  %v5251 = vld [vmem:[%s1 + $0x5f0] sm:$0xff]
  %v5252 = vld [vmem:[%s1 + $0x5f8] sm:$0xff]
  %v5253 = vld [vmem:[%s1 + $0x600] sm:$0xff]
  %v5254 = vld [vmem:[%s1 + $0x608] sm:$0xff]
  %v5255 = vld [vmem:[%s1 + $0x610] sm:$0xff]
  %v5256 = vld [vmem:[%s1 + $0x618] sm:$0xff]
  %v5257 = vld [vmem:[%s1 + $0x620] sm:$0xff]
  %v5258 = vld [vmem:[%s1 + $0x628] sm:$0xff]
  %v5259 = vld [vmem:[%s1 + $0x630] sm:$0xff]
  %v5260 = vld [vmem:[%s1 + $0x638] sm:$0xff]
  %v5261 = vld [vmem:[%s1 + $0x640] sm:$0xff]
  %v5262 = vld [vmem:[%s1 + $0x648] sm:$0xff]
  %v5263 = vld [vmem:[%s1 + $0x650] sm:$0xff]
  %v5264 = vld [vmem:[%s1 + $0x658] sm:$0xff]
  %v5265 = vld [vmem:[%s1 + $0x660] sm:$0xff]
  %v5266 = vld [vmem:[%s1 + $0x668] sm:$0xff]
  %v5267 = vld [vmem:[%s1 + $0x670] sm:$0xff]
  %v5268 = vld [vmem:[%s1 + $0x678] sm:$0xff]
  %v5269 = vld [vmem:[%s1 + $0x680] sm:$0xff]
  %v5270 = vld [vmem:[%s1 + $0x688] sm:$0xff]
  %v5271 = vld [vmem:[%s1 + $0x690] sm:$0xff]
  %v5272 = vld [vmem:[%s1 + $0x698] sm:$0xff]
  %v5273 = vld [vmem:[%s1 + $0x6a0] sm:$0xff]
  %v5274 = vld [vmem:[%s1 + $0x6a8] sm:$0xff]
  %v5275 = vld [vmem:[%s1 + $0x6b0] sm:$0xff]
  %v5276 = vld [vmem:[%s1 + $0x6b8] sm:$0xff]
  %5277 = vmatprep.subr.mxu0 %v5214
  %5278 = vmatpush1.msra.mxu0 %v5213
  %5279 = vmatprep.subr.mxu0 %v5218
  %5280 = vmatpush1.msra.mxu0 %v5217
  %5281 = vmatprep.subr.mxu0 %v5222
  %5282 = vmatpush1.msra.mxu0 %v5221
  %5283 = vmatprep.subr.mxu0 %v5226
  %5284 = vmatpush1.msra.mxu0 %v5225
  %5285 = vmatprep.subr.mxu0 %v5230
  %5286 = vmatpush1.msra.mxu0 %v5229
  %5287 = vmatprep.subr.mxu0 %v5234
  %5288 = vmatpush1.msra.mxu0 %v5233
  %5289 = vmatprep.subr.mxu0 %v5238
  %5290 = vmatpush1.msra.mxu0 %v5237
  %5291 = vmatprep.subr.mxu0 %v5242
  %5292 = vmatpush1.msra.mxu0 %v5241
  %5293 = vmatprep.subr.mxu0 %v5246
  %5294 = vmatpush1.msra.mxu0 %v5245
  %5295 = vmatprep.subr.mxu0 %v5250
  %5296 = vmatpush1.msra.mxu0 %v5249
  %5297 = vmatprep.subr.mxu0 %v5254
  %5298 = vmatpush1.msra.mxu0 %v5253
  %5299 = vmatprep.subr.mxu0 %v5258
  %5300 = vmatpush1.msra.mxu0 %v5257
  %5301 = vmatprep.subr.mxu0 %v5262
  %5302 = vmatpush1.msra.mxu0 %v5261
  %5303 = vmatprep.subr.mxu0 %v5266
  %5304 = vmatpush1.msra.mxu0 %v5265
  %5305 = vmatprep.subr.mxu0 %v5270
  %5306 = vmatpush1.msra.mxu0 %v5269
  %5307 = vmatprep.subr.mxu0 %v5274
  %5308 = vmatpush1.msra.mxu0 %v5273
  %5309 = vmatprep.subr.mxu0 0.0
  %5310 = vmatpush1.msra.mxu0 0.0
  %5311 = vmatprep.subr.mxu0 0.0
  %5312 = vmatpush1.msra.mxu0 0.0
  %5313 = vmatprep.subr.mxu0 0.0
  %5314 = vmatpush1.msra.mxu0 0.0
  %5315 = vmatprep.subr.mxu0 0.0
  %5316 = vmatpush1.msra.mxu0 0.0
  %5317 = vmatprep.subr.mxu0 0.0
  %5318 = vmatpush1.msra.mxu0 0.0
  %5319 = vmatprep.subr.mxu0 0.0
  %5320 = vmatpush1.msra.mxu0 0.0
  %5321 = vmatprep.subr.mxu0 0.0
  %5322 = vmatpush1.msra.mxu0 0.0
  %5323 = vmatprep.subr.mxu0 0.0
  %5324 = vmatpush1.msra.mxu0 0.0
  %5325 = vmatprep.subr.mxu0 0.0
  %5326 = vmatpush1.msra.mxu0 0.0
  %5327 = vmatprep.subr.mxu0 0.0
  %5328 = vmatpush1.msra.mxu0 0.0
  %5329 = vmatprep.subr.mxu0 0.0
  %5330 = vmatpush1.msra.mxu0 0.0
  %5331 = vmatprep.subr.mxu0 0.0
  %5332 = vmatpush1.msra.mxu0 0.0
  %5333 = vmatprep.subr.mxu0 0.0
  %5334 = vmatpush1.msra.mxu0 0.0
  %5335 = vmatprep.subr.mxu0 0.0
  %5336 = vmatpush1.msra.mxu0 0.0
  %5337 = vmatprep.subr.mxu0 0.0
  %5338 = vmatpush1.msra.mxu0 0.0
  %5339 = vmatprep.subr.mxu0 0.0
  %5340 = vmatpush1.msra.mxu0 0.0
  %5341 = vmatprep.mubr.f32.mxu0 0.0
  %5342 = vmatmul.mubr.f32.gmra.mrb[0].mxu0 %v5211
  %v5343 = vpop.f32.mrb[0].mxu0
  %v5344 = vadd.f32 0.0, %v5343
  %v5345 = vpop.f32.mrb[0].mxu0
  %v5346 = vadd.f32 0.0, %v5345
  %5347 = vmatprep.mubr.f32.mxu0 0.0
  %5348 = vmatmul.mubr.f32.gmra.mrb[0].mxu0 %v5212
  %v5349 = vpop.f32.mrb[0].mxu0
  %v5350 = vadd.f32 0.0, %v5349
  %v5351 = vpop.f32.mrb[0].mxu0
  %v5352 = vadd.f32 0.0, %v5351
  %5353 = vdwg.mxu0
  %5354 = vmatprep.subr.mxu0 %v5216
  %5355 = vmatpush1.msra.mxu0 %v5215
  %5356 = vmatprep.subr.mxu0 %v5220
  %5357 = vmatpush1.msra.mxu0 %v5219
  %5358 = vmatprep.subr.mxu0 %v5224
  %5359 = vmatpush1.msra.mxu0 %v5223
  %5360 = vmatprep.subr.mxu0 %v5228
  %5361 = vmatpush1.msra.mxu0 %v5227
  %5362 = vmatprep.subr.mxu0 %v5232
  %5363 = vmatpush1.msra.mxu0 %v5231
  %5364 = vmatprep.subr.mxu0 %v5236
  %5365 = vmatpush1.msra.mxu0 %v5235
  %5366 = vmatprep.subr.mxu0 %v5240
  %5367 = vmatpush1.msra.mxu0 %v5239
  %5368 = vmatprep.subr.mxu0 %v5244
  %5369 = vmatpush1.msra.mxu0 %v5243
  %5370 = vmatprep.subr.mxu0 %v5248
  %5371 = vmatpush1.msra.mxu0 %v5247
  %5372 = vmatprep.subr.mxu0 %v5252
  %5373 = vmatpush1.msra.mxu0 %v5251
  %5374 = vmatprep.subr.mxu0 %v5256
  %5375 = vmatpush1.msra.mxu0 %v5255
  %5376 = vmatprep.subr.mxu0 %v5260
  %5377 = vmatpush1.msra.mxu0 %v5259
  %5378 = vmatprep.subr.mxu0 %v5264
  %5379 = vmatpush1.msra.mxu0 %v5263
  %5380 = vmatprep.subr.mxu0 %v5268
  %5381 = vmatpush1.msra.mxu0 %v5267
  %5382 = vmatprep.subr.mxu0 %v5272
  %5383 = vmatpush1.msra.mxu0 %v5271
  %5384 = vmatprep.subr.mxu0 %v5276
  %5385 = vmatpush1.msra.mxu0 %v5275
  %5386 = vmatprep.subr.mxu0 0.0
  %5387 = vmatpush1.msra.mxu0 0.0
  %5388 = vmatprep.subr.mxu0 0.0
  %5389 = vmatpush1.msra.mxu0 0.0
  %5390 = vmatprep.subr.mxu0 0.0
  %5391 = vmatpush1.msra.mxu0 0.0
  %5392 = vmatprep.subr.mxu0 0.0
  %5393 = vmatpush1.msra.mxu0 0.0
  %5394 = vmatprep.subr.mxu0 0.0
  %5395 = vmatpush1.msra.mxu0 0.0
  %5396 = vmatprep.subr.mxu0 0.0
  %5397 = vmatpush1.msra.mxu0 0.0
  %5398 = vmatprep.subr.mxu0 0.0
  %5399 = vmatpush1.msra.mxu0 0.0
  %5400 = vmatprep.subr.mxu0 0.0
  %5401 = vmatpush1.msra.mxu0 0.0
  %5402 = vmatprep.subr.mxu0 0.0
  %5403 = vmatpush1.msra.mxu0 0.0
  %5404 = vmatprep.subr.mxu0 0.0
  %5405 = vmatpush1.msra.mxu0 0.0
  %5406 = vmatprep.subr.mxu0 0.0
  %5407 = vmatpush1.msra.mxu0 0.0
  %5408 = vmatprep.subr.mxu0 0.0
  %5409 = vmatpush1.msra.mxu0 0.0
  %5410 = vmatprep.subr.mxu0 0.0
  %5411 = vmatpush1.msra.mxu0 0.0
  %5412 = vmatprep.subr.mxu0 0.0
  %5413 = vmatpush1.msra.mxu0 0.0
  %5414 = vmatprep.subr.mxu0 0.0
  %5415 = vmatpush1.msra.mxu0 0.0
  %5416 = vmatprep.subr.mxu0 0.0
  %5417 = vmatpush1.msra.mxu0 0.0
  %5418 = vmatprep.mubr.f32.mxu0 0.0
  %5419 = vmatmul.mubr.f32.gmra.mrb[0].mxu0 %v5211
  %v5420 = vpop.f32.mrb[0].mxu0
  %v5421 = vadd.f32 0.0, %v5420
  %v5422 = vpop.f32.mrb[0].mxu0
  %v5423 = vadd.f32 0.0, %v5422
  %5424 = vmatprep.mubr.f32.mxu0 0.0
  %5425 = vmatmul.mubr.f32.gmra.mrb[0].mxu0 %v5212
  %v5426 = vpop.f32.mrb[0].mxu0
  %v5427 = vadd.f32 0.0, %v5426
  %v5428 = vpop.f32.mrb[0].mxu0
  %v5429 = vadd.f32 0.0, %v5428
  %5430 = vdwg.mxu0
  %v5431 = vadd.f32 %v5203, %v5344
  %v5432 = vadd.f32 %v5204, %v5346
  %v5433 = vadd.f32 %v5205, %v5421
  %v5434 = vadd.f32 %v5206, %v5423
  %v5435 = vadd.f32 %v5207, %v5350
  %v5436 = vadd.f32 %v5208, %v5352
  %v5437 = vadd.f32 %v5209, %v5427
  %v5438 = vadd.f32 %v5210, %v5429
  %v5439 = vxor.u32 %v5431, 2147483648
  %v5440 = vxor.u32 %v5432, 2147483648
  %v5441 = vxor.u32 %v5433, 2147483648
  %v5442 = vxor.u32 %v5434, 2147483648
  %v5443 = vxor.u32 %v5435, 2147483648
  %v5444 = vxor.u32 %v5436, 2147483648
  %v5445 = vxor.u32 %v5437, 2147483648
  %v5446 = vxor.u32 %v5438, 2147483648
  %v5447 = vmul.f32 %v5439, 1.442695
  %v5448 = vpow.pop %v5447
  %v5449 = vmul.f32 %v5440, 1.442695
  %v5450 = vpow.pop %v5449
  %v5451 = vmul.f32 %v5441, 1.442695
  %v5452 = vpow.pop %v5451
  %v5453 = vmul.f32 %v5442, 1.442695
  %v5454 = vpow.pop %v5453
  %v5455 = vmul.f32 %v5443, 1.442695
  %v5456 = vpow.pop %v5455
  %v5457 = vmul.f32 %v5444, 1.442695
  %v5458 = vpow.pop %v5457
  %v5459 = vmul.f32 %v5445, 1.442695
  %v5460 = vpow.pop %v5459
  %v5461 = vmul.f32 %v5446, 1.442695
  %v5462 = vpow.pop %v5461
  %v5463 = vadd.f32 %v5448, 1.0
  %v5464 = vadd.f32 %v5450, 1.0
  %v5465 = vadd.f32 %v5452, 1.0
  %v5466 = vadd.f32 %v5454, 1.0
  %v5467 = vadd.f32 %v5456, 1.0
  %v5468 = vadd.f32 %v5458, 1.0
  %v5469 = vadd.f32 %v5460, 1.0
  %v5470 = vadd.f32 %v5462, 1.0
  %v5471 = vrcp.pop %v5463
  %v5472 = vmul.f32 1.0, %v5471
  %v5473 = vrcp.pop %v5464
  %v5474 = vmul.f32 1.0, %v5473
  %v5475 = vrcp.pop %v5465
  %v5476 = vmul.f32 1.0, %v5475
  %v5477 = vrcp.pop %v5466
  %v5478 = vmul.f32 1.0, %v5477
  %v5479 = vrcp.pop %v5467
  %v5480 = vmul.f32 1.0, %v5479
  %v5481 = vrcp.pop %v5468
  %v5482 = vmul.f32 1.0, %v5481
  %v5483 = vrcp.pop %v5469
  %v5484 = vmul.f32 1.0, %v5483
  %v5485 = vrcp.pop %v5470
  %v5486 = vmul.f32 1.0, %v5485
  %v5487 = vmul.f32 %v5476, 2.0
  %v5488 = vmul.f32 %v5484, 2.0
  %v5489 = vsub.f32 %v5487, 1.0
  %v5490 = vsub.f32 %v5488, 1.0
  %v5491 = vld [vmem:[#allocation4] sm:$0xff]
  %v5492 = vld [vmem:[#allocation4 + $0x8] sm:$0xff]
  %v5493 = vmul.f32 %v5474, %v5491
  %v5494 = vmul.f32 %v5482, %v5492
  %v5495 = vmul.f32 %v5472, %v5489
  %v5496 = vmul.f32 %v5480, %v5490
  %v5497 = vadd.f32 %v5493, %v5495
  %v5498 = vadd.f32 %v5494, %v5496
  %5499 = vst [vmem:[#allocation4] sm:$0xff] %v5497
  %5500 = vst [vmem:[#allocation4 + $0x8] sm:$0xff] %v5498
  %v5501 = vtanh.pop %v5497
  %v5502 = vtanh.pop %v5498
  %v5503 = vmul.f32 %v5478, %v5501
  %v5504 = vmul.f32 %v5486, %v5502
  %5505 = vst [vmem:[#allocation3] sm:$0xff] %v5503
  %5506 = vst [vmem:[#allocation3 + $0x8] sm:$0xff] %v5504
  %v5507 = vld [vmem:[#allocation2 + $0x1c0] sm:$0xff]
  %v5508 = vld [vmem:[#allocation2 + $0x1c8] sm:$0xff]
  %v5509 = vld [vmem:[#allocation2 + $0x1d0] sm:$0xff]
  %v5510 = vld [vmem:[#allocation2 + $0x1d8] sm:$0xff]
  %v5511 = vld [vmem:[#allocation2 + $0x1e0] sm:$0xff]
  %v5512 = vld [vmem:[#allocation2 + $0x1e8] sm:$0xff]
  %v5513 = vld [vmem:[#allocation2 + $0x1f0] sm:$0xff]
  %v5514 = vld [vmem:[#allocation2 + $0x1f8] sm:$0xff]
  %v5515 = vld [vmem:[#allocation3] sm:$0xff]
  %v5516 = vld [vmem:[#allocation3 + $0x8] sm:$0xff]
  %v5517 = vld [vmem:[%s1 + $0x4c0] sm:$0xff]
  %v5518 = vld [vmem:[%s1 + $0x4c8] sm:$0xff]
  %v5519 = vld [vmem:[%s1 + $0x4d0] sm:$0xff]
  %v5520 = vld [vmem:[%s1 + $0x4d8] sm:$0xff]
  %v5521 = vld [vmem:[%s1 + $0x4e0] sm:$0xff]
  %v5522 = vld [vmem:[%s1 + $0x4e8] sm:$0xff]
  %v5523 = vld [vmem:[%s1 + $0x4f0] sm:$0xff]
  %v5524 = vld [vmem:[%s1 + $0x4f8] sm:$0xff]
  %v5525 = vld [vmem:[%s1 + $0x500] sm:$0xff]
  %v5526 = vld [vmem:[%s1 + $0x508] sm:$0xff]
  %v5527 = vld [vmem:[%s1 + $0x510] sm:$0xff]
  %v5528 = vld [vmem:[%s1 + $0x518] sm:$0xff]
  %v5529 = vld [vmem:[%s1 + $0x520] sm:$0xff]
  %v5530 = vld [vmem:[%s1 + $0x528] sm:$0xff]
  %v5531 = vld [vmem:[%s1 + $0x530] sm:$0xff]
  %v5532 = vld [vmem:[%s1 + $0x538] sm:$0xff]
  %v5533 = vld [vmem:[%s1 + $0x540] sm:$0xff]
  %v5534 = vld [vmem:[%s1 + $0x548] sm:$0xff]
  %v5535 = vld [vmem:[%s1 + $0x550] sm:$0xff]
  %v5536 = vld [vmem:[%s1 + $0x558] sm:$0xff]
  %v5537 = vld [vmem:[%s1 + $0x560] sm:$0xff]
  %v5538 = vld [vmem:[%s1 + $0x568] sm:$0xff]
  %v5539 = vld [vmem:[%s1 + $0x570] sm:$0xff]
  %v5540 = vld [vmem:[%s1 + $0x578] sm:$0xff]
  %v5541 = vld [vmem:[%s1 + $0x580] sm:$0xff]
  %v5542 = vld [vmem:[%s1 + $0x588] sm:$0xff]
  %v5543 = vld [vmem:[%s1 + $0x590] sm:$0xff]
  %v5544 = vld [vmem:[%s1 + $0x598] sm:$0xff]
  %v5545 = vld [vmem:[%s1 + $0x5a0] sm:$0xff]
  %v5546 = vld [vmem:[%s1 + $0x5a8] sm:$0xff]
  %v5547 = vld [vmem:[%s1 + $0x5b0] sm:$0xff]
  %v5548 = vld [vmem:[%s1 + $0x5b8] sm:$0xff]
  %v5549 = vld [vmem:[%s1 + $0x5c0] sm:$0xff]
  %v5550 = vld [vmem:[%s1 + $0x5c8] sm:$0xff]
  %v5551 = vld [vmem:[%s1 + $0x5d0] sm:$0xff]
  %v5552 = vld [vmem:[%s1 + $0x5d8] sm:$0xff]
  %v5553 = vld [vmem:[%s1 + $0x5e0] sm:$0xff]
  %v5554 = vld [vmem:[%s1 + $0x5e8] sm:$0xff]
  %v5555 = vld [vmem:[%s1 + $0x5f0] sm:$0xff]
  %v5556 = vld [vmem:[%s1 + $0x5f8] sm:$0xff]
  %v5557 = vld [vmem:[%s1 + $0x600] sm:$0xff]
  %v5558 = vld [vmem:[%s1 + $0x608] sm:$0xff]
  %v5559 = vld [vmem:[%s1 + $0x610] sm:$0xff]
  %v5560 = vld [vmem:[%s1 + $0x618] sm:$0xff]
  %v5561 = vld [vmem:[%s1 + $0x620] sm:$0xff]
  %v5562 = vld [vmem:[%s1 + $0x628] sm:$0xff]
  %v5563 = vld [vmem:[%s1 + $0x630] sm:$0xff]
  %v5564 = vld [vmem:[%s1 + $0x638] sm:$0xff]
  %v5565 = vld [vmem:[%s1 + $0x640] sm:$0xff]
  %v5566 = vld [vmem:[%s1 + $0x648] sm:$0xff]
  %v5567 = vld [vmem:[%s1 + $0x650] sm:$0xff]
  %v5568 = vld [vmem:[%s1 + $0x658] sm:$0xff]
  %v5569 = vld [vmem:[%s1 + $0x660] sm:$0xff]
  %v5570 = vld [vmem:[%s1 + $0x668] sm:$0xff]
  %v5571 = vld [vmem:[%s1 + $0x670] sm:$0xff]
  %v5572 = vld [vmem:[%s1 + $0x678] sm:$0xff]
  %v5573 = vld [vmem:[%s1 + $0x680] sm:$0xff]
  %v5574 = vld [vmem:[%s1 + $0x688] sm:$0xff]
  %v5575 = vld [vmem:[%s1 + $0x690] sm:$0xff]
  %v5576 = vld [vmem:[%s1 + $0x698] sm:$0xff]
  %v5577 = vld [vmem:[%s1 + $0x6a0] sm:$0xff]
  %v5578 = vld [vmem:[%s1 + $0x6a8] sm:$0xff]
  %v5579 = vld [vmem:[%s1 + $0x6b0] sm:$0xff]
  %v5580 = vld [vmem:[%s1 + $0x6b8] sm:$0xff]
  %5581 = vmatprep.subr.mxu0 %v5518
  %5582 = vmatpush1.msra.mxu0 %v5517
  %5583 = vmatprep.subr.mxu0 %v5522
  %5584 = vmatpush1.msra.mxu0 %v5521
  %5585 = vmatprep.subr.mxu0 %v5526
  %5586 = vmatpush1.msra.mxu0 %v5525
  %5587 = vmatprep.subr.mxu0 %v5530
  %5588 = vmatpush1.msra.mxu0 %v5529
  %5589 = vmatprep.subr.mxu0 %v5534
  %5590 = vmatpush1.msra.mxu0 %v5533
  %5591 = vmatprep.subr.mxu0 %v5538
  %5592 = vmatpush1.msra.mxu0 %v5537
  %5593 = vmatprep.subr.mxu0 %v5542
  %5594 = vmatpush1.msra.mxu0 %v5541
  %5595 = vmatprep.subr.mxu0 %v5546
  %5596 = vmatpush1.msra.mxu0 %v5545
  %5597 = vmatprep.subr.mxu0 %v5550
  %5598 = vmatpush1.msra.mxu0 %v5549
  %5599 = vmatprep.subr.mxu0 %v5554
  %5600 = vmatpush1.msra.mxu0 %v5553
  %5601 = vmatprep.subr.mxu0 %v5558
  %5602 = vmatpush1.msra.mxu0 %v5557
  %5603 = vmatprep.subr.mxu0 %v5562
  %5604 = vmatpush1.msra.mxu0 %v5561
  %5605 = vmatprep.subr.mxu0 %v5566
  %5606 = vmatpush1.msra.mxu0 %v5565
  %5607 = vmatprep.subr.mxu0 %v5570
  %5608 = vmatpush1.msra.mxu0 %v5569
  %5609 = vmatprep.subr.mxu0 %v5574
  %5610 = vmatpush1.msra.mxu0 %v5573
  %5611 = vmatprep.subr.mxu0 %v5578
  %5612 = vmatpush1.msra.mxu0 %v5577
  %5613 = vmatprep.subr.mxu0 0.0
  %5614 = vmatpush1.msra.mxu0 0.0
  %5615 = vmatprep.subr.mxu0 0.0
  %5616 = vmatpush1.msra.mxu0 0.0
  %5617 = vmatprep.subr.mxu0 0.0
  %5618 = vmatpush1.msra.mxu0 0.0
  %5619 = vmatprep.subr.mxu0 0.0
  %5620 = vmatpush1.msra.mxu0 0.0
  %5621 = vmatprep.subr.mxu0 0.0
  %5622 = vmatpush1.msra.mxu0 0.0
  %5623 = vmatprep.subr.mxu0 0.0
  %5624 = vmatpush1.msra.mxu0 0.0
  %5625 = vmatprep.subr.mxu0 0.0
  %5626 = vmatpush1.msra.mxu0 0.0
  %5627 = vmatprep.subr.mxu0 0.0
  %5628 = vmatpush1.msra.mxu0 0.0
  %5629 = vmatprep.subr.mxu0 0.0
  %5630 = vmatpush1.msra.mxu0 0.0
  %5631 = vmatprep.subr.mxu0 0.0
  %5632 = vmatpush1.msra.mxu0 0.0
  %5633 = vmatprep.subr.mxu0 0.0
  %5634 = vmatpush1.msra.mxu0 0.0
  %5635 = vmatprep.subr.mxu0 0.0
  %5636 = vmatpush1.msra.mxu0 0.0
  %5637 = vmatprep.subr.mxu0 0.0
  %5638 = vmatpush1.msra.mxu0 0.0
  %5639 = vmatprep.subr.mxu0 0.0
  %5640 = vmatpush1.msra.mxu0 0.0
  %5641 = vmatprep.subr.mxu0 0.0
  %5642 = vmatpush1.msra.mxu0 0.0
  %5643 = vmatprep.subr.mxu0 0.0
  %5644 = vmatpush1.msra.mxu0 0.0
  %5645 = vmatprep.mubr.f32.mxu0 0.0
  %5646 = vmatmul.mubr.f32.gmra.mrb[0].mxu0 %v5515
  %v5647 = vpop.f32.mrb[0].mxu0
  %v5648 = vadd.f32 0.0, %v5647
  %v5649 = vpop.f32.mrb[0].mxu0
  %v5650 = vadd.f32 0.0, %v5649
  %5651 = vmatprep.mubr.f32.mxu0 0.0
  %5652 = vmatmul.mubr.f32.gmra.mrb[0].mxu0 %v5516
  %v5653 = vpop.f32.mrb[0].mxu0
  %v5654 = vadd.f32 0.0, %v5653
  %v5655 = vpop.f32.mrb[0].mxu0
  %v5656 = vadd.f32 0.0, %v5655
  %5657 = vdwg.mxu0
  %5658 = vmatprep.subr.mxu0 %v5520
  %5659 = vmatpush1.msra.mxu0 %v5519
  %5660 = vmatprep.subr.mxu0 %v5524
  %5661 = vmatpush1.msra.mxu0 %v5523
  %5662 = vmatprep.subr.mxu0 %v5528
  %5663 = vmatpush1.msra.mxu0 %v5527
  %5664 = vmatprep.subr.mxu0 %v5532
  %5665 = vmatpush1.msra.mxu0 %v5531
  %5666 = vmatprep.subr.mxu0 %v5536
  %5667 = vmatpush1.msra.mxu0 %v5535
  %5668 = vmatprep.subr.mxu0 %v5540
  %5669 = vmatpush1.msra.mxu0 %v5539
  %5670 = vmatprep.subr.mxu0 %v5544
  %5671 = vmatpush1.msra.mxu0 %v5543
  %5672 = vmatprep.subr.mxu0 %v5548
  %5673 = vmatpush1.msra.mxu0 %v5547
  %5674 = vmatprep.subr.mxu0 %v5552
  %5675 = vmatpush1.msra.mxu0 %v5551
  %5676 = vmatprep.subr.mxu0 %v5556
  %5677 = vmatpush1.msra.mxu0 %v5555
  %5678 = vmatprep.subr.mxu0 %v5560
  %5679 = vmatpush1.msra.mxu0 %v5559
  %5680 = vmatprep.subr.mxu0 %v5564
  %5681 = vmatpush1.msra.mxu0 %v5563
  %5682 = vmatprep.subr.mxu0 %v5568
  %5683 = vmatpush1.msra.mxu0 %v5567
  %5684 = vmatprep.subr.mxu0 %v5572
  %5685 = vmatpush1.msra.mxu0 %v5571
  %5686 = vmatprep.subr.mxu0 %v5576
  %5687 = vmatpush1.msra.mxu0 %v5575
  %5688 = vmatprep.subr.mxu0 %v5580
  %5689 = vmatpush1.msra.mxu0 %v5579
  %5690 = vmatprep.subr.mxu0 0.0
  %5691 = vmatpush1.msra.mxu0 0.0
  %5692 = vmatprep.subr.mxu0 0.0
  %5693 = vmatpush1.msra.mxu0 0.0
  %5694 = vmatprep.subr.mxu0 0.0
  %5695 = vmatpush1.msra.mxu0 0.0
  %5696 = vmatprep.subr.mxu0 0.0
  %5697 = vmatpush1.msra.mxu0 0.0
  %5698 = vmatprep.subr.mxu0 0.0
  %5699 = vmatpush1.msra.mxu0 0.0
  %5700 = vmatprep.subr.mxu0 0.0
  %5701 = vmatpush1.msra.mxu0 0.0
  %5702 = vmatprep.subr.mxu0 0.0
  %5703 = vmatpush1.msra.mxu0 0.0
  %5704 = vmatprep.subr.mxu0 0.0
  %5705 = vmatpush1.msra.mxu0 0.0
  %5706 = vmatprep.subr.mxu0 0.0
  %5707 = vmatpush1.msra.mxu0 0.0
  %5708 = vmatprep.subr.mxu0 0.0
  %5709 = vmatpush1.msra.mxu0 0.0
  %5710 = vmatprep.subr.mxu0 0.0
  %5711 = vmatpush1.msra.mxu0 0.0
  %5712 = vmatprep.subr.mxu0 0.0
  %5713 = vmatpush1.msra.mxu0 0.0
  %5714 = vmatprep.subr.mxu0 0.0
  %5715 = vmatpush1.msra.mxu0 0.0
  %5716 = vmatprep.subr.mxu0 0.0
  %5717 = vmatpush1.msra.mxu0 0.0
  %5718 = vmatprep.subr.mxu0 0.0
  %5719 = vmatpush1.msra.mxu0 0.0
  %5720 = vmatprep.subr.mxu0 0.0
  %5721 = vmatpush1.msra.mxu0 0.0
  %5722 = vmatprep.mubr.f32.mxu0 0.0
  %5723 = vmatmul.mubr.f32.gmra.mrb[0].mxu0 %v5515
  %v5724 = vpop.f32.mrb[0].mxu0
  %v5725 = vadd.f32 0.0, %v5724
  %v5726 = vpop.f32.mrb[0].mxu0
  %v5727 = vadd.f32 0.0, %v5726
  %5728 = vmatprep.mubr.f32.mxu0 0.0
  %5729 = vmatmul.mubr.f32.gmra.mrb[0].mxu0 %v5516
  %v5730 = vpop.f32.mrb[0].mxu0
  %v5731 = vadd.f32 0.0, %v5730
  %v5732 = vpop.f32.mrb[0].mxu0
  %v5733 = vadd.f32 0.0, %v5732
  %5734 = vdwg.mxu0
  %v5735 = vadd.f32 %v5507, %v5648
  %v5736 = vadd.f32 %v5508, %v5650
  %v5737 = vadd.f32 %v5509, %v5725
  %v5738 = vadd.f32 %v5510, %v5727
  %v5739 = vadd.f32 %v5511, %v5654
  %v5740 = vadd.f32 %v5512, %v5656
  %v5741 = vadd.f32 %v5513, %v5731
  %v5742 = vadd.f32 %v5514, %v5733
  %v5743 = vxor.u32 %v5735, 2147483648
  %v5744 = vxor.u32 %v5736, 2147483648
  %v5745 = vxor.u32 %v5737, 2147483648
  %v5746 = vxor.u32 %v5738, 2147483648
  %v5747 = vxor.u32 %v5739, 2147483648
  %v5748 = vxor.u32 %v5740, 2147483648
  %v5749 = vxor.u32 %v5741, 2147483648
  %v5750 = vxor.u32 %v5742, 2147483648
  %v5751 = vmul.f32 %v5743, 1.442695
  %v5752 = vpow.pop %v5751
  %v5753 = vmul.f32 %v5744, 1.442695
  %v5754 = vpow.pop %v5753
  %v5755 = vmul.f32 %v5745, 1.442695
  %v5756 = vpow.pop %v5755
  %v5757 = vmul.f32 %v5746, 1.442695
  %v5758 = vpow.pop %v5757
  %v5759 = vmul.f32 %v5747, 1.442695
  %v5760 = vpow.pop %v5759
  %v5761 = vmul.f32 %v5748, 1.442695
  %v5762 = vpow.pop %v5761
  %v5763 = vmul.f32 %v5749, 1.442695
  %v5764 = vpow.pop %v5763
  %v5765 = vmul.f32 %v5750, 1.442695
  %v5766 = vpow.pop %v5765
  %v5767 = vadd.f32 %v5752, 1.0
  %v5768 = vadd.f32 %v5754, 1.0
  %v5769 = vadd.f32 %v5756, 1.0
  %v5770 = vadd.f32 %v5758, 1.0
  %v5771 = vadd.f32 %v5760, 1.0
  %v5772 = vadd.f32 %v5762, 1.0
  %v5773 = vadd.f32 %v5764, 1.0
  %v5774 = vadd.f32 %v5766, 1.0
  %v5775 = vrcp.pop %v5767
  %v5776 = vmul.f32 1.0, %v5775
  %v5777 = vrcp.pop %v5768
  %v5778 = vmul.f32 1.0, %v5777
  %v5779 = vrcp.pop %v5769
  %v5780 = vmul.f32 1.0, %v5779
  %v5781 = vrcp.pop %v5770
  %v5782 = vmul.f32 1.0, %v5781
  %v5783 = vrcp.pop %v5771
  %v5784 = vmul.f32 1.0, %v5783
  %v5785 = vrcp.pop %v5772
  %v5786 = vmul.f32 1.0, %v5785
  %v5787 = vrcp.pop %v5773
  %v5788 = vmul.f32 1.0, %v5787
  %v5789 = vrcp.pop %v5774
  %v5790 = vmul.f32 1.0, %v5789
  %v5791 = vmul.f32 %v5780, 2.0
  %v5792 = vmul.f32 %v5788, 2.0
  %v5793 = vsub.f32 %v5791, 1.0
  %v5794 = vsub.f32 %v5792, 1.0
  %v5795 = vld [vmem:[#allocation4] sm:$0xff]
  %v5796 = vld [vmem:[#allocation4 + $0x8] sm:$0xff]
  %v5797 = vmul.f32 %v5778, %v5795
  %v5798 = vmul.f32 %v5786, %v5796
  %v5799 = vmul.f32 %v5776, %v5793
  %v5800 = vmul.f32 %v5784, %v5794
  %v5801 = vadd.f32 %v5797, %v5799
  %v5802 = vadd.f32 %v5798, %v5800
  %5803 = vst [vmem:[#allocation4] sm:$0xff] %v5801
  %5804 = vst [vmem:[#allocation4 + $0x8] sm:$0xff] %v5802
  %v5805 = vtanh.pop %v5801
  %v5806 = vtanh.pop %v5802
  %v5807 = vmul.f32 %v5782, %v5805
  %v5808 = vmul.f32 %v5790, %v5806
  %5809 = vst [vmem:[#allocation3] sm:$0xff] %v5807
  %5810 = vst [vmem:[#allocation3 + $0x8] sm:$0xff] %v5808
  %v5811 = vld [vmem:[#allocation2 + $0x200] sm:$0xff]
  %v5812 = vld [vmem:[#allocation2 + $0x208] sm:$0xff]
  %v5813 = vld [vmem:[#allocation2 + $0x210] sm:$0xff]
  %v5814 = vld [vmem:[#allocation2 + $0x218] sm:$0xff]
  %v5815 = vld [vmem:[#allocation2 + $0x220] sm:$0xff]
  %v5816 = vld [vmem:[#allocation2 + $0x228] sm:$0xff]
  %v5817 = vld [vmem:[#allocation2 + $0x230] sm:$0xff]
  %v5818 = vld [vmem:[#allocation2 + $0x238] sm:$0xff]
  %v5819 = vld [vmem:[#allocation3] sm:$0xff]
  %v5820 = vld [vmem:[#allocation3 + $0x8] sm:$0xff]
  %v5821 = vld [vmem:[%s1 + $0x4c0] sm:$0xff]
  %v5822 = vld [vmem:[%s1 + $0x4c8] sm:$0xff]
  %v5823 = vld [vmem:[%s1 + $0x4d0] sm:$0xff]
  %v5824 = vld [vmem:[%s1 + $0x4d8] sm:$0xff]
  %v5825 = vld [vmem:[%s1 + $0x4e0] sm:$0xff]
  %v5826 = vld [vmem:[%s1 + $0x4e8] sm:$0xff]
  %v5827 = vld [vmem:[%s1 + $0x4f0] sm:$0xff]
  %v5828 = vld [vmem:[%s1 + $0x4f8] sm:$0xff]
  %v5829 = vld [vmem:[%s1 + $0x500] sm:$0xff]
  %v5830 = vld [vmem:[%s1 + $0x508] sm:$0xff]
  %v5831 = vld [vmem:[%s1 + $0x510] sm:$0xff]
  %v5832 = vld [vmem:[%s1 + $0x518] sm:$0xff]
  %v5833 = vld [vmem:[%s1 + $0x520] sm:$0xff]
  %v5834 = vld [vmem:[%s1 + $0x528] sm:$0xff]
  %v5835 = vld [vmem:[%s1 + $0x530] sm:$0xff]
  %v5836 = vld [vmem:[%s1 + $0x538] sm:$0xff]
  %v5837 = vld [vmem:[%s1 + $0x540] sm:$0xff]
  %v5838 = vld [vmem:[%s1 + $0x548] sm:$0xff]
  %v5839 = vld [vmem:[%s1 + $0x550] sm:$0xff]
  %v5840 = vld [vmem:[%s1 + $0x558] sm:$0xff]
  %v5841 = vld [vmem:[%s1 + $0x560] sm:$0xff]
  %v5842 = vld [vmem:[%s1 + $0x568] sm:$0xff]
  %v5843 = vld [vmem:[%s1 + $0x570] sm:$0xff]
  %v5844 = vld [vmem:[%s1 + $0x578] sm:$0xff]
  %v5845 = vld [vmem:[%s1 + $0x580] sm:$0xff]
  %v5846 = vld [vmem:[%s1 + $0x588] sm:$0xff]
  %v5847 = vld [vmem:[%s1 + $0x590] sm:$0xff]
  %v5848 = vld [vmem:[%s1 + $0x598] sm:$0xff]
  %v5849 = vld [vmem:[%s1 + $0x5a0] sm:$0xff]
  %v5850 = vld [vmem:[%s1 + $0x5a8] sm:$0xff]
  %v5851 = vld [vmem:[%s1 + $0x5b0] sm:$0xff]
  %v5852 = vld [vmem:[%s1 + $0x5b8] sm:$0xff]
  %v5853 = vld [vmem:[%s1 + $0x5c0] sm:$0xff]
  %v5854 = vld [vmem:[%s1 + $0x5c8] sm:$0xff]
  %v5855 = vld [vmem:[%s1 + $0x5d0] sm:$0xff]
  %v5856 = vld [vmem:[%s1 + $0x5d8] sm:$0xff]
  %v5857 = vld [vmem:[%s1 + $0x5e0] sm:$0xff]
  %v5858 = vld [vmem:[%s1 + $0x5e8] sm:$0xff]
  %v5859 = vld [vmem:[%s1 + $0x5f0] sm:$0xff]
  %v5860 = vld [vmem:[%s1 + $0x5f8] sm:$0xff]
  %v5861 = vld [vmem:[%s1 + $0x600] sm:$0xff]
  %v5862 = vld [vmem:[%s1 + $0x608] sm:$0xff]
  %v5863 = vld [vmem:[%s1 + $0x610] sm:$0xff]
  %v5864 = vld [vmem:[%s1 + $0x618] sm:$0xff]
  %v5865 = vld [vmem:[%s1 + $0x620] sm:$0xff]
  %v5866 = vld [vmem:[%s1 + $0x628] sm:$0xff]
  %v5867 = vld [vmem:[%s1 + $0x630] sm:$0xff]
  %v5868 = vld [vmem:[%s1 + $0x638] sm:$0xff]
  %v5869 = vld [vmem:[%s1 + $0x640] sm:$0xff]
  %v5870 = vld [vmem:[%s1 + $0x648] sm:$0xff]
  %v5871 = vld [vmem:[%s1 + $0x650] sm:$0xff]
  %v5872 = vld [vmem:[%s1 + $0x658] sm:$0xff]
  %v5873 = vld [vmem:[%s1 + $0x660] sm:$0xff]
  %v5874 = vld [vmem:[%s1 + $0x668] sm:$0xff]
  %v5875 = vld [vmem:[%s1 + $0x670] sm:$0xff]
  %v5876 = vld [vmem:[%s1 + $0x678] sm:$0xff]
  %v5877 = vld [vmem:[%s1 + $0x680] sm:$0xff]
  %v5878 = vld [vmem:[%s1 + $0x688] sm:$0xff]
  %v5879 = vld [vmem:[%s1 + $0x690] sm:$0xff]
  %v5880 = vld [vmem:[%s1 + $0x698] sm:$0xff]
  %v5881 = vld [vmem:[%s1 + $0x6a0] sm:$0xff]
  %v5882 = vld [vmem:[%s1 + $0x6a8] sm:$0xff]
  %v5883 = vld [vmem:[%s1 + $0x6b0] sm:$0xff]
  %v5884 = vld [vmem:[%s1 + $0x6b8] sm:$0xff]
  %5885 = vmatprep.subr.mxu0 %v5822
  %5886 = vmatpush1.msra.mxu0 %v5821
  %5887 = vmatprep.subr.mxu0 %v5826
  %5888 = vmatpush1.msra.mxu0 %v5825
  %5889 = vmatprep.subr.mxu0 %v5830
  %5890 = vmatpush1.msra.mxu0 %v5829
  %5891 = vmatprep.subr.mxu0 %v5834
  %5892 = vmatpush1.msra.mxu0 %v5833
  %5893 = vmatprep.subr.mxu0 %v5838
  %5894 = vmatpush1.msra.mxu0 %v5837
  %5895 = vmatprep.subr.mxu0 %v5842
  %5896 = vmatpush1.msra.mxu0 %v5841
  %5897 = vmatprep.subr.mxu0 %v5846
  %5898 = vmatpush1.msra.mxu0 %v5845
  %5899 = vmatprep.subr.mxu0 %v5850
  %5900 = vmatpush1.msra.mxu0 %v5849
  %5901 = vmatprep.subr.mxu0 %v5854
  %5902 = vmatpush1.msra.mxu0 %v5853
  %5903 = vmatprep.subr.mxu0 %v5858
  %5904 = vmatpush1.msra.mxu0 %v5857
  %5905 = vmatprep.subr.mxu0 %v5862
  %5906 = vmatpush1.msra.mxu0 %v5861
  %5907 = vmatprep.subr.mxu0 %v5866
  %5908 = vmatpush1.msra.mxu0 %v5865
  %5909 = vmatprep.subr.mxu0 %v5870
  %5910 = vmatpush1.msra.mxu0 %v5869
  %5911 = vmatprep.subr.mxu0 %v5874
  %5912 = vmatpush1.msra.mxu0 %v5873
  %5913 = vmatprep.subr.mxu0 %v5878
  %5914 = vmatpush1.msra.mxu0 %v5877
  %5915 = vmatprep.subr.mxu0 %v5882
  %5916 = vmatpush1.msra.mxu0 %v5881
  %5917 = vmatprep.subr.mxu0 0.0
  %5918 = vmatpush1.msra.mxu0 0.0
  %5919 = vmatprep.subr.mxu0 0.0
  %5920 = vmatpush1.msra.mxu0 0.0
  %5921 = vmatprep.subr.mxu0 0.0
  %5922 = vmatpush1.msra.mxu0 0.0
  %5923 = vmatprep.subr.mxu0 0.0
  %5924 = vmatpush1.msra.mxu0 0.0
  %5925 = vmatprep.subr.mxu0 0.0
  %5926 = vmatpush1.msra.mxu0 0.0
  %5927 = vmatprep.subr.mxu0 0.0
  %5928 = vmatpush1.msra.mxu0 0.0
  %5929 = vmatprep.subr.mxu0 0.0
  %5930 = vmatpush1.msra.mxu0 0.0
  %5931 = vmatprep.subr.mxu0 0.0
  %5932 = vmatpush1.msra.mxu0 0.0
  %5933 = vmatprep.subr.mxu0 0.0
  %5934 = vmatpush1.msra.mxu0 0.0
  %5935 = vmatprep.subr.mxu0 0.0
  %5936 = vmatpush1.msra.mxu0 0.0
  %5937 = vmatprep.subr.mxu0 0.0
  %5938 = vmatpush1.msra.mxu0 0.0
  %5939 = vmatprep.subr.mxu0 0.0
  %5940 = vmatpush1.msra.mxu0 0.0
  %5941 = vmatprep.subr.mxu0 0.0
  %5942 = vmatpush1.msra.mxu0 0.0
  %5943 = vmatprep.subr.mxu0 0.0
  %5944 = vmatpush1.msra.mxu0 0.0
  %5945 = vmatprep.subr.mxu0 0.0
  %5946 = vmatpush1.msra.mxu0 0.0
  %5947 = vmatprep.subr.mxu0 0.0
  %5948 = vmatpush1.msra.mxu0 0.0
  %5949 = vmatprep.mubr.f32.mxu0 0.0
  %5950 = vmatmul.mubr.f32.gmra.mrb[0].mxu0 %v5819
  %v5951 = vpop.f32.mrb[0].mxu0
  %v5952 = vadd.f32 0.0, %v5951
  %v5953 = vpop.f32.mrb[0].mxu0
  %v5954 = vadd.f32 0.0, %v5953
  %5955 = vmatprep.mubr.f32.mxu0 0.0
  %5956 = vmatmul.mubr.f32.gmra.mrb[0].mxu0 %v5820
  %v5957 = vpop.f32.mrb[0].mxu0
  %v5958 = vadd.f32 0.0, %v5957
  %v5959 = vpop.f32.mrb[0].mxu0
  %v5960 = vadd.f32 0.0, %v5959
  %5961 = vdwg.mxu0
  %5962 = vmatprep.subr.mxu0 %v5824
  %5963 = vmatpush1.msra.mxu0 %v5823
  %5964 = vmatprep.subr.mxu0 %v5828
  %5965 = vmatpush1.msra.mxu0 %v5827
  %5966 = vmatprep.subr.mxu0 %v5832
  %5967 = vmatpush1.msra.mxu0 %v5831
  %5968 = vmatprep.subr.mxu0 %v5836
  %5969 = vmatpush1.msra.mxu0 %v5835
  %5970 = vmatprep.subr.mxu0 %v5840
  %5971 = vmatpush1.msra.mxu0 %v5839
  %5972 = vmatprep.subr.mxu0 %v5844
  %5973 = vmatpush1.msra.mxu0 %v5843
  %5974 = vmatprep.subr.mxu0 %v5848
  %5975 = vmatpush1.msra.mxu0 %v5847
  %5976 = vmatprep.subr.mxu0 %v5852
  %5977 = vmatpush1.msra.mxu0 %v5851
  %5978 = vmatprep.subr.mxu0 %v5856
  %5979 = vmatpush1.msra.mxu0 %v5855
  %5980 = vmatprep.subr.mxu0 %v5860
  %5981 = vmatpush1.msra.mxu0 %v5859
  %5982 = vmatprep.subr.mxu0 %v5864
  %5983 = vmatpush1.msra.mxu0 %v5863
  %5984 = vmatprep.subr.mxu0 %v5868
  %5985 = vmatpush1.msra.mxu0 %v5867
  %5986 = vmatprep.subr.mxu0 %v5872
  %5987 = vmatpush1.msra.mxu0 %v5871
  %5988 = vmatprep.subr.mxu0 %v5876
  %5989 = vmatpush1.msra.mxu0 %v5875
  %5990 = vmatprep.subr.mxu0 %v5880
  %5991 = vmatpush1.msra.mxu0 %v5879
  %5992 = vmatprep.subr.mxu0 %v5884
  %5993 = vmatpush1.msra.mxu0 %v5883
  %5994 = vmatprep.subr.mxu0 0.0
  %5995 = vmatpush1.msra.mxu0 0.0
  %5996 = vmatprep.subr.mxu0 0.0
  %5997 = vmatpush1.msra.mxu0 0.0
  %5998 = vmatprep.subr.mxu0 0.0
  %5999 = vmatpush1.msra.mxu0 0.0
  %6000 = vmatprep.subr.mxu0 0.0
  %6001 = vmatpush1.msra.mxu0 0.0
  %6002 = vmatprep.subr.mxu0 0.0
  %6003 = vmatpush1.msra.mxu0 0.0
  %6004 = vmatprep.subr.mxu0 0.0
  %6005 = vmatpush1.msra.mxu0 0.0
  %6006 = vmatprep.subr.mxu0 0.0
  %6007 = vmatpush1.msra.mxu0 0.0
  %6008 = vmatprep.subr.mxu0 0.0
  %6009 = vmatpush1.msra.mxu0 0.0
  %6010 = vmatprep.subr.mxu0 0.0
  %6011 = vmatpush1.msra.mxu0 0.0
  %6012 = vmatprep.subr.mxu0 0.0
  %6013 = vmatpush1.msra.mxu0 0.0
  %6014 = vmatprep.subr.mxu0 0.0
  %6015 = vmatpush1.msra.mxu0 0.0
  %6016 = vmatprep.subr.mxu0 0.0
  %6017 = vmatpush1.msra.mxu0 0.0
  %6018 = vmatprep.subr.mxu0 0.0
  %6019 = vmatpush1.msra.mxu0 0.0
  %6020 = vmatprep.subr.mxu0 0.0
  %6021 = vmatpush1.msra.mxu0 0.0
  %6022 = vmatprep.subr.mxu0 0.0
  %6023 = vmatpush1.msra.mxu0 0.0
  %6024 = vmatprep.subr.mxu0 0.0
  %6025 = vmatpush1.msra.mxu0 0.0
  %6026 = vmatprep.mubr.f32.mxu0 0.0
  %6027 = vmatmul.mubr.f32.gmra.mrb[0].mxu0 %v5819
  %v6028 = vpop.f32.mrb[0].mxu0
  %v6029 = vadd.f32 0.0, %v6028
  %v6030 = vpop.f32.mrb[0].mxu0
  %v6031 = vadd.f32 0.0, %v6030
  %6032 = vmatprep.mubr.f32.mxu0 0.0
  %6033 = vmatmul.mubr.f32.gmra.mrb[0].mxu0 %v5820
  %v6034 = vpop.f32.mrb[0].mxu0
  %v6035 = vadd.f32 0.0, %v6034
  %v6036 = vpop.f32.mrb[0].mxu0
  %v6037 = vadd.f32 0.0, %v6036
  %6038 = vdwg.mxu0
  %v6039 = vadd.f32 %v5811, %v5952
  %v6040 = vadd.f32 %v5812, %v5954
  %v6041 = vadd.f32 %v5813, %v6029
  %v6042 = vadd.f32 %v5814, %v6031
  %v6043 = vadd.f32 %v5815, %v5958
  %v6044 = vadd.f32 %v5816, %v5960
  %v6045 = vadd.f32 %v5817, %v6035
  %v6046 = vadd.f32 %v5818, %v6037
  %v6047 = vxor.u32 %v6039, 2147483648
  %v6048 = vxor.u32 %v6040, 2147483648
  %v6049 = vxor.u32 %v6041, 2147483648
  %v6050 = vxor.u32 %v6042, 2147483648
  %v6051 = vxor.u32 %v6043, 2147483648
  %v6052 = vxor.u32 %v6044, 2147483648
  %v6053 = vxor.u32 %v6045, 2147483648
  %v6054 = vxor.u32 %v6046, 2147483648
  %v6055 = vmul.f32 %v6047, 1.442695
  %v6056 = vpow.pop %v6055
  %v6057 = vmul.f32 %v6048, 1.442695
  %v6058 = vpow.pop %v6057
  %v6059 = vmul.f32 %v6049, 1.442695
  %v6060 = vpow.pop %v6059
  %v6061 = vmul.f32 %v6050, 1.442695
  %v6062 = vpow.pop %v6061
  %v6063 = vmul.f32 %v6051, 1.442695
  %v6064 = vpow.pop %v6063
  %v6065 = vmul.f32 %v6052, 1.442695
  %v6066 = vpow.pop %v6065
  %v6067 = vmul.f32 %v6053, 1.442695
  %v6068 = vpow.pop %v6067
  %v6069 = vmul.f32 %v6054, 1.442695
  %v6070 = vpow.pop %v6069
  %v6071 = vadd.f32 %v6056, 1.0
  %v6072 = vadd.f32 %v6058, 1.0
  %v6073 = vadd.f32 %v6060, 1.0
  %v6074 = vadd.f32 %v6062, 1.0
  %v6075 = vadd.f32 %v6064, 1.0
  %v6076 = vadd.f32 %v6066, 1.0
  %v6077 = vadd.f32 %v6068, 1.0
  %v6078 = vadd.f32 %v6070, 1.0
  %v6079 = vrcp.pop %v6071
  %v6080 = vmul.f32 1.0, %v6079
  %v6081 = vrcp.pop %v6072
  %v6082 = vmul.f32 1.0, %v6081
  %v6083 = vrcp.pop %v6073
  %v6084 = vmul.f32 1.0, %v6083
  %v6085 = vrcp.pop %v6074
  %v6086 = vmul.f32 1.0, %v6085
  %v6087 = vrcp.pop %v6075
  %v6088 = vmul.f32 1.0, %v6087
  %v6089 = vrcp.pop %v6076
  %v6090 = vmul.f32 1.0, %v6089
  %v6091 = vrcp.pop %v6077
  %v6092 = vmul.f32 1.0, %v6091
  %v6093 = vrcp.pop %v6078
  %v6094 = vmul.f32 1.0, %v6093
  %v6095 = vmul.f32 %v6084, 2.0
  %v6096 = vmul.f32 %v6092, 2.0
  %v6097 = vsub.f32 %v6095, 1.0
  %v6098 = vsub.f32 %v6096, 1.0
  %v6099 = vld [vmem:[#allocation4] sm:$0xff]
  %v6100 = vld [vmem:[#allocation4 + $0x8] sm:$0xff]
  %v6101 = vmul.f32 %v6082, %v6099
  %v6102 = vmul.f32 %v6090, %v6100
  %v6103 = vmul.f32 %v6080, %v6097
  %v6104 = vmul.f32 %v6088, %v6098
  %v6105 = vadd.f32 %v6101, %v6103
  %v6106 = vadd.f32 %v6102, %v6104
  %6107 = vst [vmem:[#allocation4] sm:$0xff] %v6105
  %6108 = vst [vmem:[#allocation4 + $0x8] sm:$0xff] %v6106
  %v6109 = vtanh.pop %v6105
  %v6110 = vtanh.pop %v6106
  %v6111 = vmul.f32 %v6086, %v6109
  %v6112 = vmul.f32 %v6094, %v6110
  %6113 = vst [vmem:[#allocation3] sm:$0xff] %v6111
  %6114 = vst [vmem:[#allocation3 + $0x8] sm:$0xff] %v6112
  %v6115 = vld [vmem:[#allocation2 + $0x240] sm:$0xff]
  %v6116 = vld [vmem:[#allocation2 + $0x248] sm:$0xff]
  %v6117 = vld [vmem:[#allocation2 + $0x250] sm:$0xff]
  %v6118 = vld [vmem:[#allocation2 + $0x258] sm:$0xff]
  %v6119 = vld [vmem:[#allocation2 + $0x260] sm:$0xff]
  %v6120 = vld [vmem:[#allocation2 + $0x268] sm:$0xff]
  %v6121 = vld [vmem:[#allocation2 + $0x270] sm:$0xff]
  %v6122 = vld [vmem:[#allocation2 + $0x278] sm:$0xff]
  %v6123 = vld [vmem:[#allocation2 + $0x280] sm:$0xff]
  %v6124 = vld [vmem:[#allocation2 + $0x288] sm:$0xff]
  %v6125 = vld [vmem:[#allocation2 + $0x290] sm:$0xff]
  %v6126 = vld [vmem:[#allocation2 + $0x298] sm:$0xff]
  %v6127 = vld [vmem:[#allocation3] sm:$0xff]
  %v6128 = vld [vmem:[#allocation3 + $0x8] sm:$0xff]
  %v6129 = vld [vmem:[#allocation3 + $0x10] sm:$0xff]
  %v6130 = vld [vmem:[%s1 + $0x4c0] sm:$0xff]
  %v6131 = vld [vmem:[%s1 + $0x4c8] sm:$0xff]
  %v6132 = vld [vmem:[%s1 + $0x4d0] sm:$0xff]
  %v6133 = vld [vmem:[%s1 + $0x4d8] sm:$0xff]
  %v6134 = vld [vmem:[%s1 + $0x4e0] sm:$0xff]
  %v6135 = vld [vmem:[%s1 + $0x4e8] sm:$0xff]
  %v6136 = vld [vmem:[%s1 + $0x4f0] sm:$0xff]
  %v6137 = vld [vmem:[%s1 + $0x4f8] sm:$0xff]
  %v6138 = vld [vmem:[%s1 + $0x500] sm:$0xff]
  %v6139 = vld [vmem:[%s1 + $0x508] sm:$0xff]
  %v6140 = vld [vmem:[%s1 + $0x510] sm:$0xff]
  %v6141 = vld [vmem:[%s1 + $0x518] sm:$0xff]
  %v6142 = vld [vmem:[%s1 + $0x520] sm:$0xff]
  %v6143 = vld [vmem:[%s1 + $0x528] sm:$0xff]
  %v6144 = vld [vmem:[%s1 + $0x530] sm:$0xff]
  %v6145 = vld [vmem:[%s1 + $0x538] sm:$0xff]
  %v6146 = vld [vmem:[%s1 + $0x540] sm:$0xff]
  %v6147 = vld [vmem:[%s1 + $0x548] sm:$0xff]
  %v6148 = vld [vmem:[%s1 + $0x550] sm:$0xff]
  %v6149 = vld [vmem:[%s1 + $0x558] sm:$0xff]
  %v6150 = vld [vmem:[%s1 + $0x560] sm:$0xff]
  %v6151 = vld [vmem:[%s1 + $0x568] sm:$0xff]
  %v6152 = vld [vmem:[%s1 + $0x570] sm:$0xff]
  %v6153 = vld [vmem:[%s1 + $0x578] sm:$0xff]
  %v6154 = vld [vmem:[%s1 + $0x580] sm:$0xff]
  %v6155 = vld [vmem:[%s1 + $0x588] sm:$0xff]
  %v6156 = vld [vmem:[%s1 + $0x590] sm:$0xff]
  %v6157 = vld [vmem:[%s1 + $0x598] sm:$0xff]
  %v6158 = vld [vmem:[%s1 + $0x5a0] sm:$0xff]
  %v6159 = vld [vmem:[%s1 + $0x5a8] sm:$0xff]
  %v6160 = vld [vmem:[%s1 + $0x5b0] sm:$0xff]
  %v6161 = vld [vmem:[%s1 + $0x5b8] sm:$0xff]
  %v6162 = vld [vmem:[%s1 + $0x5c0] sm:$0xff]
  %v6163 = vld [vmem:[%s1 + $0x5c8] sm:$0xff]
  %v6164 = vld [vmem:[%s1 + $0x5d0] sm:$0xff]
  %v6165 = vld [vmem:[%s1 + $0x5d8] sm:$0xff]
  %v6166 = vld [vmem:[%s1 + $0x5e0] sm:$0xff]
  %v6167 = vld [vmem:[%s1 + $0x5e8] sm:$0xff]
  %v6168 = vld [vmem:[%s1 + $0x5f0] sm:$0xff]
  %v6169 = vld [vmem:[%s1 + $0x5f8] sm:$0xff]
  %v6170 = vld [vmem:[%s1 + $0x600] sm:$0xff]
  %v6171 = vld [vmem:[%s1 + $0x608] sm:$0xff]
  %v6172 = vld [vmem:[%s1 + $0x610] sm:$0xff]
  %v6173 = vld [vmem:[%s1 + $0x618] sm:$0xff]
  %v6174 = vld [vmem:[%s1 + $0x620] sm:$0xff]
  %v6175 = vld [vmem:[%s1 + $0x628] sm:$0xff]
  %v6176 = vld [vmem:[%s1 + $0x630] sm:$0xff]
  %v6177 = vld [vmem:[%s1 + $0x638] sm:$0xff]
  %v6178 = vld [vmem:[%s1 + $0x640] sm:$0xff]
  %v6179 = vld [vmem:[%s1 + $0x648] sm:$0xff]
  %v6180 = vld [vmem:[%s1 + $0x650] sm:$0xff]
  %v6181 = vld [vmem:[%s1 + $0x658] sm:$0xff]
  %v6182 = vld [vmem:[%s1 + $0x660] sm:$0xff]
  %v6183 = vld [vmem:[%s1 + $0x668] sm:$0xff]
  %v6184 = vld [vmem:[%s1 + $0x670] sm:$0xff]
  %v6185 = vld [vmem:[%s1 + $0x678] sm:$0xff]
  %v6186 = vld [vmem:[%s1 + $0x680] sm:$0xff]
  %v6187 = vld [vmem:[%s1 + $0x688] sm:$0xff]
  %v6188 = vld [vmem:[%s1 + $0x690] sm:$0xff]
  %v6189 = vld [vmem:[%s1 + $0x698] sm:$0xff]
  %v6190 = vld [vmem:[%s1 + $0x6a0] sm:$0xff]
  %v6191 = vld [vmem:[%s1 + $0x6a8] sm:$0xff]
  %v6192 = vld [vmem:[%s1 + $0x6b0] sm:$0xff]
  %v6193 = vld [vmem:[%s1 + $0x6b8] sm:$0xff]
  %6194 = vmatprep.subr.mxu0 %v6131
  %6195 = vmatpush1.msra.mxu0 %v6130
  %6196 = vmatprep.subr.mxu0 %v6135
  %6197 = vmatpush1.msra.mxu0 %v6134
  %6198 = vmatprep.subr.mxu0 %v6139
  %6199 = vmatpush1.msra.mxu0 %v6138
  %6200 = vmatprep.subr.mxu0 %v6143
  %6201 = vmatpush1.msra.mxu0 %v6142
  %6202 = vmatprep.subr.mxu0 %v6147
  %6203 = vmatpush1.msra.mxu0 %v6146
  %6204 = vmatprep.subr.mxu0 %v6151
  %6205 = vmatpush1.msra.mxu0 %v6150
  %6206 = vmatprep.subr.mxu0 %v6155
  %6207 = vmatpush1.msra.mxu0 %v6154
  %6208 = vmatprep.subr.mxu0 %v6159
  %6209 = vmatpush1.msra.mxu0 %v6158
  %6210 = vmatprep.subr.mxu0 %v6163
  %6211 = vmatpush1.msra.mxu0 %v6162
  %6212 = vmatprep.subr.mxu0 %v6167
  %6213 = vmatpush1.msra.mxu0 %v6166
  %6214 = vmatprep.subr.mxu0 %v6171
  %6215 = vmatpush1.msra.mxu0 %v6170
  %6216 = vmatprep.subr.mxu0 %v6175
  %6217 = vmatpush1.msra.mxu0 %v6174
  %6218 = vmatprep.subr.mxu0 %v6179
  %6219 = vmatpush1.msra.mxu0 %v6178
  %6220 = vmatprep.subr.mxu0 %v6183
  %6221 = vmatpush1.msra.mxu0 %v6182
  %6222 = vmatprep.subr.mxu0 %v6187
  %6223 = vmatpush1.msra.mxu0 %v6186
  %6224 = vmatprep.subr.mxu0 %v6191
  %6225 = vmatpush1.msra.mxu0 %v6190
  %6226 = vmatprep.subr.mxu0 0.0
  %6227 = vmatpush1.msra.mxu0 0.0
  %6228 = vmatprep.subr.mxu0 0.0
  %6229 = vmatpush1.msra.mxu0 0.0
  %6230 = vmatprep.subr.mxu0 0.0
  %6231 = vmatpush1.msra.mxu0 0.0
  %6232 = vmatprep.subr.mxu0 0.0
  %6233 = vmatpush1.msra.mxu0 0.0
  %6234 = vmatprep.subr.mxu0 0.0
  %6235 = vmatpush1.msra.mxu0 0.0
  %6236 = vmatprep.subr.mxu0 0.0
  %6237 = vmatpush1.msra.mxu0 0.0
  %6238 = vmatprep.subr.mxu0 0.0
  %6239 = vmatpush1.msra.mxu0 0.0
  %6240 = vmatprep.subr.mxu0 0.0
  %6241 = vmatpush1.msra.mxu0 0.0
  %6242 = vmatprep.subr.mxu0 0.0
  %6243 = vmatpush1.msra.mxu0 0.0
  %6244 = vmatprep.subr.mxu0 0.0
  %6245 = vmatpush1.msra.mxu0 0.0
  %6246 = vmatprep.subr.mxu0 0.0
  %6247 = vmatpush1.msra.mxu0 0.0
  %6248 = vmatprep.subr.mxu0 0.0
  %6249 = vmatpush1.msra.mxu0 0.0
  %6250 = vmatprep.subr.mxu0 0.0
  %6251 = vmatpush1.msra.mxu0 0.0
  %6252 = vmatprep.subr.mxu0 0.0
  %6253 = vmatpush1.msra.mxu0 0.0
  %6254 = vmatprep.subr.mxu0 0.0
  %6255 = vmatpush1.msra.mxu0 0.0
  %6256 = vmatprep.subr.mxu0 0.0
  %6257 = vmatpush1.msra.mxu0 0.0
  %6258 = vmatprep.mubr.f32.mxu0 0.0
  %6259 = vmatmul.mubr.f32.gmra.mrb[0].mxu0 %v6127
  %v6260 = vpop.f32.mrb[0].mxu0
  %v6261 = vadd.f32 0.0, %v6260
  %v6262 = vpop.f32.mrb[0].mxu0
  %v6263 = vadd.f32 0.0, %v6262
  %6264 = vmatprep.mubr.f32.mxu0 0.0
  %6265 = vmatmul.mubr.f32.gmra.mrb[0].mxu0 %v6128
  %v6266 = vpop.f32.mrb[0].mxu0
  %v6267 = vadd.f32 0.0, %v6266
  %v6268 = vpop.f32.mrb[0].mxu0
  %v6269 = vadd.f32 0.0, %v6268
  %6270 = vmatprep.mubr.f32.mxu0 0.0
  %6271 = vmatmul.mubr.f32.gmra.mrb[0].mxu0 %v6129
  %v6272 = vpop.f32.mrb[0].mxu0
  %v6273 = vadd.f32 0.0, %v6272
  %v6274 = vpop.f32.mrb[0].mxu0
  %v6275 = vadd.f32 0.0, %v6274
  %6276 = vdwg.mxu0
  %6277 = vmatprep.subr.mxu0 %v6133
  %6278 = vmatpush1.msra.mxu0 %v6132
  %6279 = vmatprep.subr.mxu0 %v6137
  %6280 = vmatpush1.msra.mxu0 %v6136
  %6281 = vmatprep.subr.mxu0 %v6141
  %6282 = vmatpush1.msra.mxu0 %v6140
  %6283 = vmatprep.subr.mxu0 %v6145
  %6284 = vmatpush1.msra.mxu0 %v6144
  %6285 = vmatprep.subr.mxu0 %v6149
  %6286 = vmatpush1.msra.mxu0 %v6148
  %6287 = vmatprep.subr.mxu0 %v6153
  %6288 = vmatpush1.msra.mxu0 %v6152
  %6289 = vmatprep.subr.mxu0 %v6157
  %6290 = vmatpush1.msra.mxu0 %v6156
  %6291 = vmatprep.subr.mxu0 %v6161
  %6292 = vmatpush1.msra.mxu0 %v6160
  %6293 = vmatprep.subr.mxu0 %v6165
  %6294 = vmatpush1.msra.mxu0 %v6164
  %6295 = vmatprep.subr.mxu0 %v6169
  %6296 = vmatpush1.msra.mxu0 %v6168
  %6297 = vmatprep.subr.mxu0 %v6173
  %6298 = vmatpush1.msra.mxu0 %v6172
  %6299 = vmatprep.subr.mxu0 %v6177
  %6300 = vmatpush1.msra.mxu0 %v6176
  %6301 = vmatprep.subr.mxu0 %v6181
  %6302 = vmatpush1.msra.mxu0 %v6180
  %6303 = vmatprep.subr.mxu0 %v6185
  %6304 = vmatpush1.msra.mxu0 %v6184
  %6305 = vmatprep.subr.mxu0 %v6189
  %6306 = vmatpush1.msra.mxu0 %v6188
  %6307 = vmatprep.subr.mxu0 %v6193
  %6308 = vmatpush1.msra.mxu0 %v6192
  %6309 = vmatprep.subr.mxu0 0.0
  %6310 = vmatpush1.msra.mxu0 0.0
  %6311 = vmatprep.subr.mxu0 0.0
  %6312 = vmatpush1.msra.mxu0 0.0
  %6313 = vmatprep.subr.mxu0 0.0
  %6314 = vmatpush1.msra.mxu0 0.0
  %6315 = vmatprep.subr.mxu0 0.0
  %6316 = vmatpush1.msra.mxu0 0.0
  %6317 = vmatprep.subr.mxu0 0.0
  %6318 = vmatpush1.msra.mxu0 0.0
  %6319 = vmatprep.subr.mxu0 0.0
  %6320 = vmatpush1.msra.mxu0 0.0
  %6321 = vmatprep.subr.mxu0 0.0
  %6322 = vmatpush1.msra.mxu0 0.0
  %6323 = vmatprep.subr.mxu0 0.0
  %6324 = vmatpush1.msra.mxu0 0.0
  %6325 = vmatprep.subr.mxu0 0.0
  %6326 = vmatpush1.msra.mxu0 0.0
  %6327 = vmatprep.subr.mxu0 0.0
  %6328 = vmatpush1.msra.mxu0 0.0
  %6329 = vmatprep.subr.mxu0 0.0
  %6330 = vmatpush1.msra.mxu0 0.0
  %6331 = vmatprep.subr.mxu0 0.0
  %6332 = vmatpush1.msra.mxu0 0.0
  %6333 = vmatprep.subr.mxu0 0.0
  %6334 = vmatpush1.msra.mxu0 0.0
  %6335 = vmatprep.subr.mxu0 0.0
  %6336 = vmatpush1.msra.mxu0 0.0
  %6337 = vmatprep.subr.mxu0 0.0
  %6338 = vmatpush1.msra.mxu0 0.0
  %6339 = vmatprep.subr.mxu0 0.0
  %6340 = vmatpush1.msra.mxu0 0.0
  %6341 = vmatprep.mubr.f32.mxu0 0.0
  %6342 = vmatmul.mubr.f32.gmra.mrb[0].mxu0 %v6127
  %v6343 = vpop.f32.mrb[0].mxu0
  %v6344 = vadd.f32 0.0, %v6343
  %v6345 = vpop.f32.mrb[0].mxu0
  %v6346 = vadd.f32 0.0, %v6345
  %6347 = vmatprep.mubr.f32.mxu0 0.0
  %6348 = vmatmul.mubr.f32.gmra.mrb[0].mxu0 %v6128
  %v6349 = vpop.f32.mrb[0].mxu0
  %v6350 = vadd.f32 0.0, %v6349
  %v6351 = vpop.f32.mrb[0].mxu0
  %v6352 = vadd.f32 0.0, %v6351
  %6353 = vmatprep.mubr.f32.mxu0 0.0
  %6354 = vmatmul.mubr.f32.gmra.mrb[0].mxu0 %v6129
  %v6355 = vpop.f32.mrb[0].mxu0
  %v6356 = vadd.f32 0.0, %v6355
  %v6357 = vpop.f32.mrb[0].mxu0
  %v6358 = vadd.f32 0.0, %v6357
  %6359 = vdwg.mxu0
  %v6360 = vadd.f32 %v6115, %v6261
  %v6361 = vadd.f32 %v6116, %v6263
  %v6362 = vadd.f32 %v6117, %v6344
  %v6363 = vadd.f32 %v6118, %v6346
  %v6364 = vadd.f32 %v6119, %v6267
  %v6365 = vadd.f32 %v6120, %v6269
  %v6366 = vadd.f32 %v6121, %v6350
  %v6367 = vadd.f32 %v6122, %v6352
  %v6368 = vadd.f32 %v6123, %v6273
  %v6369 = vadd.f32 %v6124, %v6275
  %v6370 = vadd.f32 %v6125, %v6356
  %v6371 = vadd.f32 %v6126, %v6358
  %v6372 = vxor.u32 %v6360, 2147483648
  %v6373 = vxor.u32 %v6361, 2147483648
  %v6374 = vxor.u32 %v6362, 2147483648
  %v6375 = vxor.u32 %v6363, 2147483648
  %v6376 = vxor.u32 %v6364, 2147483648
  %v6377 = vxor.u32 %v6365, 2147483648
  %v6378 = vxor.u32 %v6366, 2147483648
  %v6379 = vxor.u32 %v6367, 2147483648
  %v6380 = vxor.u32 %v6368, 2147483648
  %v6381 = vxor.u32 %v6369, 2147483648
  %v6382 = vxor.u32 %v6370, 2147483648
  %v6383 = vxor.u32 %v6371, 2147483648
  %v6384 = vmul.f32 %v6372, 1.442695
  %v6385 = vpow.pop %v6384
  %v6386 = vmul.f32 %v6373, 1.442695
  %v6387 = vpow.pop %v6386
  %v6388 = vmul.f32 %v6374, 1.442695
  %v6389 = vpow.pop %v6388
  %v6390 = vmul.f32 %v6375, 1.442695
  %v6391 = vpow.pop %v6390
  %v6392 = vmul.f32 %v6376, 1.442695
  %v6393 = vpow.pop %v6392
  %v6394 = vmul.f32 %v6377, 1.442695
  %v6395 = vpow.pop %v6394
  %v6396 = vmul.f32 %v6378, 1.442695
  %v6397 = vpow.pop %v6396
  %v6398 = vmul.f32 %v6379, 1.442695
  %v6399 = vpow.pop %v6398
  %v6400 = vmul.f32 %v6380, 1.442695
  %v6401 = vpow.pop %v6400
  %v6402 = vmul.f32 %v6381, 1.442695
  %v6403 = vpow.pop %v6402
  %v6404 = vmul.f32 %v6382, 1.442695
  %v6405 = vpow.pop %v6404
  %v6406 = vmul.f32 %v6383, 1.442695
  %v6407 = vpow.pop %v6406
  %v6408 = vadd.f32 %v6385, 1.0
  %v6409 = vadd.f32 %v6387, 1.0
  %v6410 = vadd.f32 %v6389, 1.0
  %v6411 = vadd.f32 %v6391, 1.0
  %v6412 = vadd.f32 %v6393, 1.0
  %v6413 = vadd.f32 %v6395, 1.0
  %v6414 = vadd.f32 %v6397, 1.0
  %v6415 = vadd.f32 %v6399, 1.0
  %v6416 = vadd.f32 %v6401, 1.0
  %v6417 = vadd.f32 %v6403, 1.0
  %v6418 = vadd.f32 %v6405, 1.0
  %v6419 = vadd.f32 %v6407, 1.0
  %v6420 = vrcp.pop %v6408
  %v6421 = vmul.f32 1.0, %v6420
  %v6422 = vrcp.pop %v6409
  %v6423 = vmul.f32 1.0, %v6422
  %v6424 = vrcp.pop %v6410
  %v6425 = vmul.f32 1.0, %v6424
  %v6426 = vrcp.pop %v6411
  %v6427 = vmul.f32 1.0, %v6426
  %v6428 = vrcp.pop %v6412
  %v6429 = vmul.f32 1.0, %v6428
  %v6430 = vrcp.pop %v6413
  %v6431 = vmul.f32 1.0, %v6430
  %v6432 = vrcp.pop %v6414
  %v6433 = vmul.f32 1.0, %v6432
  %v6434 = vrcp.pop %v6415
  %v6435 = vmul.f32 1.0, %v6434
  %v6436 = vrcp.pop %v6416
  %v6437 = vmul.f32 1.0, %v6436
  %v6438 = vrcp.pop %v6417
  %v6439 = vmul.f32 1.0, %v6438
  %v6440 = vrcp.pop %v6418
  %v6441 = vmul.f32 1.0, %v6440
  %v6442 = vrcp.pop %v6419
  %v6443 = vmul.f32 1.0, %v6442
  %v6444 = vmul.f32 %v6425, 2.0
  %v6445 = vmul.f32 %v6433, 2.0
  %v6446 = vmul.f32 %v6441, 2.0
  %v6447 = vsub.f32 %v6444, 1.0
  %v6448 = vsub.f32 %v6445, 1.0
  %v6449 = vsub.f32 %v6446, 1.0
  %v6450 = vld [vmem:[#allocation4] sm:$0xff]
  %v6451 = vld [vmem:[#allocation4 + $0x8] sm:$0xff]
  %v6452 = vld [vmem:[#allocation4 + $0x10] sm:$0xff]
  %v6453 = vmul.f32 %v6423, %v6450
  %v6454 = vmul.f32 %v6431, %v6451
  %v6455 = vmul.f32 %v6439, %v6452
  %v6456 = vmul.f32 %v6421, %v6447
  %v6457 = vmul.f32 %v6429, %v6448
  %v6458 = vmul.f32 %v6437, %v6449
  %v6459 = vadd.f32 %v6453, %v6456
  %v6460 = vadd.f32 %v6454, %v6457
  %v6461 = vadd.f32 %v6455, %v6458
  %6462 = vst [vmem:[#allocation4] sm:$0xff] %v6459
  %6463 = vst [vmem:[#allocation4 + $0x8] sm:$0xff] %v6460
  %6464 = vst [vmem:[#allocation4 + $0x10] sm:$0xff] %v6461
  %v6465 = vtanh.pop %v6459
  %v6466 = vtanh.pop %v6460
  %v6467 = vtanh.pop %v6461
  %v6468 = vmul.f32 %v6427, %v6465
  %v6469 = vmul.f32 %v6435, %v6466
  %v6470 = vmul.f32 %v6443, %v6467
  %6471 = vst [vmem:[#allocation3] sm:$0xff] %v6468
  %6472 = vst [vmem:[#allocation3 + $0x8] sm:$0xff] %v6469
  %6473 = vst [vmem:[#allocation3 + $0x10] sm:$0xff] %v6470
  %v6474 = vlaneseq
  %v6475 = vand.u32 %v6474, 127
  %vm6476 = vcmp.lt.s32.totalorder %v6475, 50
  %v6477 = vsel %vm6476, 1, 0
  %v6478 = vcvt.s32.f32 %v6477
  %v6479 = vld [vmem:[#allocation3] sm:$0x3]
  %v6480 = vld [vmem:[#allocation3 + $0x2] sm:$0x3]
  %v6481 = vsub.f32 %v6479, %v6480
  %v6482 = vand.u32 2147483647, %v6481
  %v6483 = vmul.f32 %v6482, %v6478
  %vm6484 = vcmask 1041408
  %v6485 = vsel %vm6484, %v6483, 0.0
  %6486 = vadd.xlane.f32.xlu0 %v6485
  %v6487 = vpop.xlane.xlu0 %6486
  %v6488 = vsub.f32 0.0, %v6487
  %v6489 = vmul.f32 %v6488, 1.442695
  %v6490 = vpow.pop %v6489
  %v6491 = vld [vmem:[#allocation3 + $0x8] sm:$0x3]
  %v6492 = vld [vmem:[#allocation3 + $0xa] sm:$0x3]
  %v6493 = vsub.f32 %v6491, %v6492
  %v6494 = vand.u32 2147483647, %v6493
  %v6495 = vmul.f32 %v6494, %v6478
  %v6496 = vsel %vm6484, %v6495, 0.0
  %6497 = vadd.xlane.f32.xlu0 %v6496
  %v6498 = vpop.xlane.xlu0 %6497
  %v6499 = vsub.f32 0.0, %v6498
  %v6500 = vmul.f32 %v6499, 1.442695
  %v6501 = vpow.pop %v6500
  %v6502 = vld [vmem:[#allocation3 + $0x10] sm:$0x3]
  %v6503 = vld [vmem:[#allocation3 + $0x12] sm:$0x3]
  %v6504 = vsub.f32 %v6502, %v6503
  %v6505 = vand.u32 2147483647, %v6504
  %v6506 = vmul.f32 %v6505, %v6478
  %v6507 = vsel %vm6484, %v6506, 0.0
  %6508 = vadd.xlane.f32.xlu0 %v6507
  %v6509 = vpop.xlane.xlu0 %6508
  %v6510 = vmul.f32 %v6509, 1.442695
  %v6511 = vpow.pop %v6510
  %s6512 = smul.u32 8, 17
  %s6513 = smul.u32 %s6512, 3
  %s6514 = sshll.u32 %s6513, 4
  %6515 = dma.done [#allocation6], %s6514
  %v6516 = vld [vmem:[%s0 + $0x1f8] sm:$0x3]
  %s6517 = scalar_lea.vmem [#allocation5], 384
  %v6518 = vld [vmem:[%s6517] ss:$8 sm:$0x7]
  %v6520 = vlaneseq
  %v6521 = vshrl.u32 %v6520, 7
  %v6522 = vsub.s32 0, %v6521
  %v6523 = vrot.slane %v6518, %v6522
  %v6524 = vlaneseq
  %v6525 = vshrl.u32 %v6524, 7
  %v6526 = vsub.s32 1, %v6525
  %v6527 = vrot.slane %v6518, %v6526
  %v6528 = vlaneseq
  %v6529 = vshrl.u32 %v6528, 7
  %v6530 = vsub.s32 2, %v6529
  %v6531 = vrot.slane %v6518, %v6530
  %v6535 = vmul.f32 %v6511, %v6523
  %v6536 = vmul.f32 %v6511, %v6527
  %v6537 = vmul.f32 %v6511, %v6531
  %s6538 = scalar_lea.vmem [#allocation5], 385
  %v6539 = vld [vmem:[%s6538] ss:$8 sm:$0x7]
  %v6541 = vlaneseq
  %v6542 = vshrl.u32 %v6541, 7
  %v6543 = vsub.s32 0, %v6542
  %v6544 = vrot.slane %v6539, %v6543
  %v6545 = vlaneseq
  %v6546 = vshrl.u32 %v6545, 7
  %v6547 = vsub.s32 1, %v6546
  %v6548 = vrot.slane %v6539, %v6547
  %v6549 = vlaneseq
  %v6550 = vshrl.u32 %v6549, 7
  %v6551 = vsub.s32 2, %v6550
  %v6552 = vrot.slane %v6539, %v6551
  %v6556 = vmul.f32 %v6501, %v6544
  %v6557 = vmul.f32 %v6501, %v6548
  %v6558 = vmul.f32 %v6501, %v6552
  %v6559 = vadd.f32 %v6535, %v6556
  %v6560 = vadd.f32 %v6536, %v6557
  %v6561 = vadd.f32 %v6537, %v6558
  %s6562 = scalar_lea.vmem [#allocation5], 386
  %v6563 = vld [vmem:[%s6562] ss:$8 sm:$0x7]
  %v6565 = vlaneseq
  %v6566 = vshrl.u32 %v6565, 7
  %v6567 = vsub.s32 0, %v6566
  %v6568 = vrot.slane %v6563, %v6567
  %v6569 = vlaneseq
  %v6570 = vshrl.u32 %v6569, 7
  %v6571 = vsub.s32 1, %v6570
  %v6572 = vrot.slane %v6563, %v6571
  %v6573 = vlaneseq
  %v6574 = vshrl.u32 %v6573, 7
  %v6575 = vsub.s32 2, %v6574
  %v6576 = vrot.slane %v6563, %v6575
  %v6580 = vmul.f32 %v6490, %v6568
  %v6581 = vmul.f32 %v6490, %v6572
  %v6582 = vmul.f32 %v6490, %v6576
  %v6583 = vadd.f32 %v6559, %v6580
  %v6584 = vadd.f32 %v6560, %v6581
  %v6585 = vadd.f32 %v6561, %v6582
  %v6586 = vld [vmem:[#allocation5] sm:$0xff]
  %v6587 = vld [vmem:[#allocation5 + $0x8] sm:$0xff]
  %v6588 = vld [vmem:[#allocation5 + $0x10] sm:$0xff]
  %v6589 = vld [vmem:[#allocation5 + $0x18] sm:$0xff]
  %v6590 = vld [vmem:[#allocation5 + $0x20] sm:$0xff]
  %v6591 = vld [vmem:[#allocation5 + $0x28] sm:$0xff]
  %v6592 = vld [vmem:[#allocation5 + $0x30] sm:$0xff]
  %v6593 = vld [vmem:[#allocation5 + $0x38] sm:$0xff]
  %v6594 = vld [vmem:[#allocation5 + $0x40] sm:$0xff]
  %v6595 = vld [vmem:[#allocation5 + $0x48] sm:$0xff]
  %v6596 = vld [vmem:[#allocation5 + $0x50] sm:$0xff]
  %v6597 = vld [vmem:[#allocation5 + $0x58] sm:$0xff]
  %v6598 = vld [vmem:[#allocation5 + $0x60] sm:$0xff]
  %v6599 = vld [vmem:[#allocation5 + $0x68] sm:$0xff]
  %v6600 = vld [vmem:[#allocation5 + $0x70] sm:$0xff]
  %v6601 = vld [vmem:[#allocation5 + $0x78] sm:$0xff]
  %v6602 = vld [vmem:[#allocation5 + $0x80] sm:$0xff]
  %v6603 = vld [vmem:[#allocation5 + $0x88] sm:$0xff]
  %v6604 = vld [vmem:[#allocation5 + $0x90] sm:$0xff]
  %v6605 = vld [vmem:[#allocation5 + $0x98] sm:$0xff]
  %v6606 = vld [vmem:[#allocation5 + $0xa0] sm:$0xff]
  %v6607 = vld [vmem:[#allocation5 + $0xa8] sm:$0xff]
  %v6608 = vld [vmem:[#allocation5 + $0xb0] sm:$0xff]
  %v6609 = vld [vmem:[#allocation5 + $0xb8] sm:$0xff]
  %v6610 = vld [vmem:[#allocation5 + $0xc0] sm:$0xff]
  %v6611 = vld [vmem:[#allocation5 + $0xc8] sm:$0xff]
  %v6612 = vld [vmem:[#allocation5 + $0xd0] sm:$0xff]
  %v6613 = vld [vmem:[#allocation5 + $0xd8] sm:$0xff]
  %v6614 = vld [vmem:[#allocation5 + $0xe0] sm:$0xff]
  %v6615 = vld [vmem:[#allocation5 + $0xe8] sm:$0xff]
  %v6616 = vld [vmem:[#allocation5 + $0xf0] sm:$0xff]
  %v6617 = vld [vmem:[#allocation5 + $0xf8] sm:$0xff]
  %v6618 = vld [vmem:[#allocation5 + $0x100] sm:$0xff]
  %v6619 = vld [vmem:[#allocation5 + $0x108] sm:$0xff]
  %v6620 = vld [vmem:[#allocation5 + $0x110] sm:$0xff]
  %v6621 = vld [vmem:[#allocation5 + $0x118] sm:$0xff]
  %v6622 = vld [vmem:[#allocation5 + $0x120] sm:$0xff]
  %v6623 = vld [vmem:[#allocation5 + $0x128] sm:$0xff]
  %v6624 = vld [vmem:[#allocation5 + $0x130] sm:$0xff]
  %v6625 = vld [vmem:[#allocation5 + $0x138] sm:$0xff]
  %v6626 = vld [vmem:[#allocation5 + $0x140] sm:$0xff]
  %v6627 = vld [vmem:[#allocation5 + $0x148] sm:$0xff]
  %v6628 = vld [vmem:[#allocation5 + $0x150] sm:$0xff]
  %v6629 = vld [vmem:[#allocation5 + $0x158] sm:$0xff]
  %v6630 = vld [vmem:[#allocation5 + $0x160] sm:$0xff]
  %v6631 = vld [vmem:[#allocation5 + $0x168] sm:$0xff]
  %v6632 = vld [vmem:[#allocation5 + $0x170] sm:$0xff]
  %v6633 = vld [vmem:[#allocation5 + $0x178] sm:$0xff]
  %6634 = vmatprep.subr.mxu0 %v6587
  %6635 = vmatpush1.msra.mxu0 %v6586
  %6636 = vmatprep.subr.mxu0 %v6590
  %6637 = vmatpush1.msra.mxu0 %v6589
  %6638 = vmatprep.subr.mxu0 %v6593
  %6639 = vmatpush1.msra.mxu0 %v6592
  %6640 = vmatprep.subr.mxu0 %v6596
  %6641 = vmatpush1.msra.mxu0 %v6595
  %6642 = vmatprep.subr.mxu0 %v6599
  %6643 = vmatpush1.msra.mxu0 %v6598
  %6644 = vmatprep.subr.mxu0 %v6602
  %6645 = vmatpush1.msra.mxu0 %v6601
  %6646 = vmatprep.subr.mxu0 %v6605
  %6647 = vmatpush1.msra.mxu0 %v6604
  %6648 = vmatprep.subr.mxu0 %v6608
  %6649 = vmatpush1.msra.mxu0 %v6607
  %6650 = vmatprep.subr.mxu0 %v6611
  %6651 = vmatpush1.msra.mxu0 %v6610
  %6652 = vmatprep.subr.mxu0 %v6614
  %6653 = vmatpush1.msra.mxu0 %v6613
  %6654 = vmatprep.subr.mxu0 %v6617
  %6655 = vmatpush1.msra.mxu0 %v6616
  %6656 = vmatprep.subr.mxu0 %v6620
  %6657 = vmatpush1.msra.mxu0 %v6619
  %6658 = vmatprep.subr.mxu0 %v6623
  %6659 = vmatpush1.msra.mxu0 %v6622
  %6660 = vmatprep.subr.mxu0 %v6626
  %6661 = vmatpush1.msra.mxu0 %v6625
  %6662 = vmatprep.subr.mxu0 %v6629
  %6663 = vmatpush1.msra.mxu0 %v6628
  %6664 = vmatprep.subr.mxu0 %v6632
  %6665 = vmatpush1.msra.mxu0 %v6631
  %6666 = vmatprep.subr.mxu0 0.0
  %6667 = vmatpush1.msra.mxu0 0.0
  %6668 = vmatprep.subr.mxu0 0.0
  %6669 = vmatpush1.msra.mxu0 0.0
  %6670 = vmatprep.subr.mxu0 0.0
  %6671 = vmatpush1.msra.mxu0 0.0
  %6672 = vmatprep.subr.mxu0 0.0
  %6673 = vmatpush1.msra.mxu0 0.0
  %6674 = vmatprep.subr.mxu0 0.0
  %6675 = vmatpush1.msra.mxu0 0.0
  %6676 = vmatprep.subr.mxu0 0.0
  %6677 = vmatpush1.msra.mxu0 0.0
  %6678 = vmatprep.subr.mxu0 0.0
  %6679 = vmatpush1.msra.mxu0 0.0
  %6680 = vmatprep.subr.mxu0 0.0
  %6681 = vmatpush1.msra.mxu0 0.0
  %6682 = vmatprep.subr.mxu0 0.0
  %6683 = vmatpush1.msra.mxu0 0.0
  %6684 = vmatprep.subr.mxu0 0.0
  %6685 = vmatpush1.msra.mxu0 0.0
  %6686 = vmatprep.subr.mxu0 0.0
  %6687 = vmatpush1.msra.mxu0 0.0
  %6688 = vmatprep.subr.mxu0 0.0
  %6689 = vmatpush1.msra.mxu0 0.0
  %6690 = vmatprep.subr.mxu0 0.0
  %6691 = vmatpush1.msra.mxu0 0.0
  %6692 = vmatprep.subr.mxu0 0.0
  %6693 = vmatpush1.msra.mxu0 0.0
  %6694 = vmatprep.subr.mxu0 0.0
  %6695 = vmatpush1.msra.mxu0 0.0
  %6696 = vmatprep.subr.mxu0 0.0
  %6697 = vmatpush1.msra.mxu0 0.0
  %6698 = vmatprep.mubr.f32.mxu0 0.0
  %6699 = vmatmul.mubr.f32.gmra.mrb[0].mxu0 %v6516
  %v6700 = vpop.f32.mrb[0].mxu0
  %v6701 = vadd.f32 0.0, %v6700
  %v6702 = vpop.f32.mrb[0].mxu0
  %v6703 = vadd.f32 0.0, %v6702
  %6704 = vdwg.mxu0
  %6705 = vmatprep.subr.mxu0 0.0
  %6706 = vmatpush1.msra.mxu0 %v6588
  %6707 = vmatprep.subr.mxu0 0.0
  %6708 = vmatpush1.msra.mxu0 %v6591
  %6709 = vmatprep.subr.mxu0 0.0
  %6710 = vmatpush1.msra.mxu0 %v6594
  %6711 = vmatprep.subr.mxu0 0.0
  %6712 = vmatpush1.msra.mxu0 %v6597
  %6713 = vmatprep.subr.mxu0 0.0
  %6714 = vmatpush1.msra.mxu0 %v6600
  %6715 = vmatprep.subr.mxu0 0.0
  %6716 = vmatpush1.msra.mxu0 %v6603
  %6717 = vmatprep.subr.mxu0 0.0
  %6718 = vmatpush1.msra.mxu0 %v6606
  %6719 = vmatprep.subr.mxu0 0.0
  %6720 = vmatpush1.msra.mxu0 %v6609
  %6721 = vmatprep.subr.mxu0 0.0
  %6722 = vmatpush1.msra.mxu0 %v6612
  %6723 = vmatprep.subr.mxu0 0.0
  %6724 = vmatpush1.msra.mxu0 %v6615
  %6725 = vmatprep.subr.mxu0 0.0
  %6726 = vmatpush1.msra.mxu0 %v6618
  %6727 = vmatprep.subr.mxu0 0.0
  %6728 = vmatpush1.msra.mxu0 %v6621
  %6729 = vmatprep.subr.mxu0 0.0
  %6730 = vmatpush1.msra.mxu0 %v6624
  %6731 = vmatprep.subr.mxu0 0.0
  %6732 = vmatpush1.msra.mxu0 %v6627
  %6733 = vmatprep.subr.mxu0 0.0
  %6734 = vmatpush1.msra.mxu0 %v6630
  %6735 = vmatprep.subr.mxu0 0.0
  %6736 = vmatpush1.msra.mxu0 %v6633
  %6737 = vmatprep.subr.mxu0 0.0
  %6738 = vmatpush1.msra.mxu0 0.0
  %6739 = vmatprep.subr.mxu0 0.0
  %6740 = vmatpush1.msra.mxu0 0.0
  %6741 = vmatprep.subr.mxu0 0.0
  %6742 = vmatpush1.msra.mxu0 0.0
  %6743 = vmatprep.subr.mxu0 0.0
  %6744 = vmatpush1.msra.mxu0 0.0
  %6745 = vmatprep.subr.mxu0 0.0
  %6746 = vmatpush1.msra.mxu0 0.0
  %6747 = vmatprep.subr.mxu0 0.0
  %6748 = vmatpush1.msra.mxu0 0.0
  %6749 = vmatprep.subr.mxu0 0.0
  %6750 = vmatpush1.msra.mxu0 0.0
  %6751 = vmatprep.subr.mxu0 0.0
  %6752 = vmatpush1.msra.mxu0 0.0
  %6753 = vmatprep.subr.mxu0 0.0
  %6754 = vmatpush1.msra.mxu0 0.0
  %6755 = vmatprep.subr.mxu0 0.0
  %6756 = vmatpush1.msra.mxu0 0.0
  %6757 = vmatprep.subr.mxu0 0.0
  %6758 = vmatpush1.msra.mxu0 0.0
  %6759 = vmatprep.subr.mxu0 0.0
  %6760 = vmatpush1.msra.mxu0 0.0
  %6761 = vmatprep.subr.mxu0 0.0
  %6762 = vmatpush1.msra.mxu0 0.0
  %6763 = vmatprep.subr.mxu0 0.0
  %6764 = vmatpush1.msra.mxu0 0.0
  %6765 = vmatprep.subr.mxu0 0.0
  %6766 = vmatpush1.msra.mxu0 0.0
  %6767 = vmatprep.subr.mxu0 0.0
  %6768 = vmatpush1.msra.mxu0 0.0
  %6769 = vmatprep.mubr.f32.mxu0 0.0
  %6770 = vmatmul.mubr.f32.gmra.mrb[0].mxu0 %v6516
  %v6771 = vpop.f32.mrb[0].mxu0
  %v6772 = vadd.f32 0.0, %v6771
  %v6773 = vpop.f32.mrb[0].mxu0
  %6774 = vdwg.mxu0
  %v6775 = vadd.f32 %v6583, %v6701
  %v6776 = vadd.f32 %v6584, %v6703
  %v6777 = vadd.f32 %v6585, %v6772
  %s6778 = scalar_lea.vmem [#allocation5], 387
  %v6779 = vld [vmem:[%s6778] ss:$8 sm:$0x7]
  %v6781 = vlaneseq
  %v6782 = vshrl.u32 %v6781, 7
  %v6783 = vsub.s32 0, %v6782
  %v6784 = vrot.slane %v6779, %v6783
  %v6785 = vlaneseq
  %v6786 = vshrl.u32 %v6785, 7
  %v6787 = vsub.s32 1, %v6786
  %v6788 = vrot.slane %v6779, %v6787
  %v6789 = vlaneseq
  %v6790 = vshrl.u32 %v6789, 7
  %v6791 = vsub.s32 2, %v6790
  %v6792 = vrot.slane %v6779, %v6791
  %v6796 = vadd.f32 %v6775, %v6784
  %v6797 = vadd.f32 %v6776, %v6788
  %v6798 = vadd.f32 %v6777, %v6792
  %v6799 = vtanh.pop %v6796
  %v6800 = vtanh.pop %v6797
  %v6801 = vtanh.pop %v6798
  %s6802 = scalar_lea.vmem [#allocation5], 388
  %v6803 = vld [vmem:[%s6802] ss:$8 sm:$0x7]
  %v6805 = vlaneseq
  %v6806 = vshrl.u32 %v6805, 7
  %v6807 = vsub.s32 0, %v6806
  %v6808 = vrot.slane %v6803, %v6807
  %v6809 = vlaneseq
  %v6810 = vshrl.u32 %v6809, 7
  %v6811 = vsub.s32 1, %v6810
  %v6812 = vrot.slane %v6803, %v6811
  %v6813 = vlaneseq
  %v6814 = vshrl.u32 %v6813, 7
  %v6815 = vsub.s32 2, %v6814
  %v6816 = vrot.slane %v6803, %v6815
  %v6820 = vmul.f32 %v6799, %v6808
  %v6821 = vmul.f32 %v6800, %v6812
  %v6822 = vmul.f32 %v6801, %v6816
  %v6823 = vsel %vm6484, %v6820, 0.0
  %v6824 = vsel %vm6484, %v6821, 0.0
  %v6825 = vadd.f32 %v6823, %v6824
  %vm6826 = vcmask 353280
  %v6827 = vsel %vm6826, %v6822, 0.0
  %v6828 = vadd.f32 %v6825, %v6827
  %6829 = vadd.xlane.f32.xlu0 %v6828
  %v6830 = vpop.xlane.xlu0 %6829
  %v6831 = vld [vmem:[#allocation5 + $0x185] ss:$0 sm:$0xff]
  %v6832 = vadd.f32 %v6830, %v6831
  %v6833 = vxor.u32 %v6832, 2147483648
  %v6834 = vmul.f32 %v6833, 1.442695
  %v6835 = vpow.pop %v6834
  %v6836 = vadd.f32 %v6835, 1.0
  %v6837 = vrcp.pop %v6836
  %v6838 = vmul.f32 1.0, %v6837
  %vm6839 = vcmask 1024
  %6840 = vst.msk [vmem:[%s3] sm:$0x3] %vm6839, %v6838
  // Predicated region
  $region44: #{sem_match_forward.1} parent=0 // pred_check
    _
  $region45: #{sem_match_forward.1} parent=0 // pred_check_branch
    %6842 = sbr.rel (0) target = $region47
  $region46: #{sem_match_forward.1} parent=0 // pred_region
    _
  $region47: #{sem_match_forward.1} parent=0 // pred_fallthru
    _
  // Predicated region
  $region48: #{sem_match_forward.1} parent=0 // pred_check
    _
  $region49: #{sem_match_forward.1} parent=0 // pred_check_branch
    %6844 = sbr.rel (0) target = $region51
  $region50: #{sem_match_forward.1} parent=0 // pred_region
    _
  $region51: #{sem_match_forward.1} parent=0 // pred_fallthru
    _
  %6845 = vsyncmov [#allocation6]
  %s6846 = vpop.sfrf %6845
  %p6847 = scmp.eq.s32.totalorder %s6846, 0
  %p6848 = pneg %p6847
  %6850 = shalt.err (%p6848)

</llo_original>
